<compile_context>
chip_gen: v5e
topology: v5e:2x2
jax: 0.10.0
libtpu: 0.0.40
codegen_flags: <defaults>
</compile_context>

<pallas_src>
import math
import functools

import jax
import jax.numpy as jnp
from jax import lax
from jax.experimental import pallas as pl
from jax.experimental.pallas import tpu as pltpu

# ---- small, module-consistent hyperparameters (module defaults: 256/512/10) ----
DIM = 128        # feature dim
HIDDEN = 256     # hidden dim
N_LAYERS = 3     # number of ResidualFF layers
RES_SCALE = 0.1
LN_EPS = 1e-5
B = 2
T = 256

_INV_SQRT2 = 1.0 / math.sqrt(2.0)


def adsr_mlp_kernel(z_ref, w1_ref, b1_ref, w2_ref, b2_ref, o_ref, *, n_layers, ff_bf16):
    """One (DIM, TT) tile of positions (channels-first); all layers run in-kernel.

    z_ref : (1, DIM, TT)            activations, DIM on sublanes, time on lanes
    w1_ref: (n_layers, HIDDEN, DIM) bf16, LN-gamma folded in   (Conv1d (out,in) layout)
    b1_ref: (n_layers, HIDDEN, 1)   f32,  b1 + W1 @ beta
    w2_ref: (n_layers, DIM, HIDDEN) bf16, res_scale folded in
    b2_ref: (n_layers, DIM, 1)      f32,  res_scale * b2
    o_ref : (1, DIM, TT)
    """
    z = z_ref[0].astype(jnp.float32)                               # (DIM, TT)
    # Static unroll is fine for the 3-layer toy config; at n_layers=10 switch to
    # lax.fori_loop (dynamic w1_ref[l]) to bound live ranges / avoid vreg spills.
    for l in range(n_layers):
        # --- pre-norm LayerNorm over the feature (sublane) axis; affine folded into fc1 ---
        mean = jnp.mean(z, axis=0, keepdims=True)                  # (1, TT)
        cent = z - mean
        var = jnp.mean(cent * cent, axis=0, keepdims=True)         # biased, like PyTorch LN
        y = cent * lax.rsqrt(var + LN_EPS)                         # (DIM, TT)

        # --- fc1 (1x1 conv == W1' @ y) ; bf16 MXU operands, f32 accumulate ---
        h = jnp.dot(w1_ref[l], y.astype(jnp.bfloat16),
                    preferred_element_type=jnp.float32)            # (HIDDEN, TT)

        # --- bias + GELU (tanh -> EUP slot); bf16 epilogue where the VPU is bf16-native ---
        if ff_bf16:
            hb = h.astype(jnp.bfloat16) + b1_ref[l].astype(jnp.bfloat16)
            hb = jax.nn.gelu(hb, approximate=True)                 # bf16, ready for fc2
        else:
            hb = jax.nn.gelu(h + b1_ref[l], approximate=True).astype(jnp.bfloat16)
        # dropout: inference mode -> identity

        # --- fc2 + residual (res_scale already folded into W2'/b2') ---
        y2 = jnp.dot(w2_ref[l], hb, preferred_element_type=jnp.float32)   # (DIM, TT)
        z = z + y2 + b2_ref[l]

    o_ref[0] = z.astype(o_ref.dtype)


def pack_params(gamma, beta, w1, b1, w2, b2):
    """One-time host-side packing (hoisted out of the jitted step):
    fold LN affine into fc1 and res_scale into fc2, transpose to Conv1d (out,in)
    layout, cast matmul weights to bf16, reshape biases to column vectors."""
    w1t = jnp.transpose(w1, (0, 2, 1)).astype(jnp.float32)         # (L, HIDDEN, DIM)
    w2t = jnp.transpose(w2, (0, 2, 1)).astype(jnp.float32)         # (L, DIM, HIDDEN)
    w1f = (w1t * gamma[:, None, :]).astype(jnp.bfloat16)           # W1 . diag(gamma)
    b1f = (b1 + jnp.einsum("lhd,ld->lh", w1t, beta))[..., None].astype(jnp.float32)
    w2f = (RES_SCALE * w2t).astype(jnp.bfloat16)
    b2f = (RES_SCALE * b2)[..., None].astype(jnp.float32)
    return w1f, b1f, w2f, b2f


def _pick_tile(t):
    """Largest lane-dense time tile in {512, 256, 128} dividing T (no padding);
    otherwise fall back to TT=128 with exact zero-padding of the time axis."""
    for tt in (512, 256, 128):
        if t % tt == 0:
            return tt, t
    t_pad = ((t + 127) // 128) * 128
    return 128, t_pad


def _vmem_limit_bytes(d, tt, hidden, n_layers):
    """Right-size the VMEM request from actual buffer math (+ margin)."""
    act = 2 * 2 * d * tt * 4                                       # z in + out tiles, double-buffered
    wts = 2 * n_layers * (2 * hidden * d * 2 + (hidden + d) * 4)   # bf16 weights + f32 biases, x2 buffers
    scratch = 4 * hidden * tt * 4                                  # live intermediates / compiler spills
    margin = 8 << 20
    return int(act + wts + scratch + margin)


@functools.partial(jax.jit, static_argnames=("ff_bf16",))
def adsr_content_mlp(z_nct, w1f, b1f, w2f, b2f, *, ff_bf16=True):
    """z_nct: (B, DIM, T) float32 -> (B, DIM, T) float32 (channels-first, like Conv1d)."""
    bz, d, t = z_nct.shape
    n_layers, hidden, _ = w1f.shape

    tt, t_pad = _pick_tile(t)
    # Padding only for ragged T (positions are independent -> padding is exact);
    # the common case (T % 128 == 0) skips both the pad and the final slice.
    z_in = z_nct if t_pad == t else jnp.pad(z_nct, ((0, 0), (0, 0), (0, t_pad - t)))

    grid = (bz, t_pad // tt)          # batch first: >= 2 "parallel" steps for v7x megacore
    const3 = lambda b, s: (0, 0, 0)   # grid-invariant -> DMA'd once, resident in VMEM
    # TODO(synk): at module-default sizes add pipeline_mode=pl.Buffered(1) on the
    # constant weight specs to reclaim the redundant second buffer (~5 MiB at 256/512/10).

    out = pl.pallas_call(
        functools.partial(adsr_mlp_kernel, n_layers=n_layers, ff_bf16=ff_bf16),
        out_shape=jax.ShapeDtypeStruct((bz, d, t_pad), jnp.float32),
        grid_spec=pltpu.PrefetchScalarGridSpec(
            num_scalar_prefetch=0,
            grid=grid,
            in_specs=[
                pl.BlockSpec((1, d, tt), lambda b, s: (b, 0, s)),       # z tile
                pl.BlockSpec((n_layers, hidden, d), const3),            # W1' (bf16, gamma folded)
                pl.BlockSpec((n_layers, hidden, 1), const3),            # b1' = b1 + W1 @ beta
                pl.BlockSpec((n_layers, d, hidden), const3),            # W2' (bf16, res_scale folded)
                pl.BlockSpec((n_layers, d, 1), const3),                 # b2' = res_scale * b2
            ],
            out_specs=pl.BlockSpec((1, d, tt), lambda b, s: (b, 0, s)),
        ),
        compiler_params=pltpu.CompilerParams(
            dimension_semantics=("parallel", "parallel"),
            vmem_limit_bytes=_vmem_limit_bytes(d, tt, hidden, n_layers),
        ),
    )(z_in, w1f, b1f, w2f, b2f)

    return out if t_pad == t else out[:, :, :t]


def _reference(z_nct, gamma, beta, w1, b1, w2, b2):
    """Pure-JAX f32 reference mirroring the PyTorch forward (exact-erf GELU, no folds)."""
    z = jnp.transpose(z_nct, (0, 2, 1))                            # (B, T, D)
    for l in range(N_LAYERS):
        mean = jnp.mean(z, axis=-1, keepdims=True)
        var = jnp.mean((z - mean) ** 2, axis=-1, keepdims=True)
        y = (z - mean) / jnp.sqrt(var + LN_EPS)
        y = y * gamma[l] + beta[l]
        h = jnp.einsum("btd,dh->bth", y, w1[l]) + b1[l]
        h = 0.5 * h * (1.0 + lax.erf(h * _INV_SQRT2))              # nn.GELU() exact
        y2 = jnp.einsum("bth,hd->btd", h, w2[l]) + b2[l]
        z = z + RES_SCALE * y2
    return jnp.transpose(z, (0, 2, 1))


if __name__ == "__main__":
    key = jax.random.PRNGKey(0)
    ks = jax.random.split(key, 8)

    # deterministic parameter init (shapes per module __init__)
    gamma = 1.0 + 0.01 * jax.random.normal(ks[0], (N_LAYERS, DIM), jnp.float32)
    beta = 0.01 * jax.random.normal(ks[1], (N_LAYERS, DIM), jnp.float32)
    # Conv1d(dim, hidden, 1).weight is (hidden, dim, 1) in PyTorch; stored here as (dim, hidden).
    w1 = 0.05 * jax.random.normal(ks[2], (N_LAYERS, DIM, HIDDEN), jnp.float32)
    b1 = 0.01 * jax.random.normal(ks[3], (N_LAYERS, HIDDEN), jnp.float32)
    # fc2 is zero-initialized in the module; use small nonzero values so the kernel is exercised.
    w2 = 0.05 * jax.random.normal(ks[4], (N_LAYERS, HIDDEN, DIM), jnp.float32)
    b2 = 0.01 * jax.random.normal(ks[5], (N_LAYERS, DIM), jnp.float32)

    z = jax.random.normal(ks[6], (B, DIM, T), jnp.float32)         # NCT, like the PyTorch input

    # bf16 fc1 epilogue on bf16-native VPUs (v6e/v7x); f32 on v5-class chips (no bf16 VPU/EUP).
    try:
        kind = jax.devices()[0].device_kind.lower()
    except Exception:
        kind = ""
    ff_bf16 = "v5" not in kind

    packed = pack_params(gamma, beta, w1, b1, w2, b2)              # one-time, outside the jitted step
    out = adsr_content_mlp(z, *packed, ff_bf16=ff_bf16)
    out = jax.block_until_ready(out)

    ref = _reference(z, gamma, beta, w1, b1, w2, b2)
    assert out.shape == z.shape
    # bf16 MXU operands + tanh-GELU + LN-fold-before-bf16-cast vs all-f32/erf reference
    assert jnp.allclose(out, ref, rtol=2e-2, atol=2e-2), "Pallas output mismatch vs reference"

    print("KERNEL_OK")
</pallas_src>

<mosaic_0001>
module attributes {stable_mosaic.version = 11 : i64} {
  func.func @adsr_mlp_kernel(%arg0: i32, %arg1: i32, %arg2: memref<1x128x256xf32, #tpu.memory_space<vmem>>, %arg3: memref<3x256x128xbf16, #tpu.memory_space<vmem>>, %arg4: memref<3x256x1xf32, #tpu.memory_space<vmem>>, %arg5: memref<3x128x256xbf16, #tpu.memory_space<vmem>>, %arg6: memref<3x128x1xf32, #tpu.memory_space<vmem>>, %arg7: memref<1x128x256xf32, #tpu.memory_space<vmem>>) attributes {dimension_semantics = [#tpu.dimension_semantics<parallel>, #tpu.dimension_semantics<parallel>], iteration_bounds = array<i64: 2, 1>, scalar_prefetch = 0 : i64, scratch_operands = 0 : i64, tpu.core_type = #tpu.core_type<tc>, window_params = [{transform_indices = @transform_0, window_bounds = array<i64: 1, 128, 256>}, {pipeline_mode = #tpu.pipeline_mode<synchronous>, transform_indices = @transform_1, window_bounds = array<i64: 3, 256, 128>}, {pipeline_mode = #tpu.pipeline_mode<synchronous>, transform_indices = @transform_2, window_bounds = array<i64: 3, 256, 1>}, {pipeline_mode = #tpu.pipeline_mode<synchronous>, transform_indices = @transform_3, window_bounds = array<i64: 3, 128, 256>}, {pipeline_mode = #tpu.pipeline_mode<synchronous>, transform_indices = @transform_4, window_bounds = array<i64: 3, 128, 1>}, {transform_indices = @transform_5, window_bounds = array<i64: 1, 128, 256>}]} {
    %c0 = arith.constant 0 : index
    %c0_0 = arith.constant 0 : index
    %c0_1 = arith.constant 0 : index
    %0 = vector.load %arg2[%c0, %c0_0, %c0_1] : memref<1x128x256xf32, #tpu.memory_space<vmem>>, vector<1x128x256xf32>
    %1 = vector.shape_cast %0 : vector<1x128x256xf32> to vector<128x256xf32>
    %cst = arith.constant dense<0.000000e+00> : vector<256xf32>
    %2 = vector.multi_reduction <add>, %1, %cst [0] : vector<128x256xf32> to vector<256xf32>
    %3 = vector.shape_cast %2 : vector<256xf32> to vector<1x256xf32>
    %cst_2 = arith.constant 1.280000e+02 : f32
    %4 = vector.broadcast %cst_2 : f32 to vector<1x256xf32>
    %5 = arith.divf %3, %4 : vector<1x256xf32>
    %6 = vector.broadcast %5 : vector<1x256xf32> to vector<128x256xf32>
    %7 = arith.subf %1, %6 : vector<128x256xf32>
    %8 = arith.mulf %7, %7 : vector<128x256xf32>
    %cst_3 = arith.constant dense<0.000000e+00> : vector<256xf32>
    %9 = vector.multi_reduction <add>, %8, %cst_3 [0] : vector<128x256xf32> to vector<256xf32>
    %10 = vector.shape_cast %9 : vector<256xf32> to vector<1x256xf32>
    %cst_4 = arith.constant 1.280000e+02 : f32
    %11 = vector.broadcast %cst_4 : f32 to vector<1x256xf32>
    %12 = arith.divf %10, %11 : vector<1x256xf32>
    %cst_5 = arith.constant 9.99999974E-6 : f32
    %13 = vector.broadcast %cst_5 : f32 to vector<1x256xf32>
    %14 = arith.addf %12, %13 : vector<1x256xf32>
    %15 = math.rsqrt %14 : vector<1x256xf32>
    %16 = vector.broadcast %15 : vector<1x256xf32> to vector<128x256xf32>
    %17 = arith.mulf %7, %16 : vector<128x256xf32>
    %c0_6 = arith.constant 0 : index
    %c0_7 = arith.constant 0 : index
    %c0_8 = arith.constant 0 : index
    %18 = vector.load %arg3[%c0_6, %c0_7, %c0_8] : memref<3x256x128xbf16, #tpu.memory_space<vmem>>, vector<1x256x128xbf16>
    %19 = vector.shape_cast %18 : vector<1x256x128xbf16> to vector<256x128xbf16>
    %20 = arith.truncf %17 : vector<128x256xf32> to vector<128x256xbf16>
    %cst_9 = arith.constant dense<0.000000e+00> : vector<256x256xf32>
    %21 = tpu.matmul %19, %20, %cst_9 {dimension_numbers = #tpu.dot_dimension_numbers<[1], [0], [0], [1], [0, 0, 1, 1], [], []>} : vector<256x128xbf16>, vector<128x256xbf16>, vector<256x256xf32> -> vector<256x256xf32>
    %22 = arith.truncf %21 : vector<256x256xf32> to vector<256x256xbf16>
    %c0_10 = arith.constant 0 : index
    %c0_11 = arith.constant 0 : index
    %c0_12 = arith.constant 0 : index
    %23 = vector.load %arg4[%c0_10, %c0_11, %c0_12] : memref<3x256x1xf32, #tpu.memory_space<vmem>>, vector<1x256x1xf32>
    %24 = vector.shape_cast %23 : vector<1x256x1xf32> to vector<256x1xf32>
    %25 = arith.truncf %24 : vector<256x1xf32> to vector<256x1xbf16>
    %26 = vector.broadcast %25 : vector<256x1xbf16> to vector<256x256xbf16>
    %27 = arith.addf %22, %26 : vector<256x256xbf16>
    %28 = arith.mulf %27, %27 : vector<256x256xbf16>
    %29 = arith.mulf %27, %28 : vector<256x256xbf16>
    %cst_13 = arith.constant 4.467770e-02 : bf16
    %30 = vector.broadcast %cst_13 : bf16 to vector<256x256xbf16>
    %31 = arith.mulf %30, %29 : vector<256x256xbf16>
    %32 = arith.addf %27, %31 : vector<256x256xbf16>
    %cst_14 = arith.constant 7.968750e-01 : bf16
    %33 = vector.broadcast %cst_14 : bf16 to vector<256x256xbf16>
    %34 = arith.mulf %33, %32 : vector<256x256xbf16>
    %35 = math.tanh %34 : vector<256x256xbf16>
    %cst_15 = arith.constant 1.000000e+00 : bf16
    %36 = vector.broadcast %cst_15 : bf16 to vector<256x256xbf16>
    %37 = arith.addf %36, %35 : vector<256x256xbf16>
    %cst_16 = arith.constant 5.000000e-01 : bf16
    %38 = vector.broadcast %cst_16 : bf16 to vector<256x256xbf16>
    %39 = arith.mulf %38, %37 : vector<256x256xbf16>
    %40 = arith.mulf %27, %39 : vector<256x256xbf16>
    %c0_17 = arith.constant 0 : index
    %c0_18 = arith.constant 0 : index
    %c0_19 = arith.constant 0 : index
    %41 = vector.load %arg5[%c0_17, %c0_18, %c0_19] : memref<3x128x256xbf16, #tpu.memory_space<vmem>>, vector<1x128x256xbf16>
    %42 = vector.shape_cast %41 : vector<1x128x256xbf16> to vector<128x256xbf16>
    %cst_20 = arith.constant dense<0.000000e+00> : vector<128x256xf32>
    %43 = tpu.matmul %42, %40, %cst_20 {dimension_numbers = #tpu.dot_dimension_numbers<[1], [0], [0], [1], [0, 0, 1, 1], [], []>} : vector<128x256xbf16>, vector<256x256xbf16>, vector<128x256xf32> -> vector<128x256xf32>
    %44 = arith.addf %1, %43 : vector<128x256xf32>
    %c0_21 = arith.constant 0 : index
    %c0_22 = arith.constant 0 : index
    %c0_23 = arith.constant 0 : index
    %45 = vector.load %arg6[%c0_21, %c0_22, %c0_23] : memref<3x128x1xf32, #tpu.memory_space<vmem>>, vector<1x128x1xf32>
    %46 = vector.shape_cast %45 : vector<1x128x1xf32> to vector<128x1xf32>
    %47 = vector.broadcast %46 : vector<128x1xf32> to vector<128x256xf32>
    %48 = arith.addf %44, %47 : vector<128x256xf32>
    %cst_24 = arith.constant dense<0.000000e+00> : vector<256xf32>
    %49 = vector.multi_reduction <add>, %48, %cst_24 [0] : vector<128x256xf32> to vector<256xf32>
    %50 = vector.shape_cast %49 : vector<256xf32> to vector<1x256xf32>
    %cst_25 = arith.constant 1.280000e+02 : f32
    %51 = vector.broadcast %cst_25 : f32 to vector<1x256xf32>
    %52 = arith.divf %50, %51 : vector<1x256xf32>
    %53 = vector.broadcast %52 : vector<1x256xf32> to vector<128x256xf32>
    %54 = arith.subf %48, %53 : vector<128x256xf32>
    %55 = arith.mulf %54, %54 : vector<128x256xf32>
    %cst_26 = arith.constant dense<0.000000e+00> : vector<256xf32>
    %56 = vector.multi_reduction <add>, %55, %cst_26 [0] : vector<128x256xf32> to vector<256xf32>
    %57 = vector.shape_cast %56 : vector<256xf32> to vector<1x256xf32>
    %cst_27 = arith.constant 1.280000e+02 : f32
    %58 = vector.broadcast %cst_27 : f32 to vector<1x256xf32>
    %59 = arith.divf %57, %58 : vector<1x256xf32>
    %cst_28 = arith.constant 9.99999974E-6 : f32
    %60 = vector.broadcast %cst_28 : f32 to vector<1x256xf32>
    %61 = arith.addf %59, %60 : vector<1x256xf32>
    %62 = math.rsqrt %61 : vector<1x256xf32>
    %63 = vector.broadcast %62 : vector<1x256xf32> to vector<128x256xf32>
    %64 = arith.mulf %54, %63 : vector<128x256xf32>
    %c1 = arith.constant 1 : index
    %c0_29 = arith.constant 0 : index
    %c0_30 = arith.constant 0 : index
    %65 = vector.load %arg3[%c1, %c0_29, %c0_30] : memref<3x256x128xbf16, #tpu.memory_space<vmem>>, vector<1x256x128xbf16>
    %66 = vector.shape_cast %65 : vector<1x256x128xbf16> to vector<256x128xbf16>
    %67 = arith.truncf %64 : vector<128x256xf32> to vector<128x256xbf16>
    %cst_31 = arith.constant dense<0.000000e+00> : vector<256x256xf32>
    %68 = tpu.matmul %66, %67, %cst_31 {dimension_numbers = #tpu.dot_dimension_numbers<[1], [0], [0], [1], [0, 0, 1, 1], [], []>} : vector<256x128xbf16>, vector<128x256xbf16>, vector<256x256xf32> -> vector<256x256xf32>
    %69 = arith.truncf %68 : vector<256x256xf32> to vector<256x256xbf16>
    %c1_32 = arith.constant 1 : index
    %c0_33 = arith.constant 0 : index
    %c0_34 = arith.constant 0 : index
    %70 = vector.load %arg4[%c1_32, %c0_33, %c0_34] : memref<3x256x1xf32, #tpu.memory_space<vmem>>, vector<1x256x1xf32>
    %71 = vector.shape_cast %70 : vector<1x256x1xf32> to vector<256x1xf32>
    %72 = arith.truncf %71 : vector<256x1xf32> to vector<256x1xbf16>
    %73 = vector.broadcast %72 : vector<256x1xbf16> to vector<256x256xbf16>
    %74 = arith.addf %69, %73 : vector<256x256xbf16>
    %75 = arith.mulf %74, %74 : vector<256x256xbf16>
    %76 = arith.mulf %74, %75 : vector<256x256xbf16>
    %cst_35 = arith.constant 4.467770e-02 : bf16
    %77 = vector.broadcast %cst_35 : bf16 to vector<256x256xbf16>
    %78 = arith.mulf %77, %76 : vector<256x256xbf16>
    %79 = arith.addf %74, %78 : vector<256x256xbf16>
    %cst_36 = arith.constant 7.968750e-01 : bf16
    %80 = vector.broadcast %cst_36 : bf16 to vector<256x256xbf16>
    %81 = arith.mulf %80, %79 : vector<256x256xbf16>
    %82 = math.tanh %81 : vector<256x256xbf16>
    %cst_37 = arith.constant 1.000000e+00 : bf16
    %83 = vector.broadcast %cst_37 : bf16 to vector<256x256xbf16>
    %84 = arith.addf %83, %82 : vector<256x256xbf16>
    %cst_38 = arith.constant 5.000000e-01 : bf16
    %85 = vector.broadcast %cst_38 : bf16 to vector<256x256xbf16>
    %86 = arith.mulf %85, %84 : vector<256x256xbf16>
    %87 = arith.mulf %74, %86 : vector<256x256xbf16>
    %c1_39 = arith.constant 1 : index
    %c0_40 = arith.constant 0 : index
    %c0_41 = arith.constant 0 : index
    %88 = vector.load %arg5[%c1_39, %c0_40, %c0_41] : memref<3x128x256xbf16, #tpu.memory_space<vmem>>, vector<1x128x256xbf16>
    %89 = vector.shape_cast %88 : vector<1x128x256xbf16> to vector<128x256xbf16>
    %cst_42 = arith.constant dense<0.000000e+00> : vector<128x256xf32>
    %90 = tpu.matmul %89, %87, %cst_42 {dimension_numbers = #tpu.dot_dimension_numbers<[1], [0], [0], [1], [0, 0, 1, 1], [], []>} : vector<128x256xbf16>, vector<256x256xbf16>, vector<128x256xf32> -> vector<128x256xf32>
    %91 = arith.addf %48, %90 : vector<128x256xf32>
    %c1_43 = arith.constant 1 : index
    %c0_44 = arith.constant 0 : index
    %c0_45 = arith.constant 0 : index
    %92 = vector.load %arg6[%c1_43, %c0_44, %c0_45] : memref<3x128x1xf32, #tpu.memory_space<vmem>>, vector<1x128x1xf32>
    %93 = vector.shape_cast %92 : vector<1x128x1xf32> to vector<128x1xf32>
    %94 = vector.broadcast %93 : vector<128x1xf32> to vector<128x256xf32>
    %95 = arith.addf %91, %94 : vector<128x256xf32>
    %cst_46 = arith.constant dense<0.000000e+00> : vector<256xf32>
    %96 = vector.multi_reduction <add>, %95, %cst_46 [0] : vector<128x256xf32> to vector<256xf32>
    %97 = vector.shape_cast %96 : vector<256xf32> to vector<1x256xf32>
    %cst_47 = arith.constant 1.280000e+02 : f32
    %98 = vector.broadcast %cst_47 : f32 to vector<1x256xf32>
    %99 = arith.divf %97, %98 : vector<1x256xf32>
    %100 = vector.broadcast %99 : vector<1x256xf32> to vector<128x256xf32>
    %101 = arith.subf %95, %100 : vector<128x256xf32>
    %102 = arith.mulf %101, %101 : vector<128x256xf32>
    %cst_48 = arith.constant dense<0.000000e+00> : vector<256xf32>
    %103 = vector.multi_reduction <add>, %102, %cst_48 [0] : vector<128x256xf32> to vector<256xf32>
    %104 = vector.shape_cast %103 : vector<256xf32> to vector<1x256xf32>
    %cst_49 = arith.constant 1.280000e+02 : f32
    %105 = vector.broadcast %cst_49 : f32 to vector<1x256xf32>
    %106 = arith.divf %104, %105 : vector<1x256xf32>
    %cst_50 = arith.constant 9.99999974E-6 : f32
    %107 = vector.broadcast %cst_50 : f32 to vector<1x256xf32>
    %108 = arith.addf %106, %107 : vector<1x256xf32>
    %109 = math.rsqrt %108 : vector<1x256xf32>
    %110 = vector.broadcast %109 : vector<1x256xf32> to vector<128x256xf32>
    %111 = arith.mulf %101, %110 : vector<128x256xf32>
    %c2 = arith.constant 2 : index
    %c0_51 = arith.constant 0 : index
    %c0_52 = arith.constant 0 : index
    %112 = vector.load %arg3[%c2, %c0_51, %c0_52] : memref<3x256x128xbf16, #tpu.memory_space<vmem>>, vector<1x256x128xbf16>
    %113 = vector.shape_cast %112 : vector<1x256x128xbf16> to vector<256x128xbf16>
    %114 = arith.truncf %111 : vector<128x256xf32> to vector<128x256xbf16>
    %cst_53 = arith.constant dense<0.000000e+00> : vector<256x256xf32>
    %115 = tpu.matmul %113, %114, %cst_53 {dimension_numbers = #tpu.dot_dimension_numbers<[1], [0], [0], [1], [0, 0, 1, 1], [], []>} : vector<256x128xbf16>, vector<128x256xbf16>, vector<256x256xf32> -> vector<256x256xf32>
    %116 = arith.truncf %115 : vector<256x256xf32> to vector<256x256xbf16>
    %c2_54 = arith.constant 2 : index
    %c0_55 = arith.constant 0 : index
    %c0_56 = arith.constant 0 : index
    %117 = vector.load %arg4[%c2_54, %c0_55, %c0_56] : memref<3x256x1xf32, #tpu.memory_space<vmem>>, vector<1x256x1xf32>
    %118 = vector.shape_cast %117 : vector<1x256x1xf32> to vector<256x1xf32>
    %119 = arith.truncf %118 : vector<256x1xf32> to vector<256x1xbf16>
    %120 = vector.broadcast %119 : vector<256x1xbf16> to vector<256x256xbf16>
    %121 = arith.addf %116, %120 : vector<256x256xbf16>
    %122 = arith.mulf %121, %121 : vector<256x256xbf16>
    %123 = arith.mulf %121, %122 : vector<256x256xbf16>
    %cst_57 = arith.constant 4.467770e-02 : bf16
    %124 = vector.broadcast %cst_57 : bf16 to vector<256x256xbf16>
    %125 = arith.mulf %124, %123 : vector<256x256xbf16>
    %126 = arith.addf %121, %125 : vector<256x256xbf16>
    %cst_58 = arith.constant 7.968750e-01 : bf16
    %127 = vector.broadcast %cst_58 : bf16 to vector<256x256xbf16>
    %128 = arith.mulf %127, %126 : vector<256x256xbf16>
    %129 = math.tanh %128 : vector<256x256xbf16>
    %cst_59 = arith.constant 1.000000e+00 : bf16
    %130 = vector.broadcast %cst_59 : bf16 to vector<256x256xbf16>
    %131 = arith.addf %130, %129 : vector<256x256xbf16>
    %cst_60 = arith.constant 5.000000e-01 : bf16
    %132 = vector.broadcast %cst_60 : bf16 to vector<256x256xbf16>
    %133 = arith.mulf %132, %131 : vector<256x256xbf16>
    %134 = arith.mulf %121, %133 : vector<256x256xbf16>
    %c2_61 = arith.constant 2 : index
    %c0_62 = arith.constant 0 : index
    %c0_63 = arith.constant 0 : index
    %135 = vector.load %arg5[%c2_61, %c0_62, %c0_63] : memref<3x128x256xbf16, #tpu.memory_space<vmem>>, vector<1x128x256xbf16>
    %136 = vector.shape_cast %135 : vector<1x128x256xbf16> to vector<128x256xbf16>
    %cst_64 = arith.constant dense<0.000000e+00> : vector<128x256xf32>
    %137 = tpu.matmul %136, %134, %cst_64 {dimension_numbers = #tpu.dot_dimension_numbers<[1], [0], [0], [1], [0, 0, 1, 1], [], []>} : vector<128x256xbf16>, vector<256x256xbf16>, vector<128x256xf32> -> vector<128x256xf32>
    %138 = arith.addf %95, %137 : vector<128x256xf32>
    %c2_65 = arith.constant 2 : index
    %c0_66 = arith.constant 0 : index
    %c0_67 = arith.constant 0 : index
    %139 = vector.load %arg6[%c2_65, %c0_66, %c0_67] : memref<3x128x1xf32, #tpu.memory_space<vmem>>, vector<1x128x1xf32>
    %140 = vector.shape_cast %139 : vector<1x128x1xf32> to vector<128x1xf32>
    %141 = vector.broadcast %140 : vector<128x1xf32> to vector<128x256xf32>
    %142 = arith.addf %138, %141 : vector<128x256xf32>
    %c0_68 = arith.constant 0 : index
    %c0_69 = arith.constant 0 : index
    %c0_70 = arith.constant 0 : index
    %143 = vector.load %arg7[%c0_68, %c0_69, %c0_70] : memref<1x128x256xf32, #tpu.memory_space<vmem>>, vector<1x128x256xf32>
    %144 = vector.shape_cast %143 : vector<1x128x256xf32> to vector<128x256xf32>
    %145 = vector.shape_cast %142 : vector<128x256xf32> to vector<1x128x256xf32>
    tpu.vector_store %arg7[%c0_68, %c0_69, %c0_70], %145 {strides = array<i32>} : memref<1x128x256xf32, #tpu.memory_space<vmem>>, vector<1x128x256xf32>,
    return
  }
  func.func @transform_0(%arg0: i32, %arg1: i32) -> (i32, i32, i32) {
    %c0_i32 = arith.constant 0 : i32
    %c0_i32_0 = arith.constant 0 : i32
    return %arg0, %c0_i32, %arg1 : i32, i32, i32
  }
  func.func @transform_1(%arg0: i32, %arg1: i32) -> (i32, i32, i32) {
    %c0_i32 = arith.constant 0 : i32
    %c0_i32_0 = arith.constant 0 : i32
    %c0_i32_1 = arith.constant 0 : i32
    %c0_i32_2 = arith.constant 0 : i32
    return %c0_i32, %c0_i32_0, %c0_i32_1 : i32, i32, i32
  }
  func.func @transform_2(%arg0: i32, %arg1: i32) -> (i32, i32, i32) {
    %c0_i32 = arith.constant 0 : i32
    %c0_i32_0 = arith.constant 0 : i32
    %c0_i32_1 = arith.constant 0 : i32
    %c0_i32_2 = arith.constant 0 : i32
    return %c0_i32, %c0_i32_0, %c0_i32_1 : i32, i32, i32
  }
  func.func @transform_3(%arg0: i32, %arg1: i32) -> (i32, i32, i32) {
    %c0_i32 = arith.constant 0 : i32
    %c0_i32_0 = arith.constant 0 : i32
    %c0_i32_1 = arith.constant 0 : i32
    %c0_i32_2 = arith.constant 0 : i32
    return %c0_i32, %c0_i32_0, %c0_i32_1 : i32, i32, i32
  }
  func.func @transform_4(%arg0: i32, %arg1: i32) -> (i32, i32, i32) {
    %c0_i32 = arith.constant 0 : i32
    %c0_i32_0 = arith.constant 0 : i32
    %c0_i32_1 = arith.constant 0 : i32
    %c0_i32_2 = arith.constant 0 : i32
    return %c0_i32, %c0_i32_0, %c0_i32_1 : i32, i32, i32
  }
  func.func @transform_5(%arg0: i32, %arg1: i32) -> (i32, i32, i32) {
    %c0_i32 = arith.constant 0 : i32
    %c0_i32_0 = arith.constant 0 : i32
    return %arg0, %c0_i32, %arg1 : i32, i32, i32
  }
}

</mosaic_0001>

<llo_original>
// kernel: adsr_content_mlp.1
$region0: #{adsr_content_mlp.1}
  #allocation0 [shape = 'u32[]', space=smem, size = 0x4, offset = 0x4, fixed_abs, tag = 'smem constant byte address 0x4 - core index']
  #allocation1 [shape = 'u32[72,128]{1,0:T(1,128)}', space=vmem, size = 0x9000, scoped, tag = 'internal scratch']
  %s0 = inlined_call_operand.vmem [shape: f32[2,128,256], index: 0, kind: input, shape index: {}]
  %s1 = inlined_call_operand.vmem [shape: bf16[3,256,128], index: 1, kind: input, shape index: {}]
  %s2 = inlined_call_operand.vmem [shape: f32[3,256,1], index: 2, kind: input, shape index: {}]
  %s3 = inlined_call_operand.hbm [shape: bf16[3,128,256], index: 3, kind: input, shape index: {}]
  %s4 = inlined_call_operand.vmem [shape: f32[3,128,1], index: 4, kind: input, shape index: {}]
  %s5 = inlined_call_operand.hbm [shape: f32[2,128,256], index: 5, kind: output, shape index: {}]
  %s6 = sld [smem:[#allocation0]]
  $region57: #{adsr_content_mlp.1} parent=0
    _
  %s8 = ssub.s32 1, %s6
  %s9 = scalar_select 0, %s8, %s6
  $region1: #{adsr_content_mlp.1} parent=0
    #allocation2 [shape = 'u8[196608]{0}', space=vmem, size = 0x30000, scoped, tag = 'input window, operand 3, single buffered']
    #allocation3 [shape = 's32[2]{0}', space=sflag, size = 0x8, scoped, tag = 'scoped memory for adsr_content_mlp.1']
    #allocation4 [shape = 's32[2]{0}', space=sflag, size = 0x8, scoped, tag = 'scoped memory for adsr_content_mlp.1']
    #allocation5 [shape = 'u8[262144]{0}', space=vmem, size = 0x40000, scoped, tag = 'output window, operand 0']
    %10 = vsyncpa [#allocation3], 0
    %11 = vsyncpa [#allocation4], 0
    %s12 = scalar_lea.sflag [#allocation4], 1
    %13 = vsyncpa %s12, 0
    loop: start=0, step=1, limit=4
    $region2: #{adsr_content_mlp.1} parent=1 // loop_pre_header
      _
    $region3: #{adsr_content_mlp.1} parent=1 // loop_header
      %s15 = sphi 0, %s19
      %p16 = scmp.ge.s32.totalorder %s15, 4
      %s22 = sphi 0, %s34
      %s23 = sphi 0, %s30
      %s24 = sphi 0, %s22
      %s25 = sphi 0, %s23
      %s26 = sphi 0, %s24
      %s27 = sphi 0, %s25
      %s39 = sphi 0, %s41
      %s42 = sphi 0, %s39
      %s43 = sphi 0, %s42
      %s59 = sphi 0, %s43
      %s63 = sphi 0, %s63
      %s65 = sphi 0, %s63
      %s66 = sphi 0, %s65
      %s80 = sphi 0, %s66
      %s84 = sphi 0, %s84
      %s86 = sphi 0, %s84
      %s87 = sphi 0, %s86
      %s101 = sphi 0, %s87
      %s105 = sphi 0, %s105
      %s107 = sphi 0, %s105
      %s108 = sphi 0, %s107
      %s122 = sphi 0, %s108
      %s126 = sphi 0, %s126
      %s128 = sphi 0, %s126
      %s129 = sphi 0, %s128
      %s143 = sphi 0, %s129
      %s151 = sphi 0, %s153
      %s154 = sphi 0, %s151
      %s155 = sphi 0, %s154
      %s171 = sphi 0, %s155
    $region4: #{adsr_content_mlp.1} parent=1 // loop_header_branch
      %18 = sbr.rel (%p16) target = $region8
    $region5: #{adsr_content_mlp.1} parent=1 // loop_body
      %s20 = ssub.s32 %s15, 1
      %s21 = ssub.s32 %s15, 2
      %s28 = sadd.s32 1, %s23
      %p29 = scmp.ge.s32.totalorder %s28, 1
      %s30 = scalar_select %p29, 0, %s28
      %s31 = sadd.s32 1, %s22
      %s32 = scalar_select %p29, %s31, %s22
      %p33 = scmp.ge.s32.totalorder %s32, 2
      %s34 = scalar_select %p33, 0, %s32
      %s35 = ssub.s32 %s22, %s34
      %s36 = ssub.s32 %s23, %s30
      %s37 = sor.u32 %s35, %s36
      %p38 = scmp.eq.s32.totalorder %s37, 0
      %s40 = sadd.s32 %s39, 1
      %s41 = scalar_select %p38, %s39, %s40
      %p44 = pneg %p38
      %p45 = scmp.eq.s32.totalorder %s15, 1
      %p46 = por %p44, %p45
      %p47 = scmp.ne.s32.totalorder %s39, %s42
      %p48 = scmp.eq.s32.totalorder %s15, 0
      %p49 = por %p47, %p48
      %p50 = scmp.ne.s32.totalorder %s39, %s42
      %p51 = scmp.eq.s32.totalorder %s20, 1
      %p52 = por %p50, %p51
      %p53 = scmp.ne.s32.totalorder %s42, %s43
      %p54 = scmp.eq.s32.totalorder %s20, 0
      %p55 = por %p53, %p54
      %p56 = scmp.ne.s32.totalorder %s42, %s43
      %p57 = scmp.eq.s32.totalorder %s21, 1
      %p58 = por %p56, %p57
      %p60 = scmp.ne.s32.totalorder %s43, %s59
      %p61 = scmp.eq.s32.totalorder %s21, 0
      %p62 = por %p60, %p61
      %s64 = sadd.s32 %s63, 1
      %p67 = scmp.eq.s32.totalorder %s15, 1
      %p68 = scmp.ne.s32.totalorder %s63, %s65
      %p69 = scmp.eq.s32.totalorder %s15, 0
      %p70 = por %p68, %p69
      %p71 = scmp.ne.s32.totalorder %s63, %s65
      %p72 = scmp.eq.s32.totalorder %s20, 1
      %p73 = por %p71, %p72
      %p74 = scmp.ne.s32.totalorder %s65, %s66
      %p75 = scmp.eq.s32.totalorder %s20, 0
      %p76 = por %p74, %p75
      %p77 = scmp.ne.s32.totalorder %s65, %s66
      %p78 = scmp.eq.s32.totalorder %s21, 1
      %p79 = por %p77, %p78
      %p81 = scmp.ne.s32.totalorder %s66, %s80
      %p82 = scmp.eq.s32.totalorder %s21, 0
      %p83 = por %p81, %p82
      %s85 = sadd.s32 %s84, 1
      %p88 = scmp.eq.s32.totalorder %s15, 1
      %p89 = scmp.ne.s32.totalorder %s84, %s86
      %p90 = scmp.eq.s32.totalorder %s15, 0
      %p91 = por %p89, %p90
      %p92 = scmp.ne.s32.totalorder %s84, %s86
      %p93 = scmp.eq.s32.totalorder %s20, 1
      %p94 = por %p92, %p93
      %p95 = scmp.ne.s32.totalorder %s86, %s87
      %p96 = scmp.eq.s32.totalorder %s20, 0
      %p97 = por %p95, %p96
      %p98 = scmp.ne.s32.totalorder %s86, %s87
      %p99 = scmp.eq.s32.totalorder %s21, 1
      %p100 = por %p98, %p99
      %p102 = scmp.ne.s32.totalorder %s87, %s101
      %p103 = scmp.eq.s32.totalorder %s21, 0
      %p104 = por %p102, %p103
      %s106 = sadd.s32 %s105, 1
      %p109 = scmp.eq.s32.totalorder %s15, 1
      %p110 = scmp.ne.s32.totalorder %s105, %s107
      %p111 = scmp.eq.s32.totalorder %s15, 0
      %p112 = por %p110, %p111
      %p113 = scmp.ne.s32.totalorder %s105, %s107
      %p114 = scmp.eq.s32.totalorder %s20, 1
      %p115 = por %p113, %p114
      %p116 = scmp.ne.s32.totalorder %s107, %s108
      %p117 = scmp.eq.s32.totalorder %s20, 0
      %p118 = por %p116, %p117
      %p119 = scmp.ne.s32.totalorder %s107, %s108
      %p120 = scmp.eq.s32.totalorder %s21, 1
      %p121 = por %p119, %p120
      %p123 = scmp.ne.s32.totalorder %s108, %s122
      %p124 = scmp.eq.s32.totalorder %s21, 0
      %p125 = por %p123, %p124
      %s127 = sadd.s32 %s126, 1
      %p130 = scmp.eq.s32.totalorder %s15, 1
      %p131 = scmp.ne.s32.totalorder %s126, %s128
      %p132 = scmp.eq.s32.totalorder %s15, 0
      %p133 = por %p131, %p132
      %p134 = scmp.ne.s32.totalorder %s126, %s128
      %p135 = scmp.eq.s32.totalorder %s20, 1
      %p136 = por %p134, %p135
      %p137 = scmp.ne.s32.totalorder %s128, %s129
      %p138 = scmp.eq.s32.totalorder %s20, 0
      %p139 = por %p137, %p138
      %p140 = scmp.ne.s32.totalorder %s128, %s129
      %p141 = scmp.eq.s32.totalorder %s21, 1
      %p142 = por %p140, %p141
      %p144 = scmp.ne.s32.totalorder %s129, %s143
      %p145 = scmp.eq.s32.totalorder %s21, 0
      %p146 = por %p144, %p145
      %s147 = ssub.s32 %s22, %s34
      %s148 = ssub.s32 %s23, %s30
      %s149 = sor.u32 %s147, %s148
      %p150 = scmp.eq.s32.totalorder %s149, 0
      %s152 = sadd.s32 %s151, 1
      %s153 = scalar_select %p150, %s151, %s152
      %p156 = pneg %p150
      %p157 = scmp.eq.s32.totalorder %s15, 1
      %p158 = por %p156, %p157
      %p159 = scmp.ne.s32.totalorder %s151, %s154
      %p160 = scmp.eq.s32.totalorder %s15, 0
      %p161 = por %p159, %p160
      %p162 = scmp.ne.s32.totalorder %s151, %s154
      %p163 = scmp.eq.s32.totalorder %s20, 1
      %p164 = por %p162, %p163
      %p165 = scmp.ne.s32.totalorder %s154, %s155
      %p166 = scmp.eq.s32.totalorder %s20, 0
      %p167 = por %p165, %p166
      %p168 = scmp.ne.s32.totalorder %s154, %s155
      %p169 = scmp.eq.s32.totalorder %s21, 1
      %p170 = por %p168, %p169
      %p172 = scmp.ne.s32.totalorder %s155, %s171
      %p173 = scmp.eq.s32.totalorder %s21, 0
      %p174 = por %p172, %p173
      %p175 = scmp.le.s32.totalorder 1, %s15
      %p176 = scmp.lt.s32.totalorder %s15, 3
      %p177 = pnand %p175, %p176
      %p178 = pneg %p177
      // Predicated region
      $region9: #{adsr_content_mlp.1} parent=5 // pred_check
        _
      $region10: #{adsr_content_mlp.1} parent=5 // pred_check_branch
        %180 = sbr.rel (%p177) target = $region12
      $region11: #{adsr_content_mlp.1} parent=5 // pred_region
        %s181 = ssub.s32 %s15, 1
        // Predicated region
        $region13: #{adsr_content_mlp.1} parent=11 // pred_check
          %p182 = pneg %p76
        $region14: #{adsr_content_mlp.1} parent=11 // pred_check_branch
          %184 = sbr.rel (%p182) target = $region16
        $region15: #{adsr_content_mlp.1} parent=11 // pred_region
          _
        $region16: #{adsr_content_mlp.1} parent=11 // pred_fallthru
          _
        // Predicated region
        $region17: #{adsr_content_mlp.1} parent=11 // pred_check
          %p185 = pneg %p97
        $region18: #{adsr_content_mlp.1} parent=11 // pred_check_branch
          %187 = sbr.rel (%p185) target = $region20
        $region19: #{adsr_content_mlp.1} parent=11 // pred_region
          _
        $region20: #{adsr_content_mlp.1} parent=11 // pred_fallthru
          _
        // Predicated region
        $region21: #{adsr_content_mlp.1} parent=11 // pred_check
          %p188 = pneg %p118
        $region22: #{adsr_content_mlp.1} parent=11 // pred_check_branch
          %190 = sbr.rel (%p188) target = $region24
        $region23: #{adsr_content_mlp.1} parent=11 // pred_region
          %192 = vsyncadd [#allocation3], 0
          %s193 = sshll.u32 %s3, 4
          %s194 = int_to_ptr.hbm [resolvable:$true] %s193
          %s195 = sshll.u32 [#allocation2], 4
          %s196 = int_to_ptr.vmem [resolvable:$true] %s195
          %201 = dma.hbm_to_vmem [thread:$0]  %s194, 6144, %s196, [#allocation3], 128, 128, 8
        $region24: #{adsr_content_mlp.1} parent=11 // pred_fallthru
          _
        // Predicated region
        $region25: #{adsr_content_mlp.1} parent=11 // pred_check
          %p202 = pneg %p139
        $region26: #{adsr_content_mlp.1} parent=11 // pred_check_branch
          %204 = sbr.rel (%p202) target = $region28
        $region27: #{adsr_content_mlp.1} parent=11 // pred_region
          _
        $region28: #{adsr_content_mlp.1} parent=11 // pred_fallthru
          _
      $region12: #{adsr_content_mlp.1} parent=5 // pred_fallthru
        _
      %p205 = scmp.lt.s32.totalorder %s15, 2
      // Predicated region
      $region29: #{adsr_content_mlp.1} parent=5 // pred_check
        %p206 = pneg %p205
      $region30: #{adsr_content_mlp.1} parent=5 // pred_check_branch
        %208 = sbr.rel (%p206) target = $region32
      $region31: #{adsr_content_mlp.1} parent=5 // pred_region
        // Predicated region
        $region33: #{adsr_content_mlp.1} parent=31 // pred_check
          %p209 = pneg %p49
        $region34: #{adsr_content_mlp.1} parent=31 // pred_check_branch
          %211 = sbr.rel (%p209) target = $region36
        $region35: #{adsr_content_mlp.1} parent=31 // pred_region
          %s212 = smul.u32 2, %s23
          %p213 = scmp.lt.s32.totalorder %s22, 1
          %s214 = scalar_select %p213, %s22, 1
          %p215 = scmp.lt.s32.totalorder %s212, 1
          %s216 = scalar_select %p215, %s212, 1
          %s217 = smul.addr %s214, 32
          %s218 = sadd.s32 %s216, %s217
          %s219 = smul.addr %s218, 8
          %s220 = scalar_lea.vmem %s0, %s219
          %s221 = smul.u32 2, %s23
        $region36: #{adsr_content_mlp.1} parent=31 // pred_fallthru
          _
      $region32: #{adsr_content_mlp.1} parent=5 // pred_fallthru
        _
      %p222 = scmp.le.s32.totalorder 1, %s15
      %p223 = scmp.lt.s32.totalorder %s15, 3
      %p224 = pnand %p222, %p223
      %p225 = pneg %p224
      // Predicated region
      $region37: #{adsr_content_mlp.1} parent=5 // pred_check
        _
      $region38: #{adsr_content_mlp.1} parent=5 // pred_check_branch
        %227 = sbr.rel (%p224) target = $region40
      $region39: #{adsr_content_mlp.1} parent=5 // pred_region
        %s228 = ssub.s32 %s15, 1
        // Predicated region
        $region41: #{adsr_content_mlp.1} parent=39 // pred_check
          %p229 = pneg %p118
        $region42: #{adsr_content_mlp.1} parent=39 // pred_check_branch
          %231 = sbr.rel (%p229) target = $region44
        $region43: #{adsr_content_mlp.1} parent=39 // pred_region
          %233 = dma.done [#allocation3], 6144
        $region44: #{adsr_content_mlp.1} parent=39 // pred_fallthru
          _
        %s234 = smul.u32 2, %s25
        %p235 = scmp.lt.s32.totalorder %s24, 1
        %s236 = scalar_select %p235, %s24, 1
        %p237 = scmp.lt.s32.totalorder %s234, 1
        %s238 = scalar_select %p237, %s234, 1
        %s239 = smul.addr %s236, 32
        %s240 = sadd.s32 %s238, %s239
        %s241 = smul.addr %s240, 8
        %s242 = scalar_lea.vmem %s0, %s241
        %p243 = pneg %p55
        %p244 = pneg %p52
        %p245 = pneg %p76
        %p246 = pneg %p73
        %p247 = pneg %p97
        %p248 = pneg %p94
        %p249 = pneg %p118
        %p250 = pneg %p115
        %p251 = pneg %p139
        %p252 = pneg %p136
        %p253 = pneg %p167
        %p254 = pneg %p164
        %s255 = sand.u32 %s154, 1
        %s256 = scalar_lea.sflag [#allocation4], %s255
        %s257 = sand.u32 %s154, 1
        %s258 = smul.addr %s257, 256
        %s259 = scalar_lea.vmem [#allocation5], %s258
        %s260 = smul.u32 2, %s25
        %p261 = scmp.lt.s32.totalorder %s24, 1
        %s262 = scalar_select %p261, %s24, 1
        %p263 = scmp.lt.s32.totalorder %s260, 1
        %s264 = scalar_select %p263, %s260, 1
        %s265 = smul.addr %s262, 32
        %s266 = sadd.s32 %s264, %s265
        %s267 = smul.addr %s266, 8
        %s268 = scalar_lea.vmem %s0, %s267
        %s269 = smul.u32 2, %s25
        %s270 = smul.u32 2, %s25
        %v271 = vld [vmem:[%s268] sm:$0xff]
        %v272 = vld [vmem:[%s268 + $0x8] sm:$0xff]
        %v273 = vld [vmem:[%s268 + $0x10] sm:$0xff]
        %v274 = vld [vmem:[%s268 + $0x18] sm:$0xff]
        %v275 = vld [vmem:[%s268 + $0x20] sm:$0xff]
        %v276 = vld [vmem:[%s268 + $0x28] sm:$0xff]
        %v277 = vld [vmem:[%s268 + $0x30] sm:$0xff]
        %v278 = vld [vmem:[%s268 + $0x38] sm:$0xff]
        %v279 = vld [vmem:[%s268 + $0x40] sm:$0xff]
        %v280 = vld [vmem:[%s268 + $0x48] sm:$0xff]
        %v281 = vld [vmem:[%s268 + $0x50] sm:$0xff]
        %v282 = vld [vmem:[%s268 + $0x58] sm:$0xff]
        %v283 = vld [vmem:[%s268 + $0x60] sm:$0xff]
        %v284 = vld [vmem:[%s268 + $0x68] sm:$0xff]
        %v285 = vld [vmem:[%s268 + $0x70] sm:$0xff]
        %v286 = vld [vmem:[%s268 + $0x78] sm:$0xff]
        %v287 = vld [vmem:[%s268 + $0x80] sm:$0xff]
        %v288 = vld [vmem:[%s268 + $0x88] sm:$0xff]
        %v289 = vld [vmem:[%s268 + $0x90] sm:$0xff]
        %v290 = vld [vmem:[%s268 + $0x98] sm:$0xff]
        %v291 = vld [vmem:[%s268 + $0xa0] sm:$0xff]
        %v292 = vld [vmem:[%s268 + $0xa8] sm:$0xff]
        %v293 = vld [vmem:[%s268 + $0xb0] sm:$0xff]
        %v294 = vld [vmem:[%s268 + $0xb8] sm:$0xff]
        %v295 = vld [vmem:[%s268 + $0xc0] sm:$0xff]
        %v296 = vld [vmem:[%s268 + $0xc8] sm:$0xff]
        %v297 = vld [vmem:[%s268 + $0xd0] sm:$0xff]
        %v298 = vld [vmem:[%s268 + $0xd8] sm:$0xff]
        %v299 = vld [vmem:[%s268 + $0xe0] sm:$0xff]
        %v300 = vld [vmem:[%s268 + $0xe8] sm:$0xff]
        %v301 = vld [vmem:[%s268 + $0xf0] sm:$0xff]
        %v302 = vld [vmem:[%s268 + $0xf8] sm:$0xff]
        %v303 = vadd.f32 %v271, %v273
        %v304 = vadd.f32 %v303, %v275
        %v305 = vadd.f32 %v304, %v277
        %v306 = vadd.f32 %v305, %v279
        %v307 = vadd.f32 %v306, %v281
        %v308 = vadd.f32 %v307, %v283
        %v309 = vadd.f32 %v308, %v285
        %v310 = vadd.f32 %v309, %v287
        %v311 = vadd.f32 %v310, %v289
        %v312 = vadd.f32 %v311, %v291
        %v313 = vadd.f32 %v312, %v293
        %v314 = vadd.f32 %v313, %v295
        %v315 = vadd.f32 %v314, %v297
        %v316 = vadd.f32 %v315, %v299
        %v317 = vadd.f32 %v316, %v301
        %v318 = vrot.slane %v317, 4
        %v319 = vadd.f32 %v317, %v318
        %v320 = vrot.slane %v319, 2
        %v321 = vadd.f32 %v319, %v320
        %v322 = vrot.slane %v321, 1
        %v323 = vadd.f32 %v321, %v322
        %v324 = vadd.f32 %v272, %v274
        %v325 = vadd.f32 %v324, %v276
        %v326 = vadd.f32 %v325, %v278
        %v327 = vadd.f32 %v326, %v280
        %v328 = vadd.f32 %v327, %v282
        %v329 = vadd.f32 %v328, %v284
        %v330 = vadd.f32 %v329, %v286
        %v331 = vadd.f32 %v330, %v288
        %v332 = vadd.f32 %v331, %v290
        %v333 = vadd.f32 %v332, %v292
        %v334 = vadd.f32 %v333, %v294
        %v335 = vadd.f32 %v334, %v296
        %v336 = vadd.f32 %v335, %v298
        %v337 = vadd.f32 %v336, %v300
        %v338 = vadd.f32 %v337, %v302
        %v339 = vrot.slane %v338, 4
        %v340 = vadd.f32 %v338, %v339
        %v341 = vrot.slane %v340, 2
        %v342 = vadd.f32 %v340, %v341
        %v343 = vrot.slane %v342, 1
        %v344 = vadd.f32 %v342, %v343
        %v345 = vrcp.pop 128.0
        %v346 = vmul.f32 128.0, %v345
        %v347 = vsub.f32 1.0, %v346
        %v348 = vmul.f32 %v345, %v347
        %v349 = vadd.f32 %v345, %v348
        %vm350 = vweird.f32 %v345
        %v351 = vsel %vm350, %v345, %v349
        %v352 = vmul.f32 %v323, %v351
        %v353 = vmul.f32 %v344, %v351
        %v354 = vsub.f32 %v271, %v352
        %v355 = vsub.f32 %v272, %v353
        %v356 = vsub.f32 %v273, %v352
        %v357 = vsub.f32 %v274, %v353
        %v358 = vsub.f32 %v275, %v352
        %v359 = vsub.f32 %v276, %v353
        %v360 = vsub.f32 %v277, %v352
        %v361 = vsub.f32 %v278, %v353
        %v362 = vsub.f32 %v279, %v352
        %v363 = vsub.f32 %v280, %v353
        %v364 = vsub.f32 %v281, %v352
        %v365 = vsub.f32 %v282, %v353
        %v366 = vsub.f32 %v283, %v352
        %v367 = vsub.f32 %v284, %v353
        %v368 = vsub.f32 %v285, %v352
        %v369 = vsub.f32 %v286, %v353
        %v370 = vsub.f32 %v287, %v352
        %v371 = vsub.f32 %v288, %v353
        %v372 = vsub.f32 %v289, %v352
        %v373 = vsub.f32 %v290, %v353
        %v374 = vsub.f32 %v291, %v352
        %v375 = vsub.f32 %v292, %v353
        %v376 = vsub.f32 %v293, %v352
        %v377 = vsub.f32 %v294, %v353
        %v378 = vsub.f32 %v295, %v352
        %v379 = vsub.f32 %v296, %v353
        %v380 = vsub.f32 %v297, %v352
        %v381 = vsub.f32 %v298, %v353
        %v382 = vsub.f32 %v299, %v352
        %v383 = vsub.f32 %v300, %v353
        %v384 = vsub.f32 %v301, %v352
        %v385 = vsub.f32 %v302, %v353
        %v386 = vmul.f32 %v354, %v354
        %v387 = vmul.f32 %v355, %v355
        %v388 = vmul.f32 %v356, %v356
        %v389 = vmul.f32 %v357, %v357
        %v390 = vmul.f32 %v358, %v358
        %v391 = vmul.f32 %v359, %v359
        %v392 = vmul.f32 %v360, %v360
        %v393 = vmul.f32 %v361, %v361
        %v394 = vmul.f32 %v362, %v362
        %v395 = vmul.f32 %v363, %v363
        %v396 = vmul.f32 %v364, %v364
        %v397 = vmul.f32 %v365, %v365
        %v398 = vmul.f32 %v366, %v366
        %v399 = vmul.f32 %v367, %v367
        %v400 = vmul.f32 %v368, %v368
        %v401 = vmul.f32 %v369, %v369
        %v402 = vmul.f32 %v370, %v370
        %v403 = vmul.f32 %v371, %v371
        %v404 = vmul.f32 %v372, %v372
        %v405 = vmul.f32 %v373, %v373
        %v406 = vmul.f32 %v374, %v374
        %v407 = vmul.f32 %v375, %v375
        %v408 = vmul.f32 %v376, %v376
        %v409 = vmul.f32 %v377, %v377
        %v410 = vmul.f32 %v378, %v378
        %v411 = vmul.f32 %v379, %v379
        %v412 = vmul.f32 %v380, %v380
        %v413 = vmul.f32 %v381, %v381
        %v414 = vmul.f32 %v382, %v382
        %v415 = vmul.f32 %v383, %v383
        %v416 = vmul.f32 %v384, %v384
        %v417 = vmul.f32 %v385, %v385
        %v418 = vadd.f32 %v386, %v388
        %v419 = vadd.f32 %v418, %v390
        %v420 = vadd.f32 %v419, %v392
        %v421 = vadd.f32 %v420, %v394
        %v422 = vadd.f32 %v421, %v396
        %v423 = vadd.f32 %v422, %v398
        %v424 = vadd.f32 %v423, %v400
        %v425 = vadd.f32 %v424, %v402
        %v426 = vadd.f32 %v425, %v404
        %v427 = vadd.f32 %v426, %v406
        %v428 = vadd.f32 %v427, %v408
        %v429 = vadd.f32 %v428, %v410
        %v430 = vadd.f32 %v429, %v412
        %v431 = vadd.f32 %v430, %v414
        %v432 = vadd.f32 %v431, %v416
        %v433 = vrot.slane %v432, 4
        %v434 = vadd.f32 %v432, %v433
        %v435 = vrot.slane %v434, 2
        %v436 = vadd.f32 %v434, %v435
        %v437 = vrot.slane %v436, 1
        %v438 = vadd.f32 %v436, %v437
        %v439 = vadd.f32 %v387, %v389
        %v440 = vadd.f32 %v439, %v391
        %v441 = vadd.f32 %v440, %v393
        %v442 = vadd.f32 %v441, %v395
        %v443 = vadd.f32 %v442, %v397
        %v444 = vadd.f32 %v443, %v399
        %v445 = vadd.f32 %v444, %v401
        %v446 = vadd.f32 %v445, %v403
        %v447 = vadd.f32 %v446, %v405
        %v448 = vadd.f32 %v447, %v407
        %v449 = vadd.f32 %v448, %v409
        %v450 = vadd.f32 %v449, %v411
        %v451 = vadd.f32 %v450, %v413
        %v452 = vadd.f32 %v451, %v415
        %v453 = vadd.f32 %v452, %v417
        %v454 = vrot.slane %v453, 4
        %v455 = vadd.f32 %v453, %v454
        %v456 = vrot.slane %v455, 2
        %v457 = vadd.f32 %v455, %v456
        %v458 = vrot.slane %v457, 1
        %v459 = vadd.f32 %v457, %v458
        %v460 = vmul.f32 %v438, %v351
        %v461 = vmul.f32 %v459, %v351
        %v462 = vadd.f32 %v460, 1e-05
        %v463 = vadd.f32 %v461, 1e-05
        %v464 = vrsqrt.pop %v462
        %v465 = vmul.f32 %v464, %v462
        %v466 = vmul.f32 %v465, %v464
        %v467 = vmul.f32 0.5, %v466
        %v468 = vsub.f32 1.5, %v467
        %v469 = vmul.f32 %v464, %v468
        %vm470 = vweird.f32 %v462
        %vm471 = vweird.f32 %v464
        %vm472 = vmor %vm470, %vm471
        %v473 = vsel %vm472, %v464, %v469
        %v474 = vrsqrt.pop %v463
        %v475 = vmul.f32 %v474, %v463
        %v476 = vmul.f32 %v475, %v474
        %v477 = vmul.f32 0.5, %v476
        %v478 = vsub.f32 1.5, %v477
        %v479 = vmul.f32 %v474, %v478
        %vm480 = vweird.f32 %v463
        %vm481 = vweird.f32 %v474
        %vm482 = vmor %vm480, %vm481
        %v483 = vsel %vm482, %v474, %v479
        %v484 = vmul.f32 %v354, %v473
        %v485 = vmul.f32 %v355, %v483
        %v486 = vmul.f32 %v356, %v473
        %v487 = vmul.f32 %v357, %v483
        %v488 = vmul.f32 %v358, %v473
        %v489 = vmul.f32 %v359, %v483
        %v490 = vmul.f32 %v360, %v473
        %v491 = vmul.f32 %v361, %v483
        %v492 = vmul.f32 %v362, %v473
        %v493 = vmul.f32 %v363, %v483
        %v494 = vmul.f32 %v364, %v473
        %v495 = vmul.f32 %v365, %v483
        %v496 = vmul.f32 %v366, %v473
        %v497 = vmul.f32 %v367, %v483
        %v498 = vmul.f32 %v368, %v473
        %v499 = vmul.f32 %v369, %v483
        %v500 = vmul.f32 %v370, %v473
        %v501 = vmul.f32 %v371, %v483
        %v502 = vmul.f32 %v372, %v473
        %v503 = vmul.f32 %v373, %v483
        %v504 = vmul.f32 %v374, %v473
        %v505 = vmul.f32 %v375, %v483
        %v506 = vmul.f32 %v376, %v473
        %v507 = vmul.f32 %v377, %v483
        %v508 = vmul.f32 %v378, %v473
        %v509 = vmul.f32 %v379, %v483
        %v510 = vmul.f32 %v380, %v473
        %v511 = vmul.f32 %v381, %v483
        %v512 = vmul.f32 %v382, %v473
        %v513 = vmul.f32 %v383, %v483
        %v514 = vmul.f32 %v384, %v473
        %v515 = vmul.f32 %v385, %v483
        %v516 = vld [vmem:[%s1] sm:$0xf]
        %v517 = vld [vmem:[%s1 + $0x4] sm:$0xf]
        %v518 = vld [vmem:[%s1 + $0x8] sm:$0xf]
        %v519 = vld [vmem:[%s1 + $0xc] sm:$0xf]
        %v520 = vld [vmem:[%s1 + $0x10] sm:$0xf]
        %v521 = vld [vmem:[%s1 + $0x14] sm:$0xf]
        %v522 = vld [vmem:[%s1 + $0x18] sm:$0xf]
        %v523 = vld [vmem:[%s1 + $0x1c] sm:$0xf]
        %v524 = vld [vmem:[%s1 + $0x20] sm:$0xf]
        %v525 = vld [vmem:[%s1 + $0x24] sm:$0xf]
        %v526 = vld [vmem:[%s1 + $0x28] sm:$0xf]
        %v527 = vld [vmem:[%s1 + $0x2c] sm:$0xf]
        %v528 = vld [vmem:[%s1 + $0x30] sm:$0xf]
        %v529 = vld [vmem:[%s1 + $0x34] sm:$0xf]
        %v530 = vld [vmem:[%s1 + $0x38] sm:$0xf]
        %v531 = vld [vmem:[%s1 + $0x3c] sm:$0xf]
        %v532 = vld [vmem:[%s1 + $0x40] sm:$0xf]
        %v533 = vld [vmem:[%s1 + $0x44] sm:$0xf]
        %v534 = vld [vmem:[%s1 + $0x48] sm:$0xf]
        %v535 = vld [vmem:[%s1 + $0x4c] sm:$0xf]
        %v536 = vld [vmem:[%s1 + $0x50] sm:$0xf]
        %v537 = vld [vmem:[%s1 + $0x54] sm:$0xf]
        %v538 = vld [vmem:[%s1 + $0x58] sm:$0xf]
        %v539 = vld [vmem:[%s1 + $0x5c] sm:$0xf]
        %v540 = vld [vmem:[%s1 + $0x60] sm:$0xf]
        %v541 = vld [vmem:[%s1 + $0x64] sm:$0xf]
        %v542 = vld [vmem:[%s1 + $0x68] sm:$0xf]
        %v543 = vld [vmem:[%s1 + $0x6c] sm:$0xf]
        %v544 = vld [vmem:[%s1 + $0x70] sm:$0xf]
        %v545 = vld [vmem:[%s1 + $0x74] sm:$0xf]
        %v546 = vld [vmem:[%s1 + $0x78] sm:$0xf]
        %v547 = vld [vmem:[%s1 + $0x7c] sm:$0xf]
        %v548 = vpack.c.bf16 %v486, %v484
        %v549 = vpack.c.bf16 %v487, %v485
        %v550 = vpack.c.bf16 %v490, %v488
        %v551 = vpack.c.bf16 %v491, %v489
        %v552 = vpack.c.bf16 %v494, %v492
        %v553 = vpack.c.bf16 %v495, %v493
        %v554 = vpack.c.bf16 %v498, %v496
        %v555 = vpack.c.bf16 %v499, %v497
        %v556 = vpack.c.bf16 %v502, %v500
        %v557 = vpack.c.bf16 %v503, %v501
        %v558 = vpack.c.bf16 %v506, %v504
        %v559 = vpack.c.bf16 %v507, %v505
        %v560 = vpack.c.bf16 %v510, %v508
        %v561 = vpack.c.bf16 %v511, %v509
        %v562 = vpack.c.bf16 %v514, %v512
        %v563 = vpack.c.bf16 %v515, %v513
        %v596 = vunpack.c.l.b16 %v516
        %v597 = vunpack.c.l.b16 %v517
        %v598 = vunpack.c.l.b16 %v518
        %v599 = vunpack.c.l.b16 %v519
        %v600 = vunpack.c.l.b16 %v520
        %v601 = vunpack.c.l.b16 %v521
        %v602 = vunpack.c.l.b16 %v522
        %v603 = vunpack.c.l.b16 %v523
        %v604 = vunpack.c.l.b16 %v524
        %v605 = vunpack.c.l.b16 %v525
        %v606 = vunpack.c.l.b16 %v526
        %v607 = vunpack.c.l.b16 %v527
        %v608 = vunpack.c.l.b16 %v528
        %v609 = vunpack.c.l.b16 %v529
        %v610 = vunpack.c.l.b16 %v530
        %v611 = vunpack.c.l.b16 %v531
        %v612 = vunpack.c.l.b16 %v532
        %v613 = vunpack.c.l.b16 %v533
        %v614 = vunpack.c.l.b16 %v534
        %v615 = vunpack.c.l.b16 %v535
        %v616 = vunpack.c.l.b16 %v536
        %v617 = vunpack.c.l.b16 %v537
        %v618 = vunpack.c.l.b16 %v538
        %v619 = vunpack.c.l.b16 %v539
        %v620 = vunpack.c.l.b16 %v540
        %v621 = vunpack.c.l.b16 %v541
        %v622 = vunpack.c.l.b16 %v542
        %v623 = vunpack.c.l.b16 %v543
        %v624 = vunpack.c.l.b16 %v544
        %v625 = vunpack.c.l.b16 %v545
        %v626 = vunpack.c.l.b16 %v546
        %v627 = vunpack.c.l.b16 %v547
        %v628 = vpack.c.b16 %v597, %v596
        %v629 = vpack.c.b16 %v599, %v598
        %v630 = vpack.c.b16 %v601, %v600
        %v631 = vpack.c.b16 %v603, %v602
        %v632 = vpack.c.b16 %v605, %v604
        %v633 = vpack.c.b16 %v607, %v606
        %v634 = vpack.c.b16 %v609, %v608
        %v635 = vpack.c.b16 %v611, %v610
        %v636 = vpack.c.b16 %v613, %v612
        %v637 = vpack.c.b16 %v615, %v614
        %v638 = vpack.c.b16 %v617, %v616
        %v639 = vpack.c.b16 %v619, %v618
        %v640 = vpack.c.b16 %v621, %v620
        %v641 = vpack.c.b16 %v623, %v622
        %v642 = vpack.c.b16 %v625, %v624
        %v643 = vpack.c.b16 %v627, %v626
        %660 = vmatpush.bf16.msra.mxu0 %v562
        %661 = vmatpush.bf16.msra.mxu0 %v560
        %662 = vmatpush.bf16.msra.mxu0 %v558
        %663 = vmatpush.bf16.msra.mxu0 %v556
        %664 = vmatpush.bf16.msra.mxu0 %v554
        %665 = vmatpush.bf16.msra.mxu0 %v552
        %666 = vmatpush.bf16.msra.mxu0 %v550
        %667 = vmatpush.bf16.msra.mxu0 %v548
        %668 = vmatmul.bf16.gmra.mxu0 %v628
        %v669 = vpop.f32.mrf.mxu0
        %v670 = vadd.f32 0.0, %v669
        %v671 = vpop.f32.mrf.mxu0
        %v672 = vadd.f32 0.0, %v671
        %673 = vmatmul.bf16.gmra.mxu0 %v629
        %v674 = vpop.f32.mrf.mxu0
        %v675 = vadd.f32 0.0, %v674
        %v676 = vpop.f32.mrf.mxu0
        %v677 = vadd.f32 0.0, %v676
        %678 = vmatmul.bf16.gmra.mxu0 %v630
        %v679 = vpop.f32.mrf.mxu0
        %v680 = vadd.f32 0.0, %v679
        %v681 = vpop.f32.mrf.mxu0
        %v682 = vadd.f32 0.0, %v681
        %683 = vmatmul.bf16.gmra.mxu0 %v631
        %v684 = vpop.f32.mrf.mxu0
        %v685 = vadd.f32 0.0, %v684
        %v686 = vpop.f32.mrf.mxu0
        %v687 = vadd.f32 0.0, %v686
        %688 = vmatmul.bf16.gmra.mxu0 %v632
        %v689 = vpop.f32.mrf.mxu0
        %v690 = vadd.f32 0.0, %v689
        %v691 = vpop.f32.mrf.mxu0
        %v692 = vadd.f32 0.0, %v691
        %693 = vmatmul.bf16.gmra.mxu0 %v633
        %v694 = vpop.f32.mrf.mxu0
        %v695 = vadd.f32 0.0, %v694
        %v696 = vpop.f32.mrf.mxu0
        %v697 = vadd.f32 0.0, %v696
        %698 = vmatmul.bf16.gmra.mxu0 %v634
        %v699 = vpop.f32.mrf.mxu0
        %v700 = vadd.f32 0.0, %v699
        %v701 = vpop.f32.mrf.mxu0
        %v702 = vadd.f32 0.0, %v701
        %703 = vmatmul.bf16.gmra.mxu0 %v635
        %v704 = vpop.f32.mrf.mxu0
        %v705 = vadd.f32 0.0, %v704
        %v706 = vpop.f32.mrf.mxu0
        %v707 = vadd.f32 0.0, %v706
        %708 = vmatmul.bf16.gmra.mxu0 %v636
        %v709 = vpop.f32.mrf.mxu0
        %v710 = vadd.f32 0.0, %v709
        %v711 = vpop.f32.mrf.mxu0
        %v712 = vadd.f32 0.0, %v711
        %713 = vmatmul.bf16.gmra.mxu0 %v637
        %v714 = vpop.f32.mrf.mxu0
        %v715 = vadd.f32 0.0, %v714
        %v716 = vpop.f32.mrf.mxu0
        %v717 = vadd.f32 0.0, %v716
        %718 = vmatmul.bf16.gmra.mxu0 %v638
        %v719 = vpop.f32.mrf.mxu0
        %v720 = vadd.f32 0.0, %v719
        %v721 = vpop.f32.mrf.mxu0
        %v722 = vadd.f32 0.0, %v721
        %723 = vmatmul.bf16.gmra.mxu0 %v639
        %v724 = vpop.f32.mrf.mxu0
        %v725 = vadd.f32 0.0, %v724
        %v726 = vpop.f32.mrf.mxu0
        %v727 = vadd.f32 0.0, %v726
        %728 = vmatmul.bf16.gmra.mxu0 %v640
        %v729 = vpop.f32.mrf.mxu0
        %v730 = vadd.f32 0.0, %v729
        %v731 = vpop.f32.mrf.mxu0
        %v732 = vadd.f32 0.0, %v731
        %733 = vmatmul.bf16.gmra.mxu0 %v641
        %v734 = vpop.f32.mrf.mxu0
        %v735 = vadd.f32 0.0, %v734
        %v736 = vpop.f32.mrf.mxu0
        %v737 = vadd.f32 0.0, %v736
        %738 = vmatmul.bf16.gmra.mxu0 %v642
        %v739 = vpop.f32.mrf.mxu0
        %v740 = vadd.f32 0.0, %v739
        %v741 = vpop.f32.mrf.mxu0
        %v742 = vadd.f32 0.0, %v741
        %743 = vmatmul.bf16.gmra.mxu0 %v643
        %v744 = vpop.f32.mrf.mxu0
        %v745 = vadd.f32 0.0, %v744
        %v746 = vpop.f32.mrf.mxu0
        %v747 = vadd.f32 0.0, %v746
        %748 = vdwg.mxu0
        %749 = vmatpush.bf16.msra.mxu0 %v563
        %750 = vmatpush.bf16.msra.mxu0 %v561
        %751 = vmatpush.bf16.msra.mxu0 %v559
        %752 = vmatpush.bf16.msra.mxu0 %v557
        %753 = vmatpush.bf16.msra.mxu0 %v555
        %754 = vmatpush.bf16.msra.mxu0 %v553
        %755 = vmatpush.bf16.msra.mxu0 %v551
        %756 = vmatpush.bf16.msra.mxu0 %v549
        %757 = vmatmul.bf16.gmra.mxu0 %v628
        %v758 = vpop.f32.mrf.mxu0
        %v759 = vadd.f32 0.0, %v758
        %v760 = vpop.f32.mrf.mxu0
        %v761 = vadd.f32 0.0, %v760
        %762 = vmatmul.bf16.gmra.mxu0 %v629
        %v763 = vpop.f32.mrf.mxu0
        %v764 = vadd.f32 0.0, %v763
        %v765 = vpop.f32.mrf.mxu0
        %v766 = vadd.f32 0.0, %v765
        %767 = vmatmul.bf16.gmra.mxu0 %v630
        %v768 = vpop.f32.mrf.mxu0
        %v769 = vadd.f32 0.0, %v768
        %v770 = vpop.f32.mrf.mxu0
        %v771 = vadd.f32 0.0, %v770
        %772 = vmatmul.bf16.gmra.mxu0 %v631
        %v773 = vpop.f32.mrf.mxu0
        %v774 = vadd.f32 0.0, %v773
        %v775 = vpop.f32.mrf.mxu0
        %v776 = vadd.f32 0.0, %v775
        %777 = vmatmul.bf16.gmra.mxu0 %v632
        %v778 = vpop.f32.mrf.mxu0
        %v779 = vadd.f32 0.0, %v778
        %v780 = vpop.f32.mrf.mxu0
        %v781 = vadd.f32 0.0, %v780
        %782 = vmatmul.bf16.gmra.mxu0 %v633
        %v783 = vpop.f32.mrf.mxu0
        %v784 = vadd.f32 0.0, %v783
        %v785 = vpop.f32.mrf.mxu0
        %v786 = vadd.f32 0.0, %v785
        %787 = vmatmul.bf16.gmra.mxu0 %v634
        %v788 = vpop.f32.mrf.mxu0
        %v789 = vadd.f32 0.0, %v788
        %v790 = vpop.f32.mrf.mxu0
        %v791 = vadd.f32 0.0, %v790
        %792 = vmatmul.bf16.gmra.mxu0 %v635
        %v793 = vpop.f32.mrf.mxu0
        %v794 = vadd.f32 0.0, %v793
        %v795 = vpop.f32.mrf.mxu0
        %v796 = vadd.f32 0.0, %v795
        %797 = vmatmul.bf16.gmra.mxu0 %v636
        %v798 = vpop.f32.mrf.mxu0
        %v799 = vadd.f32 0.0, %v798
        %v800 = vpop.f32.mrf.mxu0
        %v801 = vadd.f32 0.0, %v800
        %802 = vmatmul.bf16.gmra.mxu0 %v637
        %v803 = vpop.f32.mrf.mxu0
        %v804 = vadd.f32 0.0, %v803
        %v805 = vpop.f32.mrf.mxu0
        %v806 = vadd.f32 0.0, %v805
        %807 = vmatmul.bf16.gmra.mxu0 %v638
        %v808 = vpop.f32.mrf.mxu0
        %v809 = vadd.f32 0.0, %v808
        %v810 = vpop.f32.mrf.mxu0
        %v811 = vadd.f32 0.0, %v810
        %812 = vmatmul.bf16.gmra.mxu0 %v639
        %v813 = vpop.f32.mrf.mxu0
        %v814 = vadd.f32 0.0, %v813
        %v815 = vpop.f32.mrf.mxu0
        %v816 = vadd.f32 0.0, %v815
        %817 = vmatmul.bf16.gmra.mxu0 %v640
        %v818 = vpop.f32.mrf.mxu0
        %v819 = vadd.f32 0.0, %v818
        %v820 = vpop.f32.mrf.mxu0
        %v821 = vadd.f32 0.0, %v820
        %822 = vmatmul.bf16.gmra.mxu0 %v641
        %v823 = vpop.f32.mrf.mxu0
        %v824 = vadd.f32 0.0, %v823
        %v825 = vpop.f32.mrf.mxu0
        %v826 = vadd.f32 0.0, %v825
        %827 = vmatmul.bf16.gmra.mxu0 %v642
        %v828 = vpop.f32.mrf.mxu0
        %v829 = vadd.f32 0.0, %v828
        %v830 = vpop.f32.mrf.mxu0
        %v831 = vadd.f32 0.0, %v830
        %832 = vmatmul.bf16.gmra.mxu0 %v643
        %v833 = vpop.f32.mrf.mxu0
        %v834 = vadd.f32 0.0, %v833
        %v835 = vpop.f32.mrf.mxu0
        %v836 = vadd.f32 0.0, %v835
        %837 = vdwg.mxu0
        %v838 = vpack.c.bf16 %v759, %v670
        %v839 = vpack.c.bf16 %v761, %v672
        %v840 = vpack.c.bf16 %v764, %v675
        %v841 = vpack.c.bf16 %v766, %v677
        %v842 = vpack.c.bf16 %v769, %v680
        %v843 = vpack.c.bf16 %v771, %v682
        %v844 = vpack.c.bf16 %v774, %v685
        %v845 = vpack.c.bf16 %v776, %v687
        %v846 = vpack.c.bf16 %v779, %v690
        %v847 = vpack.c.bf16 %v781, %v692
        %v848 = vpack.c.bf16 %v784, %v695
        %v849 = vpack.c.bf16 %v786, %v697
        %v850 = vpack.c.bf16 %v789, %v700
        %v851 = vpack.c.bf16 %v791, %v702
        %v852 = vpack.c.bf16 %v794, %v705
        %v853 = vpack.c.bf16 %v796, %v707
        %v854 = vpack.c.bf16 %v799, %v710
        %v855 = vpack.c.bf16 %v801, %v712
        %v856 = vpack.c.bf16 %v804, %v715
        %v857 = vpack.c.bf16 %v806, %v717
        %v858 = vpack.c.bf16 %v809, %v720
        %v859 = vpack.c.bf16 %v811, %v722
        %v860 = vpack.c.bf16 %v814, %v725
        %v861 = vpack.c.bf16 %v816, %v727
        %v862 = vpack.c.bf16 %v819, %v730
        %v863 = vpack.c.bf16 %v821, %v732
        %v864 = vpack.c.bf16 %v824, %v735
        %v865 = vpack.c.bf16 %v826, %v737
        %v866 = vpack.c.bf16 %v829, %v740
        %v867 = vpack.c.bf16 %v831, %v742
        %v868 = vpack.c.bf16 %v834, %v745
        %v869 = vpack.c.bf16 %v836, %v747
        %v870 = vld [vmem:[%s2] sm:$0xff]
        %v871 = vld [vmem:[%s2 + $0x8] sm:$0xff]
        %v872 = vld [vmem:[%s2 + $0x10] sm:$0xff]
        %v873 = vld [vmem:[%s2 + $0x18] sm:$0xff]
        %v874 = vld [vmem:[%s2 + $0x20] sm:$0xff]
        %v875 = vld [vmem:[%s2 + $0x28] sm:$0xff]
        %v876 = vld [vmem:[%s2 + $0x30] sm:$0xff]
        %v877 = vld [vmem:[%s2 + $0x38] sm:$0xff]
        %v878 = vld [vmem:[%s2 + $0x40] sm:$0xff]
        %v879 = vld [vmem:[%s2 + $0x48] sm:$0xff]
        %v880 = vld [vmem:[%s2 + $0x50] sm:$0xff]
        %v881 = vld [vmem:[%s2 + $0x58] sm:$0xff]
        %v882 = vld [vmem:[%s2 + $0x60] sm:$0xff]
        %v883 = vld [vmem:[%s2 + $0x68] sm:$0xff]
        %v884 = vld [vmem:[%s2 + $0x70] sm:$0xff]
        %v885 = vld [vmem:[%s2 + $0x78] sm:$0xff]
        %v886 = vld [vmem:[%s2 + $0x80] sm:$0xff]
        %v887 = vld [vmem:[%s2 + $0x88] sm:$0xff]
        %v888 = vld [vmem:[%s2 + $0x90] sm:$0xff]
        %v889 = vld [vmem:[%s2 + $0x98] sm:$0xff]
        %v890 = vld [vmem:[%s2 + $0xa0] sm:$0xff]
        %v891 = vld [vmem:[%s2 + $0xa8] sm:$0xff]
        %v892 = vld [vmem:[%s2 + $0xb0] sm:$0xff]
        %v893 = vld [vmem:[%s2 + $0xb8] sm:$0xff]
        %v894 = vld [vmem:[%s2 + $0xc0] sm:$0xff]
        %v895 = vld [vmem:[%s2 + $0xc8] sm:$0xff]
        %v896 = vld [vmem:[%s2 + $0xd0] sm:$0xff]
        %v897 = vld [vmem:[%s2 + $0xd8] sm:$0xff]
        %v898 = vld [vmem:[%s2 + $0xe0] sm:$0xff]
        %v899 = vld [vmem:[%s2 + $0xe8] sm:$0xff]
        %v900 = vld [vmem:[%s2 + $0xf0] sm:$0xff]
        %v901 = vld [vmem:[%s2 + $0xf8] sm:$0xff]
        %v902 = vpack.c.bf16 %v870, %v870
        %v903 = vpack.c.bf16 %v871, %v871
        %v904 = vpack.c.bf16 %v872, %v872
        %v905 = vpack.c.bf16 %v873, %v873
        %v906 = vpack.c.bf16 %v874, %v874
        %v907 = vpack.c.bf16 %v875, %v875
        %v908 = vpack.c.bf16 %v876, %v876
        %v909 = vpack.c.bf16 %v877, %v877
        %v910 = vpack.c.bf16 %v878, %v878
        %v911 = vpack.c.bf16 %v879, %v879
        %v912 = vpack.c.bf16 %v880, %v880
        %v913 = vpack.c.bf16 %v881, %v881
        %v914 = vpack.c.bf16 %v882, %v882
        %v915 = vpack.c.bf16 %v883, %v883
        %v916 = vpack.c.bf16 %v884, %v884
        %v917 = vpack.c.bf16 %v885, %v885
        %v918 = vpack.c.bf16 %v886, %v886
        %v919 = vpack.c.bf16 %v887, %v887
        %v920 = vpack.c.bf16 %v888, %v888
        %v921 = vpack.c.bf16 %v889, %v889
        %v922 = vpack.c.bf16 %v890, %v890
        %v923 = vpack.c.bf16 %v891, %v891
        %v924 = vpack.c.bf16 %v892, %v892
        %v925 = vpack.c.bf16 %v893, %v893
        %v926 = vpack.c.bf16 %v894, %v894
        %v927 = vpack.c.bf16 %v895, %v895
        %v928 = vpack.c.bf16 %v896, %v896
        %v929 = vpack.c.bf16 %v897, %v897
        %v930 = vpack.c.bf16 %v898, %v898
        %v931 = vpack.c.bf16 %v899, %v899
        %v932 = vpack.c.bf16 %v900, %v900
        %v933 = vpack.c.bf16 %v901, %v901
        %935 = vset.pattern.permute.xlu0 0
        %936 = vperm.xlu0 %935, %v902
        %v937 = vpop.permute.xlu0 %936
        %v940 = vunpack.c.l.s4 839922192
        %v941 = vunpack.c.0.s8 %v940
        %v942 = vperm.slane %v937, %v941
        %944 = vset.pattern.permute.xlu0 0
        %945 = vperm.xlu0 %944, %v903
        %v946 = vpop.permute.xlu0 %945
        %v949 = vunpack.c.l.s4 839922192
        %v950 = vunpack.c.0.s8 %v949
        %v951 = vperm.slane %v946, %v950
        %953 = vset.pattern.permute.xlu0 0
        %954 = vperm.xlu0 %953, %v904
        %v955 = vpop.permute.xlu0 %954
        %v958 = vunpack.c.l.s4 839922192
        %v959 = vunpack.c.0.s8 %v958
        %v960 = vperm.slane %v955, %v959
        %962 = vset.pattern.permute.xlu0 0
        %963 = vperm.xlu0 %962, %v905
        %v964 = vpop.permute.xlu0 %963
        %v967 = vunpack.c.l.s4 839922192
        %v968 = vunpack.c.0.s8 %v967
        %v969 = vperm.slane %v964, %v968
        %971 = vset.pattern.permute.xlu0 0
        %972 = vperm.xlu0 %971, %v906
        %v973 = vpop.permute.xlu0 %972
        %v976 = vunpack.c.l.s4 839922192
        %v977 = vunpack.c.0.s8 %v976
        %v978 = vperm.slane %v973, %v977
        %980 = vset.pattern.permute.xlu0 0
        %981 = vperm.xlu0 %980, %v907
        %v982 = vpop.permute.xlu0 %981
        %v985 = vunpack.c.l.s4 839922192
        %v986 = vunpack.c.0.s8 %v985
        %v987 = vperm.slane %v982, %v986
        %989 = vset.pattern.permute.xlu0 0
        %990 = vperm.xlu0 %989, %v908
        %v991 = vpop.permute.xlu0 %990
        %v994 = vunpack.c.l.s4 839922192
        %v995 = vunpack.c.0.s8 %v994
        %v996 = vperm.slane %v991, %v995
        %998 = vset.pattern.permute.xlu0 0
        %999 = vperm.xlu0 %998, %v909
        %v1000 = vpop.permute.xlu0 %999
        %v1003 = vunpack.c.l.s4 839922192
        %v1004 = vunpack.c.0.s8 %v1003
        %v1005 = vperm.slane %v1000, %v1004
        %1007 = vset.pattern.permute.xlu0 0
        %1008 = vperm.xlu0 %1007, %v910
        %v1009 = vpop.permute.xlu0 %1008
        %v1012 = vunpack.c.l.s4 839922192
        %v1013 = vunpack.c.0.s8 %v1012
        %v1014 = vperm.slane %v1009, %v1013
        %1016 = vset.pattern.permute.xlu0 0
        %1017 = vperm.xlu0 %1016, %v911
        %v1018 = vpop.permute.xlu0 %1017
        %v1021 = vunpack.c.l.s4 839922192
        %v1022 = vunpack.c.0.s8 %v1021
        %v1023 = vperm.slane %v1018, %v1022
        %1025 = vset.pattern.permute.xlu0 0
        %1026 = vperm.xlu0 %1025, %v912
        %v1027 = vpop.permute.xlu0 %1026
        %v1030 = vunpack.c.l.s4 839922192
        %v1031 = vunpack.c.0.s8 %v1030
        %v1032 = vperm.slane %v1027, %v1031
        %1034 = vset.pattern.permute.xlu0 0
        %1035 = vperm.xlu0 %1034, %v913
        %v1036 = vpop.permute.xlu0 %1035
        %v1039 = vunpack.c.l.s4 839922192
        %v1040 = vunpack.c.0.s8 %v1039
        %v1041 = vperm.slane %v1036, %v1040
        %1043 = vset.pattern.permute.xlu0 0
        %1044 = vperm.xlu0 %1043, %v914
        %v1045 = vpop.permute.xlu0 %1044
        %v1048 = vunpack.c.l.s4 839922192
        %v1049 = vunpack.c.0.s8 %v1048
        %v1050 = vperm.slane %v1045, %v1049
        %1052 = vset.pattern.permute.xlu0 0
        %1053 = vperm.xlu0 %1052, %v915
        %v1054 = vpop.permute.xlu0 %1053
        %v1057 = vunpack.c.l.s4 839922192
        %v1058 = vunpack.c.0.s8 %v1057
        %v1059 = vperm.slane %v1054, %v1058
        %1061 = vset.pattern.permute.xlu0 0
        %1062 = vperm.xlu0 %1061, %v916
        %v1063 = vpop.permute.xlu0 %1062
        %v1066 = vunpack.c.l.s4 839922192
        %v1067 = vunpack.c.0.s8 %v1066
        %v1068 = vperm.slane %v1063, %v1067
        %1070 = vset.pattern.permute.xlu0 0
        %1071 = vperm.xlu0 %1070, %v917
        %v1072 = vpop.permute.xlu0 %1071
        %v1075 = vunpack.c.l.s4 839922192
        %v1076 = vunpack.c.0.s8 %v1075
        %v1077 = vperm.slane %v1072, %v1076
        %1079 = vset.pattern.permute.xlu0 0
        %1080 = vperm.xlu0 %1079, %v918
        %v1081 = vpop.permute.xlu0 %1080
        %v1084 = vunpack.c.l.s4 839922192
        %v1085 = vunpack.c.0.s8 %v1084
        %v1086 = vperm.slane %v1081, %v1085
        %1088 = vset.pattern.permute.xlu0 0
        %1089 = vperm.xlu0 %1088, %v919
        %v1090 = vpop.permute.xlu0 %1089
        %v1093 = vunpack.c.l.s4 839922192
        %v1094 = vunpack.c.0.s8 %v1093
        %v1095 = vperm.slane %v1090, %v1094
        %1097 = vset.pattern.permute.xlu0 0
        %1098 = vperm.xlu0 %1097, %v920
        %v1099 = vpop.permute.xlu0 %1098
        %v1102 = vunpack.c.l.s4 839922192
        %v1103 = vunpack.c.0.s8 %v1102
        %v1104 = vperm.slane %v1099, %v1103
        %1106 = vset.pattern.permute.xlu0 0
        %1107 = vperm.xlu0 %1106, %v921
        %v1108 = vpop.permute.xlu0 %1107
        %v1111 = vunpack.c.l.s4 839922192
        %v1112 = vunpack.c.0.s8 %v1111
        %v1113 = vperm.slane %v1108, %v1112
        %1115 = vset.pattern.permute.xlu0 0
        %1116 = vperm.xlu0 %1115, %v922
        %v1117 = vpop.permute.xlu0 %1116
        %v1120 = vunpack.c.l.s4 839922192
        %v1121 = vunpack.c.0.s8 %v1120
        %v1122 = vperm.slane %v1117, %v1121
        %1124 = vset.pattern.permute.xlu0 0
        %1125 = vperm.xlu0 %1124, %v923
        %v1126 = vpop.permute.xlu0 %1125
        %v1129 = vunpack.c.l.s4 839922192
        %v1130 = vunpack.c.0.s8 %v1129
        %v1131 = vperm.slane %v1126, %v1130
        %1133 = vset.pattern.permute.xlu0 0
        %1134 = vperm.xlu0 %1133, %v924
        %v1135 = vpop.permute.xlu0 %1134
        %v1138 = vunpack.c.l.s4 839922192
        %v1139 = vunpack.c.0.s8 %v1138
        %v1140 = vperm.slane %v1135, %v1139
        %1142 = vset.pattern.permute.xlu0 0
        %1143 = vperm.xlu0 %1142, %v925
        %v1144 = vpop.permute.xlu0 %1143
        %v1147 = vunpack.c.l.s4 839922192
        %v1148 = vunpack.c.0.s8 %v1147
        %v1149 = vperm.slane %v1144, %v1148
        %1151 = vset.pattern.permute.xlu0 0
        %1152 = vperm.xlu0 %1151, %v926
        %v1153 = vpop.permute.xlu0 %1152
        %v1156 = vunpack.c.l.s4 839922192
        %v1157 = vunpack.c.0.s8 %v1156
        %v1158 = vperm.slane %v1153, %v1157
        %1160 = vset.pattern.permute.xlu0 0
        %1161 = vperm.xlu0 %1160, %v927
        %v1162 = vpop.permute.xlu0 %1161
        %v1165 = vunpack.c.l.s4 839922192
        %v1166 = vunpack.c.0.s8 %v1165
        %v1167 = vperm.slane %v1162, %v1166
        %1169 = vset.pattern.permute.xlu0 0
        %1170 = vperm.xlu0 %1169, %v928
        %v1171 = vpop.permute.xlu0 %1170
        %v1174 = vunpack.c.l.s4 839922192
        %v1175 = vunpack.c.0.s8 %v1174
        %v1176 = vperm.slane %v1171, %v1175
        %1178 = vset.pattern.permute.xlu0 0
        %1179 = vperm.xlu0 %1178, %v929
        %v1180 = vpop.permute.xlu0 %1179
        %v1183 = vunpack.c.l.s4 839922192
        %v1184 = vunpack.c.0.s8 %v1183
        %v1185 = vperm.slane %v1180, %v1184
        %1187 = vset.pattern.permute.xlu0 0
        %1188 = vperm.xlu0 %1187, %v930
        %v1189 = vpop.permute.xlu0 %1188
        %v1192 = vunpack.c.l.s4 839922192
        %v1193 = vunpack.c.0.s8 %v1192
        %v1194 = vperm.slane %v1189, %v1193
        %1196 = vset.pattern.permute.xlu0 0
        %1197 = vperm.xlu0 %1196, %v931
        %v1198 = vpop.permute.xlu0 %1197
        %v1201 = vunpack.c.l.s4 839922192
        %v1202 = vunpack.c.0.s8 %v1201
        %v1203 = vperm.slane %v1198, %v1202
        %1205 = vset.pattern.permute.xlu0 0
        %1206 = vperm.xlu0 %1205, %v932
        %v1207 = vpop.permute.xlu0 %1206
        %v1210 = vunpack.c.l.s4 839922192
        %v1211 = vunpack.c.0.s8 %v1210
        %v1212 = vperm.slane %v1207, %v1211
        %1214 = vset.pattern.permute.xlu0 0
        %1215 = vperm.xlu0 %1214, %v933
        %v1216 = vpop.permute.xlu0 %1215
        %v1219 = vunpack.c.l.s4 839922192
        %v1220 = vunpack.c.0.s8 %v1219
        %v1221 = vperm.slane %v1216, %v1220
        %v1222 = vunpack.c.l.bf16 %v838
        %v1223 = vunpack.c.h.bf16 %v838
        %v1224 = vunpack.c.l.bf16 %v839
        %v1225 = vunpack.c.h.bf16 %v839
        %v1226 = vunpack.c.l.bf16 %v840
        %v1227 = vunpack.c.h.bf16 %v840
        %v1228 = vunpack.c.l.bf16 %v841
        %v1229 = vunpack.c.h.bf16 %v841
        %v1230 = vunpack.c.l.bf16 %v842
        %v1231 = vunpack.c.h.bf16 %v842
        %v1232 = vunpack.c.l.bf16 %v843
        %v1233 = vunpack.c.h.bf16 %v843
        %v1234 = vunpack.c.l.bf16 %v844
        %v1235 = vunpack.c.h.bf16 %v844
        %v1236 = vunpack.c.l.bf16 %v845
        %v1237 = vunpack.c.h.bf16 %v845
        %v1238 = vunpack.c.l.bf16 %v846
        %v1239 = vunpack.c.h.bf16 %v846
        %v1240 = vunpack.c.l.bf16 %v847
        %v1241 = vunpack.c.h.bf16 %v847
        %v1242 = vunpack.c.l.bf16 %v848
        %v1243 = vunpack.c.h.bf16 %v848
        %v1244 = vunpack.c.l.bf16 %v849
        %v1245 = vunpack.c.h.bf16 %v849
        %v1246 = vunpack.c.l.bf16 %v850
        %v1247 = vunpack.c.h.bf16 %v850
        %v1248 = vunpack.c.l.bf16 %v851
        %v1249 = vunpack.c.h.bf16 %v851
        %v1250 = vunpack.c.l.bf16 %v852
        %v1251 = vunpack.c.h.bf16 %v852
        %v1252 = vunpack.c.l.bf16 %v853
        %v1253 = vunpack.c.h.bf16 %v853
        %v1254 = vunpack.c.l.bf16 %v854
        %v1255 = vunpack.c.h.bf16 %v854
        %v1256 = vunpack.c.l.bf16 %v855
        %v1257 = vunpack.c.h.bf16 %v855
        %v1258 = vunpack.c.l.bf16 %v856
        %v1259 = vunpack.c.h.bf16 %v856
        %v1260 = vunpack.c.l.bf16 %v857
        %v1261 = vunpack.c.h.bf16 %v857
        %v1262 = vunpack.c.l.bf16 %v858
        %v1263 = vunpack.c.h.bf16 %v858
        %v1264 = vunpack.c.l.bf16 %v859
        %v1265 = vunpack.c.h.bf16 %v859
        %v1266 = vunpack.c.l.bf16 %v860
        %v1267 = vunpack.c.h.bf16 %v860
        %v1268 = vunpack.c.l.bf16 %v861
        %v1269 = vunpack.c.h.bf16 %v861
        %v1270 = vunpack.c.l.bf16 %v862
        %v1271 = vunpack.c.h.bf16 %v862
        %v1272 = vunpack.c.l.bf16 %v863
        %v1273 = vunpack.c.h.bf16 %v863
        %v1274 = vunpack.c.l.bf16 %v864
        %v1275 = vunpack.c.h.bf16 %v864
        %v1276 = vunpack.c.l.bf16 %v865
        %v1277 = vunpack.c.h.bf16 %v865
        %v1278 = vunpack.c.l.bf16 %v866
        %v1279 = vunpack.c.h.bf16 %v866
        %v1280 = vunpack.c.l.bf16 %v867
        %v1281 = vunpack.c.h.bf16 %v867
        %v1282 = vunpack.c.l.bf16 %v868
        %v1283 = vunpack.c.h.bf16 %v868
        %v1284 = vunpack.c.l.bf16 %v869
        %v1285 = vunpack.c.h.bf16 %v869
        %v1286 = vunpack.c.l.bf16 %v942
        %v1287 = vunpack.c.l.bf16 %v951
        %v1288 = vunpack.c.l.bf16 %v960
        %v1289 = vunpack.c.l.bf16 %v969
        %v1290 = vunpack.c.l.bf16 %v978
        %v1291 = vunpack.c.l.bf16 %v987
        %v1292 = vunpack.c.l.bf16 %v996
        %v1293 = vunpack.c.l.bf16 %v1005
        %v1294 = vunpack.c.l.bf16 %v1014
        %v1295 = vunpack.c.l.bf16 %v1023
        %v1296 = vunpack.c.l.bf16 %v1032
        %v1297 = vunpack.c.l.bf16 %v1041
        %v1298 = vunpack.c.l.bf16 %v1050
        %v1299 = vunpack.c.l.bf16 %v1059
        %v1300 = vunpack.c.l.bf16 %v1068
        %v1301 = vunpack.c.l.bf16 %v1077
        %v1302 = vunpack.c.l.bf16 %v1086
        %v1303 = vunpack.c.l.bf16 %v1095
        %v1304 = vunpack.c.l.bf16 %v1104
        %v1305 = vunpack.c.l.bf16 %v1113
        %v1306 = vunpack.c.l.bf16 %v1122
        %v1307 = vunpack.c.l.bf16 %v1131
        %v1308 = vunpack.c.l.bf16 %v1140
        %v1309 = vunpack.c.l.bf16 %v1149
        %v1310 = vunpack.c.l.bf16 %v1158
        %v1311 = vunpack.c.l.bf16 %v1167
        %v1312 = vunpack.c.l.bf16 %v1176
        %v1313 = vunpack.c.l.bf16 %v1185
        %v1314 = vunpack.c.l.bf16 %v1194
        %v1315 = vunpack.c.l.bf16 %v1203
        %v1316 = vunpack.c.l.bf16 %v1212
        %v1317 = vunpack.c.l.bf16 %v1221
        %v1318 = vadd.f32 %v1222, %v1286
        %v1319 = vadd.f32 %v1223, %v1286
        %v1320 = vadd.f32 %v1224, %v1287
        %v1321 = vadd.f32 %v1225, %v1287
        %v1322 = vadd.f32 %v1226, %v1288
        %v1323 = vadd.f32 %v1227, %v1288
        %v1324 = vadd.f32 %v1228, %v1289
        %v1325 = vadd.f32 %v1229, %v1289
        %v1326 = vadd.f32 %v1230, %v1290
        %v1327 = vadd.f32 %v1231, %v1290
        %v1328 = vadd.f32 %v1232, %v1291
        %v1329 = vadd.f32 %v1233, %v1291
        %v1330 = vadd.f32 %v1234, %v1292
        %v1331 = vadd.f32 %v1235, %v1292
        %v1332 = vadd.f32 %v1236, %v1293
        %v1333 = vadd.f32 %v1237, %v1293
        %v1334 = vadd.f32 %v1238, %v1294
        %v1335 = vadd.f32 %v1239, %v1294
        %v1336 = vadd.f32 %v1240, %v1295
        %v1337 = vadd.f32 %v1241, %v1295
        %v1338 = vadd.f32 %v1242, %v1296
        %v1339 = vadd.f32 %v1243, %v1296
        %v1340 = vadd.f32 %v1244, %v1297
        %v1341 = vadd.f32 %v1245, %v1297
        %v1342 = vadd.f32 %v1246, %v1298
        %v1343 = vadd.f32 %v1247, %v1298
        %v1344 = vadd.f32 %v1248, %v1299
        %v1345 = vadd.f32 %v1249, %v1299
        %v1346 = vadd.f32 %v1250, %v1300
        %v1347 = vadd.f32 %v1251, %v1300
        %v1348 = vadd.f32 %v1252, %v1301
        %v1349 = vadd.f32 %v1253, %v1301
        %v1350 = vadd.f32 %v1254, %v1302
        %v1351 = vadd.f32 %v1255, %v1302
        %v1352 = vadd.f32 %v1256, %v1303
        %v1353 = vadd.f32 %v1257, %v1303
        %v1354 = vadd.f32 %v1258, %v1304
        %v1355 = vadd.f32 %v1259, %v1304
        %v1356 = vadd.f32 %v1260, %v1305
        %v1357 = vadd.f32 %v1261, %v1305
        %v1358 = vadd.f32 %v1262, %v1306
        %v1359 = vadd.f32 %v1263, %v1306
        %v1360 = vadd.f32 %v1264, %v1307
        %v1361 = vadd.f32 %v1265, %v1307
        %v1362 = vadd.f32 %v1266, %v1308
        %v1363 = vadd.f32 %v1267, %v1308
        %v1364 = vadd.f32 %v1268, %v1309
        %v1365 = vadd.f32 %v1269, %v1309
        %v1366 = vadd.f32 %v1270, %v1310
        %v1367 = vadd.f32 %v1271, %v1310
        %v1368 = vadd.f32 %v1272, %v1311
        %v1369 = vadd.f32 %v1273, %v1311
        %v1370 = vadd.f32 %v1274, %v1312
        %v1371 = vadd.f32 %v1275, %v1312
        %v1372 = vadd.f32 %v1276, %v1313
        %v1373 = vadd.f32 %v1277, %v1313
        %v1374 = vadd.f32 %v1278, %v1314
        %v1375 = vadd.f32 %v1279, %v1314
        %v1376 = vadd.f32 %v1280, %v1315
        %v1377 = vadd.f32 %v1281, %v1315
        %v1378 = vadd.f32 %v1282, %v1316
        %v1379 = vadd.f32 %v1283, %v1316
        %v1380 = vadd.f32 %v1284, %v1317
        %v1381 = vadd.f32 %v1285, %v1317
        %v1382 = vpack.c.bf16 %v1319, %v1318
        %v1383 = vpack.c.bf16 %v1321, %v1320
        %v1384 = vpack.c.bf16 %v1323, %v1322
        %v1385 = vpack.c.bf16 %v1325, %v1324
        %v1386 = vpack.c.bf16 %v1327, %v1326
        %v1387 = vpack.c.bf16 %v1329, %v1328
        %v1388 = vpack.c.bf16 %v1331, %v1330
        %v1389 = vpack.c.bf16 %v1333, %v1332
        %v1390 = vpack.c.bf16 %v1335, %v1334
        %v1391 = vpack.c.bf16 %v1337, %v1336
        %v1392 = vpack.c.bf16 %v1339, %v1338
        %v1393 = vpack.c.bf16 %v1341, %v1340
        %v1394 = vpack.c.bf16 %v1343, %v1342
        %v1395 = vpack.c.bf16 %v1345, %v1344
        %v1396 = vpack.c.bf16 %v1347, %v1346
        %v1397 = vpack.c.bf16 %v1349, %v1348
        %v1398 = vpack.c.bf16 %v1351, %v1350
        %v1399 = vpack.c.bf16 %v1353, %v1352
        %v1400 = vpack.c.bf16 %v1355, %v1354
        %v1401 = vpack.c.bf16 %v1357, %v1356
        %v1402 = vpack.c.bf16 %v1359, %v1358
        %v1403 = vpack.c.bf16 %v1361, %v1360
        %v1404 = vpack.c.bf16 %v1363, %v1362
        %v1405 = vpack.c.bf16 %v1365, %v1364
        %v1406 = vpack.c.bf16 %v1367, %v1366
        %v1407 = vpack.c.bf16 %v1369, %v1368
        %v1408 = vpack.c.bf16 %v1371, %v1370
        %v1409 = vpack.c.bf16 %v1373, %v1372
        %v1410 = vpack.c.bf16 %v1375, %v1374
        %v1411 = vpack.c.bf16 %v1377, %v1376
        %v1412 = vpack.c.bf16 %v1379, %v1378
        %v1413 = vpack.c.bf16 %v1381, %v1380
        %v1414 = vunpack.c.l.bf16 %v1382
        %v1415 = vunpack.c.h.bf16 %v1382
        %v1416 = vunpack.c.l.bf16 %v1383
        %v1417 = vunpack.c.h.bf16 %v1383
        %v1418 = vunpack.c.l.bf16 %v1384
        %v1419 = vunpack.c.h.bf16 %v1384
        %v1420 = vunpack.c.l.bf16 %v1385
        %v1421 = vunpack.c.h.bf16 %v1385
        %v1422 = vunpack.c.l.bf16 %v1386
        %v1423 = vunpack.c.h.bf16 %v1386
        %v1424 = vunpack.c.l.bf16 %v1387
        %v1425 = vunpack.c.h.bf16 %v1387
        %v1426 = vunpack.c.l.bf16 %v1388
        %v1427 = vunpack.c.h.bf16 %v1388
        %v1428 = vunpack.c.l.bf16 %v1389
        %v1429 = vunpack.c.h.bf16 %v1389
        %v1430 = vunpack.c.l.bf16 %v1390
        %v1431 = vunpack.c.h.bf16 %v1390
        %v1432 = vunpack.c.l.bf16 %v1391
        %v1433 = vunpack.c.h.bf16 %v1391
        %v1434 = vunpack.c.l.bf16 %v1392
        %v1435 = vunpack.c.h.bf16 %v1392
        %v1436 = vunpack.c.l.bf16 %v1393
        %v1437 = vunpack.c.h.bf16 %v1393
        %v1438 = vunpack.c.l.bf16 %v1394
        %v1439 = vunpack.c.h.bf16 %v1394
        %v1440 = vunpack.c.l.bf16 %v1395
        %v1441 = vunpack.c.h.bf16 %v1395
        %v1442 = vunpack.c.l.bf16 %v1396
        %v1443 = vunpack.c.h.bf16 %v1396
        %v1444 = vunpack.c.l.bf16 %v1397
        %v1445 = vunpack.c.h.bf16 %v1397
        %v1446 = vunpack.c.l.bf16 %v1398
        %v1447 = vunpack.c.h.bf16 %v1398
        %v1448 = vunpack.c.l.bf16 %v1399
        %v1449 = vunpack.c.h.bf16 %v1399
        %v1450 = vunpack.c.l.bf16 %v1400
        %v1451 = vunpack.c.h.bf16 %v1400
        %v1452 = vunpack.c.l.bf16 %v1401
        %v1453 = vunpack.c.h.bf16 %v1401
        %v1454 = vunpack.c.l.bf16 %v1402
        %v1455 = vunpack.c.h.bf16 %v1402
        %v1456 = vunpack.c.l.bf16 %v1403
        %v1457 = vunpack.c.h.bf16 %v1403
        %v1458 = vunpack.c.l.bf16 %v1404
        %v1459 = vunpack.c.h.bf16 %v1404
        %v1460 = vunpack.c.l.bf16 %v1405
        %v1461 = vunpack.c.h.bf16 %v1405
        %v1462 = vunpack.c.l.bf16 %v1406
        %v1463 = vunpack.c.h.bf16 %v1406
        %v1464 = vunpack.c.l.bf16 %v1407
        %v1465 = vunpack.c.h.bf16 %v1407
        %v1466 = vunpack.c.l.bf16 %v1408
        %v1467 = vunpack.c.h.bf16 %v1408
        %v1468 = vunpack.c.l.bf16 %v1409
        %v1469 = vunpack.c.h.bf16 %v1409
        %v1470 = vunpack.c.l.bf16 %v1410
        %v1471 = vunpack.c.h.bf16 %v1410
        %v1472 = vunpack.c.l.bf16 %v1411
        %v1473 = vunpack.c.h.bf16 %v1411
        %v1474 = vunpack.c.l.bf16 %v1412
        %v1475 = vunpack.c.h.bf16 %v1412
        %v1476 = vunpack.c.l.bf16 %v1413
        %v1477 = vunpack.c.h.bf16 %v1413
        %v1478 = vmul.f32 %v1414, %v1414
        %v1479 = vmul.f32 %v1415, %v1415
        %v1480 = vmul.f32 %v1416, %v1416
        %v1481 = vmul.f32 %v1417, %v1417
        %v1482 = vmul.f32 %v1418, %v1418
        %v1483 = vmul.f32 %v1419, %v1419
        %v1484 = vmul.f32 %v1420, %v1420
        %v1485 = vmul.f32 %v1421, %v1421
        %v1486 = vmul.f32 %v1422, %v1422
        %v1487 = vmul.f32 %v1423, %v1423
        %v1488 = vmul.f32 %v1424, %v1424
        %v1489 = vmul.f32 %v1425, %v1425
        %v1490 = vmul.f32 %v1426, %v1426
        %v1491 = vmul.f32 %v1427, %v1427
        %v1492 = vmul.f32 %v1428, %v1428
        %v1493 = vmul.f32 %v1429, %v1429
        %v1494 = vmul.f32 %v1430, %v1430
        %v1495 = vmul.f32 %v1431, %v1431
        %v1496 = vmul.f32 %v1432, %v1432
        %v1497 = vmul.f32 %v1433, %v1433
        %v1498 = vmul.f32 %v1434, %v1434
        %v1499 = vmul.f32 %v1435, %v1435
        %v1500 = vmul.f32 %v1436, %v1436
        %v1501 = vmul.f32 %v1437, %v1437
        %v1502 = vmul.f32 %v1438, %v1438
        %v1503 = vmul.f32 %v1439, %v1439
        %v1504 = vmul.f32 %v1440, %v1440
        %v1505 = vmul.f32 %v1441, %v1441
        %v1506 = vmul.f32 %v1442, %v1442
        %v1507 = vmul.f32 %v1443, %v1443
        %v1508 = vmul.f32 %v1444, %v1444
        %v1509 = vmul.f32 %v1445, %v1445
        %v1510 = vmul.f32 %v1446, %v1446
        %v1511 = vmul.f32 %v1447, %v1447
        %v1512 = vmul.f32 %v1448, %v1448
        %v1513 = vmul.f32 %v1449, %v1449
        %v1514 = vmul.f32 %v1450, %v1450
        %v1515 = vmul.f32 %v1451, %v1451
        %v1516 = vmul.f32 %v1452, %v1452
        %v1517 = vmul.f32 %v1453, %v1453
        %v1518 = vmul.f32 %v1454, %v1454
        %v1519 = vmul.f32 %v1455, %v1455
        %v1520 = vmul.f32 %v1456, %v1456
        %v1521 = vmul.f32 %v1457, %v1457
        %v1522 = vmul.f32 %v1458, %v1458
        %v1523 = vmul.f32 %v1459, %v1459
        %v1524 = vmul.f32 %v1460, %v1460
        %v1525 = vmul.f32 %v1461, %v1461
        %v1526 = vmul.f32 %v1462, %v1462
        %v1527 = vmul.f32 %v1463, %v1463
        %v1528 = vmul.f32 %v1464, %v1464
        %v1529 = vmul.f32 %v1465, %v1465
        %v1530 = vmul.f32 %v1466, %v1466
        %v1531 = vmul.f32 %v1467, %v1467
        %v1532 = vmul.f32 %v1468, %v1468
        %v1533 = vmul.f32 %v1469, %v1469
        %v1534 = vmul.f32 %v1470, %v1470
        %v1535 = vmul.f32 %v1471, %v1471
        %v1536 = vmul.f32 %v1472, %v1472
        %v1537 = vmul.f32 %v1473, %v1473
        %v1538 = vmul.f32 %v1474, %v1474
        %v1539 = vmul.f32 %v1475, %v1475
        %v1540 = vmul.f32 %v1476, %v1476
        %v1541 = vmul.f32 %v1477, %v1477
        %v1542 = vpack.c.bf16 %v1479, %v1478
        %v1543 = vpack.c.bf16 %v1481, %v1480
        %v1544 = vpack.c.bf16 %v1483, %v1482
        %v1545 = vpack.c.bf16 %v1485, %v1484
        %v1546 = vpack.c.bf16 %v1487, %v1486
        %v1547 = vpack.c.bf16 %v1489, %v1488
        %v1548 = vpack.c.bf16 %v1491, %v1490
        %v1549 = vpack.c.bf16 %v1493, %v1492
        %v1550 = vpack.c.bf16 %v1495, %v1494
        %v1551 = vpack.c.bf16 %v1497, %v1496
        %v1552 = vpack.c.bf16 %v1499, %v1498
        %v1553 = vpack.c.bf16 %v1501, %v1500
        %v1554 = vpack.c.bf16 %v1503, %v1502
        %v1555 = vpack.c.bf16 %v1505, %v1504
        %v1556 = vpack.c.bf16 %v1507, %v1506
        %v1557 = vpack.c.bf16 %v1509, %v1508
        %v1558 = vpack.c.bf16 %v1511, %v1510
        %v1559 = vpack.c.bf16 %v1513, %v1512
        %v1560 = vpack.c.bf16 %v1515, %v1514
        %v1561 = vpack.c.bf16 %v1517, %v1516
        %v1562 = vpack.c.bf16 %v1519, %v1518
        %v1563 = vpack.c.bf16 %v1521, %v1520
        %v1564 = vpack.c.bf16 %v1523, %v1522
        %v1565 = vpack.c.bf16 %v1525, %v1524
        %v1566 = vpack.c.bf16 %v1527, %v1526
        %v1567 = vpack.c.bf16 %v1529, %v1528
        %v1568 = vpack.c.bf16 %v1531, %v1530
        %v1569 = vpack.c.bf16 %v1533, %v1532
        %v1570 = vpack.c.bf16 %v1535, %v1534
        %v1571 = vpack.c.bf16 %v1537, %v1536
        %v1572 = vpack.c.bf16 %v1539, %v1538
        %v1573 = vpack.c.bf16 %v1541, %v1540
        %v1574 = vunpack.c.l.bf16 %v1542
        %v1575 = vunpack.c.h.bf16 %v1542
        %v1576 = vunpack.c.l.bf16 %v1543
        %v1577 = vunpack.c.h.bf16 %v1543
        %v1578 = vunpack.c.l.bf16 %v1544
        %v1579 = vunpack.c.h.bf16 %v1544
        %v1580 = vunpack.c.l.bf16 %v1545
        %v1581 = vunpack.c.h.bf16 %v1545
        %v1582 = vunpack.c.l.bf16 %v1546
        %v1583 = vunpack.c.h.bf16 %v1546
        %v1584 = vunpack.c.l.bf16 %v1547
        %v1585 = vunpack.c.h.bf16 %v1547
        %v1586 = vunpack.c.l.bf16 %v1548
        %v1587 = vunpack.c.h.bf16 %v1548
        %v1588 = vunpack.c.l.bf16 %v1549
        %v1589 = vunpack.c.h.bf16 %v1549
        %v1590 = vunpack.c.l.bf16 %v1550
        %v1591 = vunpack.c.h.bf16 %v1550
        %v1592 = vunpack.c.l.bf16 %v1551
        %v1593 = vunpack.c.h.bf16 %v1551
        %v1594 = vunpack.c.l.bf16 %v1552
        %v1595 = vunpack.c.h.bf16 %v1552
        %v1596 = vunpack.c.l.bf16 %v1553
        %v1597 = vunpack.c.h.bf16 %v1553
        %v1598 = vunpack.c.l.bf16 %v1554
        %v1599 = vunpack.c.h.bf16 %v1554
        %v1600 = vunpack.c.l.bf16 %v1555
        %v1601 = vunpack.c.h.bf16 %v1555
        %v1602 = vunpack.c.l.bf16 %v1556
        %v1603 = vunpack.c.h.bf16 %v1556
        %v1604 = vunpack.c.l.bf16 %v1557
        %v1605 = vunpack.c.h.bf16 %v1557
        %v1606 = vunpack.c.l.bf16 %v1558
        %v1607 = vunpack.c.h.bf16 %v1558
        %v1608 = vunpack.c.l.bf16 %v1559
        %v1609 = vunpack.c.h.bf16 %v1559
        %v1610 = vunpack.c.l.bf16 %v1560
        %v1611 = vunpack.c.h.bf16 %v1560
        %v1612 = vunpack.c.l.bf16 %v1561
        %v1613 = vunpack.c.h.bf16 %v1561
        %v1614 = vunpack.c.l.bf16 %v1562
        %v1615 = vunpack.c.h.bf16 %v1562
        %v1616 = vunpack.c.l.bf16 %v1563
        %v1617 = vunpack.c.h.bf16 %v1563
        %v1618 = vunpack.c.l.bf16 %v1564
        %v1619 = vunpack.c.h.bf16 %v1564
        %v1620 = vunpack.c.l.bf16 %v1565
        %v1621 = vunpack.c.h.bf16 %v1565
        %v1622 = vunpack.c.l.bf16 %v1566
        %v1623 = vunpack.c.h.bf16 %v1566
        %v1624 = vunpack.c.l.bf16 %v1567
        %v1625 = vunpack.c.h.bf16 %v1567
        %v1626 = vunpack.c.l.bf16 %v1568
        %v1627 = vunpack.c.h.bf16 %v1568
        %v1628 = vunpack.c.l.bf16 %v1569
        %v1629 = vunpack.c.h.bf16 %v1569
        %v1630 = vunpack.c.l.bf16 %v1570
        %v1631 = vunpack.c.h.bf16 %v1570
        %v1632 = vunpack.c.l.bf16 %v1571
        %v1633 = vunpack.c.h.bf16 %v1571
        %v1634 = vunpack.c.l.bf16 %v1572
        %v1635 = vunpack.c.h.bf16 %v1572
        %v1636 = vunpack.c.l.bf16 %v1573
        %v1637 = vunpack.c.h.bf16 %v1573
        %v1638 = vmul.f32 %v1414, %v1574
        %v1639 = vmul.f32 %v1415, %v1575
        %v1640 = vmul.f32 %v1416, %v1576
        %v1641 = vmul.f32 %v1417, %v1577
        %v1642 = vmul.f32 %v1418, %v1578
        %v1643 = vmul.f32 %v1419, %v1579
        %v1644 = vmul.f32 %v1420, %v1580
        %v1645 = vmul.f32 %v1421, %v1581
        %v1646 = vmul.f32 %v1422, %v1582
        %v1647 = vmul.f32 %v1423, %v1583
        %v1648 = vmul.f32 %v1424, %v1584
        %v1649 = vmul.f32 %v1425, %v1585
        %v1650 = vmul.f32 %v1426, %v1586
        %v1651 = vmul.f32 %v1427, %v1587
        %v1652 = vmul.f32 %v1428, %v1588
        %v1653 = vmul.f32 %v1429, %v1589
        %v1654 = vmul.f32 %v1430, %v1590
        %v1655 = vmul.f32 %v1431, %v1591
        %v1656 = vmul.f32 %v1432, %v1592
        %v1657 = vmul.f32 %v1433, %v1593
        %v1658 = vmul.f32 %v1434, %v1594
        %v1659 = vmul.f32 %v1435, %v1595
        %v1660 = vmul.f32 %v1436, %v1596
        %v1661 = vmul.f32 %v1437, %v1597
        %v1662 = vmul.f32 %v1438, %v1598
        %v1663 = vmul.f32 %v1439, %v1599
        %v1664 = vmul.f32 %v1440, %v1600
        %v1665 = vmul.f32 %v1441, %v1601
        %v1666 = vmul.f32 %v1442, %v1602
        %v1667 = vmul.f32 %v1443, %v1603
        %v1668 = vmul.f32 %v1444, %v1604
        %v1669 = vmul.f32 %v1445, %v1605
        %v1670 = vmul.f32 %v1446, %v1606
        %v1671 = vmul.f32 %v1447, %v1607
        %v1672 = vmul.f32 %v1448, %v1608
        %v1673 = vmul.f32 %v1449, %v1609
        %v1674 = vmul.f32 %v1450, %v1610
        %v1675 = vmul.f32 %v1451, %v1611
        %v1676 = vmul.f32 %v1452, %v1612
        %v1677 = vmul.f32 %v1453, %v1613
        %v1678 = vmul.f32 %v1454, %v1614
        %v1679 = vmul.f32 %v1455, %v1615
        %v1680 = vmul.f32 %v1456, %v1616
        %v1681 = vmul.f32 %v1457, %v1617
        %v1682 = vmul.f32 %v1458, %v1618
        %v1683 = vmul.f32 %v1459, %v1619
        %v1684 = vmul.f32 %v1460, %v1620
        %v1685 = vmul.f32 %v1461, %v1621
        %v1686 = vmul.f32 %v1462, %v1622
        %v1687 = vmul.f32 %v1463, %v1623
        %v1688 = vmul.f32 %v1464, %v1624
        %v1689 = vmul.f32 %v1465, %v1625
        %v1690 = vmul.f32 %v1466, %v1626
        %v1691 = vmul.f32 %v1467, %v1627
        %v1692 = vmul.f32 %v1468, %v1628
        %v1693 = vmul.f32 %v1469, %v1629
        %v1694 = vmul.f32 %v1470, %v1630
        %v1695 = vmul.f32 %v1471, %v1631
        %v1696 = vmul.f32 %v1472, %v1632
        %v1697 = vmul.f32 %v1473, %v1633
        %v1698 = vmul.f32 %v1474, %v1634
        %v1699 = vmul.f32 %v1475, %v1635
        %v1700 = vmul.f32 %v1476, %v1636
        %v1701 = vmul.f32 %v1477, %v1637
        %v1702 = vpack.c.bf16 %v1639, %v1638
        %v1703 = vpack.c.bf16 %v1641, %v1640
        %v1704 = vpack.c.bf16 %v1643, %v1642
        %v1705 = vpack.c.bf16 %v1645, %v1644
        %v1706 = vpack.c.bf16 %v1647, %v1646
        %v1707 = vpack.c.bf16 %v1649, %v1648
        %v1708 = vpack.c.bf16 %v1651, %v1650
        %v1709 = vpack.c.bf16 %v1653, %v1652
        %v1710 = vpack.c.bf16 %v1655, %v1654
        %v1711 = vpack.c.bf16 %v1657, %v1656
        %v1712 = vpack.c.bf16 %v1659, %v1658
        %v1713 = vpack.c.bf16 %v1661, %v1660
        %v1714 = vpack.c.bf16 %v1663, %v1662
        %v1715 = vpack.c.bf16 %v1665, %v1664
        %v1716 = vpack.c.bf16 %v1667, %v1666
        %v1717 = vpack.c.bf16 %v1669, %v1668
        %v1718 = vpack.c.bf16 %v1671, %v1670
        %v1719 = vpack.c.bf16 %v1673, %v1672
        %v1720 = vpack.c.bf16 %v1675, %v1674
        %v1721 = vpack.c.bf16 %v1677, %v1676
        %v1722 = vpack.c.bf16 %v1679, %v1678
        %v1723 = vpack.c.bf16 %v1681, %v1680
        %v1724 = vpack.c.bf16 %v1683, %v1682
        %v1725 = vpack.c.bf16 %v1685, %v1684
        %v1726 = vpack.c.bf16 %v1687, %v1686
        %v1727 = vpack.c.bf16 %v1689, %v1688
        %v1728 = vpack.c.bf16 %v1691, %v1690
        %v1729 = vpack.c.bf16 %v1693, %v1692
        %v1730 = vpack.c.bf16 %v1695, %v1694
        %v1731 = vpack.c.bf16 %v1697, %v1696
        %v1732 = vpack.c.bf16 %v1699, %v1698
        %v1733 = vpack.c.bf16 %v1701, %v1700
        %v1734 = vunpack.c.l.bf16 %v1702
        %v1735 = vunpack.c.h.bf16 %v1702
        %v1736 = vunpack.c.l.bf16 %v1703
        %v1737 = vunpack.c.h.bf16 %v1703
        %v1738 = vunpack.c.l.bf16 %v1704
        %v1739 = vunpack.c.h.bf16 %v1704
        %v1740 = vunpack.c.l.bf16 %v1705
        %v1741 = vunpack.c.h.bf16 %v1705
        %v1742 = vunpack.c.l.bf16 %v1706
        %v1743 = vunpack.c.h.bf16 %v1706
        %v1744 = vunpack.c.l.bf16 %v1707
        %v1745 = vunpack.c.h.bf16 %v1707
        %v1746 = vunpack.c.l.bf16 %v1708
        %v1747 = vunpack.c.h.bf16 %v1708
        %v1748 = vunpack.c.l.bf16 %v1709
        %v1749 = vunpack.c.h.bf16 %v1709
        %v1750 = vunpack.c.l.bf16 %v1710
        %v1751 = vunpack.c.h.bf16 %v1710
        %v1752 = vunpack.c.l.bf16 %v1711
        %v1753 = vunpack.c.h.bf16 %v1711
        %v1754 = vunpack.c.l.bf16 %v1712
        %v1755 = vunpack.c.h.bf16 %v1712
        %v1756 = vunpack.c.l.bf16 %v1713
        %v1757 = vunpack.c.h.bf16 %v1713
        %v1758 = vunpack.c.l.bf16 %v1714
        %v1759 = vunpack.c.h.bf16 %v1714
        %v1760 = vunpack.c.l.bf16 %v1715
        %v1761 = vunpack.c.h.bf16 %v1715
        %v1762 = vunpack.c.l.bf16 %v1716
        %v1763 = vunpack.c.h.bf16 %v1716
        %v1764 = vunpack.c.l.bf16 %v1717
        %v1765 = vunpack.c.h.bf16 %v1717
        %v1766 = vunpack.c.l.bf16 %v1718
        %v1767 = vunpack.c.h.bf16 %v1718
        %v1768 = vunpack.c.l.bf16 %v1719
        %v1769 = vunpack.c.h.bf16 %v1719
        %v1770 = vunpack.c.l.bf16 %v1720
        %v1771 = vunpack.c.h.bf16 %v1720
        %v1772 = vunpack.c.l.bf16 %v1721
        %v1773 = vunpack.c.h.bf16 %v1721
        %v1774 = vunpack.c.l.bf16 %v1722
        %v1775 = vunpack.c.h.bf16 %v1722
        %v1776 = vunpack.c.l.bf16 %v1723
        %v1777 = vunpack.c.h.bf16 %v1723
        %v1778 = vunpack.c.l.bf16 %v1724
        %v1779 = vunpack.c.h.bf16 %v1724
        %v1780 = vunpack.c.l.bf16 %v1725
        %v1781 = vunpack.c.h.bf16 %v1725
        %v1782 = vunpack.c.l.bf16 %v1726
        %v1783 = vunpack.c.h.bf16 %v1726
        %v1784 = vunpack.c.l.bf16 %v1727
        %v1785 = vunpack.c.h.bf16 %v1727
        %v1786 = vunpack.c.l.bf16 %v1728
        %v1787 = vunpack.c.h.bf16 %v1728
        %v1788 = vunpack.c.l.bf16 %v1729
        %v1789 = vunpack.c.h.bf16 %v1729
        %v1790 = vunpack.c.l.bf16 %v1730
        %v1791 = vunpack.c.h.bf16 %v1730
        %v1792 = vunpack.c.l.bf16 %v1731
        %v1793 = vunpack.c.h.bf16 %v1731
        %v1794 = vunpack.c.l.bf16 %v1732
        %v1795 = vunpack.c.h.bf16 %v1732
        %v1796 = vunpack.c.l.bf16 %v1733
        %v1797 = vunpack.c.h.bf16 %v1733
        %v1798 = vmul.f32 %v1734, 0.044677734
        %v1799 = vmul.f32 %v1735, 0.044677734
        %v1800 = vmul.f32 %v1736, 0.044677734
        %v1801 = vmul.f32 %v1737, 0.044677734
        %v1802 = vmul.f32 %v1738, 0.044677734
        %v1803 = vmul.f32 %v1739, 0.044677734
        %v1804 = vmul.f32 %v1740, 0.044677734
        %v1805 = vmul.f32 %v1741, 0.044677734
        %v1806 = vmul.f32 %v1742, 0.044677734
        %v1807 = vmul.f32 %v1743, 0.044677734
        %v1808 = vmul.f32 %v1744, 0.044677734
        %v1809 = vmul.f32 %v1745, 0.044677734
        %v1810 = vmul.f32 %v1746, 0.044677734
        %v1811 = vmul.f32 %v1747, 0.044677734
        %v1812 = vmul.f32 %v1748, 0.044677734
        %v1813 = vmul.f32 %v1749, 0.044677734
        %v1814 = vmul.f32 %v1750, 0.044677734
        %v1815 = vmul.f32 %v1751, 0.044677734
        %v1816 = vmul.f32 %v1752, 0.044677734
        %v1817 = vmul.f32 %v1753, 0.044677734
        %v1818 = vmul.f32 %v1754, 0.044677734
        %v1819 = vmul.f32 %v1755, 0.044677734
        %v1820 = vmul.f32 %v1756, 0.044677734
        %v1821 = vmul.f32 %v1757, 0.044677734
        %v1822 = vmul.f32 %v1758, 0.044677734
        %v1823 = vmul.f32 %v1759, 0.044677734
        %v1824 = vmul.f32 %v1760, 0.044677734
        %v1825 = vmul.f32 %v1761, 0.044677734
        %v1826 = vmul.f32 %v1762, 0.044677734
        %v1827 = vmul.f32 %v1763, 0.044677734
        %v1828 = vmul.f32 %v1764, 0.044677734
        %v1829 = vmul.f32 %v1765, 0.044677734
        %v1830 = vmul.f32 %v1766, 0.044677734
        %v1831 = vmul.f32 %v1767, 0.044677734
        %v1832 = vmul.f32 %v1768, 0.044677734
        %v1833 = vmul.f32 %v1769, 0.044677734
        %v1834 = vmul.f32 %v1770, 0.044677734
        %v1835 = vmul.f32 %v1771, 0.044677734
        %v1836 = vmul.f32 %v1772, 0.044677734
        %v1837 = vmul.f32 %v1773, 0.044677734
        %v1838 = vmul.f32 %v1774, 0.044677734
        %v1839 = vmul.f32 %v1775, 0.044677734
        %v1840 = vmul.f32 %v1776, 0.044677734
        %v1841 = vmul.f32 %v1777, 0.044677734
        %v1842 = vmul.f32 %v1778, 0.044677734
        %v1843 = vmul.f32 %v1779, 0.044677734
        %v1844 = vmul.f32 %v1780, 0.044677734
        %v1845 = vmul.f32 %v1781, 0.044677734
        %v1846 = vmul.f32 %v1782, 0.044677734
        %v1847 = vmul.f32 %v1783, 0.044677734
        %v1848 = vmul.f32 %v1784, 0.044677734
        %v1849 = vmul.f32 %v1785, 0.044677734
        %v1850 = vmul.f32 %v1786, 0.044677734
        %v1851 = vmul.f32 %v1787, 0.044677734
        %v1852 = vmul.f32 %v1788, 0.044677734
        %v1853 = vmul.f32 %v1789, 0.044677734
        %v1854 = vmul.f32 %v1790, 0.044677734
        %v1855 = vmul.f32 %v1791, 0.044677734
        %v1856 = vmul.f32 %v1792, 0.044677734
        %v1857 = vmul.f32 %v1793, 0.044677734
        %v1858 = vmul.f32 %v1794, 0.044677734
        %v1859 = vmul.f32 %v1795, 0.044677734
        %v1860 = vmul.f32 %v1796, 0.044677734
        %v1861 = vmul.f32 %v1797, 0.044677734
        %v1862 = vpack.c.bf16 %v1799, %v1798
        %v1863 = vpack.c.bf16 %v1801, %v1800
        %v1864 = vpack.c.bf16 %v1803, %v1802
        %v1865 = vpack.c.bf16 %v1805, %v1804
        %v1866 = vpack.c.bf16 %v1807, %v1806
        %v1867 = vpack.c.bf16 %v1809, %v1808
        %v1868 = vpack.c.bf16 %v1811, %v1810
        %v1869 = vpack.c.bf16 %v1813, %v1812
        %v1870 = vpack.c.bf16 %v1815, %v1814
        %v1871 = vpack.c.bf16 %v1817, %v1816
        %v1872 = vpack.c.bf16 %v1819, %v1818
        %v1873 = vpack.c.bf16 %v1821, %v1820
        %v1874 = vpack.c.bf16 %v1823, %v1822
        %v1875 = vpack.c.bf16 %v1825, %v1824
        %v1876 = vpack.c.bf16 %v1827, %v1826
        %v1877 = vpack.c.bf16 %v1829, %v1828
        %v1878 = vpack.c.bf16 %v1831, %v1830
        %v1879 = vpack.c.bf16 %v1833, %v1832
        %v1880 = vpack.c.bf16 %v1835, %v1834
        %v1881 = vpack.c.bf16 %v1837, %v1836
        %v1882 = vpack.c.bf16 %v1839, %v1838
        %v1883 = vpack.c.bf16 %v1841, %v1840
        %v1884 = vpack.c.bf16 %v1843, %v1842
        %v1885 = vpack.c.bf16 %v1845, %v1844
        %v1886 = vpack.c.bf16 %v1847, %v1846
        %v1887 = vpack.c.bf16 %v1849, %v1848
        %v1888 = vpack.c.bf16 %v1851, %v1850
        %v1889 = vpack.c.bf16 %v1853, %v1852
        %v1890 = vpack.c.bf16 %v1855, %v1854
        %v1891 = vpack.c.bf16 %v1857, %v1856
        %v1892 = vpack.c.bf16 %v1859, %v1858
        %v1893 = vpack.c.bf16 %v1861, %v1860
        %v1894 = vunpack.c.l.bf16 %v1862
        %v1895 = vunpack.c.h.bf16 %v1862
        %v1896 = vunpack.c.l.bf16 %v1863
        %v1897 = vunpack.c.h.bf16 %v1863
        %v1898 = vunpack.c.l.bf16 %v1864
        %v1899 = vunpack.c.h.bf16 %v1864
        %v1900 = vunpack.c.l.bf16 %v1865
        %v1901 = vunpack.c.h.bf16 %v1865
        %v1902 = vunpack.c.l.bf16 %v1866
        %v1903 = vunpack.c.h.bf16 %v1866
        %v1904 = vunpack.c.l.bf16 %v1867
        %v1905 = vunpack.c.h.bf16 %v1867
        %v1906 = vunpack.c.l.bf16 %v1868
        %v1907 = vunpack.c.h.bf16 %v1868
        %v1908 = vunpack.c.l.bf16 %v1869
        %v1909 = vunpack.c.h.bf16 %v1869
        %v1910 = vunpack.c.l.bf16 %v1870
        %v1911 = vunpack.c.h.bf16 %v1870
        %v1912 = vunpack.c.l.bf16 %v1871
        %v1913 = vunpack.c.h.bf16 %v1871
        %v1914 = vunpack.c.l.bf16 %v1872
        %v1915 = vunpack.c.h.bf16 %v1872
        %v1916 = vunpack.c.l.bf16 %v1873
        %v1917 = vunpack.c.h.bf16 %v1873
        %v1918 = vunpack.c.l.bf16 %v1874
        %v1919 = vunpack.c.h.bf16 %v1874
        %v1920 = vunpack.c.l.bf16 %v1875
        %v1921 = vunpack.c.h.bf16 %v1875
        %v1922 = vunpack.c.l.bf16 %v1876
        %v1923 = vunpack.c.h.bf16 %v1876
        %v1924 = vunpack.c.l.bf16 %v1877
        %v1925 = vunpack.c.h.bf16 %v1877
        %v1926 = vunpack.c.l.bf16 %v1878
        %v1927 = vunpack.c.h.bf16 %v1878
        %v1928 = vunpack.c.l.bf16 %v1879
        %v1929 = vunpack.c.h.bf16 %v1879
        %v1930 = vunpack.c.l.bf16 %v1880
        %v1931 = vunpack.c.h.bf16 %v1880
        %v1932 = vunpack.c.l.bf16 %v1881
        %v1933 = vunpack.c.h.bf16 %v1881
        %v1934 = vunpack.c.l.bf16 %v1882
        %v1935 = vunpack.c.h.bf16 %v1882
        %v1936 = vunpack.c.l.bf16 %v1883
        %v1937 = vunpack.c.h.bf16 %v1883
        %v1938 = vunpack.c.l.bf16 %v1884
        %v1939 = vunpack.c.h.bf16 %v1884
        %v1940 = vunpack.c.l.bf16 %v1885
        %v1941 = vunpack.c.h.bf16 %v1885
        %v1942 = vunpack.c.l.bf16 %v1886
        %v1943 = vunpack.c.h.bf16 %v1886
        %v1944 = vunpack.c.l.bf16 %v1887
        %v1945 = vunpack.c.h.bf16 %v1887
        %v1946 = vunpack.c.l.bf16 %v1888
        %v1947 = vunpack.c.h.bf16 %v1888
        %v1948 = vunpack.c.l.bf16 %v1889
        %v1949 = vunpack.c.h.bf16 %v1889
        %v1950 = vunpack.c.l.bf16 %v1890
        %v1951 = vunpack.c.h.bf16 %v1890
        %v1952 = vunpack.c.l.bf16 %v1891
        %v1953 = vunpack.c.h.bf16 %v1891
        %v1954 = vunpack.c.l.bf16 %v1892
        %v1955 = vunpack.c.h.bf16 %v1892
        %v1956 = vunpack.c.l.bf16 %v1893
        %v1957 = vunpack.c.h.bf16 %v1893
        %v1958 = vadd.f32 %v1414, %v1894
        %v1959 = vadd.f32 %v1415, %v1895
        %v1960 = vadd.f32 %v1416, %v1896
        %v1961 = vadd.f32 %v1417, %v1897
        %v1962 = vadd.f32 %v1418, %v1898
        %v1963 = vadd.f32 %v1419, %v1899
        %v1964 = vadd.f32 %v1420, %v1900
        %v1965 = vadd.f32 %v1421, %v1901
        %v1966 = vadd.f32 %v1422, %v1902
        %v1967 = vadd.f32 %v1423, %v1903
        %v1968 = vadd.f32 %v1424, %v1904
        %v1969 = vadd.f32 %v1425, %v1905
        %v1970 = vadd.f32 %v1426, %v1906
        %v1971 = vadd.f32 %v1427, %v1907
        %v1972 = vadd.f32 %v1428, %v1908
        %v1973 = vadd.f32 %v1429, %v1909
        %v1974 = vadd.f32 %v1430, %v1910
        %v1975 = vadd.f32 %v1431, %v1911
        %v1976 = vadd.f32 %v1432, %v1912
        %v1977 = vadd.f32 %v1433, %v1913
        %v1978 = vadd.f32 %v1434, %v1914
        %v1979 = vadd.f32 %v1435, %v1915
        %v1980 = vadd.f32 %v1436, %v1916
        %v1981 = vadd.f32 %v1437, %v1917
        %v1982 = vadd.f32 %v1438, %v1918
        %v1983 = vadd.f32 %v1439, %v1919
        %v1984 = vadd.f32 %v1440, %v1920
        %v1985 = vadd.f32 %v1441, %v1921
        %v1986 = vadd.f32 %v1442, %v1922
        %v1987 = vadd.f32 %v1443, %v1923
        %v1988 = vadd.f32 %v1444, %v1924
        %v1989 = vadd.f32 %v1445, %v1925
        %v1990 = vadd.f32 %v1446, %v1926
        %v1991 = vadd.f32 %v1447, %v1927
        %v1992 = vadd.f32 %v1448, %v1928
        %v1993 = vadd.f32 %v1449, %v1929
        %v1994 = vadd.f32 %v1450, %v1930
        %v1995 = vadd.f32 %v1451, %v1931
        %v1996 = vadd.f32 %v1452, %v1932
        %v1997 = vadd.f32 %v1453, %v1933
        %v1998 = vadd.f32 %v1454, %v1934
        %v1999 = vadd.f32 %v1455, %v1935
        %v2000 = vadd.f32 %v1456, %v1936
        %v2001 = vadd.f32 %v1457, %v1937
        %v2002 = vadd.f32 %v1458, %v1938
        %v2003 = vadd.f32 %v1459, %v1939
        %v2004 = vadd.f32 %v1460, %v1940
        %v2005 = vadd.f32 %v1461, %v1941
        %v2006 = vadd.f32 %v1462, %v1942
        %v2007 = vadd.f32 %v1463, %v1943
        %v2008 = vadd.f32 %v1464, %v1944
        %v2009 = vadd.f32 %v1465, %v1945
        %v2010 = vadd.f32 %v1466, %v1946
        %v2011 = vadd.f32 %v1467, %v1947
        %v2012 = vadd.f32 %v1468, %v1948
        %v2013 = vadd.f32 %v1469, %v1949
        %v2014 = vadd.f32 %v1470, %v1950
        %v2015 = vadd.f32 %v1471, %v1951
        %v2016 = vadd.f32 %v1472, %v1952
        %v2017 = vadd.f32 %v1473, %v1953
        %v2018 = vadd.f32 %v1474, %v1954
        %v2019 = vadd.f32 %v1475, %v1955
        %v2020 = vadd.f32 %v1476, %v1956
        %v2021 = vadd.f32 %v1477, %v1957
        %v2022 = vpack.c.bf16 %v1959, %v1958
        %v2023 = vpack.c.bf16 %v1961, %v1960
        %v2024 = vpack.c.bf16 %v1963, %v1962
        %v2025 = vpack.c.bf16 %v1965, %v1964
        %v2026 = vpack.c.bf16 %v1967, %v1966
        %v2027 = vpack.c.bf16 %v1969, %v1968
        %v2028 = vpack.c.bf16 %v1971, %v1970
        %v2029 = vpack.c.bf16 %v1973, %v1972
        %v2030 = vpack.c.bf16 %v1975, %v1974
        %v2031 = vpack.c.bf16 %v1977, %v1976
        %v2032 = vpack.c.bf16 %v1979, %v1978
        %v2033 = vpack.c.bf16 %v1981, %v1980
        %v2034 = vpack.c.bf16 %v1983, %v1982
        %v2035 = vpack.c.bf16 %v1985, %v1984
        %v2036 = vpack.c.bf16 %v1987, %v1986
        %v2037 = vpack.c.bf16 %v1989, %v1988
        %v2038 = vpack.c.bf16 %v1991, %v1990
        %v2039 = vpack.c.bf16 %v1993, %v1992
        %v2040 = vpack.c.bf16 %v1995, %v1994
        %v2041 = vpack.c.bf16 %v1997, %v1996
        %v2042 = vpack.c.bf16 %v1999, %v1998
        %v2043 = vpack.c.bf16 %v2001, %v2000
        %v2044 = vpack.c.bf16 %v2003, %v2002
        %v2045 = vpack.c.bf16 %v2005, %v2004
        %v2046 = vpack.c.bf16 %v2007, %v2006
        %v2047 = vpack.c.bf16 %v2009, %v2008
        %v2048 = vpack.c.bf16 %v2011, %v2010
        %v2049 = vpack.c.bf16 %v2013, %v2012
        %v2050 = vpack.c.bf16 %v2015, %v2014
        %v2051 = vpack.c.bf16 %v2017, %v2016
        %v2052 = vpack.c.bf16 %v2019, %v2018
        %v2053 = vpack.c.bf16 %v2021, %v2020
        %v2054 = vunpack.c.l.bf16 %v2022
        %v2055 = vunpack.c.h.bf16 %v2022
        %v2056 = vunpack.c.l.bf16 %v2023
        %v2057 = vunpack.c.h.bf16 %v2023
        %v2058 = vunpack.c.l.bf16 %v2024
        %v2059 = vunpack.c.h.bf16 %v2024
        %v2060 = vunpack.c.l.bf16 %v2025
        %v2061 = vunpack.c.h.bf16 %v2025
        %v2062 = vunpack.c.l.bf16 %v2026
        %v2063 = vunpack.c.h.bf16 %v2026
        %v2064 = vunpack.c.l.bf16 %v2027
        %v2065 = vunpack.c.h.bf16 %v2027
        %v2066 = vunpack.c.l.bf16 %v2028
        %v2067 = vunpack.c.h.bf16 %v2028
        %v2068 = vunpack.c.l.bf16 %v2029
        %v2069 = vunpack.c.h.bf16 %v2029
        %v2070 = vunpack.c.l.bf16 %v2030
        %v2071 = vunpack.c.h.bf16 %v2030
        %v2072 = vunpack.c.l.bf16 %v2031
        %v2073 = vunpack.c.h.bf16 %v2031
        %v2074 = vunpack.c.l.bf16 %v2032
        %v2075 = vunpack.c.h.bf16 %v2032
        %v2076 = vunpack.c.l.bf16 %v2033
        %v2077 = vunpack.c.h.bf16 %v2033
        %v2078 = vunpack.c.l.bf16 %v2034
        %v2079 = vunpack.c.h.bf16 %v2034
        %v2080 = vunpack.c.l.bf16 %v2035
        %v2081 = vunpack.c.h.bf16 %v2035
        %v2082 = vunpack.c.l.bf16 %v2036
        %v2083 = vunpack.c.h.bf16 %v2036
        %v2084 = vunpack.c.l.bf16 %v2037
        %v2085 = vunpack.c.h.bf16 %v2037
        %v2086 = vunpack.c.l.bf16 %v2038
        %v2087 = vunpack.c.h.bf16 %v2038
        %v2088 = vunpack.c.l.bf16 %v2039
        %v2089 = vunpack.c.h.bf16 %v2039
        %v2090 = vunpack.c.l.bf16 %v2040
        %v2091 = vunpack.c.h.bf16 %v2040
        %v2092 = vunpack.c.l.bf16 %v2041
        %v2093 = vunpack.c.h.bf16 %v2041
        %v2094 = vunpack.c.l.bf16 %v2042
        %v2095 = vunpack.c.h.bf16 %v2042
        %v2096 = vunpack.c.l.bf16 %v2043
        %v2097 = vunpack.c.h.bf16 %v2043
        %v2098 = vunpack.c.l.bf16 %v2044
        %v2099 = vunpack.c.h.bf16 %v2044
        %v2100 = vunpack.c.l.bf16 %v2045
        %v2101 = vunpack.c.h.bf16 %v2045
        %v2102 = vunpack.c.l.bf16 %v2046
        %v2103 = vunpack.c.h.bf16 %v2046
        %v2104 = vunpack.c.l.bf16 %v2047
        %v2105 = vunpack.c.h.bf16 %v2047
        %v2106 = vunpack.c.l.bf16 %v2048
        %v2107 = vunpack.c.h.bf16 %v2048
        %v2108 = vunpack.c.l.bf16 %v2049
        %v2109 = vunpack.c.h.bf16 %v2049
        %v2110 = vunpack.c.l.bf16 %v2050
        %v2111 = vunpack.c.h.bf16 %v2050
        %v2112 = vunpack.c.l.bf16 %v2051
        %v2113 = vunpack.c.h.bf16 %v2051
        %v2114 = vunpack.c.l.bf16 %v2052
        %v2115 = vunpack.c.h.bf16 %v2052
        %v2116 = vunpack.c.l.bf16 %v2053
        %v2117 = vunpack.c.h.bf16 %v2053
        %v2118 = vmul.f32 %v2054, 0.796875
        %v2119 = vmul.f32 %v2055, 0.796875
        %v2120 = vmul.f32 %v2056, 0.796875
        %v2121 = vmul.f32 %v2057, 0.796875
        %v2122 = vmul.f32 %v2058, 0.796875
        %v2123 = vmul.f32 %v2059, 0.796875
        %v2124 = vmul.f32 %v2060, 0.796875
        %v2125 = vmul.f32 %v2061, 0.796875
        %v2126 = vmul.f32 %v2062, 0.796875
        %v2127 = vmul.f32 %v2063, 0.796875
        %v2128 = vmul.f32 %v2064, 0.796875
        %v2129 = vmul.f32 %v2065, 0.796875
        %v2130 = vmul.f32 %v2066, 0.796875
        %v2131 = vmul.f32 %v2067, 0.796875
        %v2132 = vmul.f32 %v2068, 0.796875
        %v2133 = vmul.f32 %v2069, 0.796875
        %v2134 = vmul.f32 %v2070, 0.796875
        %v2135 = vmul.f32 %v2071, 0.796875
        %v2136 = vmul.f32 %v2072, 0.796875
        %v2137 = vmul.f32 %v2073, 0.796875
        %v2138 = vmul.f32 %v2074, 0.796875
        %v2139 = vmul.f32 %v2075, 0.796875
        %v2140 = vmul.f32 %v2076, 0.796875
        %v2141 = vmul.f32 %v2077, 0.796875
        %v2142 = vmul.f32 %v2078, 0.796875
        %v2143 = vmul.f32 %v2079, 0.796875
        %v2144 = vmul.f32 %v2080, 0.796875
        %v2145 = vmul.f32 %v2081, 0.796875
        %v2146 = vmul.f32 %v2082, 0.796875
        %v2147 = vmul.f32 %v2083, 0.796875
        %v2148 = vmul.f32 %v2084, 0.796875
        %v2149 = vmul.f32 %v2085, 0.796875
        %v2150 = vmul.f32 %v2086, 0.796875
        %v2151 = vmul.f32 %v2087, 0.796875
        %v2152 = vmul.f32 %v2088, 0.796875
        %v2153 = vmul.f32 %v2089, 0.796875
        %v2154 = vmul.f32 %v2090, 0.796875
        %v2155 = vmul.f32 %v2091, 0.796875
        %v2156 = vmul.f32 %v2092, 0.796875
        %v2157 = vmul.f32 %v2093, 0.796875
        %v2158 = vmul.f32 %v2094, 0.796875
        %v2159 = vmul.f32 %v2095, 0.796875
        %v2160 = vmul.f32 %v2096, 0.796875
        %v2161 = vmul.f32 %v2097, 0.796875
        %v2162 = vmul.f32 %v2098, 0.796875
        %v2163 = vmul.f32 %v2099, 0.796875
        %v2164 = vmul.f32 %v2100, 0.796875
        %v2165 = vmul.f32 %v2101, 0.796875
        %v2166 = vmul.f32 %v2102, 0.796875
        %v2167 = vmul.f32 %v2103, 0.796875
        %v2168 = vmul.f32 %v2104, 0.796875
        %v2169 = vmul.f32 %v2105, 0.796875
        %v2170 = vmul.f32 %v2106, 0.796875
        %v2171 = vmul.f32 %v2107, 0.796875
        %v2172 = vmul.f32 %v2108, 0.796875
        %v2173 = vmul.f32 %v2109, 0.796875
        %v2174 = vmul.f32 %v2110, 0.796875
        %v2175 = vmul.f32 %v2111, 0.796875
        %v2176 = vmul.f32 %v2112, 0.796875
        %v2177 = vmul.f32 %v2113, 0.796875
        %v2178 = vmul.f32 %v2114, 0.796875
        %v2179 = vmul.f32 %v2115, 0.796875
        %v2180 = vmul.f32 %v2116, 0.796875
        %v2181 = vmul.f32 %v2117, 0.796875
        %v2182 = vpack.c.bf16 %v2119, %v2118
        %v2183 = vpack.c.bf16 %v2121, %v2120
        %v2184 = vpack.c.bf16 %v2123, %v2122
        %v2185 = vpack.c.bf16 %v2125, %v2124
        %v2186 = vpack.c.bf16 %v2127, %v2126
        %v2187 = vpack.c.bf16 %v2129, %v2128
        %v2188 = vpack.c.bf16 %v2131, %v2130
        %v2189 = vpack.c.bf16 %v2133, %v2132
        %v2190 = vpack.c.bf16 %v2135, %v2134
        %v2191 = vpack.c.bf16 %v2137, %v2136
        %v2192 = vpack.c.bf16 %v2139, %v2138
        %v2193 = vpack.c.bf16 %v2141, %v2140
        %v2194 = vpack.c.bf16 %v2143, %v2142
        %v2195 = vpack.c.bf16 %v2145, %v2144
        %v2196 = vpack.c.bf16 %v2147, %v2146
        %v2197 = vpack.c.bf16 %v2149, %v2148
        %v2198 = vpack.c.bf16 %v2151, %v2150
        %v2199 = vpack.c.bf16 %v2153, %v2152
        %v2200 = vpack.c.bf16 %v2155, %v2154
        %v2201 = vpack.c.bf16 %v2157, %v2156
        %v2202 = vpack.c.bf16 %v2159, %v2158
        %v2203 = vpack.c.bf16 %v2161, %v2160
        %v2204 = vpack.c.bf16 %v2163, %v2162
        %v2205 = vpack.c.bf16 %v2165, %v2164
        %v2206 = vpack.c.bf16 %v2167, %v2166
        %v2207 = vpack.c.bf16 %v2169, %v2168
        %v2208 = vpack.c.bf16 %v2171, %v2170
        %v2209 = vpack.c.bf16 %v2173, %v2172
        %v2210 = vpack.c.bf16 %v2175, %v2174
        %v2211 = vpack.c.bf16 %v2177, %v2176
        %v2212 = vpack.c.bf16 %v2179, %v2178
        %v2213 = vpack.c.bf16 %v2181, %v2180
        %v2214 = vunpack.c.l.bf16 %v2182
        %v2215 = vunpack.c.h.bf16 %v2182
        %v2216 = vunpack.c.l.bf16 %v2183
        %v2217 = vunpack.c.h.bf16 %v2183
        %v2218 = vunpack.c.l.bf16 %v2184
        %v2219 = vunpack.c.h.bf16 %v2184
        %v2220 = vunpack.c.l.bf16 %v2185
        %v2221 = vunpack.c.h.bf16 %v2185
        %v2222 = vunpack.c.l.bf16 %v2186
        %v2223 = vunpack.c.h.bf16 %v2186
        %v2224 = vunpack.c.l.bf16 %v2187
        %v2225 = vunpack.c.h.bf16 %v2187
        %v2226 = vunpack.c.l.bf16 %v2188
        %v2227 = vunpack.c.h.bf16 %v2188
        %v2228 = vunpack.c.l.bf16 %v2189
        %v2229 = vunpack.c.h.bf16 %v2189
        %v2230 = vunpack.c.l.bf16 %v2190
        %v2231 = vunpack.c.h.bf16 %v2190
        %v2232 = vunpack.c.l.bf16 %v2191
        %v2233 = vunpack.c.h.bf16 %v2191
        %v2234 = vunpack.c.l.bf16 %v2192
        %v2235 = vunpack.c.h.bf16 %v2192
        %v2236 = vunpack.c.l.bf16 %v2193
        %v2237 = vunpack.c.h.bf16 %v2193
        %v2238 = vunpack.c.l.bf16 %v2194
        %v2239 = vunpack.c.h.bf16 %v2194
        %v2240 = vunpack.c.l.bf16 %v2195
        %v2241 = vunpack.c.h.bf16 %v2195
        %v2242 = vunpack.c.l.bf16 %v2196
        %v2243 = vunpack.c.h.bf16 %v2196
        %v2244 = vunpack.c.l.bf16 %v2197
        %v2245 = vunpack.c.h.bf16 %v2197
        %v2246 = vunpack.c.l.bf16 %v2198
        %v2247 = vunpack.c.h.bf16 %v2198
        %v2248 = vunpack.c.l.bf16 %v2199
        %v2249 = vunpack.c.h.bf16 %v2199
        %v2250 = vunpack.c.l.bf16 %v2200
        %v2251 = vunpack.c.h.bf16 %v2200
        %v2252 = vunpack.c.l.bf16 %v2201
        %v2253 = vunpack.c.h.bf16 %v2201
        %v2254 = vunpack.c.l.bf16 %v2202
        %v2255 = vunpack.c.h.bf16 %v2202
        %v2256 = vunpack.c.l.bf16 %v2203
        %v2257 = vunpack.c.h.bf16 %v2203
        %v2258 = vunpack.c.l.bf16 %v2204
        %v2259 = vunpack.c.h.bf16 %v2204
        %v2260 = vunpack.c.l.bf16 %v2205
        %v2261 = vunpack.c.h.bf16 %v2205
        %v2262 = vunpack.c.l.bf16 %v2206
        %v2263 = vunpack.c.h.bf16 %v2206
        %v2264 = vunpack.c.l.bf16 %v2207
        %v2265 = vunpack.c.h.bf16 %v2207
        %v2266 = vunpack.c.l.bf16 %v2208
        %v2267 = vunpack.c.h.bf16 %v2208
        %v2268 = vunpack.c.l.bf16 %v2209
        %v2269 = vunpack.c.h.bf16 %v2209
        %v2270 = vunpack.c.l.bf16 %v2210
        %v2271 = vunpack.c.h.bf16 %v2210
        %v2272 = vunpack.c.l.bf16 %v2211
        %v2273 = vunpack.c.h.bf16 %v2211
        %v2274 = vunpack.c.l.bf16 %v2212
        %v2275 = vunpack.c.h.bf16 %v2212
        %v2276 = vunpack.c.l.bf16 %v2213
        %v2277 = vunpack.c.h.bf16 %v2213
        %v2278 = vtanh.pop %v2214
        %v2279 = vtanh.pop %v2215
        %v2280 = vtanh.pop %v2216
        %v2281 = vtanh.pop %v2217
        %v2282 = vtanh.pop %v2218
        %v2283 = vtanh.pop %v2219
        %v2284 = vtanh.pop %v2220
        %v2285 = vtanh.pop %v2221
        %v2286 = vtanh.pop %v2222
        %v2287 = vtanh.pop %v2223
        %v2288 = vtanh.pop %v2224
        %v2289 = vtanh.pop %v2225
        %v2290 = vtanh.pop %v2226
        %v2291 = vtanh.pop %v2227
        %v2292 = vtanh.pop %v2228
        %v2293 = vtanh.pop %v2229
        %v2294 = vtanh.pop %v2230
        %v2295 = vtanh.pop %v2231
        %v2296 = vtanh.pop %v2232
        %v2297 = vtanh.pop %v2233
        %v2298 = vtanh.pop %v2234
        %v2299 = vtanh.pop %v2235
        %v2300 = vtanh.pop %v2236
        %v2301 = vtanh.pop %v2237
        %v2302 = vtanh.pop %v2238
        %v2303 = vtanh.pop %v2239
        %v2304 = vtanh.pop %v2240
        %v2305 = vtanh.pop %v2241
        %v2306 = vtanh.pop %v2242
        %v2307 = vtanh.pop %v2243
        %v2308 = vtanh.pop %v2244
        %v2309 = vtanh.pop %v2245
        %v2310 = vtanh.pop %v2246
        %v2311 = vtanh.pop %v2247
        %v2312 = vtanh.pop %v2248
        %v2313 = vtanh.pop %v2249
        %v2314 = vtanh.pop %v2250
        %v2315 = vtanh.pop %v2251
        %v2316 = vtanh.pop %v2252
        %v2317 = vtanh.pop %v2253
        %v2318 = vtanh.pop %v2254
        %v2319 = vtanh.pop %v2255
        %v2320 = vtanh.pop %v2256
        %v2321 = vtanh.pop %v2257
        %v2322 = vtanh.pop %v2258
        %v2323 = vtanh.pop %v2259
        %v2324 = vtanh.pop %v2260
        %v2325 = vtanh.pop %v2261
        %v2326 = vtanh.pop %v2262
        %v2327 = vtanh.pop %v2263
        %v2328 = vtanh.pop %v2264
        %v2329 = vtanh.pop %v2265
        %v2330 = vtanh.pop %v2266
        %v2331 = vtanh.pop %v2267
        %v2332 = vtanh.pop %v2268
        %v2333 = vtanh.pop %v2269
        %v2334 = vtanh.pop %v2270
        %v2335 = vtanh.pop %v2271
        %v2336 = vtanh.pop %v2272
        %v2337 = vtanh.pop %v2273
        %v2338 = vtanh.pop %v2274
        %v2339 = vtanh.pop %v2275
        %v2340 = vtanh.pop %v2276
        %v2341 = vtanh.pop %v2277
        %v2342 = vpack.c.bf16 %v2279, %v2278
        %v2343 = vpack.c.bf16 %v2281, %v2280
        %v2344 = vpack.c.bf16 %v2283, %v2282
        %v2345 = vpack.c.bf16 %v2285, %v2284
        %v2346 = vpack.c.bf16 %v2287, %v2286
        %v2347 = vpack.c.bf16 %v2289, %v2288
        %v2348 = vpack.c.bf16 %v2291, %v2290
        %v2349 = vpack.c.bf16 %v2293, %v2292
        %v2350 = vpack.c.bf16 %v2295, %v2294
        %v2351 = vpack.c.bf16 %v2297, %v2296
        %v2352 = vpack.c.bf16 %v2299, %v2298
        %v2353 = vpack.c.bf16 %v2301, %v2300
        %v2354 = vpack.c.bf16 %v2303, %v2302
        %v2355 = vpack.c.bf16 %v2305, %v2304
        %v2356 = vpack.c.bf16 %v2307, %v2306
        %v2357 = vpack.c.bf16 %v2309, %v2308
        %v2358 = vpack.c.bf16 %v2311, %v2310
        %v2359 = vpack.c.bf16 %v2313, %v2312
        %v2360 = vpack.c.bf16 %v2315, %v2314
        %v2361 = vpack.c.bf16 %v2317, %v2316
        %v2362 = vpack.c.bf16 %v2319, %v2318
        %v2363 = vpack.c.bf16 %v2321, %v2320
        %v2364 = vpack.c.bf16 %v2323, %v2322
        %v2365 = vpack.c.bf16 %v2325, %v2324
        %v2366 = vpack.c.bf16 %v2327, %v2326
        %v2367 = vpack.c.bf16 %v2329, %v2328
        %v2368 = vpack.c.bf16 %v2331, %v2330
        %v2369 = vpack.c.bf16 %v2333, %v2332
        %v2370 = vpack.c.bf16 %v2335, %v2334
        %v2371 = vpack.c.bf16 %v2337, %v2336
        %v2372 = vpack.c.bf16 %v2339, %v2338
        %v2373 = vpack.c.bf16 %v2341, %v2340
        %v2374 = vunpack.c.l.bf16 %v2342
        %v2375 = vunpack.c.h.bf16 %v2342
        %v2376 = vunpack.c.l.bf16 %v2343
        %v2377 = vunpack.c.h.bf16 %v2343
        %v2378 = vunpack.c.l.bf16 %v2344
        %v2379 = vunpack.c.h.bf16 %v2344
        %v2380 = vunpack.c.l.bf16 %v2345
        %v2381 = vunpack.c.h.bf16 %v2345
        %v2382 = vunpack.c.l.bf16 %v2346
        %v2383 = vunpack.c.h.bf16 %v2346
        %v2384 = vunpack.c.l.bf16 %v2347
        %v2385 = vunpack.c.h.bf16 %v2347
        %v2386 = vunpack.c.l.bf16 %v2348
        %v2387 = vunpack.c.h.bf16 %v2348
        %v2388 = vunpack.c.l.bf16 %v2349
        %v2389 = vunpack.c.h.bf16 %v2349
        %v2390 = vunpack.c.l.bf16 %v2350
        %v2391 = vunpack.c.h.bf16 %v2350
        %v2392 = vunpack.c.l.bf16 %v2351
        %v2393 = vunpack.c.h.bf16 %v2351
        %v2394 = vunpack.c.l.bf16 %v2352
        %v2395 = vunpack.c.h.bf16 %v2352
        %v2396 = vunpack.c.l.bf16 %v2353
        %v2397 = vunpack.c.h.bf16 %v2353
        %v2398 = vunpack.c.l.bf16 %v2354
        %v2399 = vunpack.c.h.bf16 %v2354
        %v2400 = vunpack.c.l.bf16 %v2355
        %v2401 = vunpack.c.h.bf16 %v2355
        %v2402 = vunpack.c.l.bf16 %v2356
        %v2403 = vunpack.c.h.bf16 %v2356
        %v2404 = vunpack.c.l.bf16 %v2357
        %v2405 = vunpack.c.h.bf16 %v2357
        %v2406 = vunpack.c.l.bf16 %v2358
        %v2407 = vunpack.c.h.bf16 %v2358
        %v2408 = vunpack.c.l.bf16 %v2359
        %v2409 = vunpack.c.h.bf16 %v2359
        %v2410 = vunpack.c.l.bf16 %v2360
        %v2411 = vunpack.c.h.bf16 %v2360
        %v2412 = vunpack.c.l.bf16 %v2361
        %v2413 = vunpack.c.h.bf16 %v2361
        %v2414 = vunpack.c.l.bf16 %v2362
        %v2415 = vunpack.c.h.bf16 %v2362
        %v2416 = vunpack.c.l.bf16 %v2363
        %v2417 = vunpack.c.h.bf16 %v2363
        %v2418 = vunpack.c.l.bf16 %v2364
        %v2419 = vunpack.c.h.bf16 %v2364
        %v2420 = vunpack.c.l.bf16 %v2365
        %v2421 = vunpack.c.h.bf16 %v2365
        %v2422 = vunpack.c.l.bf16 %v2366
        %v2423 = vunpack.c.h.bf16 %v2366
        %v2424 = vunpack.c.l.bf16 %v2367
        %v2425 = vunpack.c.h.bf16 %v2367
        %v2426 = vunpack.c.l.bf16 %v2368
        %v2427 = vunpack.c.h.bf16 %v2368
        %v2428 = vunpack.c.l.bf16 %v2369
        %v2429 = vunpack.c.h.bf16 %v2369
        %v2430 = vunpack.c.l.bf16 %v2370
        %v2431 = vunpack.c.h.bf16 %v2370
        %v2432 = vunpack.c.l.bf16 %v2371
        %v2433 = vunpack.c.h.bf16 %v2371
        %v2434 = vunpack.c.l.bf16 %v2372
        %v2435 = vunpack.c.h.bf16 %v2372
        %v2436 = vunpack.c.l.bf16 %v2373
        %v2437 = vunpack.c.h.bf16 %v2373
        %v2438 = vadd.f32 %v2374, 1.0
        %v2439 = vadd.f32 %v2375, 1.0
        %v2440 = vadd.f32 %v2376, 1.0
        %v2441 = vadd.f32 %v2377, 1.0
        %v2442 = vadd.f32 %v2378, 1.0
        %v2443 = vadd.f32 %v2379, 1.0
        %v2444 = vadd.f32 %v2380, 1.0
        %v2445 = vadd.f32 %v2381, 1.0
        %v2446 = vadd.f32 %v2382, 1.0
        %v2447 = vadd.f32 %v2383, 1.0
        %v2448 = vadd.f32 %v2384, 1.0
        %v2449 = vadd.f32 %v2385, 1.0
        %v2450 = vadd.f32 %v2386, 1.0
        %v2451 = vadd.f32 %v2387, 1.0
        %v2452 = vadd.f32 %v2388, 1.0
        %v2453 = vadd.f32 %v2389, 1.0
        %v2454 = vadd.f32 %v2390, 1.0
        %v2455 = vadd.f32 %v2391, 1.0
        %v2456 = vadd.f32 %v2392, 1.0
        %v2457 = vadd.f32 %v2393, 1.0
        %v2458 = vadd.f32 %v2394, 1.0
        %v2459 = vadd.f32 %v2395, 1.0
        %v2460 = vadd.f32 %v2396, 1.0
        %v2461 = vadd.f32 %v2397, 1.0
        %v2462 = vadd.f32 %v2398, 1.0
        %v2463 = vadd.f32 %v2399, 1.0
        %v2464 = vadd.f32 %v2400, 1.0
        %v2465 = vadd.f32 %v2401, 1.0
        %v2466 = vadd.f32 %v2402, 1.0
        %v2467 = vadd.f32 %v2403, 1.0
        %v2468 = vadd.f32 %v2404, 1.0
        %v2469 = vadd.f32 %v2405, 1.0
        %v2470 = vadd.f32 %v2406, 1.0
        %v2471 = vadd.f32 %v2407, 1.0
        %v2472 = vadd.f32 %v2408, 1.0
        %v2473 = vadd.f32 %v2409, 1.0
        %v2474 = vadd.f32 %v2410, 1.0
        %v2475 = vadd.f32 %v2411, 1.0
        %v2476 = vadd.f32 %v2412, 1.0
        %v2477 = vadd.f32 %v2413, 1.0
        %v2478 = vadd.f32 %v2414, 1.0
        %v2479 = vadd.f32 %v2415, 1.0
        %v2480 = vadd.f32 %v2416, 1.0
        %v2481 = vadd.f32 %v2417, 1.0
        %v2482 = vadd.f32 %v2418, 1.0
        %v2483 = vadd.f32 %v2419, 1.0
        %v2484 = vadd.f32 %v2420, 1.0
        %v2485 = vadd.f32 %v2421, 1.0
        %v2486 = vadd.f32 %v2422, 1.0
        %v2487 = vadd.f32 %v2423, 1.0
        %v2488 = vadd.f32 %v2424, 1.0
        %v2489 = vadd.f32 %v2425, 1.0
        %v2490 = vadd.f32 %v2426, 1.0
        %v2491 = vadd.f32 %v2427, 1.0
        %v2492 = vadd.f32 %v2428, 1.0
        %v2493 = vadd.f32 %v2429, 1.0
        %v2494 = vadd.f32 %v2430, 1.0
        %v2495 = vadd.f32 %v2431, 1.0
        %v2496 = vadd.f32 %v2432, 1.0
        %v2497 = vadd.f32 %v2433, 1.0
        %v2498 = vadd.f32 %v2434, 1.0
        %v2499 = vadd.f32 %v2435, 1.0
        %v2500 = vadd.f32 %v2436, 1.0
        %v2501 = vadd.f32 %v2437, 1.0
        %v2502 = vpack.c.bf16 %v2439, %v2438
        %v2503 = vpack.c.bf16 %v2441, %v2440
        %v2504 = vpack.c.bf16 %v2443, %v2442
        %v2505 = vpack.c.bf16 %v2445, %v2444
        %v2506 = vpack.c.bf16 %v2447, %v2446
        %v2507 = vpack.c.bf16 %v2449, %v2448
        %v2508 = vpack.c.bf16 %v2451, %v2450
        %v2509 = vpack.c.bf16 %v2453, %v2452
        %v2510 = vpack.c.bf16 %v2455, %v2454
        %v2511 = vpack.c.bf16 %v2457, %v2456
        %v2512 = vpack.c.bf16 %v2459, %v2458
        %v2513 = vpack.c.bf16 %v2461, %v2460
        %v2514 = vpack.c.bf16 %v2463, %v2462
        %v2515 = vpack.c.bf16 %v2465, %v2464
        %v2516 = vpack.c.bf16 %v2467, %v2466
        %v2517 = vpack.c.bf16 %v2469, %v2468
        %v2518 = vpack.c.bf16 %v2471, %v2470
        %v2519 = vpack.c.bf16 %v2473, %v2472
        %v2520 = vpack.c.bf16 %v2475, %v2474
        %v2521 = vpack.c.bf16 %v2477, %v2476
        %v2522 = vpack.c.bf16 %v2479, %v2478
        %v2523 = vpack.c.bf16 %v2481, %v2480
        %v2524 = vpack.c.bf16 %v2483, %v2482
        %v2525 = vpack.c.bf16 %v2485, %v2484
        %v2526 = vpack.c.bf16 %v2487, %v2486
        %v2527 = vpack.c.bf16 %v2489, %v2488
        %v2528 = vpack.c.bf16 %v2491, %v2490
        %v2529 = vpack.c.bf16 %v2493, %v2492
        %v2530 = vpack.c.bf16 %v2495, %v2494
        %v2531 = vpack.c.bf16 %v2497, %v2496
        %v2532 = vpack.c.bf16 %v2499, %v2498
        %v2533 = vpack.c.bf16 %v2501, %v2500
        %v2534 = vunpack.c.l.bf16 %v2502
        %v2535 = vunpack.c.h.bf16 %v2502
        %v2536 = vunpack.c.l.bf16 %v2503
        %v2537 = vunpack.c.h.bf16 %v2503
        %v2538 = vunpack.c.l.bf16 %v2504
        %v2539 = vunpack.c.h.bf16 %v2504
        %v2540 = vunpack.c.l.bf16 %v2505
        %v2541 = vunpack.c.h.bf16 %v2505
        %v2542 = vunpack.c.l.bf16 %v2506
        %v2543 = vunpack.c.h.bf16 %v2506
        %v2544 = vunpack.c.l.bf16 %v2507
        %v2545 = vunpack.c.h.bf16 %v2507
        %v2546 = vunpack.c.l.bf16 %v2508
        %v2547 = vunpack.c.h.bf16 %v2508
        %v2548 = vunpack.c.l.bf16 %v2509
        %v2549 = vunpack.c.h.bf16 %v2509
        %v2550 = vunpack.c.l.bf16 %v2510
        %v2551 = vunpack.c.h.bf16 %v2510
        %v2552 = vunpack.c.l.bf16 %v2511
        %v2553 = vunpack.c.h.bf16 %v2511
        %v2554 = vunpack.c.l.bf16 %v2512
        %v2555 = vunpack.c.h.bf16 %v2512
        %v2556 = vunpack.c.l.bf16 %v2513
        %v2557 = vunpack.c.h.bf16 %v2513
        %v2558 = vunpack.c.l.bf16 %v2514
        %v2559 = vunpack.c.h.bf16 %v2514
        %v2560 = vunpack.c.l.bf16 %v2515
        %v2561 = vunpack.c.h.bf16 %v2515
        %v2562 = vunpack.c.l.bf16 %v2516
        %v2563 = vunpack.c.h.bf16 %v2516
        %v2564 = vunpack.c.l.bf16 %v2517
        %v2565 = vunpack.c.h.bf16 %v2517
        %v2566 = vunpack.c.l.bf16 %v2518
        %v2567 = vunpack.c.h.bf16 %v2518
        %v2568 = vunpack.c.l.bf16 %v2519
        %v2569 = vunpack.c.h.bf16 %v2519
        %v2570 = vunpack.c.l.bf16 %v2520
        %v2571 = vunpack.c.h.bf16 %v2520
        %v2572 = vunpack.c.l.bf16 %v2521
        %v2573 = vunpack.c.h.bf16 %v2521
        %v2574 = vunpack.c.l.bf16 %v2522
        %v2575 = vunpack.c.h.bf16 %v2522
        %v2576 = vunpack.c.l.bf16 %v2523
        %v2577 = vunpack.c.h.bf16 %v2523
        %v2578 = vunpack.c.l.bf16 %v2524
        %v2579 = vunpack.c.h.bf16 %v2524
        %v2580 = vunpack.c.l.bf16 %v2525
        %v2581 = vunpack.c.h.bf16 %v2525
        %v2582 = vunpack.c.l.bf16 %v2526
        %v2583 = vunpack.c.h.bf16 %v2526
        %v2584 = vunpack.c.l.bf16 %v2527
        %v2585 = vunpack.c.h.bf16 %v2527
        %v2586 = vunpack.c.l.bf16 %v2528
        %v2587 = vunpack.c.h.bf16 %v2528
        %v2588 = vunpack.c.l.bf16 %v2529
        %v2589 = vunpack.c.h.bf16 %v2529
        %v2590 = vunpack.c.l.bf16 %v2530
        %v2591 = vunpack.c.h.bf16 %v2530
        %v2592 = vunpack.c.l.bf16 %v2531
        %v2593 = vunpack.c.h.bf16 %v2531
        %v2594 = vunpack.c.l.bf16 %v2532
        %v2595 = vunpack.c.h.bf16 %v2532
        %v2596 = vunpack.c.l.bf16 %v2533
        %v2597 = vunpack.c.h.bf16 %v2533
        %v2598 = vmul.f32 %v2534, 0.5
        %v2599 = vmul.f32 %v2535, 0.5
        %v2600 = vmul.f32 %v2536, 0.5
        %v2601 = vmul.f32 %v2537, 0.5
        %v2602 = vmul.f32 %v2538, 0.5
        %v2603 = vmul.f32 %v2539, 0.5
        %v2604 = vmul.f32 %v2540, 0.5
        %v2605 = vmul.f32 %v2541, 0.5
        %v2606 = vmul.f32 %v2542, 0.5
        %v2607 = vmul.f32 %v2543, 0.5
        %v2608 = vmul.f32 %v2544, 0.5
        %v2609 = vmul.f32 %v2545, 0.5
        %v2610 = vmul.f32 %v2546, 0.5
        %v2611 = vmul.f32 %v2547, 0.5
        %v2612 = vmul.f32 %v2548, 0.5
        %v2613 = vmul.f32 %v2549, 0.5
        %v2614 = vmul.f32 %v2550, 0.5
        %v2615 = vmul.f32 %v2551, 0.5
        %v2616 = vmul.f32 %v2552, 0.5
        %v2617 = vmul.f32 %v2553, 0.5
        %v2618 = vmul.f32 %v2554, 0.5
        %v2619 = vmul.f32 %v2555, 0.5
        %v2620 = vmul.f32 %v2556, 0.5
        %v2621 = vmul.f32 %v2557, 0.5
        %v2622 = vmul.f32 %v2558, 0.5
        %v2623 = vmul.f32 %v2559, 0.5
        %v2624 = vmul.f32 %v2560, 0.5
        %v2625 = vmul.f32 %v2561, 0.5
        %v2626 = vmul.f32 %v2562, 0.5
        %v2627 = vmul.f32 %v2563, 0.5
        %v2628 = vmul.f32 %v2564, 0.5
        %v2629 = vmul.f32 %v2565, 0.5
        %v2630 = vmul.f32 %v2566, 0.5
        %v2631 = vmul.f32 %v2567, 0.5
        %v2632 = vmul.f32 %v2568, 0.5
        %v2633 = vmul.f32 %v2569, 0.5
        %v2634 = vmul.f32 %v2570, 0.5
        %v2635 = vmul.f32 %v2571, 0.5
        %v2636 = vmul.f32 %v2572, 0.5
        %v2637 = vmul.f32 %v2573, 0.5
        %v2638 = vmul.f32 %v2574, 0.5
        %v2639 = vmul.f32 %v2575, 0.5
        %v2640 = vmul.f32 %v2576, 0.5
        %v2641 = vmul.f32 %v2577, 0.5
        %v2642 = vmul.f32 %v2578, 0.5
        %v2643 = vmul.f32 %v2579, 0.5
        %v2644 = vmul.f32 %v2580, 0.5
        %v2645 = vmul.f32 %v2581, 0.5
        %v2646 = vmul.f32 %v2582, 0.5
        %v2647 = vmul.f32 %v2583, 0.5
        %v2648 = vmul.f32 %v2584, 0.5
        %v2649 = vmul.f32 %v2585, 0.5
        %v2650 = vmul.f32 %v2586, 0.5
        %v2651 = vmul.f32 %v2587, 0.5
        %v2652 = vmul.f32 %v2588, 0.5
        %v2653 = vmul.f32 %v2589, 0.5
        %v2654 = vmul.f32 %v2590, 0.5
        %v2655 = vmul.f32 %v2591, 0.5
        %v2656 = vmul.f32 %v2592, 0.5
        %v2657 = vmul.f32 %v2593, 0.5
        %v2658 = vmul.f32 %v2594, 0.5
        %v2659 = vmul.f32 %v2595, 0.5
        %v2660 = vmul.f32 %v2596, 0.5
        %v2661 = vmul.f32 %v2597, 0.5
        %v2662 = vpack.c.bf16 %v2599, %v2598
        %v2663 = vpack.c.bf16 %v2601, %v2600
        %v2664 = vpack.c.bf16 %v2603, %v2602
        %v2665 = vpack.c.bf16 %v2605, %v2604
        %v2666 = vpack.c.bf16 %v2607, %v2606
        %v2667 = vpack.c.bf16 %v2609, %v2608
        %v2668 = vpack.c.bf16 %v2611, %v2610
        %v2669 = vpack.c.bf16 %v2613, %v2612
        %v2670 = vpack.c.bf16 %v2615, %v2614
        %v2671 = vpack.c.bf16 %v2617, %v2616
        %v2672 = vpack.c.bf16 %v2619, %v2618
        %v2673 = vpack.c.bf16 %v2621, %v2620
        %v2674 = vpack.c.bf16 %v2623, %v2622
        %v2675 = vpack.c.bf16 %v2625, %v2624
        %v2676 = vpack.c.bf16 %v2627, %v2626
        %v2677 = vpack.c.bf16 %v2629, %v2628
        %v2678 = vpack.c.bf16 %v2631, %v2630
        %v2679 = vpack.c.bf16 %v2633, %v2632
        %v2680 = vpack.c.bf16 %v2635, %v2634
        %v2681 = vpack.c.bf16 %v2637, %v2636
        %v2682 = vpack.c.bf16 %v2639, %v2638
        %v2683 = vpack.c.bf16 %v2641, %v2640
        %v2684 = vpack.c.bf16 %v2643, %v2642
        %v2685 = vpack.c.bf16 %v2645, %v2644
        %v2686 = vpack.c.bf16 %v2647, %v2646
        %v2687 = vpack.c.bf16 %v2649, %v2648
        %v2688 = vpack.c.bf16 %v2651, %v2650
        %v2689 = vpack.c.bf16 %v2653, %v2652
        %v2690 = vpack.c.bf16 %v2655, %v2654
        %v2691 = vpack.c.bf16 %v2657, %v2656
        %v2692 = vpack.c.bf16 %v2659, %v2658
        %v2693 = vpack.c.bf16 %v2661, %v2660
        %v2694 = vunpack.c.l.bf16 %v2662
        %v2695 = vunpack.c.h.bf16 %v2662
        %v2696 = vunpack.c.l.bf16 %v2663
        %v2697 = vunpack.c.h.bf16 %v2663
        %v2698 = vunpack.c.l.bf16 %v2664
        %v2699 = vunpack.c.h.bf16 %v2664
        %v2700 = vunpack.c.l.bf16 %v2665
        %v2701 = vunpack.c.h.bf16 %v2665
        %v2702 = vunpack.c.l.bf16 %v2666
        %v2703 = vunpack.c.h.bf16 %v2666
        %v2704 = vunpack.c.l.bf16 %v2667
        %v2705 = vunpack.c.h.bf16 %v2667
        %v2706 = vunpack.c.l.bf16 %v2668
        %v2707 = vunpack.c.h.bf16 %v2668
        %v2708 = vunpack.c.l.bf16 %v2669
        %v2709 = vunpack.c.h.bf16 %v2669
        %v2710 = vunpack.c.l.bf16 %v2670
        %v2711 = vunpack.c.h.bf16 %v2670
        %v2712 = vunpack.c.l.bf16 %v2671
        %v2713 = vunpack.c.h.bf16 %v2671
        %v2714 = vunpack.c.l.bf16 %v2672
        %v2715 = vunpack.c.h.bf16 %v2672
        %v2716 = vunpack.c.l.bf16 %v2673
        %v2717 = vunpack.c.h.bf16 %v2673
        %v2718 = vunpack.c.l.bf16 %v2674
        %v2719 = vunpack.c.h.bf16 %v2674
        %v2720 = vunpack.c.l.bf16 %v2675
        %v2721 = vunpack.c.h.bf16 %v2675
        %v2722 = vunpack.c.l.bf16 %v2676
        %v2723 = vunpack.c.h.bf16 %v2676
        %v2724 = vunpack.c.l.bf16 %v2677
        %v2725 = vunpack.c.h.bf16 %v2677
        %v2726 = vunpack.c.l.bf16 %v2678
        %v2727 = vunpack.c.h.bf16 %v2678
        %v2728 = vunpack.c.l.bf16 %v2679
        %v2729 = vunpack.c.h.bf16 %v2679
        %v2730 = vunpack.c.l.bf16 %v2680
        %v2731 = vunpack.c.h.bf16 %v2680
        %v2732 = vunpack.c.l.bf16 %v2681
        %v2733 = vunpack.c.h.bf16 %v2681
        %v2734 = vunpack.c.l.bf16 %v2682
        %v2735 = vunpack.c.h.bf16 %v2682
        %v2736 = vunpack.c.l.bf16 %v2683
        %v2737 = vunpack.c.h.bf16 %v2683
        %v2738 = vunpack.c.l.bf16 %v2684
        %v2739 = vunpack.c.h.bf16 %v2684
        %v2740 = vunpack.c.l.bf16 %v2685
        %v2741 = vunpack.c.h.bf16 %v2685
        %v2742 = vunpack.c.l.bf16 %v2686
        %v2743 = vunpack.c.h.bf16 %v2686
        %v2744 = vunpack.c.l.bf16 %v2687
        %v2745 = vunpack.c.h.bf16 %v2687
        %v2746 = vunpack.c.l.bf16 %v2688
        %v2747 = vunpack.c.h.bf16 %v2688
        %v2748 = vunpack.c.l.bf16 %v2689
        %v2749 = vunpack.c.h.bf16 %v2689
        %v2750 = vunpack.c.l.bf16 %v2690
        %v2751 = vunpack.c.h.bf16 %v2690
        %v2752 = vunpack.c.l.bf16 %v2691
        %v2753 = vunpack.c.h.bf16 %v2691
        %v2754 = vunpack.c.l.bf16 %v2692
        %v2755 = vunpack.c.h.bf16 %v2692
        %v2756 = vunpack.c.l.bf16 %v2693
        %v2757 = vunpack.c.h.bf16 %v2693
        %v2758 = vmul.f32 %v1414, %v2694
        %v2759 = vmul.f32 %v1415, %v2695
        %v2760 = vmul.f32 %v1416, %v2696
        %v2761 = vmul.f32 %v1417, %v2697
        %v2762 = vmul.f32 %v1418, %v2698
        %v2763 = vmul.f32 %v1419, %v2699
        %v2764 = vmul.f32 %v1420, %v2700
        %v2765 = vmul.f32 %v1421, %v2701
        %v2766 = vmul.f32 %v1422, %v2702
        %v2767 = vmul.f32 %v1423, %v2703
        %v2768 = vmul.f32 %v1424, %v2704
        %v2769 = vmul.f32 %v1425, %v2705
        %v2770 = vmul.f32 %v1426, %v2706
        %v2771 = vmul.f32 %v1427, %v2707
        %v2772 = vmul.f32 %v1428, %v2708
        %v2773 = vmul.f32 %v1429, %v2709
        %v2774 = vmul.f32 %v1430, %v2710
        %v2775 = vmul.f32 %v1431, %v2711
        %v2776 = vmul.f32 %v1432, %v2712
        %v2777 = vmul.f32 %v1433, %v2713
        %v2778 = vmul.f32 %v1434, %v2714
        %v2779 = vmul.f32 %v1435, %v2715
        %v2780 = vmul.f32 %v1436, %v2716
        %v2781 = vmul.f32 %v1437, %v2717
        %v2782 = vmul.f32 %v1438, %v2718
        %v2783 = vmul.f32 %v1439, %v2719
        %v2784 = vmul.f32 %v1440, %v2720
        %v2785 = vmul.f32 %v1441, %v2721
        %v2786 = vmul.f32 %v1442, %v2722
        %v2787 = vmul.f32 %v1443, %v2723
        %v2788 = vmul.f32 %v1444, %v2724
        %v2789 = vmul.f32 %v1445, %v2725
        %v2790 = vmul.f32 %v1446, %v2726
        %v2791 = vmul.f32 %v1447, %v2727
        %v2792 = vmul.f32 %v1448, %v2728
        %v2793 = vmul.f32 %v1449, %v2729
        %v2794 = vmul.f32 %v1450, %v2730
        %v2795 = vmul.f32 %v1451, %v2731
        %v2796 = vmul.f32 %v1452, %v2732
        %v2797 = vmul.f32 %v1453, %v2733
        %v2798 = vmul.f32 %v1454, %v2734
        %v2799 = vmul.f32 %v1455, %v2735
        %v2800 = vmul.f32 %v1456, %v2736
        %v2801 = vmul.f32 %v1457, %v2737
        %v2802 = vmul.f32 %v1458, %v2738
        %v2803 = vmul.f32 %v1459, %v2739
        %v2804 = vmul.f32 %v1460, %v2740
        %v2805 = vmul.f32 %v1461, %v2741
        %v2806 = vmul.f32 %v1462, %v2742
        %v2807 = vmul.f32 %v1463, %v2743
        %v2808 = vmul.f32 %v1464, %v2744
        %v2809 = vmul.f32 %v1465, %v2745
        %v2810 = vmul.f32 %v1466, %v2746
        %v2811 = vmul.f32 %v1467, %v2747
        %v2812 = vmul.f32 %v1468, %v2748
        %v2813 = vmul.f32 %v1469, %v2749
        %v2814 = vmul.f32 %v1470, %v2750
        %v2815 = vmul.f32 %v1471, %v2751
        %v2816 = vmul.f32 %v1472, %v2752
        %v2817 = vmul.f32 %v1473, %v2753
        %v2818 = vmul.f32 %v1474, %v2754
        %v2819 = vmul.f32 %v1475, %v2755
        %v2820 = vmul.f32 %v1476, %v2756
        %v2821 = vmul.f32 %v1477, %v2757
        %v2822 = vpack.c.bf16 %v2760, %v2758
        %v2823 = vpack.c.bf16 %v2761, %v2759
        %v2824 = vpack.c.bf16 %v2764, %v2762
        %v2825 = vpack.c.bf16 %v2765, %v2763
        %v2826 = vpack.c.bf16 %v2768, %v2766
        %v2827 = vpack.c.bf16 %v2769, %v2767
        %v2828 = vpack.c.bf16 %v2772, %v2770
        %v2829 = vpack.c.bf16 %v2773, %v2771
        %v2830 = vpack.c.bf16 %v2776, %v2774
        %v2831 = vpack.c.bf16 %v2777, %v2775
        %v2832 = vpack.c.bf16 %v2780, %v2778
        %v2833 = vpack.c.bf16 %v2781, %v2779
        %v2834 = vpack.c.bf16 %v2784, %v2782
        %v2835 = vpack.c.bf16 %v2785, %v2783
        %v2836 = vpack.c.bf16 %v2788, %v2786
        %v2837 = vpack.c.bf16 %v2789, %v2787
        %v2838 = vpack.c.bf16 %v2792, %v2790
        %v2839 = vpack.c.bf16 %v2793, %v2791
        %v2840 = vpack.c.bf16 %v2796, %v2794
        %v2841 = vpack.c.bf16 %v2797, %v2795
        %v2842 = vpack.c.bf16 %v2800, %v2798
        %v2843 = vpack.c.bf16 %v2801, %v2799
        %v2844 = vpack.c.bf16 %v2804, %v2802
        %v2845 = vpack.c.bf16 %v2805, %v2803
        %v2846 = vpack.c.bf16 %v2808, %v2806
        %v2847 = vpack.c.bf16 %v2809, %v2807
        %v2848 = vpack.c.bf16 %v2812, %v2810
        %v2849 = vpack.c.bf16 %v2813, %v2811
        %v2850 = vpack.c.bf16 %v2816, %v2814
        %v2851 = vpack.c.bf16 %v2817, %v2815
        %v2852 = vpack.c.bf16 %v2820, %v2818
        %v2853 = vpack.c.bf16 %v2821, %v2819
        %v2854 = vld [vmem:[#allocation2] sm:$0xff]
        %v2855 = vld [vmem:[#allocation2 + $0x8] sm:$0xff]
        %v2856 = vld [vmem:[#allocation2 + $0x10] sm:$0xff]
        %v2857 = vld [vmem:[#allocation2 + $0x18] sm:$0xff]
        %v2858 = vld [vmem:[#allocation2 + $0x20] sm:$0xff]
        %v2859 = vld [vmem:[#allocation2 + $0x28] sm:$0xff]
        %v2860 = vld [vmem:[#allocation2 + $0x30] sm:$0xff]
        %v2861 = vld [vmem:[#allocation2 + $0x38] sm:$0xff]
        %v2862 = vld [vmem:[#allocation2 + $0x40] sm:$0xff]
        %v2863 = vld [vmem:[#allocation2 + $0x48] sm:$0xff]
        %v2864 = vld [vmem:[#allocation2 + $0x50] sm:$0xff]
        %v2865 = vld [vmem:[#allocation2 + $0x58] sm:$0xff]
        %v2866 = vld [vmem:[#allocation2 + $0x60] sm:$0xff]
        %v2867 = vld [vmem:[#allocation2 + $0x68] sm:$0xff]
        %v2868 = vld [vmem:[#allocation2 + $0x70] sm:$0xff]
        %v2869 = vld [vmem:[#allocation2 + $0x78] sm:$0xff]
        %v2886 = vunpack.c.l.b16 %v2854
        %v2887 = vunpack.c.h.b16 %v2854
        %v2888 = vunpack.c.l.b16 %v2855
        %v2889 = vunpack.c.h.b16 %v2855
        %v2890 = vunpack.c.l.b16 %v2856
        %v2891 = vunpack.c.h.b16 %v2856
        %v2892 = vunpack.c.l.b16 %v2857
        %v2893 = vunpack.c.h.b16 %v2857
        %v2894 = vunpack.c.l.b16 %v2858
        %v2895 = vunpack.c.h.b16 %v2858
        %v2896 = vunpack.c.l.b16 %v2859
        %v2897 = vunpack.c.h.b16 %v2859
        %v2898 = vunpack.c.l.b16 %v2860
        %v2899 = vunpack.c.h.b16 %v2860
        %v2900 = vunpack.c.l.b16 %v2861
        %v2901 = vunpack.c.h.b16 %v2861
        %v2902 = vunpack.c.l.b16 %v2862
        %v2903 = vunpack.c.h.b16 %v2862
        %v2904 = vunpack.c.l.b16 %v2863
        %v2905 = vunpack.c.h.b16 %v2863
        %v2906 = vunpack.c.l.b16 %v2864
        %v2907 = vunpack.c.h.b16 %v2864
        %v2908 = vunpack.c.l.b16 %v2865
        %v2909 = vunpack.c.h.b16 %v2865
        %v2910 = vunpack.c.l.b16 %v2866
        %v2911 = vunpack.c.h.b16 %v2866
        %v2912 = vunpack.c.l.b16 %v2867
        %v2913 = vunpack.c.h.b16 %v2867
        %v2914 = vunpack.c.l.b16 %v2868
        %v2915 = vunpack.c.h.b16 %v2868
        %v2916 = vunpack.c.l.b16 %v2869
        %v2917 = vunpack.c.h.b16 %v2869
        %v2918 = vpack.c.b16 %v2888, %v2886
        %v2919 = vpack.c.b16 %v2889, %v2887
        %v2920 = vpack.c.b16 %v2892, %v2890
        %v2921 = vpack.c.b16 %v2893, %v2891
        %v2922 = vpack.c.b16 %v2896, %v2894
        %v2923 = vpack.c.b16 %v2897, %v2895
        %v2924 = vpack.c.b16 %v2900, %v2898
        %v2925 = vpack.c.b16 %v2901, %v2899
        %v2926 = vpack.c.b16 %v2904, %v2902
        %v2927 = vpack.c.b16 %v2905, %v2903
        %v2928 = vpack.c.b16 %v2908, %v2906
        %v2929 = vpack.c.b16 %v2909, %v2907
        %v2930 = vpack.c.b16 %v2912, %v2910
        %v2931 = vpack.c.b16 %v2913, %v2911
        %v2932 = vpack.c.b16 %v2916, %v2914
        %v2933 = vpack.c.b16 %v2917, %v2915
        %2950 = vmatpush.bf16.msra.mxu0 %v2836
        %2951 = vmatpush.bf16.msra.mxu0 %v2834
        %2952 = vmatpush.bf16.msra.mxu0 %v2832
        %2953 = vmatpush.bf16.msra.mxu0 %v2830
        %2954 = vmatpush.bf16.msra.mxu0 %v2828
        %2955 = vmatpush.bf16.msra.mxu0 %v2826
        %2956 = vmatpush.bf16.msra.mxu0 %v2824
        %2957 = vmatpush.bf16.msra.mxu0 %v2822
        %2958 = vmatmul.bf16.gmra.mxu0 %v2918
        %v2959 = vpop.f32.mrf.mxu0
        %v2960 = vadd.f32 0.0, %v2959
        %v2961 = vpop.f32.mrf.mxu0
        %v2962 = vadd.f32 0.0, %v2961
        %2963 = vmatmul.bf16.gmra.mxu0 %v2920
        %v2964 = vpop.f32.mrf.mxu0
        %v2965 = vadd.f32 0.0, %v2964
        %v2966 = vpop.f32.mrf.mxu0
        %v2967 = vadd.f32 0.0, %v2966
        %2968 = vmatmul.bf16.gmra.mxu0 %v2922
        %v2969 = vpop.f32.mrf.mxu0
        %v2970 = vadd.f32 0.0, %v2969
        %v2971 = vpop.f32.mrf.mxu0
        %v2972 = vadd.f32 0.0, %v2971
        %2973 = vmatmul.bf16.gmra.mxu0 %v2924
        %v2974 = vpop.f32.mrf.mxu0
        %v2975 = vadd.f32 0.0, %v2974
        %v2976 = vpop.f32.mrf.mxu0
        %v2977 = vadd.f32 0.0, %v2976
        %2978 = vmatmul.bf16.gmra.mxu0 %v2926
        %v2979 = vpop.f32.mrf.mxu0
        %v2980 = vadd.f32 0.0, %v2979
        %v2981 = vpop.f32.mrf.mxu0
        %v2982 = vadd.f32 0.0, %v2981
        %2983 = vmatmul.bf16.gmra.mxu0 %v2928
        %v2984 = vpop.f32.mrf.mxu0
        %v2985 = vadd.f32 0.0, %v2984
        %v2986 = vpop.f32.mrf.mxu0
        %v2987 = vadd.f32 0.0, %v2986
        %2988 = vmatmul.bf16.gmra.mxu0 %v2930
        %v2989 = vpop.f32.mrf.mxu0
        %v2990 = vadd.f32 0.0, %v2989
        %v2991 = vpop.f32.mrf.mxu0
        %v2992 = vadd.f32 0.0, %v2991
        %2993 = vmatmul.bf16.gmra.mxu0 %v2932
        %v2994 = vpop.f32.mrf.mxu0
        %v2995 = vadd.f32 0.0, %v2994
        %v2996 = vpop.f32.mrf.mxu0
        %v2997 = vadd.f32 0.0, %v2996
        %2998 = vdwg.mxu0
        %2999 = vmatpush.bf16.msra.mxu0 %v2852
        %3000 = vmatpush.bf16.msra.mxu0 %v2850
        %3001 = vmatpush.bf16.msra.mxu0 %v2848
        %3002 = vmatpush.bf16.msra.mxu0 %v2846
        %3003 = vmatpush.bf16.msra.mxu0 %v2844
        %3004 = vmatpush.bf16.msra.mxu0 %v2842
        %3005 = vmatpush.bf16.msra.mxu0 %v2840
        %3006 = vmatpush.bf16.msra.mxu0 %v2838
        %3007 = vmatmul.bf16.gmra.mxu0 %v2919
        %v3008 = vpop.f32.mrf.mxu0
        %v3009 = vadd.f32 %v2960, %v3008
        %v3010 = vpop.f32.mrf.mxu0
        %v3011 = vadd.f32 %v2962, %v3010
        %3012 = vmatmul.bf16.gmra.mxu0 %v2921
        %v3013 = vpop.f32.mrf.mxu0
        %v3014 = vadd.f32 %v2965, %v3013
        %v3015 = vpop.f32.mrf.mxu0
        %v3016 = vadd.f32 %v2967, %v3015
        %3017 = vmatmul.bf16.gmra.mxu0 %v2923
        %v3018 = vpop.f32.mrf.mxu0
        %v3019 = vadd.f32 %v2970, %v3018
        %v3020 = vpop.f32.mrf.mxu0
        %v3021 = vadd.f32 %v2972, %v3020
        %3022 = vmatmul.bf16.gmra.mxu0 %v2925
        %v3023 = vpop.f32.mrf.mxu0
        %v3024 = vadd.f32 %v2975, %v3023
        %v3025 = vpop.f32.mrf.mxu0
        %v3026 = vadd.f32 %v2977, %v3025
        %3027 = vmatmul.bf16.gmra.mxu0 %v2927
        %v3028 = vpop.f32.mrf.mxu0
        %v3029 = vadd.f32 %v2980, %v3028
        %v3030 = vpop.f32.mrf.mxu0
        %v3031 = vadd.f32 %v2982, %v3030
        %3032 = vmatmul.bf16.gmra.mxu0 %v2929
        %v3033 = vpop.f32.mrf.mxu0
        %v3034 = vadd.f32 %v2985, %v3033
        %v3035 = vpop.f32.mrf.mxu0
        %v3036 = vadd.f32 %v2987, %v3035
        %3037 = vmatmul.bf16.gmra.mxu0 %v2931
        %v3038 = vpop.f32.mrf.mxu0
        %v3039 = vadd.f32 %v2990, %v3038
        %v3040 = vpop.f32.mrf.mxu0
        %v3041 = vadd.f32 %v2992, %v3040
        %3042 = vmatmul.bf16.gmra.mxu0 %v2933
        %v3043 = vpop.f32.mrf.mxu0
        %v3044 = vadd.f32 %v2995, %v3043
        %v3045 = vpop.f32.mrf.mxu0
        %v3046 = vadd.f32 %v2997, %v3045
        %3047 = vdwg.mxu0
        %3048 = vmatpush.bf16.msra.mxu0 %v2837
        %3049 = vmatpush.bf16.msra.mxu0 %v2835
        %3050 = vmatpush.bf16.msra.mxu0 %v2833
        %3051 = vmatpush.bf16.msra.mxu0 %v2831
        %3052 = vmatpush.bf16.msra.mxu0 %v2829
        %3053 = vmatpush.bf16.msra.mxu0 %v2827
        %3054 = vmatpush.bf16.msra.mxu0 %v2825
        %3055 = vmatpush.bf16.msra.mxu0 %v2823
        %3056 = vmatmul.bf16.gmra.mxu0 %v2918
        %v3057 = vpop.f32.mrf.mxu0
        %v3058 = vadd.f32 0.0, %v3057
        %v3059 = vpop.f32.mrf.mxu0
        %v3060 = vadd.f32 0.0, %v3059
        %3061 = vmatmul.bf16.gmra.mxu0 %v2920
        %v3062 = vpop.f32.mrf.mxu0
        %v3063 = vadd.f32 0.0, %v3062
        %v3064 = vpop.f32.mrf.mxu0
        %v3065 = vadd.f32 0.0, %v3064
        %3066 = vmatmul.bf16.gmra.mxu0 %v2922
        %v3067 = vpop.f32.mrf.mxu0
        %v3068 = vadd.f32 0.0, %v3067
        %v3069 = vpop.f32.mrf.mxu0
        %v3070 = vadd.f32 0.0, %v3069
        %3071 = vmatmul.bf16.gmra.mxu0 %v2924
        %v3072 = vpop.f32.mrf.mxu0
        %v3073 = vadd.f32 0.0, %v3072
        %v3074 = vpop.f32.mrf.mxu0
        %v3075 = vadd.f32 0.0, %v3074
        %3076 = vmatmul.bf16.gmra.mxu0 %v2926
        %v3077 = vpop.f32.mrf.mxu0
        %v3078 = vadd.f32 0.0, %v3077
        %v3079 = vpop.f32.mrf.mxu0
        %v3080 = vadd.f32 0.0, %v3079
        %3081 = vmatmul.bf16.gmra.mxu0 %v2928
        %v3082 = vpop.f32.mrf.mxu0
        %v3083 = vadd.f32 0.0, %v3082
        %v3084 = vpop.f32.mrf.mxu0
        %v3085 = vadd.f32 0.0, %v3084
        %3086 = vmatmul.bf16.gmra.mxu0 %v2930
        %v3087 = vpop.f32.mrf.mxu0
        %v3088 = vadd.f32 0.0, %v3087
        %v3089 = vpop.f32.mrf.mxu0
        %v3090 = vadd.f32 0.0, %v3089
        %3091 = vmatmul.bf16.gmra.mxu0 %v2932
        %v3092 = vpop.f32.mrf.mxu0
        %v3093 = vadd.f32 0.0, %v3092
        %v3094 = vpop.f32.mrf.mxu0
        %v3095 = vadd.f32 0.0, %v3094
        %3096 = vdwg.mxu0
        %3097 = vmatpush.bf16.msra.mxu0 %v2853
        %3098 = vmatpush.bf16.msra.mxu0 %v2851
        %3099 = vmatpush.bf16.msra.mxu0 %v2849
        %3100 = vmatpush.bf16.msra.mxu0 %v2847
        %3101 = vmatpush.bf16.msra.mxu0 %v2845
        %3102 = vmatpush.bf16.msra.mxu0 %v2843
        %3103 = vmatpush.bf16.msra.mxu0 %v2841
        %3104 = vmatpush.bf16.msra.mxu0 %v2839
        %3105 = vmatmul.bf16.gmra.mxu0 %v2919
        %v3106 = vpop.f32.mrf.mxu0
        %v3107 = vadd.f32 %v3058, %v3106
        %v3108 = vpop.f32.mrf.mxu0
        %v3109 = vadd.f32 %v3060, %v3108
        %3110 = vmatmul.bf16.gmra.mxu0 %v2921
        %v3111 = vpop.f32.mrf.mxu0
        %v3112 = vadd.f32 %v3063, %v3111
        %v3113 = vpop.f32.mrf.mxu0
        %v3114 = vadd.f32 %v3065, %v3113
        %3115 = vmatmul.bf16.gmra.mxu0 %v2923
        %v3116 = vpop.f32.mrf.mxu0
        %v3117 = vadd.f32 %v3068, %v3116
        %v3118 = vpop.f32.mrf.mxu0
        %v3119 = vadd.f32 %v3070, %v3118
        %3120 = vmatmul.bf16.gmra.mxu0 %v2925
        %v3121 = vpop.f32.mrf.mxu0
        %v3122 = vadd.f32 %v3073, %v3121
        %v3123 = vpop.f32.mrf.mxu0
        %v3124 = vadd.f32 %v3075, %v3123
        %3125 = vmatmul.bf16.gmra.mxu0 %v2927
        %v3126 = vpop.f32.mrf.mxu0
        %v3127 = vadd.f32 %v3078, %v3126
        %v3128 = vpop.f32.mrf.mxu0
        %v3129 = vadd.f32 %v3080, %v3128
        %3130 = vmatmul.bf16.gmra.mxu0 %v2929
        %v3131 = vpop.f32.mrf.mxu0
        %v3132 = vadd.f32 %v3083, %v3131
        %v3133 = vpop.f32.mrf.mxu0
        %v3134 = vadd.f32 %v3085, %v3133
        %3135 = vmatmul.bf16.gmra.mxu0 %v2931
        %v3136 = vpop.f32.mrf.mxu0
        %v3137 = vadd.f32 %v3088, %v3136
        %v3138 = vpop.f32.mrf.mxu0
        %v3139 = vadd.f32 %v3090, %v3138
        %3140 = vmatmul.bf16.gmra.mxu0 %v2933
        %v3141 = vpop.f32.mrf.mxu0
        %v3142 = vadd.f32 %v3093, %v3141
        %v3143 = vpop.f32.mrf.mxu0
        %v3144 = vadd.f32 %v3095, %v3143
        %3145 = vdwg.mxu0
        %v3146 = vadd.f32 %v271, %v3009
        %v3147 = vadd.f32 %v272, %v3107
        %v3148 = vadd.f32 %v273, %v3011
        %v3149 = vadd.f32 %v274, %v3109
        %v3150 = vadd.f32 %v275, %v3014
        %v3151 = vadd.f32 %v276, %v3112
        %v3152 = vadd.f32 %v277, %v3016
        %v3153 = vadd.f32 %v278, %v3114
        %v3154 = vadd.f32 %v279, %v3019
        %v3155 = vadd.f32 %v280, %v3117
        %v3156 = vadd.f32 %v281, %v3021
        %v3157 = vadd.f32 %v282, %v3119
        %v3158 = vadd.f32 %v283, %v3024
        %v3159 = vadd.f32 %v284, %v3122
        %v3160 = vadd.f32 %v285, %v3026
        %v3161 = vadd.f32 %v286, %v3124
        %v3162 = vadd.f32 %v287, %v3029
        %v3163 = vadd.f32 %v288, %v3127
        %v3164 = vadd.f32 %v289, %v3031
        %v3165 = vadd.f32 %v290, %v3129
        %v3166 = vadd.f32 %v291, %v3034
        %v3167 = vadd.f32 %v292, %v3132
        %v3168 = vadd.f32 %v293, %v3036
        %v3169 = vadd.f32 %v294, %v3134
        %v3170 = vadd.f32 %v295, %v3039
        %v3171 = vadd.f32 %v296, %v3137
        %v3172 = vadd.f32 %v297, %v3041
        %v3173 = vadd.f32 %v298, %v3139
        %v3174 = vadd.f32 %v299, %v3044
        %v3175 = vadd.f32 %v300, %v3142
        %v3176 = vadd.f32 %v301, %v3046
        %v3177 = vadd.f32 %v302, %v3144
        %v3178 = vld [vmem:[%s4] sm:$0xff]
        %v3179 = vld [vmem:[%s4 + $0x8] sm:$0xff]
        %v3180 = vld [vmem:[%s4 + $0x10] sm:$0xff]
        %v3181 = vld [vmem:[%s4 + $0x18] sm:$0xff]
        %v3182 = vld [vmem:[%s4 + $0x20] sm:$0xff]
        %v3183 = vld [vmem:[%s4 + $0x28] sm:$0xff]
        %v3184 = vld [vmem:[%s4 + $0x30] sm:$0xff]
        %v3185 = vld [vmem:[%s4 + $0x38] sm:$0xff]
        %v3186 = vld [vmem:[%s4 + $0x40] sm:$0xff]
        %v3187 = vld [vmem:[%s4 + $0x48] sm:$0xff]
        %v3188 = vld [vmem:[%s4 + $0x50] sm:$0xff]
        %v3189 = vld [vmem:[%s4 + $0x58] sm:$0xff]
        %v3190 = vld [vmem:[%s4 + $0x60] sm:$0xff]
        %v3191 = vld [vmem:[%s4 + $0x68] sm:$0xff]
        %v3192 = vld [vmem:[%s4 + $0x70] sm:$0xff]
        %v3193 = vld [vmem:[%s4 + $0x78] sm:$0xff]
        %3195 = vset.pattern.permute.xlu0 0
        %3196 = vperm.xlu0 %3195, %v3178
        %v3197 = vpop.permute.xlu0 %3196
        %3200 = vset.pattern.permute.xlu0 0
        %3201 = vperm.xlu0 %3200, %v3179
        %v3202 = vpop.permute.xlu0 %3201
        %3205 = vset.pattern.permute.xlu0 0
        %3206 = vperm.xlu0 %3205, %v3180
        %v3207 = vpop.permute.xlu0 %3206
        %3210 = vset.pattern.permute.xlu0 0
        %3211 = vperm.xlu0 %3210, %v3181
        %v3212 = vpop.permute.xlu0 %3211
        %3215 = vset.pattern.permute.xlu0 0
        %3216 = vperm.xlu0 %3215, %v3182
        %v3217 = vpop.permute.xlu0 %3216
        %3220 = vset.pattern.permute.xlu0 0
        %3221 = vperm.xlu0 %3220, %v3183
        %v3222 = vpop.permute.xlu0 %3221
        %3225 = vset.pattern.permute.xlu0 0
        %3226 = vperm.xlu0 %3225, %v3184
        %v3227 = vpop.permute.xlu0 %3226
        %3230 = vset.pattern.permute.xlu0 0
        %3231 = vperm.xlu0 %3230, %v3185
        %v3232 = vpop.permute.xlu0 %3231
        %3235 = vset.pattern.permute.xlu0 0
        %3236 = vperm.xlu0 %3235, %v3186
        %v3237 = vpop.permute.xlu0 %3236
        %3240 = vset.pattern.permute.xlu0 0
        %3241 = vperm.xlu0 %3240, %v3187
        %v3242 = vpop.permute.xlu0 %3241
        %3245 = vset.pattern.permute.xlu0 0
        %3246 = vperm.xlu0 %3245, %v3188
        %v3247 = vpop.permute.xlu0 %3246
        %3250 = vset.pattern.permute.xlu0 0
        %3251 = vperm.xlu0 %3250, %v3189
        %v3252 = vpop.permute.xlu0 %3251
        %3255 = vset.pattern.permute.xlu0 0
        %3256 = vperm.xlu0 %3255, %v3190
        %v3257 = vpop.permute.xlu0 %3256
        %3260 = vset.pattern.permute.xlu0 0
        %3261 = vperm.xlu0 %3260, %v3191
        %v3262 = vpop.permute.xlu0 %3261
        %3265 = vset.pattern.permute.xlu0 0
        %3266 = vperm.xlu0 %3265, %v3192
        %v3267 = vpop.permute.xlu0 %3266
        %3270 = vset.pattern.permute.xlu0 0
        %3271 = vperm.xlu0 %3270, %v3193
        %v3272 = vpop.permute.xlu0 %3271
        %v3274 = vadd.f32 %v3146, %v3197
        %v3275 = vadd.f32 %v3147, %v3197
        %v3276 = vadd.f32 %v3148, %v3202
        %v3277 = vadd.f32 %v3149, %v3202
        %v3278 = vadd.f32 %v3150, %v3207
        %v3279 = vadd.f32 %v3151, %v3207
        %v3280 = vadd.f32 %v3152, %v3212
        %v3281 = vadd.f32 %v3153, %v3212
        %v3282 = vadd.f32 %v3154, %v3217
        %v3283 = vadd.f32 %v3155, %v3217
        %v3284 = vadd.f32 %v3156, %v3222
        %v3285 = vadd.f32 %v3157, %v3222
        %v3286 = vadd.f32 %v3158, %v3227
        %v3287 = vadd.f32 %v3159, %v3227
        %v3288 = vadd.f32 %v3160, %v3232
        %v3289 = vadd.f32 %v3161, %v3232
        %v3290 = vadd.f32 %v3162, %v3237
        %v3291 = vadd.f32 %v3163, %v3237
        %v3292 = vadd.f32 %v3164, %v3242
        %v3293 = vadd.f32 %v3165, %v3242
        %v3294 = vadd.f32 %v3166, %v3247
        %v3295 = vadd.f32 %v3167, %v3247
        %v3296 = vadd.f32 %v3168, %v3252
        %v3297 = vadd.f32 %v3169, %v3252
        %v3298 = vadd.f32 %v3170, %v3257
        %v3299 = vadd.f32 %v3171, %v3257
        %v3300 = vadd.f32 %v3172, %v3262
        %v3301 = vadd.f32 %v3173, %v3262
        %v3302 = vadd.f32 %v3174, %v3267
        %v3303 = vadd.f32 %v3175, %v3267
        %v3304 = vadd.f32 %v3176, %v3272
        %v3305 = vadd.f32 %v3177, %v3272
        %v3306 = vadd.f32 %v3274, %v3276
        %v3307 = vadd.f32 %v3306, %v3278
        %v3308 = vadd.f32 %v3307, %v3280
        %v3309 = vadd.f32 %v3308, %v3282
        %v3310 = vadd.f32 %v3309, %v3284
        %v3311 = vadd.f32 %v3310, %v3286
        %v3312 = vadd.f32 %v3311, %v3288
        %v3313 = vadd.f32 %v3312, %v3290
        %v3314 = vadd.f32 %v3313, %v3292
        %v3315 = vadd.f32 %v3314, %v3294
        %v3316 = vadd.f32 %v3315, %v3296
        %v3317 = vadd.f32 %v3316, %v3298
        %v3318 = vadd.f32 %v3317, %v3300
        %v3319 = vadd.f32 %v3318, %v3302
        %v3320 = vadd.f32 %v3319, %v3304
        %v3321 = vrot.slane %v3320, 4
        %v3322 = vadd.f32 %v3320, %v3321
        %v3323 = vrot.slane %v3322, 2
        %v3324 = vadd.f32 %v3322, %v3323
        %v3325 = vrot.slane %v3324, 1
        %v3326 = vadd.f32 %v3324, %v3325
        %v3327 = vadd.f32 %v3275, %v3277
        %v3328 = vadd.f32 %v3327, %v3279
        %v3329 = vadd.f32 %v3328, %v3281
        %v3330 = vadd.f32 %v3329, %v3283
        %v3331 = vadd.f32 %v3330, %v3285
        %v3332 = vadd.f32 %v3331, %v3287
        %v3333 = vadd.f32 %v3332, %v3289
        %v3334 = vadd.f32 %v3333, %v3291
        %v3335 = vadd.f32 %v3334, %v3293
        %v3336 = vadd.f32 %v3335, %v3295
        %v3337 = vadd.f32 %v3336, %v3297
        %v3338 = vadd.f32 %v3337, %v3299
        %v3339 = vadd.f32 %v3338, %v3301
        %v3340 = vadd.f32 %v3339, %v3303
        %v3341 = vadd.f32 %v3340, %v3305
        %v3342 = vrot.slane %v3341, 4
        %v3343 = vadd.f32 %v3341, %v3342
        %v3344 = vrot.slane %v3343, 2
        %v3345 = vadd.f32 %v3343, %v3344
        %v3346 = vrot.slane %v3345, 1
        %v3347 = vadd.f32 %v3345, %v3346
        %v3348 = vmul.f32 %v3326, %v351
        %v3349 = vmul.f32 %v3347, %v351
        %v3350 = vsub.f32 %v3274, %v3348
        %v3351 = vsub.f32 %v3275, %v3349
        %v3352 = vsub.f32 %v3276, %v3348
        %v3353 = vsub.f32 %v3277, %v3349
        %v3354 = vsub.f32 %v3278, %v3348
        %v3355 = vsub.f32 %v3279, %v3349
        %v3356 = vsub.f32 %v3280, %v3348
        %v3357 = vsub.f32 %v3281, %v3349
        %v3358 = vsub.f32 %v3282, %v3348
        %v3359 = vsub.f32 %v3283, %v3349
        %v3360 = vsub.f32 %v3284, %v3348
        %v3361 = vsub.f32 %v3285, %v3349
        %v3362 = vsub.f32 %v3286, %v3348
        %v3363 = vsub.f32 %v3287, %v3349
        %v3364 = vsub.f32 %v3288, %v3348
        %v3365 = vsub.f32 %v3289, %v3349
        %v3366 = vsub.f32 %v3290, %v3348
        %v3367 = vsub.f32 %v3291, %v3349
        %v3368 = vsub.f32 %v3292, %v3348
        %v3369 = vsub.f32 %v3293, %v3349
        %v3370 = vsub.f32 %v3294, %v3348
        %v3371 = vsub.f32 %v3295, %v3349
        %v3372 = vsub.f32 %v3296, %v3348
        %v3373 = vsub.f32 %v3297, %v3349
        %v3374 = vsub.f32 %v3298, %v3348
        %v3375 = vsub.f32 %v3299, %v3349
        %v3376 = vsub.f32 %v3300, %v3348
        %v3377 = vsub.f32 %v3301, %v3349
        %v3378 = vsub.f32 %v3302, %v3348
        %v3379 = vsub.f32 %v3303, %v3349
        %v3380 = vsub.f32 %v3304, %v3348
        %v3381 = vsub.f32 %v3305, %v3349
        %v3382 = vmul.f32 %v3350, %v3350
        %v3383 = vmul.f32 %v3351, %v3351
        %v3384 = vmul.f32 %v3352, %v3352
        %v3385 = vmul.f32 %v3353, %v3353
        %v3386 = vmul.f32 %v3354, %v3354
        %v3387 = vmul.f32 %v3355, %v3355
        %v3388 = vmul.f32 %v3356, %v3356
        %v3389 = vmul.f32 %v3357, %v3357
        %v3390 = vmul.f32 %v3358, %v3358
        %v3391 = vmul.f32 %v3359, %v3359
        %v3392 = vmul.f32 %v3360, %v3360
        %v3393 = vmul.f32 %v3361, %v3361
        %v3394 = vmul.f32 %v3362, %v3362
        %v3395 = vmul.f32 %v3363, %v3363
        %v3396 = vmul.f32 %v3364, %v3364
        %v3397 = vmul.f32 %v3365, %v3365
        %v3398 = vmul.f32 %v3366, %v3366
        %v3399 = vmul.f32 %v3367, %v3367
        %v3400 = vmul.f32 %v3368, %v3368
        %v3401 = vmul.f32 %v3369, %v3369
        %v3402 = vmul.f32 %v3370, %v3370
        %v3403 = vmul.f32 %v3371, %v3371
        %v3404 = vmul.f32 %v3372, %v3372
        %v3405 = vmul.f32 %v3373, %v3373
        %v3406 = vmul.f32 %v3374, %v3374
        %v3407 = vmul.f32 %v3375, %v3375
        %v3408 = vmul.f32 %v3376, %v3376
        %v3409 = vmul.f32 %v3377, %v3377
        %v3410 = vmul.f32 %v3378, %v3378
        %v3411 = vmul.f32 %v3379, %v3379
        %v3412 = vmul.f32 %v3380, %v3380
        %v3413 = vmul.f32 %v3381, %v3381
        %v3414 = vadd.f32 %v3382, %v3384
        %v3415 = vadd.f32 %v3414, %v3386
        %v3416 = vadd.f32 %v3415, %v3388
        %v3417 = vadd.f32 %v3416, %v3390
        %v3418 = vadd.f32 %v3417, %v3392
        %v3419 = vadd.f32 %v3418, %v3394
        %v3420 = vadd.f32 %v3419, %v3396
        %v3421 = vadd.f32 %v3420, %v3398
        %v3422 = vadd.f32 %v3421, %v3400
        %v3423 = vadd.f32 %v3422, %v3402
        %v3424 = vadd.f32 %v3423, %v3404
        %v3425 = vadd.f32 %v3424, %v3406
        %v3426 = vadd.f32 %v3425, %v3408
        %v3427 = vadd.f32 %v3426, %v3410
        %v3428 = vadd.f32 %v3427, %v3412
        %v3429 = vrot.slane %v3428, 4
        %v3430 = vadd.f32 %v3428, %v3429
        %v3431 = vrot.slane %v3430, 2
        %v3432 = vadd.f32 %v3430, %v3431
        %v3433 = vrot.slane %v3432, 1
        %v3434 = vadd.f32 %v3432, %v3433
        %v3435 = vadd.f32 %v3383, %v3385
        %v3436 = vadd.f32 %v3435, %v3387
        %v3437 = vadd.f32 %v3436, %v3389
        %v3438 = vadd.f32 %v3437, %v3391
        %v3439 = vadd.f32 %v3438, %v3393
        %v3440 = vadd.f32 %v3439, %v3395
        %v3441 = vadd.f32 %v3440, %v3397
        %v3442 = vadd.f32 %v3441, %v3399
        %v3443 = vadd.f32 %v3442, %v3401
        %v3444 = vadd.f32 %v3443, %v3403
        %v3445 = vadd.f32 %v3444, %v3405
        %v3446 = vadd.f32 %v3445, %v3407
        %v3447 = vadd.f32 %v3446, %v3409
        %v3448 = vadd.f32 %v3447, %v3411
        %v3449 = vadd.f32 %v3448, %v3413
        %v3450 = vrot.slane %v3449, 4
        %v3451 = vadd.f32 %v3449, %v3450
        %v3452 = vrot.slane %v3451, 2
        %v3453 = vadd.f32 %v3451, %v3452
        %v3454 = vrot.slane %v3453, 1
        %v3455 = vadd.f32 %v3453, %v3454
        %v3456 = vmul.f32 %v3434, %v351
        %v3457 = vmul.f32 %v3455, %v351
        %v3458 = vadd.f32 %v3456, 1e-05
        %v3459 = vadd.f32 %v3457, 1e-05
        %v3460 = vrsqrt.pop %v3458
        %v3461 = vmul.f32 %v3460, %v3458
        %v3462 = vmul.f32 %v3461, %v3460
        %v3463 = vmul.f32 0.5, %v3462
        %v3464 = vsub.f32 1.5, %v3463
        %v3465 = vmul.f32 %v3460, %v3464
        %vm3466 = vweird.f32 %v3458
        %vm3467 = vweird.f32 %v3460
        %vm3468 = vmor %vm3466, %vm3467
        %v3469 = vsel %vm3468, %v3460, %v3465
        %v3470 = vrsqrt.pop %v3459
        %v3471 = vmul.f32 %v3470, %v3459
        %v3472 = vmul.f32 %v3471, %v3470
        %v3473 = vmul.f32 0.5, %v3472
        %v3474 = vsub.f32 1.5, %v3473
        %v3475 = vmul.f32 %v3470, %v3474
        %vm3476 = vweird.f32 %v3459
        %vm3477 = vweird.f32 %v3470
        %vm3478 = vmor %vm3476, %vm3477
        %v3479 = vsel %vm3478, %v3470, %v3475
        %v3480 = vmul.f32 %v3350, %v3469
        %v3481 = vmul.f32 %v3351, %v3479
        %v3482 = vmul.f32 %v3352, %v3469
        %v3483 = vmul.f32 %v3353, %v3479
        %v3484 = vmul.f32 %v3354, %v3469
        %v3485 = vmul.f32 %v3355, %v3479
        %v3486 = vmul.f32 %v3356, %v3469
        %v3487 = vmul.f32 %v3357, %v3479
        %v3488 = vmul.f32 %v3358, %v3469
        %v3489 = vmul.f32 %v3359, %v3479
        %v3490 = vmul.f32 %v3360, %v3469
        %v3491 = vmul.f32 %v3361, %v3479
        %v3492 = vmul.f32 %v3362, %v3469
        %v3493 = vmul.f32 %v3363, %v3479
        %v3494 = vmul.f32 %v3364, %v3469
        %v3495 = vmul.f32 %v3365, %v3479
        %v3496 = vmul.f32 %v3366, %v3469
        %v3497 = vmul.f32 %v3367, %v3479
        %v3498 = vmul.f32 %v3368, %v3469
        %v3499 = vmul.f32 %v3369, %v3479
        %v3500 = vmul.f32 %v3370, %v3469
        %v3501 = vmul.f32 %v3371, %v3479
        %v3502 = vmul.f32 %v3372, %v3469
        %v3503 = vmul.f32 %v3373, %v3479
        %v3504 = vmul.f32 %v3374, %v3469
        %v3505 = vmul.f32 %v3375, %v3479
        %v3506 = vmul.f32 %v3376, %v3469
        %v3507 = vmul.f32 %v3377, %v3479
        %v3508 = vmul.f32 %v3378, %v3469
        %v3509 = vmul.f32 %v3379, %v3479
        %v3510 = vmul.f32 %v3380, %v3469
        %v3511 = vmul.f32 %v3381, %v3479
        %s3512 = scalar_lea.vmem %s1, 128
        %v3513 = vld [vmem:[%s3512] sm:$0xf]
        %v3514 = vld [vmem:[%s3512 + $0x4] sm:$0xf]
        %v3515 = vld [vmem:[%s3512 + $0x8] sm:$0xf]
        %v3516 = vld [vmem:[%s3512 + $0xc] sm:$0xf]
        %v3517 = vld [vmem:[%s3512 + $0x10] sm:$0xf]
        %v3518 = vld [vmem:[%s3512 + $0x14] sm:$0xf]
        %v3519 = vld [vmem:[%s3512 + $0x18] sm:$0xf]
        %v3520 = vld [vmem:[%s3512 + $0x1c] sm:$0xf]
        %v3521 = vld [vmem:[%s3512 + $0x20] sm:$0xf]
        %v3522 = vld [vmem:[%s3512 + $0x24] sm:$0xf]
        %v3523 = vld [vmem:[%s3512 + $0x28] sm:$0xf]
        %v3524 = vld [vmem:[%s3512 + $0x2c] sm:$0xf]
        %v3525 = vld [vmem:[%s3512 + $0x30] sm:$0xf]
        %v3526 = vld [vmem:[%s3512 + $0x34] sm:$0xf]
        %v3527 = vld [vmem:[%s3512 + $0x38] sm:$0xf]
        %v3528 = vld [vmem:[%s3512 + $0x3c] sm:$0xf]
        %v3529 = vld [vmem:[%s3512 + $0x40] sm:$0xf]
        %v3530 = vld [vmem:[%s3512 + $0x44] sm:$0xf]
        %v3531 = vld [vmem:[%s3512 + $0x48] sm:$0xf]
        %v3532 = vld [vmem:[%s3512 + $0x4c] sm:$0xf]
        %v3533 = vld [vmem:[%s3512 + $0x50] sm:$0xf]
        %v3534 = vld [vmem:[%s3512 + $0x54] sm:$0xf]
        %v3535 = vld [vmem:[%s3512 + $0x58] sm:$0xf]
        %v3536 = vld [vmem:[%s3512 + $0x5c] sm:$0xf]
        %v3537 = vld [vmem:[%s3512 + $0x60] sm:$0xf]
        %v3538 = vld [vmem:[%s3512 + $0x64] sm:$0xf]
        %v3539 = vld [vmem:[%s3512 + $0x68] sm:$0xf]
        %v3540 = vld [vmem:[%s3512 + $0x6c] sm:$0xf]
        %v3541 = vld [vmem:[%s3512 + $0x70] sm:$0xf]
        %v3542 = vld [vmem:[%s3512 + $0x74] sm:$0xf]
        %v3543 = vld [vmem:[%s3512 + $0x78] sm:$0xf]
        %v3544 = vld [vmem:[%s3512 + $0x7c] sm:$0xf]
        %v3545 = vpack.c.bf16 %v3482, %v3480
        %v3546 = vpack.c.bf16 %v3483, %v3481
        %v3547 = vpack.c.bf16 %v3486, %v3484
        %v3548 = vpack.c.bf16 %v3487, %v3485
        %v3549 = vpack.c.bf16 %v3490, %v3488
        %v3550 = vpack.c.bf16 %v3491, %v3489
        %v3551 = vpack.c.bf16 %v3494, %v3492
        %v3552 = vpack.c.bf16 %v3495, %v3493
        %v3553 = vpack.c.bf16 %v3498, %v3496
        %v3554 = vpack.c.bf16 %v3499, %v3497
        %v3555 = vpack.c.bf16 %v3502, %v3500
        %v3556 = vpack.c.bf16 %v3503, %v3501
        %v3557 = vpack.c.bf16 %v3506, %v3504
        %v3558 = vpack.c.bf16 %v3507, %v3505
        %v3559 = vpack.c.bf16 %v3510, %v3508
        %v3560 = vpack.c.bf16 %v3511, %v3509
        %v3593 = vunpack.c.l.b16 %v3513
        %v3594 = vunpack.c.l.b16 %v3514
        %v3595 = vunpack.c.l.b16 %v3515
        %v3596 = vunpack.c.l.b16 %v3516
        %v3597 = vunpack.c.l.b16 %v3517
        %v3598 = vunpack.c.l.b16 %v3518
        %v3599 = vunpack.c.l.b16 %v3519
        %v3600 = vunpack.c.l.b16 %v3520
        %v3601 = vunpack.c.l.b16 %v3521
        %v3602 = vunpack.c.l.b16 %v3522
        %v3603 = vunpack.c.l.b16 %v3523
        %v3604 = vunpack.c.l.b16 %v3524
        %v3605 = vunpack.c.l.b16 %v3525
        %v3606 = vunpack.c.l.b16 %v3526
        %v3607 = vunpack.c.l.b16 %v3527
        %v3608 = vunpack.c.l.b16 %v3528
        %v3609 = vunpack.c.l.b16 %v3529
        %v3610 = vunpack.c.l.b16 %v3530
        %v3611 = vunpack.c.l.b16 %v3531
        %v3612 = vunpack.c.l.b16 %v3532
        %v3613 = vunpack.c.l.b16 %v3533
        %v3614 = vunpack.c.l.b16 %v3534
        %v3615 = vunpack.c.l.b16 %v3535
        %v3616 = vunpack.c.l.b16 %v3536
        %v3617 = vunpack.c.l.b16 %v3537
        %v3618 = vunpack.c.l.b16 %v3538
        %v3619 = vunpack.c.l.b16 %v3539
        %v3620 = vunpack.c.l.b16 %v3540
        %v3621 = vunpack.c.l.b16 %v3541
        %v3622 = vunpack.c.l.b16 %v3542
        %v3623 = vunpack.c.l.b16 %v3543
        %v3624 = vunpack.c.l.b16 %v3544
        %v3625 = vpack.c.b16 %v3594, %v3593
        %v3626 = vpack.c.b16 %v3596, %v3595
        %v3627 = vpack.c.b16 %v3598, %v3597
        %v3628 = vpack.c.b16 %v3600, %v3599
        %v3629 = vpack.c.b16 %v3602, %v3601
        %v3630 = vpack.c.b16 %v3604, %v3603
        %v3631 = vpack.c.b16 %v3606, %v3605
        %v3632 = vpack.c.b16 %v3608, %v3607
        %v3633 = vpack.c.b16 %v3610, %v3609
        %v3634 = vpack.c.b16 %v3612, %v3611
        %v3635 = vpack.c.b16 %v3614, %v3613
        %v3636 = vpack.c.b16 %v3616, %v3615
        %v3637 = vpack.c.b16 %v3618, %v3617
        %v3638 = vpack.c.b16 %v3620, %v3619
        %v3639 = vpack.c.b16 %v3622, %v3621
        %v3640 = vpack.c.b16 %v3624, %v3623
        %3657 = vmatpush.bf16.msra.mxu0 %v3559
        %3658 = vmatpush.bf16.msra.mxu0 %v3557
        %3659 = vmatpush.bf16.msra.mxu0 %v3555
        %3660 = vmatpush.bf16.msra.mxu0 %v3553
        %3661 = vmatpush.bf16.msra.mxu0 %v3551
        %3662 = vmatpush.bf16.msra.mxu0 %v3549
        %3663 = vmatpush.bf16.msra.mxu0 %v3547
        %3664 = vmatpush.bf16.msra.mxu0 %v3545
        %3665 = vmatmul.bf16.gmra.mxu0 %v3625
        %v3666 = vpop.f32.mrf.mxu0
        %v3667 = vadd.f32 0.0, %v3666
        %v3668 = vpop.f32.mrf.mxu0
        %v3669 = vadd.f32 0.0, %v3668
        %3670 = vmatmul.bf16.gmra.mxu0 %v3626
        %v3671 = vpop.f32.mrf.mxu0
        %v3672 = vadd.f32 0.0, %v3671
        %v3673 = vpop.f32.mrf.mxu0
        %v3674 = vadd.f32 0.0, %v3673
        %3675 = vmatmul.bf16.gmra.mxu0 %v3627
        %v3676 = vpop.f32.mrf.mxu0
        %v3677 = vadd.f32 0.0, %v3676
        %v3678 = vpop.f32.mrf.mxu0
        %v3679 = vadd.f32 0.0, %v3678
        %3680 = vmatmul.bf16.gmra.mxu0 %v3628
        %v3681 = vpop.f32.mrf.mxu0
        %v3682 = vadd.f32 0.0, %v3681
        %v3683 = vpop.f32.mrf.mxu0
        %v3684 = vadd.f32 0.0, %v3683
        %3685 = vmatmul.bf16.gmra.mxu0 %v3629
        %v3686 = vpop.f32.mrf.mxu0
        %v3687 = vadd.f32 0.0, %v3686
        %v3688 = vpop.f32.mrf.mxu0
        %v3689 = vadd.f32 0.0, %v3688
        %3690 = vmatmul.bf16.gmra.mxu0 %v3630
        %v3691 = vpop.f32.mrf.mxu0
        %v3692 = vadd.f32 0.0, %v3691
        %v3693 = vpop.f32.mrf.mxu0
        %v3694 = vadd.f32 0.0, %v3693
        %3695 = vmatmul.bf16.gmra.mxu0 %v3631
        %v3696 = vpop.f32.mrf.mxu0
        %v3697 = vadd.f32 0.0, %v3696
        %v3698 = vpop.f32.mrf.mxu0
        %v3699 = vadd.f32 0.0, %v3698
        %3700 = vmatmul.bf16.gmra.mxu0 %v3632
        %v3701 = vpop.f32.mrf.mxu0
        %v3702 = vadd.f32 0.0, %v3701
        %v3703 = vpop.f32.mrf.mxu0
        %v3704 = vadd.f32 0.0, %v3703
        %3705 = vmatmul.bf16.gmra.mxu0 %v3633
        %v3706 = vpop.f32.mrf.mxu0
        %v3707 = vadd.f32 0.0, %v3706
        %v3708 = vpop.f32.mrf.mxu0
        %v3709 = vadd.f32 0.0, %v3708
        %3710 = vmatmul.bf16.gmra.mxu0 %v3634
        %v3711 = vpop.f32.mrf.mxu0
        %v3712 = vadd.f32 0.0, %v3711
        %v3713 = vpop.f32.mrf.mxu0
        %v3714 = vadd.f32 0.0, %v3713
        %3715 = vmatmul.bf16.gmra.mxu0 %v3635
        %v3716 = vpop.f32.mrf.mxu0
        %v3717 = vadd.f32 0.0, %v3716
        %v3718 = vpop.f32.mrf.mxu0
        %v3719 = vadd.f32 0.0, %v3718
        %3720 = vmatmul.bf16.gmra.mxu0 %v3636
        %v3721 = vpop.f32.mrf.mxu0
        %v3722 = vadd.f32 0.0, %v3721
        %v3723 = vpop.f32.mrf.mxu0
        %v3724 = vadd.f32 0.0, %v3723
        %3725 = vmatmul.bf16.gmra.mxu0 %v3637
        %v3726 = vpop.f32.mrf.mxu0
        %v3727 = vadd.f32 0.0, %v3726
        %v3728 = vpop.f32.mrf.mxu0
        %v3729 = vadd.f32 0.0, %v3728
        %3730 = vmatmul.bf16.gmra.mxu0 %v3638
        %v3731 = vpop.f32.mrf.mxu0
        %v3732 = vadd.f32 0.0, %v3731
        %v3733 = vpop.f32.mrf.mxu0
        %v3734 = vadd.f32 0.0, %v3733
        %3735 = vmatmul.bf16.gmra.mxu0 %v3639
        %v3736 = vpop.f32.mrf.mxu0
        %v3737 = vadd.f32 0.0, %v3736
        %v3738 = vpop.f32.mrf.mxu0
        %v3739 = vadd.f32 0.0, %v3738
        %3740 = vmatmul.bf16.gmra.mxu0 %v3640
        %v3741 = vpop.f32.mrf.mxu0
        %v3742 = vadd.f32 0.0, %v3741
        %v3743 = vpop.f32.mrf.mxu0
        %v3744 = vadd.f32 0.0, %v3743
        %3745 = vdwg.mxu0
        %3746 = vmatpush.bf16.msra.mxu0 %v3560
        %3747 = vmatpush.bf16.msra.mxu0 %v3558
        %3748 = vmatpush.bf16.msra.mxu0 %v3556
        %3749 = vmatpush.bf16.msra.mxu0 %v3554
        %3750 = vmatpush.bf16.msra.mxu0 %v3552
        %3751 = vmatpush.bf16.msra.mxu0 %v3550
        %3752 = vmatpush.bf16.msra.mxu0 %v3548
        %3753 = vmatpush.bf16.msra.mxu0 %v3546
        %3754 = vmatmul.bf16.gmra.mxu0 %v3625
        %v3755 = vpop.f32.mrf.mxu0
        %v3756 = vadd.f32 0.0, %v3755
        %v3757 = vpop.f32.mrf.mxu0
        %v3758 = vadd.f32 0.0, %v3757
        %3759 = vmatmul.bf16.gmra.mxu0 %v3626
        %v3760 = vpop.f32.mrf.mxu0
        %v3761 = vadd.f32 0.0, %v3760
        %v3762 = vpop.f32.mrf.mxu0
        %v3763 = vadd.f32 0.0, %v3762
        %3764 = vmatmul.bf16.gmra.mxu0 %v3627
        %v3765 = vpop.f32.mrf.mxu0
        %v3766 = vadd.f32 0.0, %v3765
        %v3767 = vpop.f32.mrf.mxu0
        %v3768 = vadd.f32 0.0, %v3767
        %3769 = vmatmul.bf16.gmra.mxu0 %v3628
        %v3770 = vpop.f32.mrf.mxu0
        %v3771 = vadd.f32 0.0, %v3770
        %v3772 = vpop.f32.mrf.mxu0
        %v3773 = vadd.f32 0.0, %v3772
        %3774 = vmatmul.bf16.gmra.mxu0 %v3629
        %v3775 = vpop.f32.mrf.mxu0
        %v3776 = vadd.f32 0.0, %v3775
        %v3777 = vpop.f32.mrf.mxu0
        %v3778 = vadd.f32 0.0, %v3777
        %3779 = vmatmul.bf16.gmra.mxu0 %v3630
        %v3780 = vpop.f32.mrf.mxu0
        %v3781 = vadd.f32 0.0, %v3780
        %v3782 = vpop.f32.mrf.mxu0
        %v3783 = vadd.f32 0.0, %v3782
        %3784 = vmatmul.bf16.gmra.mxu0 %v3631
        %v3785 = vpop.f32.mrf.mxu0
        %v3786 = vadd.f32 0.0, %v3785
        %v3787 = vpop.f32.mrf.mxu0
        %v3788 = vadd.f32 0.0, %v3787
        %3789 = vmatmul.bf16.gmra.mxu0 %v3632
        %v3790 = vpop.f32.mrf.mxu0
        %v3791 = vadd.f32 0.0, %v3790
        %v3792 = vpop.f32.mrf.mxu0
        %v3793 = vadd.f32 0.0, %v3792
        %3794 = vmatmul.bf16.gmra.mxu0 %v3633
        %v3795 = vpop.f32.mrf.mxu0
        %v3796 = vadd.f32 0.0, %v3795
        %v3797 = vpop.f32.mrf.mxu0
        %v3798 = vadd.f32 0.0, %v3797
        %3799 = vmatmul.bf16.gmra.mxu0 %v3634
        %v3800 = vpop.f32.mrf.mxu0
        %v3801 = vadd.f32 0.0, %v3800
        %v3802 = vpop.f32.mrf.mxu0
        %v3803 = vadd.f32 0.0, %v3802
        %3804 = vmatmul.bf16.gmra.mxu0 %v3635
        %v3805 = vpop.f32.mrf.mxu0
        %v3806 = vadd.f32 0.0, %v3805
        %v3807 = vpop.f32.mrf.mxu0
        %v3808 = vadd.f32 0.0, %v3807
        %3809 = vmatmul.bf16.gmra.mxu0 %v3636
        %v3810 = vpop.f32.mrf.mxu0
        %v3811 = vadd.f32 0.0, %v3810
        %v3812 = vpop.f32.mrf.mxu0
        %v3813 = vadd.f32 0.0, %v3812
        %3814 = vmatmul.bf16.gmra.mxu0 %v3637
        %v3815 = vpop.f32.mrf.mxu0
        %v3816 = vadd.f32 0.0, %v3815
        %v3817 = vpop.f32.mrf.mxu0
        %v3818 = vadd.f32 0.0, %v3817
        %3819 = vmatmul.bf16.gmra.mxu0 %v3638
        %v3820 = vpop.f32.mrf.mxu0
        %v3821 = vadd.f32 0.0, %v3820
        %v3822 = vpop.f32.mrf.mxu0
        %v3823 = vadd.f32 0.0, %v3822
        %3824 = vmatmul.bf16.gmra.mxu0 %v3639
        %v3825 = vpop.f32.mrf.mxu0
        %v3826 = vadd.f32 0.0, %v3825
        %v3827 = vpop.f32.mrf.mxu0
        %v3828 = vadd.f32 0.0, %v3827
        %3829 = vmatmul.bf16.gmra.mxu0 %v3640
        %v3830 = vpop.f32.mrf.mxu0
        %v3831 = vadd.f32 0.0, %v3830
        %v3832 = vpop.f32.mrf.mxu0
        %v3833 = vadd.f32 0.0, %v3832
        %3834 = vdwg.mxu0
        %v3835 = vpack.c.bf16 %v3756, %v3667
        %v3836 = vpack.c.bf16 %v3758, %v3669
        %v3837 = vpack.c.bf16 %v3761, %v3672
        %v3838 = vpack.c.bf16 %v3763, %v3674
        %v3839 = vpack.c.bf16 %v3766, %v3677
        %v3840 = vpack.c.bf16 %v3768, %v3679
        %v3841 = vpack.c.bf16 %v3771, %v3682
        %v3842 = vpack.c.bf16 %v3773, %v3684
        %v3843 = vpack.c.bf16 %v3776, %v3687
        %v3844 = vpack.c.bf16 %v3778, %v3689
        %v3845 = vpack.c.bf16 %v3781, %v3692
        %v3846 = vpack.c.bf16 %v3783, %v3694
        %v3847 = vpack.c.bf16 %v3786, %v3697
        %v3848 = vpack.c.bf16 %v3788, %v3699
        %v3849 = vpack.c.bf16 %v3791, %v3702
        %v3850 = vpack.c.bf16 %v3793, %v3704
        %v3851 = vpack.c.bf16 %v3796, %v3707
        %v3852 = vpack.c.bf16 %v3798, %v3709
        %v3853 = vpack.c.bf16 %v3801, %v3712
        %v3854 = vpack.c.bf16 %v3803, %v3714
        %v3855 = vpack.c.bf16 %v3806, %v3717
        %v3856 = vpack.c.bf16 %v3808, %v3719
        %v3857 = vpack.c.bf16 %v3811, %v3722
        %v3858 = vpack.c.bf16 %v3813, %v3724
        %v3859 = vpack.c.bf16 %v3816, %v3727
        %v3860 = vpack.c.bf16 %v3818, %v3729
        %v3861 = vpack.c.bf16 %v3821, %v3732
        %v3862 = vpack.c.bf16 %v3823, %v3734
        %v3863 = vpack.c.bf16 %v3826, %v3737
        %v3864 = vpack.c.bf16 %v3828, %v3739
        %v3865 = vpack.c.bf16 %v3831, %v3742
        %v3866 = vpack.c.bf16 %v3833, %v3744
        %s3867 = scalar_lea.vmem %s2, 256
        %v3868 = vld [vmem:[%s3867] sm:$0xff]
        %v3869 = vld [vmem:[%s3867 + $0x8] sm:$0xff]
        %v3870 = vld [vmem:[%s3867 + $0x10] sm:$0xff]
        %v3871 = vld [vmem:[%s3867 + $0x18] sm:$0xff]
        %v3872 = vld [vmem:[%s3867 + $0x20] sm:$0xff]
        %v3873 = vld [vmem:[%s3867 + $0x28] sm:$0xff]
        %v3874 = vld [vmem:[%s3867 + $0x30] sm:$0xff]
        %v3875 = vld [vmem:[%s3867 + $0x38] sm:$0xff]
        %v3876 = vld [vmem:[%s3867 + $0x40] sm:$0xff]
        %v3877 = vld [vmem:[%s3867 + $0x48] sm:$0xff]
        %v3878 = vld [vmem:[%s3867 + $0x50] sm:$0xff]
        %v3879 = vld [vmem:[%s3867 + $0x58] sm:$0xff]
        %v3880 = vld [vmem:[%s3867 + $0x60] sm:$0xff]
        %v3881 = vld [vmem:[%s3867 + $0x68] sm:$0xff]
        %v3882 = vld [vmem:[%s3867 + $0x70] sm:$0xff]
        %v3883 = vld [vmem:[%s3867 + $0x78] sm:$0xff]
        %v3884 = vld [vmem:[%s3867 + $0x80] sm:$0xff]
        %v3885 = vld [vmem:[%s3867 + $0x88] sm:$0xff]
        %v3886 = vld [vmem:[%s3867 + $0x90] sm:$0xff]
        %v3887 = vld [vmem:[%s3867 + $0x98] sm:$0xff]
        %v3888 = vld [vmem:[%s3867 + $0xa0] sm:$0xff]
        %v3889 = vld [vmem:[%s3867 + $0xa8] sm:$0xff]
        %v3890 = vld [vmem:[%s3867 + $0xb0] sm:$0xff]
        %v3891 = vld [vmem:[%s3867 + $0xb8] sm:$0xff]
        %v3892 = vld [vmem:[%s3867 + $0xc0] sm:$0xff]
        %v3893 = vld [vmem:[%s3867 + $0xc8] sm:$0xff]
        %v3894 = vld [vmem:[%s3867 + $0xd0] sm:$0xff]
        %v3895 = vld [vmem:[%s3867 + $0xd8] sm:$0xff]
        %v3896 = vld [vmem:[%s3867 + $0xe0] sm:$0xff]
        %v3897 = vld [vmem:[%s3867 + $0xe8] sm:$0xff]
        %v3898 = vld [vmem:[%s3867 + $0xf0] sm:$0xff]
        %v3899 = vld [vmem:[%s3867 + $0xf8] sm:$0xff]
        %v3900 = vpack.c.bf16 %v3868, %v3868
        %v3901 = vpack.c.bf16 %v3869, %v3869
        %v3902 = vpack.c.bf16 %v3870, %v3870
        %v3903 = vpack.c.bf16 %v3871, %v3871
        %v3904 = vpack.c.bf16 %v3872, %v3872
        %v3905 = vpack.c.bf16 %v3873, %v3873
        %v3906 = vpack.c.bf16 %v3874, %v3874
        %v3907 = vpack.c.bf16 %v3875, %v3875
        %v3908 = vpack.c.bf16 %v3876, %v3876
        %v3909 = vpack.c.bf16 %v3877, %v3877
        %v3910 = vpack.c.bf16 %v3878, %v3878
        %v3911 = vpack.c.bf16 %v3879, %v3879
        %v3912 = vpack.c.bf16 %v3880, %v3880
        %v3913 = vpack.c.bf16 %v3881, %v3881
        %v3914 = vpack.c.bf16 %v3882, %v3882
        %v3915 = vpack.c.bf16 %v3883, %v3883
        %v3916 = vpack.c.bf16 %v3884, %v3884
        %v3917 = vpack.c.bf16 %v3885, %v3885
        %v3918 = vpack.c.bf16 %v3886, %v3886
        %v3919 = vpack.c.bf16 %v3887, %v3887
        %v3920 = vpack.c.bf16 %v3888, %v3888
        %v3921 = vpack.c.bf16 %v3889, %v3889
        %v3922 = vpack.c.bf16 %v3890, %v3890
        %v3923 = vpack.c.bf16 %v3891, %v3891
        %v3924 = vpack.c.bf16 %v3892, %v3892
        %v3925 = vpack.c.bf16 %v3893, %v3893
        %v3926 = vpack.c.bf16 %v3894, %v3894
        %v3927 = vpack.c.bf16 %v3895, %v3895
        %v3928 = vpack.c.bf16 %v3896, %v3896
        %v3929 = vpack.c.bf16 %v3897, %v3897
        %v3930 = vpack.c.bf16 %v3898, %v3898
        %v3931 = vpack.c.bf16 %v3899, %v3899
        %3933 = vset.pattern.permute.xlu0 0
        %3934 = vperm.xlu0 %3933, %v3900
        %v3935 = vpop.permute.xlu0 %3934
        %v3938 = vunpack.c.l.s4 839922192
        %v3939 = vunpack.c.0.s8 %v3938
        %v3940 = vperm.slane %v3935, %v3939
        %3942 = vset.pattern.permute.xlu0 0
        %3943 = vperm.xlu0 %3942, %v3901
        %v3944 = vpop.permute.xlu0 %3943
        %v3947 = vunpack.c.l.s4 839922192
        %v3948 = vunpack.c.0.s8 %v3947
        %v3949 = vperm.slane %v3944, %v3948
        %3951 = vset.pattern.permute.xlu0 0
        %3952 = vperm.xlu0 %3951, %v3902
        %v3953 = vpop.permute.xlu0 %3952
        %v3956 = vunpack.c.l.s4 839922192
        %v3957 = vunpack.c.0.s8 %v3956
        %v3958 = vperm.slane %v3953, %v3957
        %3960 = vset.pattern.permute.xlu0 0
        %3961 = vperm.xlu0 %3960, %v3903
        %v3962 = vpop.permute.xlu0 %3961
        %v3965 = vunpack.c.l.s4 839922192
        %v3966 = vunpack.c.0.s8 %v3965
        %v3967 = vperm.slane %v3962, %v3966
        %3969 = vset.pattern.permute.xlu0 0
        %3970 = vperm.xlu0 %3969, %v3904
        %v3971 = vpop.permute.xlu0 %3970
        %v3974 = vunpack.c.l.s4 839922192
        %v3975 = vunpack.c.0.s8 %v3974
        %v3976 = vperm.slane %v3971, %v3975
        %3978 = vset.pattern.permute.xlu0 0
        %3979 = vperm.xlu0 %3978, %v3905
        %v3980 = vpop.permute.xlu0 %3979
        %v3983 = vunpack.c.l.s4 839922192
        %v3984 = vunpack.c.0.s8 %v3983
        %v3985 = vperm.slane %v3980, %v3984
        %3987 = vset.pattern.permute.xlu0 0
        %3988 = vperm.xlu0 %3987, %v3906
        %v3989 = vpop.permute.xlu0 %3988
        %v3992 = vunpack.c.l.s4 839922192
        %v3993 = vunpack.c.0.s8 %v3992
        %v3994 = vperm.slane %v3989, %v3993
        %3996 = vset.pattern.permute.xlu0 0
        %3997 = vperm.xlu0 %3996, %v3907
        %v3998 = vpop.permute.xlu0 %3997
        %v4001 = vunpack.c.l.s4 839922192
        %v4002 = vunpack.c.0.s8 %v4001
        %v4003 = vperm.slane %v3998, %v4002
        %4005 = vset.pattern.permute.xlu0 0
        %4006 = vperm.xlu0 %4005, %v3908
        %v4007 = vpop.permute.xlu0 %4006
        %v4010 = vunpack.c.l.s4 839922192
        %v4011 = vunpack.c.0.s8 %v4010
        %v4012 = vperm.slane %v4007, %v4011
        %4014 = vset.pattern.permute.xlu0 0
        %4015 = vperm.xlu0 %4014, %v3909
        %v4016 = vpop.permute.xlu0 %4015
        %v4019 = vunpack.c.l.s4 839922192
        %v4020 = vunpack.c.0.s8 %v4019
        %v4021 = vperm.slane %v4016, %v4020
        %4023 = vset.pattern.permute.xlu0 0
        %4024 = vperm.xlu0 %4023, %v3910
        %v4025 = vpop.permute.xlu0 %4024
        %v4028 = vunpack.c.l.s4 839922192
        %v4029 = vunpack.c.0.s8 %v4028
        %v4030 = vperm.slane %v4025, %v4029
        %4032 = vset.pattern.permute.xlu0 0
        %4033 = vperm.xlu0 %4032, %v3911
        %v4034 = vpop.permute.xlu0 %4033
        %v4037 = vunpack.c.l.s4 839922192
        %v4038 = vunpack.c.0.s8 %v4037
        %v4039 = vperm.slane %v4034, %v4038
        %4041 = vset.pattern.permute.xlu0 0
        %4042 = vperm.xlu0 %4041, %v3912
        %v4043 = vpop.permute.xlu0 %4042
        %v4046 = vunpack.c.l.s4 839922192
        %v4047 = vunpack.c.0.s8 %v4046
        %v4048 = vperm.slane %v4043, %v4047
        %4050 = vset.pattern.permute.xlu0 0
        %4051 = vperm.xlu0 %4050, %v3913
        %v4052 = vpop.permute.xlu0 %4051
        %v4055 = vunpack.c.l.s4 839922192
        %v4056 = vunpack.c.0.s8 %v4055
        %v4057 = vperm.slane %v4052, %v4056
        %4059 = vset.pattern.permute.xlu0 0
        %4060 = vperm.xlu0 %4059, %v3914
        %v4061 = vpop.permute.xlu0 %4060
        %v4064 = vunpack.c.l.s4 839922192
        %v4065 = vunpack.c.0.s8 %v4064
        %v4066 = vperm.slane %v4061, %v4065
        %4068 = vset.pattern.permute.xlu0 0
        %4069 = vperm.xlu0 %4068, %v3915
        %v4070 = vpop.permute.xlu0 %4069
        %v4073 = vunpack.c.l.s4 839922192
        %v4074 = vunpack.c.0.s8 %v4073
        %v4075 = vperm.slane %v4070, %v4074
        %4077 = vset.pattern.permute.xlu0 0
        %4078 = vperm.xlu0 %4077, %v3916
        %v4079 = vpop.permute.xlu0 %4078
        %v4082 = vunpack.c.l.s4 839922192
        %v4083 = vunpack.c.0.s8 %v4082
        %v4084 = vperm.slane %v4079, %v4083
        %4086 = vset.pattern.permute.xlu0 0
        %4087 = vperm.xlu0 %4086, %v3917
        %v4088 = vpop.permute.xlu0 %4087
        %v4091 = vunpack.c.l.s4 839922192
        %v4092 = vunpack.c.0.s8 %v4091
        %v4093 = vperm.slane %v4088, %v4092
        %4095 = vset.pattern.permute.xlu0 0
        %4096 = vperm.xlu0 %4095, %v3918
        %v4097 = vpop.permute.xlu0 %4096
        %v4100 = vunpack.c.l.s4 839922192
        %v4101 = vunpack.c.0.s8 %v4100
        %v4102 = vperm.slane %v4097, %v4101
        %4104 = vset.pattern.permute.xlu0 0
        %4105 = vperm.xlu0 %4104, %v3919
        %v4106 = vpop.permute.xlu0 %4105
        %v4109 = vunpack.c.l.s4 839922192
        %v4110 = vunpack.c.0.s8 %v4109
        %v4111 = vperm.slane %v4106, %v4110
        %4113 = vset.pattern.permute.xlu0 0
        %4114 = vperm.xlu0 %4113, %v3920
        %v4115 = vpop.permute.xlu0 %4114
        %v4118 = vunpack.c.l.s4 839922192
        %v4119 = vunpack.c.0.s8 %v4118
        %v4120 = vperm.slane %v4115, %v4119
        %4122 = vset.pattern.permute.xlu0 0
        %4123 = vperm.xlu0 %4122, %v3921
        %v4124 = vpop.permute.xlu0 %4123
        %v4127 = vunpack.c.l.s4 839922192
        %v4128 = vunpack.c.0.s8 %v4127
        %v4129 = vperm.slane %v4124, %v4128
        %4131 = vset.pattern.permute.xlu0 0
        %4132 = vperm.xlu0 %4131, %v3922
        %v4133 = vpop.permute.xlu0 %4132
        %v4136 = vunpack.c.l.s4 839922192
        %v4137 = vunpack.c.0.s8 %v4136
        %v4138 = vperm.slane %v4133, %v4137
        %4140 = vset.pattern.permute.xlu0 0
        %4141 = vperm.xlu0 %4140, %v3923
        %v4142 = vpop.permute.xlu0 %4141
        %v4145 = vunpack.c.l.s4 839922192
        %v4146 = vunpack.c.0.s8 %v4145
        %v4147 = vperm.slane %v4142, %v4146
        %4149 = vset.pattern.permute.xlu0 0
        %4150 = vperm.xlu0 %4149, %v3924
        %v4151 = vpop.permute.xlu0 %4150
        %v4154 = vunpack.c.l.s4 839922192
        %v4155 = vunpack.c.0.s8 %v4154
        %v4156 = vperm.slane %v4151, %v4155
        %4158 = vset.pattern.permute.xlu0 0
        %4159 = vperm.xlu0 %4158, %v3925
        %v4160 = vpop.permute.xlu0 %4159
        %v4163 = vunpack.c.l.s4 839922192
        %v4164 = vunpack.c.0.s8 %v4163
        %v4165 = vperm.slane %v4160, %v4164
        %4167 = vset.pattern.permute.xlu0 0
        %4168 = vperm.xlu0 %4167, %v3926
        %v4169 = vpop.permute.xlu0 %4168
        %v4172 = vunpack.c.l.s4 839922192
        %v4173 = vunpack.c.0.s8 %v4172
        %v4174 = vperm.slane %v4169, %v4173
        %4176 = vset.pattern.permute.xlu0 0
        %4177 = vperm.xlu0 %4176, %v3927
        %v4178 = vpop.permute.xlu0 %4177
        %v4181 = vunpack.c.l.s4 839922192
        %v4182 = vunpack.c.0.s8 %v4181
        %v4183 = vperm.slane %v4178, %v4182
        %4185 = vset.pattern.permute.xlu0 0
        %4186 = vperm.xlu0 %4185, %v3928
        %v4187 = vpop.permute.xlu0 %4186
        %v4190 = vunpack.c.l.s4 839922192
        %v4191 = vunpack.c.0.s8 %v4190
        %v4192 = vperm.slane %v4187, %v4191
        %4194 = vset.pattern.permute.xlu0 0
        %4195 = vperm.xlu0 %4194, %v3929
        %v4196 = vpop.permute.xlu0 %4195
        %v4199 = vunpack.c.l.s4 839922192
        %v4200 = vunpack.c.0.s8 %v4199
        %v4201 = vperm.slane %v4196, %v4200
        %4203 = vset.pattern.permute.xlu0 0
        %4204 = vperm.xlu0 %4203, %v3930
        %v4205 = vpop.permute.xlu0 %4204
        %v4208 = vunpack.c.l.s4 839922192
        %v4209 = vunpack.c.0.s8 %v4208
        %v4210 = vperm.slane %v4205, %v4209
        %4212 = vset.pattern.permute.xlu0 0
        %4213 = vperm.xlu0 %4212, %v3931
        %v4214 = vpop.permute.xlu0 %4213
        %v4217 = vunpack.c.l.s4 839922192
        %v4218 = vunpack.c.0.s8 %v4217
        %v4219 = vperm.slane %v4214, %v4218
        %v4220 = vunpack.c.l.bf16 %v3835
        %v4221 = vunpack.c.h.bf16 %v3835
        %v4222 = vunpack.c.l.bf16 %v3836
        %v4223 = vunpack.c.h.bf16 %v3836
        %v4224 = vunpack.c.l.bf16 %v3837
        %v4225 = vunpack.c.h.bf16 %v3837
        %v4226 = vunpack.c.l.bf16 %v3838
        %v4227 = vunpack.c.h.bf16 %v3838
        %v4228 = vunpack.c.l.bf16 %v3839
        %v4229 = vunpack.c.h.bf16 %v3839
        %v4230 = vunpack.c.l.bf16 %v3840
        %v4231 = vunpack.c.h.bf16 %v3840
        %v4232 = vunpack.c.l.bf16 %v3841
        %v4233 = vunpack.c.h.bf16 %v3841
        %v4234 = vunpack.c.l.bf16 %v3842
        %v4235 = vunpack.c.h.bf16 %v3842
        %v4236 = vunpack.c.l.bf16 %v3843
        %v4237 = vunpack.c.h.bf16 %v3843
        %v4238 = vunpack.c.l.bf16 %v3844
        %v4239 = vunpack.c.h.bf16 %v3844
        %v4240 = vunpack.c.l.bf16 %v3845
        %v4241 = vunpack.c.h.bf16 %v3845
        %v4242 = vunpack.c.l.bf16 %v3846
        %v4243 = vunpack.c.h.bf16 %v3846
        %v4244 = vunpack.c.l.bf16 %v3847
        %v4245 = vunpack.c.h.bf16 %v3847
        %v4246 = vunpack.c.l.bf16 %v3848
        %v4247 = vunpack.c.h.bf16 %v3848
        %v4248 = vunpack.c.l.bf16 %v3849
        %v4249 = vunpack.c.h.bf16 %v3849
        %v4250 = vunpack.c.l.bf16 %v3850
        %v4251 = vunpack.c.h.bf16 %v3850
        %v4252 = vunpack.c.l.bf16 %v3851
        %v4253 = vunpack.c.h.bf16 %v3851
        %v4254 = vunpack.c.l.bf16 %v3852
        %v4255 = vunpack.c.h.bf16 %v3852
        %v4256 = vunpack.c.l.bf16 %v3853
        %v4257 = vunpack.c.h.bf16 %v3853
        %v4258 = vunpack.c.l.bf16 %v3854
        %v4259 = vunpack.c.h.bf16 %v3854
        %v4260 = vunpack.c.l.bf16 %v3855
        %v4261 = vunpack.c.h.bf16 %v3855
        %v4262 = vunpack.c.l.bf16 %v3856
        %v4263 = vunpack.c.h.bf16 %v3856
        %v4264 = vunpack.c.l.bf16 %v3857
        %v4265 = vunpack.c.h.bf16 %v3857
        %v4266 = vunpack.c.l.bf16 %v3858
        %v4267 = vunpack.c.h.bf16 %v3858
        %v4268 = vunpack.c.l.bf16 %v3859
        %v4269 = vunpack.c.h.bf16 %v3859
        %v4270 = vunpack.c.l.bf16 %v3860
        %v4271 = vunpack.c.h.bf16 %v3860
        %v4272 = vunpack.c.l.bf16 %v3861
        %v4273 = vunpack.c.h.bf16 %v3861
        %v4274 = vunpack.c.l.bf16 %v3862
        %v4275 = vunpack.c.h.bf16 %v3862
        %v4276 = vunpack.c.l.bf16 %v3863
        %v4277 = vunpack.c.h.bf16 %v3863
        %v4278 = vunpack.c.l.bf16 %v3864
        %v4279 = vunpack.c.h.bf16 %v3864
        %v4280 = vunpack.c.l.bf16 %v3865
        %v4281 = vunpack.c.h.bf16 %v3865
        %v4282 = vunpack.c.l.bf16 %v3866
        %v4283 = vunpack.c.h.bf16 %v3866
        %v4284 = vunpack.c.l.bf16 %v3940
        %v4285 = vunpack.c.l.bf16 %v3949
        %v4286 = vunpack.c.l.bf16 %v3958
        %v4287 = vunpack.c.l.bf16 %v3967
        %v4288 = vunpack.c.l.bf16 %v3976
        %v4289 = vunpack.c.l.bf16 %v3985
        %v4290 = vunpack.c.l.bf16 %v3994
        %v4291 = vunpack.c.l.bf16 %v4003
        %v4292 = vunpack.c.l.bf16 %v4012
        %v4293 = vunpack.c.l.bf16 %v4021
        %v4294 = vunpack.c.l.bf16 %v4030
        %v4295 = vunpack.c.l.bf16 %v4039
        %v4296 = vunpack.c.l.bf16 %v4048
        %v4297 = vunpack.c.l.bf16 %v4057
        %v4298 = vunpack.c.l.bf16 %v4066
        %v4299 = vunpack.c.l.bf16 %v4075
        %v4300 = vunpack.c.l.bf16 %v4084
        %v4301 = vunpack.c.l.bf16 %v4093
        %v4302 = vunpack.c.l.bf16 %v4102
        %v4303 = vunpack.c.l.bf16 %v4111
        %v4304 = vunpack.c.l.bf16 %v4120
        %v4305 = vunpack.c.l.bf16 %v4129
        %v4306 = vunpack.c.l.bf16 %v4138
        %v4307 = vunpack.c.l.bf16 %v4147
        %v4308 = vunpack.c.l.bf16 %v4156
        %v4309 = vunpack.c.l.bf16 %v4165
        %v4310 = vunpack.c.l.bf16 %v4174
        %v4311 = vunpack.c.l.bf16 %v4183
        %v4312 = vunpack.c.l.bf16 %v4192
        %v4313 = vunpack.c.l.bf16 %v4201
        %v4314 = vunpack.c.l.bf16 %v4210
        %v4315 = vunpack.c.l.bf16 %v4219
        %v4316 = vadd.f32 %v4220, %v4284
        %v4317 = vadd.f32 %v4221, %v4284
        %v4318 = vadd.f32 %v4222, %v4285
        %v4319 = vadd.f32 %v4223, %v4285
        %v4320 = vadd.f32 %v4224, %v4286
        %v4321 = vadd.f32 %v4225, %v4286
        %v4322 = vadd.f32 %v4226, %v4287
        %v4323 = vadd.f32 %v4227, %v4287
        %v4324 = vadd.f32 %v4228, %v4288
        %v4325 = vadd.f32 %v4229, %v4288
        %v4326 = vadd.f32 %v4230, %v4289
        %v4327 = vadd.f32 %v4231, %v4289
        %v4328 = vadd.f32 %v4232, %v4290
        %v4329 = vadd.f32 %v4233, %v4290
        %v4330 = vadd.f32 %v4234, %v4291
        %v4331 = vadd.f32 %v4235, %v4291
        %v4332 = vadd.f32 %v4236, %v4292
        %v4333 = vadd.f32 %v4237, %v4292
        %v4334 = vadd.f32 %v4238, %v4293
        %v4335 = vadd.f32 %v4239, %v4293
        %v4336 = vadd.f32 %v4240, %v4294
        %v4337 = vadd.f32 %v4241, %v4294
        %v4338 = vadd.f32 %v4242, %v4295
        %v4339 = vadd.f32 %v4243, %v4295
        %v4340 = vadd.f32 %v4244, %v4296
        %v4341 = vadd.f32 %v4245, %v4296
        %v4342 = vadd.f32 %v4246, %v4297
        %v4343 = vadd.f32 %v4247, %v4297
        %v4344 = vadd.f32 %v4248, %v4298
        %v4345 = vadd.f32 %v4249, %v4298
        %v4346 = vadd.f32 %v4250, %v4299
        %v4347 = vadd.f32 %v4251, %v4299
        %v4348 = vadd.f32 %v4252, %v4300
        %v4349 = vadd.f32 %v4253, %v4300
        %v4350 = vadd.f32 %v4254, %v4301
        %v4351 = vadd.f32 %v4255, %v4301
        %v4352 = vadd.f32 %v4256, %v4302
        %v4353 = vadd.f32 %v4257, %v4302
        %v4354 = vadd.f32 %v4258, %v4303
        %v4355 = vadd.f32 %v4259, %v4303
        %v4356 = vadd.f32 %v4260, %v4304
        %v4357 = vadd.f32 %v4261, %v4304
        %v4358 = vadd.f32 %v4262, %v4305
        %v4359 = vadd.f32 %v4263, %v4305
        %v4360 = vadd.f32 %v4264, %v4306
        %v4361 = vadd.f32 %v4265, %v4306
        %v4362 = vadd.f32 %v4266, %v4307
        %v4363 = vadd.f32 %v4267, %v4307
        %v4364 = vadd.f32 %v4268, %v4308
        %v4365 = vadd.f32 %v4269, %v4308
        %v4366 = vadd.f32 %v4270, %v4309
        %v4367 = vadd.f32 %v4271, %v4309
        %v4368 = vadd.f32 %v4272, %v4310
        %v4369 = vadd.f32 %v4273, %v4310
        %v4370 = vadd.f32 %v4274, %v4311
        %v4371 = vadd.f32 %v4275, %v4311
        %v4372 = vadd.f32 %v4276, %v4312
        %v4373 = vadd.f32 %v4277, %v4312
        %v4374 = vadd.f32 %v4278, %v4313
        %v4375 = vadd.f32 %v4279, %v4313
        %v4376 = vadd.f32 %v4280, %v4314
        %v4377 = vadd.f32 %v4281, %v4314
        %v4378 = vadd.f32 %v4282, %v4315
        %v4379 = vadd.f32 %v4283, %v4315
        %v4380 = vpack.c.bf16 %v4317, %v4316
        %v4381 = vpack.c.bf16 %v4319, %v4318
        %v4382 = vpack.c.bf16 %v4321, %v4320
        %v4383 = vpack.c.bf16 %v4323, %v4322
        %v4384 = vpack.c.bf16 %v4325, %v4324
        %v4385 = vpack.c.bf16 %v4327, %v4326
        %v4386 = vpack.c.bf16 %v4329, %v4328
        %v4387 = vpack.c.bf16 %v4331, %v4330
        %v4388 = vpack.c.bf16 %v4333, %v4332
        %v4389 = vpack.c.bf16 %v4335, %v4334
        %v4390 = vpack.c.bf16 %v4337, %v4336
        %v4391 = vpack.c.bf16 %v4339, %v4338
        %v4392 = vpack.c.bf16 %v4341, %v4340
        %v4393 = vpack.c.bf16 %v4343, %v4342
        %v4394 = vpack.c.bf16 %v4345, %v4344
        %v4395 = vpack.c.bf16 %v4347, %v4346
        %v4396 = vpack.c.bf16 %v4349, %v4348
        %v4397 = vpack.c.bf16 %v4351, %v4350
        %v4398 = vpack.c.bf16 %v4353, %v4352
        %v4399 = vpack.c.bf16 %v4355, %v4354
        %v4400 = vpack.c.bf16 %v4357, %v4356
        %v4401 = vpack.c.bf16 %v4359, %v4358
        %v4402 = vpack.c.bf16 %v4361, %v4360
        %v4403 = vpack.c.bf16 %v4363, %v4362
        %v4404 = vpack.c.bf16 %v4365, %v4364
        %v4405 = vpack.c.bf16 %v4367, %v4366
        %v4406 = vpack.c.bf16 %v4369, %v4368
        %v4407 = vpack.c.bf16 %v4371, %v4370
        %v4408 = vpack.c.bf16 %v4373, %v4372
        %v4409 = vpack.c.bf16 %v4375, %v4374
        %v4410 = vpack.c.bf16 %v4377, %v4376
        %v4411 = vpack.c.bf16 %v4379, %v4378
        %v4412 = vunpack.c.l.bf16 %v4380
        %v4413 = vunpack.c.h.bf16 %v4380
        %v4414 = vunpack.c.l.bf16 %v4381
        %v4415 = vunpack.c.h.bf16 %v4381
        %v4416 = vunpack.c.l.bf16 %v4382
        %v4417 = vunpack.c.h.bf16 %v4382
        %v4418 = vunpack.c.l.bf16 %v4383
        %v4419 = vunpack.c.h.bf16 %v4383
        %v4420 = vunpack.c.l.bf16 %v4384
        %v4421 = vunpack.c.h.bf16 %v4384
        %v4422 = vunpack.c.l.bf16 %v4385
        %v4423 = vunpack.c.h.bf16 %v4385
        %v4424 = vunpack.c.l.bf16 %v4386
        %v4425 = vunpack.c.h.bf16 %v4386
        %v4426 = vunpack.c.l.bf16 %v4387
        %v4427 = vunpack.c.h.bf16 %v4387
        %v4428 = vunpack.c.l.bf16 %v4388
        %v4429 = vunpack.c.h.bf16 %v4388
        %v4430 = vunpack.c.l.bf16 %v4389
        %v4431 = vunpack.c.h.bf16 %v4389
        %v4432 = vunpack.c.l.bf16 %v4390
        %v4433 = vunpack.c.h.bf16 %v4390
        %v4434 = vunpack.c.l.bf16 %v4391
        %v4435 = vunpack.c.h.bf16 %v4391
        %v4436 = vunpack.c.l.bf16 %v4392
        %v4437 = vunpack.c.h.bf16 %v4392
        %v4438 = vunpack.c.l.bf16 %v4393
        %v4439 = vunpack.c.h.bf16 %v4393
        %v4440 = vunpack.c.l.bf16 %v4394
        %v4441 = vunpack.c.h.bf16 %v4394
        %v4442 = vunpack.c.l.bf16 %v4395
        %v4443 = vunpack.c.h.bf16 %v4395
        %v4444 = vunpack.c.l.bf16 %v4396
        %v4445 = vunpack.c.h.bf16 %v4396
        %v4446 = vunpack.c.l.bf16 %v4397
        %v4447 = vunpack.c.h.bf16 %v4397
        %v4448 = vunpack.c.l.bf16 %v4398
        %v4449 = vunpack.c.h.bf16 %v4398
        %v4450 = vunpack.c.l.bf16 %v4399
        %v4451 = vunpack.c.h.bf16 %v4399
        %v4452 = vunpack.c.l.bf16 %v4400
        %v4453 = vunpack.c.h.bf16 %v4400
        %v4454 = vunpack.c.l.bf16 %v4401
        %v4455 = vunpack.c.h.bf16 %v4401
        %v4456 = vunpack.c.l.bf16 %v4402
        %v4457 = vunpack.c.h.bf16 %v4402
        %v4458 = vunpack.c.l.bf16 %v4403
        %v4459 = vunpack.c.h.bf16 %v4403
        %v4460 = vunpack.c.l.bf16 %v4404
        %v4461 = vunpack.c.h.bf16 %v4404
        %v4462 = vunpack.c.l.bf16 %v4405
        %v4463 = vunpack.c.h.bf16 %v4405
        %v4464 = vunpack.c.l.bf16 %v4406
        %v4465 = vunpack.c.h.bf16 %v4406
        %v4466 = vunpack.c.l.bf16 %v4407
        %v4467 = vunpack.c.h.bf16 %v4407
        %v4468 = vunpack.c.l.bf16 %v4408
        %v4469 = vunpack.c.h.bf16 %v4408
        %v4470 = vunpack.c.l.bf16 %v4409
        %v4471 = vunpack.c.h.bf16 %v4409
        %v4472 = vunpack.c.l.bf16 %v4410
        %v4473 = vunpack.c.h.bf16 %v4410
        %v4474 = vunpack.c.l.bf16 %v4411
        %v4475 = vunpack.c.h.bf16 %v4411
        %v4476 = vmul.f32 %v4412, %v4412
        %v4477 = vmul.f32 %v4413, %v4413
        %v4478 = vmul.f32 %v4414, %v4414
        %v4479 = vmul.f32 %v4415, %v4415
        %v4480 = vmul.f32 %v4416, %v4416
        %v4481 = vmul.f32 %v4417, %v4417
        %v4482 = vmul.f32 %v4418, %v4418
        %v4483 = vmul.f32 %v4419, %v4419
        %v4484 = vmul.f32 %v4420, %v4420
        %v4485 = vmul.f32 %v4421, %v4421
        %v4486 = vmul.f32 %v4422, %v4422
        %v4487 = vmul.f32 %v4423, %v4423
        %v4488 = vmul.f32 %v4424, %v4424
        %v4489 = vmul.f32 %v4425, %v4425
        %v4490 = vmul.f32 %v4426, %v4426
        %v4491 = vmul.f32 %v4427, %v4427
        %v4492 = vmul.f32 %v4428, %v4428
        %v4493 = vmul.f32 %v4429, %v4429
        %v4494 = vmul.f32 %v4430, %v4430
        %v4495 = vmul.f32 %v4431, %v4431
        %v4496 = vmul.f32 %v4432, %v4432
        %v4497 = vmul.f32 %v4433, %v4433
        %v4498 = vmul.f32 %v4434, %v4434
        %v4499 = vmul.f32 %v4435, %v4435
        %v4500 = vmul.f32 %v4436, %v4436
        %v4501 = vmul.f32 %v4437, %v4437
        %v4502 = vmul.f32 %v4438, %v4438
        %v4503 = vmul.f32 %v4439, %v4439
        %v4504 = vmul.f32 %v4440, %v4440
        %v4505 = vmul.f32 %v4441, %v4441
        %v4506 = vmul.f32 %v4442, %v4442
        %v4507 = vmul.f32 %v4443, %v4443
        %v4508 = vmul.f32 %v4444, %v4444
        %v4509 = vmul.f32 %v4445, %v4445
        %v4510 = vmul.f32 %v4446, %v4446
        %v4511 = vmul.f32 %v4447, %v4447
        %v4512 = vmul.f32 %v4448, %v4448
        %v4513 = vmul.f32 %v4449, %v4449
        %v4514 = vmul.f32 %v4450, %v4450
        %v4515 = vmul.f32 %v4451, %v4451
        %v4516 = vmul.f32 %v4452, %v4452
        %v4517 = vmul.f32 %v4453, %v4453
        %v4518 = vmul.f32 %v4454, %v4454
        %v4519 = vmul.f32 %v4455, %v4455
        %v4520 = vmul.f32 %v4456, %v4456
        %v4521 = vmul.f32 %v4457, %v4457
        %v4522 = vmul.f32 %v4458, %v4458
        %v4523 = vmul.f32 %v4459, %v4459
        %v4524 = vmul.f32 %v4460, %v4460
        %v4525 = vmul.f32 %v4461, %v4461
        %v4526 = vmul.f32 %v4462, %v4462
        %v4527 = vmul.f32 %v4463, %v4463
        %v4528 = vmul.f32 %v4464, %v4464
        %v4529 = vmul.f32 %v4465, %v4465
        %v4530 = vmul.f32 %v4466, %v4466
        %v4531 = vmul.f32 %v4467, %v4467
        %v4532 = vmul.f32 %v4468, %v4468
        %v4533 = vmul.f32 %v4469, %v4469
        %v4534 = vmul.f32 %v4470, %v4470
        %v4535 = vmul.f32 %v4471, %v4471
        %v4536 = vmul.f32 %v4472, %v4472
        %v4537 = vmul.f32 %v4473, %v4473
        %v4538 = vmul.f32 %v4474, %v4474
        %v4539 = vmul.f32 %v4475, %v4475
        %v4540 = vpack.c.bf16 %v4477, %v4476
        %v4541 = vpack.c.bf16 %v4479, %v4478
        %v4542 = vpack.c.bf16 %v4481, %v4480
        %v4543 = vpack.c.bf16 %v4483, %v4482
        %v4544 = vpack.c.bf16 %v4485, %v4484
        %v4545 = vpack.c.bf16 %v4487, %v4486
        %v4546 = vpack.c.bf16 %v4489, %v4488
        %v4547 = vpack.c.bf16 %v4491, %v4490
        %v4548 = vpack.c.bf16 %v4493, %v4492
        %v4549 = vpack.c.bf16 %v4495, %v4494
        %v4550 = vpack.c.bf16 %v4497, %v4496
        %v4551 = vpack.c.bf16 %v4499, %v4498
        %v4552 = vpack.c.bf16 %v4501, %v4500
        %v4553 = vpack.c.bf16 %v4503, %v4502
        %v4554 = vpack.c.bf16 %v4505, %v4504
        %v4555 = vpack.c.bf16 %v4507, %v4506
        %v4556 = vpack.c.bf16 %v4509, %v4508
        %v4557 = vpack.c.bf16 %v4511, %v4510
        %v4558 = vpack.c.bf16 %v4513, %v4512
        %v4559 = vpack.c.bf16 %v4515, %v4514
        %v4560 = vpack.c.bf16 %v4517, %v4516
        %v4561 = vpack.c.bf16 %v4519, %v4518
        %v4562 = vpack.c.bf16 %v4521, %v4520
        %v4563 = vpack.c.bf16 %v4523, %v4522
        %v4564 = vpack.c.bf16 %v4525, %v4524
        %v4565 = vpack.c.bf16 %v4527, %v4526
        %v4566 = vpack.c.bf16 %v4529, %v4528
        %v4567 = vpack.c.bf16 %v4531, %v4530
        %v4568 = vpack.c.bf16 %v4533, %v4532
        %v4569 = vpack.c.bf16 %v4535, %v4534
        %v4570 = vpack.c.bf16 %v4537, %v4536
        %v4571 = vpack.c.bf16 %v4539, %v4538
        %v4572 = vunpack.c.l.bf16 %v4540
        %v4573 = vunpack.c.h.bf16 %v4540
        %v4574 = vunpack.c.l.bf16 %v4541
        %v4575 = vunpack.c.h.bf16 %v4541
        %v4576 = vunpack.c.l.bf16 %v4542
        %v4577 = vunpack.c.h.bf16 %v4542
        %v4578 = vunpack.c.l.bf16 %v4543
        %v4579 = vunpack.c.h.bf16 %v4543
        %v4580 = vunpack.c.l.bf16 %v4544
        %v4581 = vunpack.c.h.bf16 %v4544
        %v4582 = vunpack.c.l.bf16 %v4545
        %v4583 = vunpack.c.h.bf16 %v4545
        %v4584 = vunpack.c.l.bf16 %v4546
        %v4585 = vunpack.c.h.bf16 %v4546
        %v4586 = vunpack.c.l.bf16 %v4547
        %v4587 = vunpack.c.h.bf16 %v4547
        %v4588 = vunpack.c.l.bf16 %v4548
        %v4589 = vunpack.c.h.bf16 %v4548
        %v4590 = vunpack.c.l.bf16 %v4549
        %v4591 = vunpack.c.h.bf16 %v4549
        %v4592 = vunpack.c.l.bf16 %v4550
        %v4593 = vunpack.c.h.bf16 %v4550
        %v4594 = vunpack.c.l.bf16 %v4551
        %v4595 = vunpack.c.h.bf16 %v4551
        %v4596 = vunpack.c.l.bf16 %v4552
        %v4597 = vunpack.c.h.bf16 %v4552
        %v4598 = vunpack.c.l.bf16 %v4553
        %v4599 = vunpack.c.h.bf16 %v4553
        %v4600 = vunpack.c.l.bf16 %v4554
        %v4601 = vunpack.c.h.bf16 %v4554
        %v4602 = vunpack.c.l.bf16 %v4555
        %v4603 = vunpack.c.h.bf16 %v4555
        %v4604 = vunpack.c.l.bf16 %v4556
        %v4605 = vunpack.c.h.bf16 %v4556
        %v4606 = vunpack.c.l.bf16 %v4557
        %v4607 = vunpack.c.h.bf16 %v4557
        %v4608 = vunpack.c.l.bf16 %v4558
        %v4609 = vunpack.c.h.bf16 %v4558
        %v4610 = vunpack.c.l.bf16 %v4559
        %v4611 = vunpack.c.h.bf16 %v4559
        %v4612 = vunpack.c.l.bf16 %v4560
        %v4613 = vunpack.c.h.bf16 %v4560
        %v4614 = vunpack.c.l.bf16 %v4561
        %v4615 = vunpack.c.h.bf16 %v4561
        %v4616 = vunpack.c.l.bf16 %v4562
        %v4617 = vunpack.c.h.bf16 %v4562
        %v4618 = vunpack.c.l.bf16 %v4563
        %v4619 = vunpack.c.h.bf16 %v4563
        %v4620 = vunpack.c.l.bf16 %v4564
        %v4621 = vunpack.c.h.bf16 %v4564
        %v4622 = vunpack.c.l.bf16 %v4565
        %v4623 = vunpack.c.h.bf16 %v4565
        %v4624 = vunpack.c.l.bf16 %v4566
        %v4625 = vunpack.c.h.bf16 %v4566
        %v4626 = vunpack.c.l.bf16 %v4567
        %v4627 = vunpack.c.h.bf16 %v4567
        %v4628 = vunpack.c.l.bf16 %v4568
        %v4629 = vunpack.c.h.bf16 %v4568
        %v4630 = vunpack.c.l.bf16 %v4569
        %v4631 = vunpack.c.h.bf16 %v4569
        %v4632 = vunpack.c.l.bf16 %v4570
        %v4633 = vunpack.c.h.bf16 %v4570
        %v4634 = vunpack.c.l.bf16 %v4571
        %v4635 = vunpack.c.h.bf16 %v4571
        %v4636 = vmul.f32 %v4412, %v4572
        %v4637 = vmul.f32 %v4413, %v4573
        %v4638 = vmul.f32 %v4414, %v4574
        %v4639 = vmul.f32 %v4415, %v4575
        %v4640 = vmul.f32 %v4416, %v4576
        %v4641 = vmul.f32 %v4417, %v4577
        %v4642 = vmul.f32 %v4418, %v4578
        %v4643 = vmul.f32 %v4419, %v4579
        %v4644 = vmul.f32 %v4420, %v4580
        %v4645 = vmul.f32 %v4421, %v4581
        %v4646 = vmul.f32 %v4422, %v4582
        %v4647 = vmul.f32 %v4423, %v4583
        %v4648 = vmul.f32 %v4424, %v4584
        %v4649 = vmul.f32 %v4425, %v4585
        %v4650 = vmul.f32 %v4426, %v4586
        %v4651 = vmul.f32 %v4427, %v4587
        %v4652 = vmul.f32 %v4428, %v4588
        %v4653 = vmul.f32 %v4429, %v4589
        %v4654 = vmul.f32 %v4430, %v4590
        %v4655 = vmul.f32 %v4431, %v4591
        %v4656 = vmul.f32 %v4432, %v4592
        %v4657 = vmul.f32 %v4433, %v4593
        %v4658 = vmul.f32 %v4434, %v4594
        %v4659 = vmul.f32 %v4435, %v4595
        %v4660 = vmul.f32 %v4436, %v4596
        %v4661 = vmul.f32 %v4437, %v4597
        %v4662 = vmul.f32 %v4438, %v4598
        %v4663 = vmul.f32 %v4439, %v4599
        %v4664 = vmul.f32 %v4440, %v4600
        %v4665 = vmul.f32 %v4441, %v4601
        %v4666 = vmul.f32 %v4442, %v4602
        %v4667 = vmul.f32 %v4443, %v4603
        %v4668 = vmul.f32 %v4444, %v4604
        %v4669 = vmul.f32 %v4445, %v4605
        %v4670 = vmul.f32 %v4446, %v4606
        %v4671 = vmul.f32 %v4447, %v4607
        %v4672 = vmul.f32 %v4448, %v4608
        %v4673 = vmul.f32 %v4449, %v4609
        %v4674 = vmul.f32 %v4450, %v4610
        %v4675 = vmul.f32 %v4451, %v4611
        %v4676 = vmul.f32 %v4452, %v4612
        %v4677 = vmul.f32 %v4453, %v4613
        %v4678 = vmul.f32 %v4454, %v4614
        %v4679 = vmul.f32 %v4455, %v4615
        %v4680 = vmul.f32 %v4456, %v4616
        %v4681 = vmul.f32 %v4457, %v4617
        %v4682 = vmul.f32 %v4458, %v4618
        %v4683 = vmul.f32 %v4459, %v4619
        %v4684 = vmul.f32 %v4460, %v4620
        %v4685 = vmul.f32 %v4461, %v4621
        %v4686 = vmul.f32 %v4462, %v4622
        %v4687 = vmul.f32 %v4463, %v4623
        %v4688 = vmul.f32 %v4464, %v4624
        %v4689 = vmul.f32 %v4465, %v4625
        %v4690 = vmul.f32 %v4466, %v4626
        %v4691 = vmul.f32 %v4467, %v4627
        %v4692 = vmul.f32 %v4468, %v4628
        %v4693 = vmul.f32 %v4469, %v4629
        %v4694 = vmul.f32 %v4470, %v4630
        %v4695 = vmul.f32 %v4471, %v4631
        %v4696 = vmul.f32 %v4472, %v4632
        %v4697 = vmul.f32 %v4473, %v4633
        %v4698 = vmul.f32 %v4474, %v4634
        %v4699 = vmul.f32 %v4475, %v4635
        %v4700 = vpack.c.bf16 %v4637, %v4636
        %v4701 = vpack.c.bf16 %v4639, %v4638
        %v4702 = vpack.c.bf16 %v4641, %v4640
        %v4703 = vpack.c.bf16 %v4643, %v4642
        %v4704 = vpack.c.bf16 %v4645, %v4644
        %v4705 = vpack.c.bf16 %v4647, %v4646
        %v4706 = vpack.c.bf16 %v4649, %v4648
        %v4707 = vpack.c.bf16 %v4651, %v4650
        %v4708 = vpack.c.bf16 %v4653, %v4652
        %v4709 = vpack.c.bf16 %v4655, %v4654
        %v4710 = vpack.c.bf16 %v4657, %v4656
        %v4711 = vpack.c.bf16 %v4659, %v4658
        %v4712 = vpack.c.bf16 %v4661, %v4660
        %v4713 = vpack.c.bf16 %v4663, %v4662
        %v4714 = vpack.c.bf16 %v4665, %v4664
        %v4715 = vpack.c.bf16 %v4667, %v4666
        %v4716 = vpack.c.bf16 %v4669, %v4668
        %v4717 = vpack.c.bf16 %v4671, %v4670
        %v4718 = vpack.c.bf16 %v4673, %v4672
        %v4719 = vpack.c.bf16 %v4675, %v4674
        %v4720 = vpack.c.bf16 %v4677, %v4676
        %v4721 = vpack.c.bf16 %v4679, %v4678
        %v4722 = vpack.c.bf16 %v4681, %v4680
        %v4723 = vpack.c.bf16 %v4683, %v4682
        %v4724 = vpack.c.bf16 %v4685, %v4684
        %v4725 = vpack.c.bf16 %v4687, %v4686
        %v4726 = vpack.c.bf16 %v4689, %v4688
        %v4727 = vpack.c.bf16 %v4691, %v4690
        %v4728 = vpack.c.bf16 %v4693, %v4692
        %v4729 = vpack.c.bf16 %v4695, %v4694
        %v4730 = vpack.c.bf16 %v4697, %v4696
        %v4731 = vpack.c.bf16 %v4699, %v4698
        %v4732 = vunpack.c.l.bf16 %v4700
        %v4733 = vunpack.c.h.bf16 %v4700
        %v4734 = vunpack.c.l.bf16 %v4701
        %v4735 = vunpack.c.h.bf16 %v4701
        %v4736 = vunpack.c.l.bf16 %v4702
        %v4737 = vunpack.c.h.bf16 %v4702
        %v4738 = vunpack.c.l.bf16 %v4703
        %v4739 = vunpack.c.h.bf16 %v4703
        %v4740 = vunpack.c.l.bf16 %v4704
        %v4741 = vunpack.c.h.bf16 %v4704
        %v4742 = vunpack.c.l.bf16 %v4705
        %v4743 = vunpack.c.h.bf16 %v4705
        %v4744 = vunpack.c.l.bf16 %v4706
        %v4745 = vunpack.c.h.bf16 %v4706
        %v4746 = vunpack.c.l.bf16 %v4707
        %v4747 = vunpack.c.h.bf16 %v4707
        %v4748 = vunpack.c.l.bf16 %v4708
        %v4749 = vunpack.c.h.bf16 %v4708
        %v4750 = vunpack.c.l.bf16 %v4709
        %v4751 = vunpack.c.h.bf16 %v4709
        %v4752 = vunpack.c.l.bf16 %v4710
        %v4753 = vunpack.c.h.bf16 %v4710
        %v4754 = vunpack.c.l.bf16 %v4711
        %v4755 = vunpack.c.h.bf16 %v4711
        %v4756 = vunpack.c.l.bf16 %v4712
        %v4757 = vunpack.c.h.bf16 %v4712
        %v4758 = vunpack.c.l.bf16 %v4713
        %v4759 = vunpack.c.h.bf16 %v4713
        %v4760 = vunpack.c.l.bf16 %v4714
        %v4761 = vunpack.c.h.bf16 %v4714
        %v4762 = vunpack.c.l.bf16 %v4715
        %v4763 = vunpack.c.h.bf16 %v4715
        %v4764 = vunpack.c.l.bf16 %v4716
        %v4765 = vunpack.c.h.bf16 %v4716
        %v4766 = vunpack.c.l.bf16 %v4717
        %v4767 = vunpack.c.h.bf16 %v4717
        %v4768 = vunpack.c.l.bf16 %v4718
        %v4769 = vunpack.c.h.bf16 %v4718
        %v4770 = vunpack.c.l.bf16 %v4719
        %v4771 = vunpack.c.h.bf16 %v4719
        %v4772 = vunpack.c.l.bf16 %v4720
        %v4773 = vunpack.c.h.bf16 %v4720
        %v4774 = vunpack.c.l.bf16 %v4721
        %v4775 = vunpack.c.h.bf16 %v4721
        %v4776 = vunpack.c.l.bf16 %v4722
        %v4777 = vunpack.c.h.bf16 %v4722
        %v4778 = vunpack.c.l.bf16 %v4723
        %v4779 = vunpack.c.h.bf16 %v4723
        %v4780 = vunpack.c.l.bf16 %v4724
        %v4781 = vunpack.c.h.bf16 %v4724
        %v4782 = vunpack.c.l.bf16 %v4725
        %v4783 = vunpack.c.h.bf16 %v4725
        %v4784 = vunpack.c.l.bf16 %v4726
        %v4785 = vunpack.c.h.bf16 %v4726
        %v4786 = vunpack.c.l.bf16 %v4727
        %v4787 = vunpack.c.h.bf16 %v4727
        %v4788 = vunpack.c.l.bf16 %v4728
        %v4789 = vunpack.c.h.bf16 %v4728
        %v4790 = vunpack.c.l.bf16 %v4729
        %v4791 = vunpack.c.h.bf16 %v4729
        %v4792 = vunpack.c.l.bf16 %v4730
        %v4793 = vunpack.c.h.bf16 %v4730
        %v4794 = vunpack.c.l.bf16 %v4731
        %v4795 = vunpack.c.h.bf16 %v4731
        %v4796 = vmul.f32 %v4732, 0.044677734
        %v4797 = vmul.f32 %v4733, 0.044677734
        %v4798 = vmul.f32 %v4734, 0.044677734
        %v4799 = vmul.f32 %v4735, 0.044677734
        %v4800 = vmul.f32 %v4736, 0.044677734
        %v4801 = vmul.f32 %v4737, 0.044677734
        %v4802 = vmul.f32 %v4738, 0.044677734
        %v4803 = vmul.f32 %v4739, 0.044677734
        %v4804 = vmul.f32 %v4740, 0.044677734
        %v4805 = vmul.f32 %v4741, 0.044677734
        %v4806 = vmul.f32 %v4742, 0.044677734
        %v4807 = vmul.f32 %v4743, 0.044677734
        %v4808 = vmul.f32 %v4744, 0.044677734
        %v4809 = vmul.f32 %v4745, 0.044677734
        %v4810 = vmul.f32 %v4746, 0.044677734
        %v4811 = vmul.f32 %v4747, 0.044677734
        %v4812 = vmul.f32 %v4748, 0.044677734
        %v4813 = vmul.f32 %v4749, 0.044677734
        %v4814 = vmul.f32 %v4750, 0.044677734
        %v4815 = vmul.f32 %v4751, 0.044677734
        %v4816 = vmul.f32 %v4752, 0.044677734
        %v4817 = vmul.f32 %v4753, 0.044677734
        %v4818 = vmul.f32 %v4754, 0.044677734
        %v4819 = vmul.f32 %v4755, 0.044677734
        %v4820 = vmul.f32 %v4756, 0.044677734
        %v4821 = vmul.f32 %v4757, 0.044677734
        %v4822 = vmul.f32 %v4758, 0.044677734
        %v4823 = vmul.f32 %v4759, 0.044677734
        %v4824 = vmul.f32 %v4760, 0.044677734
        %v4825 = vmul.f32 %v4761, 0.044677734
        %v4826 = vmul.f32 %v4762, 0.044677734
        %v4827 = vmul.f32 %v4763, 0.044677734
        %v4828 = vmul.f32 %v4764, 0.044677734
        %v4829 = vmul.f32 %v4765, 0.044677734
        %v4830 = vmul.f32 %v4766, 0.044677734
        %v4831 = vmul.f32 %v4767, 0.044677734
        %v4832 = vmul.f32 %v4768, 0.044677734
        %v4833 = vmul.f32 %v4769, 0.044677734
        %v4834 = vmul.f32 %v4770, 0.044677734
        %v4835 = vmul.f32 %v4771, 0.044677734
        %v4836 = vmul.f32 %v4772, 0.044677734
        %v4837 = vmul.f32 %v4773, 0.044677734
        %v4838 = vmul.f32 %v4774, 0.044677734
        %v4839 = vmul.f32 %v4775, 0.044677734
        %v4840 = vmul.f32 %v4776, 0.044677734
        %v4841 = vmul.f32 %v4777, 0.044677734
        %v4842 = vmul.f32 %v4778, 0.044677734
        %v4843 = vmul.f32 %v4779, 0.044677734
        %v4844 = vmul.f32 %v4780, 0.044677734
        %v4845 = vmul.f32 %v4781, 0.044677734
        %v4846 = vmul.f32 %v4782, 0.044677734
        %v4847 = vmul.f32 %v4783, 0.044677734
        %v4848 = vmul.f32 %v4784, 0.044677734
        %v4849 = vmul.f32 %v4785, 0.044677734
        %v4850 = vmul.f32 %v4786, 0.044677734
        %v4851 = vmul.f32 %v4787, 0.044677734
        %v4852 = vmul.f32 %v4788, 0.044677734
        %v4853 = vmul.f32 %v4789, 0.044677734
        %v4854 = vmul.f32 %v4790, 0.044677734
        %v4855 = vmul.f32 %v4791, 0.044677734
        %v4856 = vmul.f32 %v4792, 0.044677734
        %v4857 = vmul.f32 %v4793, 0.044677734
        %v4858 = vmul.f32 %v4794, 0.044677734
        %v4859 = vmul.f32 %v4795, 0.044677734
        %v4860 = vpack.c.bf16 %v4797, %v4796
        %v4861 = vpack.c.bf16 %v4799, %v4798
        %v4862 = vpack.c.bf16 %v4801, %v4800
        %v4863 = vpack.c.bf16 %v4803, %v4802
        %v4864 = vpack.c.bf16 %v4805, %v4804
        %v4865 = vpack.c.bf16 %v4807, %v4806
        %v4866 = vpack.c.bf16 %v4809, %v4808
        %v4867 = vpack.c.bf16 %v4811, %v4810
        %v4868 = vpack.c.bf16 %v4813, %v4812
        %v4869 = vpack.c.bf16 %v4815, %v4814
        %v4870 = vpack.c.bf16 %v4817, %v4816
        %v4871 = vpack.c.bf16 %v4819, %v4818
        %v4872 = vpack.c.bf16 %v4821, %v4820
        %v4873 = vpack.c.bf16 %v4823, %v4822
        %v4874 = vpack.c.bf16 %v4825, %v4824
        %v4875 = vpack.c.bf16 %v4827, %v4826
        %v4876 = vpack.c.bf16 %v4829, %v4828
        %v4877 = vpack.c.bf16 %v4831, %v4830
        %v4878 = vpack.c.bf16 %v4833, %v4832
        %v4879 = vpack.c.bf16 %v4835, %v4834
        %v4880 = vpack.c.bf16 %v4837, %v4836
        %v4881 = vpack.c.bf16 %v4839, %v4838
        %v4882 = vpack.c.bf16 %v4841, %v4840
        %v4883 = vpack.c.bf16 %v4843, %v4842
        %v4884 = vpack.c.bf16 %v4845, %v4844
        %v4885 = vpack.c.bf16 %v4847, %v4846
        %v4886 = vpack.c.bf16 %v4849, %v4848
        %v4887 = vpack.c.bf16 %v4851, %v4850
        %v4888 = vpack.c.bf16 %v4853, %v4852
        %v4889 = vpack.c.bf16 %v4855, %v4854
        %v4890 = vpack.c.bf16 %v4857, %v4856
        %v4891 = vpack.c.bf16 %v4859, %v4858
        %v4892 = vunpack.c.l.bf16 %v4860
        %v4893 = vunpack.c.h.bf16 %v4860
        %v4894 = vunpack.c.l.bf16 %v4861
        %v4895 = vunpack.c.h.bf16 %v4861
        %v4896 = vunpack.c.l.bf16 %v4862
        %v4897 = vunpack.c.h.bf16 %v4862
        %v4898 = vunpack.c.l.bf16 %v4863
        %v4899 = vunpack.c.h.bf16 %v4863
        %v4900 = vunpack.c.l.bf16 %v4864
        %v4901 = vunpack.c.h.bf16 %v4864
        %v4902 = vunpack.c.l.bf16 %v4865
        %v4903 = vunpack.c.h.bf16 %v4865
        %v4904 = vunpack.c.l.bf16 %v4866
        %v4905 = vunpack.c.h.bf16 %v4866
        %v4906 = vunpack.c.l.bf16 %v4867
        %v4907 = vunpack.c.h.bf16 %v4867
        %v4908 = vunpack.c.l.bf16 %v4868
        %v4909 = vunpack.c.h.bf16 %v4868
        %v4910 = vunpack.c.l.bf16 %v4869
        %v4911 = vunpack.c.h.bf16 %v4869
        %v4912 = vunpack.c.l.bf16 %v4870
        %v4913 = vunpack.c.h.bf16 %v4870
        %v4914 = vunpack.c.l.bf16 %v4871
        %v4915 = vunpack.c.h.bf16 %v4871
        %v4916 = vunpack.c.l.bf16 %v4872
        %v4917 = vunpack.c.h.bf16 %v4872
        %v4918 = vunpack.c.l.bf16 %v4873
        %v4919 = vunpack.c.h.bf16 %v4873
        %v4920 = vunpack.c.l.bf16 %v4874
        %v4921 = vunpack.c.h.bf16 %v4874
        %v4922 = vunpack.c.l.bf16 %v4875
        %v4923 = vunpack.c.h.bf16 %v4875
        %v4924 = vunpack.c.l.bf16 %v4876
        %v4925 = vunpack.c.h.bf16 %v4876
        %v4926 = vunpack.c.l.bf16 %v4877
        %v4927 = vunpack.c.h.bf16 %v4877
        %v4928 = vunpack.c.l.bf16 %v4878
        %v4929 = vunpack.c.h.bf16 %v4878
        %v4930 = vunpack.c.l.bf16 %v4879
        %v4931 = vunpack.c.h.bf16 %v4879
        %v4932 = vunpack.c.l.bf16 %v4880
        %v4933 = vunpack.c.h.bf16 %v4880
        %v4934 = vunpack.c.l.bf16 %v4881
        %v4935 = vunpack.c.h.bf16 %v4881
        %v4936 = vunpack.c.l.bf16 %v4882
        %v4937 = vunpack.c.h.bf16 %v4882
        %v4938 = vunpack.c.l.bf16 %v4883
        %v4939 = vunpack.c.h.bf16 %v4883
        %v4940 = vunpack.c.l.bf16 %v4884
        %v4941 = vunpack.c.h.bf16 %v4884
        %v4942 = vunpack.c.l.bf16 %v4885
        %v4943 = vunpack.c.h.bf16 %v4885
        %v4944 = vunpack.c.l.bf16 %v4886
        %v4945 = vunpack.c.h.bf16 %v4886
        %v4946 = vunpack.c.l.bf16 %v4887
        %v4947 = vunpack.c.h.bf16 %v4887
        %v4948 = vunpack.c.l.bf16 %v4888
        %v4949 = vunpack.c.h.bf16 %v4888
        %v4950 = vunpack.c.l.bf16 %v4889
        %v4951 = vunpack.c.h.bf16 %v4889
        %v4952 = vunpack.c.l.bf16 %v4890
        %v4953 = vunpack.c.h.bf16 %v4890
        %v4954 = vunpack.c.l.bf16 %v4891
        %v4955 = vunpack.c.h.bf16 %v4891
        %v4956 = vadd.f32 %v4412, %v4892
        %v4957 = vadd.f32 %v4413, %v4893
        %v4958 = vadd.f32 %v4414, %v4894
        %v4959 = vadd.f32 %v4415, %v4895
        %v4960 = vadd.f32 %v4416, %v4896
        %v4961 = vadd.f32 %v4417, %v4897
        %v4962 = vadd.f32 %v4418, %v4898
        %v4963 = vadd.f32 %v4419, %v4899
        %v4964 = vadd.f32 %v4420, %v4900
        %v4965 = vadd.f32 %v4421, %v4901
        %v4966 = vadd.f32 %v4422, %v4902
        %v4967 = vadd.f32 %v4423, %v4903
        %v4968 = vadd.f32 %v4424, %v4904
        %v4969 = vadd.f32 %v4425, %v4905
        %v4970 = vadd.f32 %v4426, %v4906
        %v4971 = vadd.f32 %v4427, %v4907
        %v4972 = vadd.f32 %v4428, %v4908
        %v4973 = vadd.f32 %v4429, %v4909
        %v4974 = vadd.f32 %v4430, %v4910
        %v4975 = vadd.f32 %v4431, %v4911
        %v4976 = vadd.f32 %v4432, %v4912
        %v4977 = vadd.f32 %v4433, %v4913
        %v4978 = vadd.f32 %v4434, %v4914
        %v4979 = vadd.f32 %v4435, %v4915
        %v4980 = vadd.f32 %v4436, %v4916
        %v4981 = vadd.f32 %v4437, %v4917
        %v4982 = vadd.f32 %v4438, %v4918
        %v4983 = vadd.f32 %v4439, %v4919
        %v4984 = vadd.f32 %v4440, %v4920
        %v4985 = vadd.f32 %v4441, %v4921
        %v4986 = vadd.f32 %v4442, %v4922
        %v4987 = vadd.f32 %v4443, %v4923
        %v4988 = vadd.f32 %v4444, %v4924
        %v4989 = vadd.f32 %v4445, %v4925
        %v4990 = vadd.f32 %v4446, %v4926
        %v4991 = vadd.f32 %v4447, %v4927
        %v4992 = vadd.f32 %v4448, %v4928
        %v4993 = vadd.f32 %v4449, %v4929
        %v4994 = vadd.f32 %v4450, %v4930
        %v4995 = vadd.f32 %v4451, %v4931
        %v4996 = vadd.f32 %v4452, %v4932
        %v4997 = vadd.f32 %v4453, %v4933
        %v4998 = vadd.f32 %v4454, %v4934
        %v4999 = vadd.f32 %v4455, %v4935
        %v5000 = vadd.f32 %v4456, %v4936
        %v5001 = vadd.f32 %v4457, %v4937
        %v5002 = vadd.f32 %v4458, %v4938
        %v5003 = vadd.f32 %v4459, %v4939
        %v5004 = vadd.f32 %v4460, %v4940
        %v5005 = vadd.f32 %v4461, %v4941
        %v5006 = vadd.f32 %v4462, %v4942
        %v5007 = vadd.f32 %v4463, %v4943
        %v5008 = vadd.f32 %v4464, %v4944
        %v5009 = vadd.f32 %v4465, %v4945
        %v5010 = vadd.f32 %v4466, %v4946
        %v5011 = vadd.f32 %v4467, %v4947
        %v5012 = vadd.f32 %v4468, %v4948
        %v5013 = vadd.f32 %v4469, %v4949
        %v5014 = vadd.f32 %v4470, %v4950
        %v5015 = vadd.f32 %v4471, %v4951
        %v5016 = vadd.f32 %v4472, %v4952
        %v5017 = vadd.f32 %v4473, %v4953
        %v5018 = vadd.f32 %v4474, %v4954
        %v5019 = vadd.f32 %v4475, %v4955
        %v5020 = vpack.c.bf16 %v4957, %v4956
        %v5021 = vpack.c.bf16 %v4959, %v4958
        %v5022 = vpack.c.bf16 %v4961, %v4960
        %v5023 = vpack.c.bf16 %v4963, %v4962
        %v5024 = vpack.c.bf16 %v4965, %v4964
        %v5025 = vpack.c.bf16 %v4967, %v4966
        %v5026 = vpack.c.bf16 %v4969, %v4968
        %v5027 = vpack.c.bf16 %v4971, %v4970
        %v5028 = vpack.c.bf16 %v4973, %v4972
        %v5029 = vpack.c.bf16 %v4975, %v4974
        %v5030 = vpack.c.bf16 %v4977, %v4976
        %v5031 = vpack.c.bf16 %v4979, %v4978
        %v5032 = vpack.c.bf16 %v4981, %v4980
        %v5033 = vpack.c.bf16 %v4983, %v4982
        %v5034 = vpack.c.bf16 %v4985, %v4984
        %v5035 = vpack.c.bf16 %v4987, %v4986
        %v5036 = vpack.c.bf16 %v4989, %v4988
        %v5037 = vpack.c.bf16 %v4991, %v4990
        %v5038 = vpack.c.bf16 %v4993, %v4992
        %v5039 = vpack.c.bf16 %v4995, %v4994
        %v5040 = vpack.c.bf16 %v4997, %v4996
        %v5041 = vpack.c.bf16 %v4999, %v4998
        %v5042 = vpack.c.bf16 %v5001, %v5000
        %v5043 = vpack.c.bf16 %v5003, %v5002
        %v5044 = vpack.c.bf16 %v5005, %v5004
        %v5045 = vpack.c.bf16 %v5007, %v5006
        %v5046 = vpack.c.bf16 %v5009, %v5008
        %v5047 = vpack.c.bf16 %v5011, %v5010
        %v5048 = vpack.c.bf16 %v5013, %v5012
        %v5049 = vpack.c.bf16 %v5015, %v5014
        %v5050 = vpack.c.bf16 %v5017, %v5016
        %v5051 = vpack.c.bf16 %v5019, %v5018
        %v5052 = vunpack.c.l.bf16 %v5020
        %v5053 = vunpack.c.h.bf16 %v5020
        %v5054 = vunpack.c.l.bf16 %v5021
        %v5055 = vunpack.c.h.bf16 %v5021
        %v5056 = vunpack.c.l.bf16 %v5022
        %v5057 = vunpack.c.h.bf16 %v5022
        %v5058 = vunpack.c.l.bf16 %v5023
        %v5059 = vunpack.c.h.bf16 %v5023
        %v5060 = vunpack.c.l.bf16 %v5024
        %v5061 = vunpack.c.h.bf16 %v5024
        %v5062 = vunpack.c.l.bf16 %v5025
        %v5063 = vunpack.c.h.bf16 %v5025
        %v5064 = vunpack.c.l.bf16 %v5026
        %v5065 = vunpack.c.h.bf16 %v5026
        %v5066 = vunpack.c.l.bf16 %v5027
        %v5067 = vunpack.c.h.bf16 %v5027
        %v5068 = vunpack.c.l.bf16 %v5028
        %v5069 = vunpack.c.h.bf16 %v5028
        %v5070 = vunpack.c.l.bf16 %v5029
        %v5071 = vunpack.c.h.bf16 %v5029
        %v5072 = vunpack.c.l.bf16 %v5030
        %v5073 = vunpack.c.h.bf16 %v5030
        %v5074 = vunpack.c.l.bf16 %v5031
        %v5075 = vunpack.c.h.bf16 %v5031
        %v5076 = vunpack.c.l.bf16 %v5032
        %v5077 = vunpack.c.h.bf16 %v5032
        %v5078 = vunpack.c.l.bf16 %v5033
        %v5079 = vunpack.c.h.bf16 %v5033
        %v5080 = vunpack.c.l.bf16 %v5034
        %v5081 = vunpack.c.h.bf16 %v5034
        %v5082 = vunpack.c.l.bf16 %v5035
        %v5083 = vunpack.c.h.bf16 %v5035
        %v5084 = vunpack.c.l.bf16 %v5036
        %v5085 = vunpack.c.h.bf16 %v5036
        %v5086 = vunpack.c.l.bf16 %v5037
        %v5087 = vunpack.c.h.bf16 %v5037
        %v5088 = vunpack.c.l.bf16 %v5038
        %v5089 = vunpack.c.h.bf16 %v5038
        %v5090 = vunpack.c.l.bf16 %v5039
        %v5091 = vunpack.c.h.bf16 %v5039
        %v5092 = vunpack.c.l.bf16 %v5040
        %v5093 = vunpack.c.h.bf16 %v5040
        %v5094 = vunpack.c.l.bf16 %v5041
        %v5095 = vunpack.c.h.bf16 %v5041
        %v5096 = vunpack.c.l.bf16 %v5042
        %v5097 = vunpack.c.h.bf16 %v5042
        %v5098 = vunpack.c.l.bf16 %v5043
        %v5099 = vunpack.c.h.bf16 %v5043
        %v5100 = vunpack.c.l.bf16 %v5044
        %v5101 = vunpack.c.h.bf16 %v5044
        %v5102 = vunpack.c.l.bf16 %v5045
        %v5103 = vunpack.c.h.bf16 %v5045
        %v5104 = vunpack.c.l.bf16 %v5046
        %v5105 = vunpack.c.h.bf16 %v5046
        %v5106 = vunpack.c.l.bf16 %v5047
        %v5107 = vunpack.c.h.bf16 %v5047
        %v5108 = vunpack.c.l.bf16 %v5048
        %v5109 = vunpack.c.h.bf16 %v5048
        %v5110 = vunpack.c.l.bf16 %v5049
        %v5111 = vunpack.c.h.bf16 %v5049
        %v5112 = vunpack.c.l.bf16 %v5050
        %v5113 = vunpack.c.h.bf16 %v5050
        %v5114 = vunpack.c.l.bf16 %v5051
        %v5115 = vunpack.c.h.bf16 %v5051
        %v5116 = vmul.f32 %v5052, 0.796875
        %v5117 = vmul.f32 %v5053, 0.796875
        %v5118 = vmul.f32 %v5054, 0.796875
        %v5119 = vmul.f32 %v5055, 0.796875
        %v5120 = vmul.f32 %v5056, 0.796875
        %v5121 = vmul.f32 %v5057, 0.796875
        %v5122 = vmul.f32 %v5058, 0.796875
        %v5123 = vmul.f32 %v5059, 0.796875
        %v5124 = vmul.f32 %v5060, 0.796875
        %v5125 = vmul.f32 %v5061, 0.796875
        %v5126 = vmul.f32 %v5062, 0.796875
        %v5127 = vmul.f32 %v5063, 0.796875
        %v5128 = vmul.f32 %v5064, 0.796875
        %v5129 = vmul.f32 %v5065, 0.796875
        %v5130 = vmul.f32 %v5066, 0.796875
        %v5131 = vmul.f32 %v5067, 0.796875
        %v5132 = vmul.f32 %v5068, 0.796875
        %v5133 = vmul.f32 %v5069, 0.796875
        %v5134 = vmul.f32 %v5070, 0.796875
        %v5135 = vmul.f32 %v5071, 0.796875
        %v5136 = vmul.f32 %v5072, 0.796875
        %v5137 = vmul.f32 %v5073, 0.796875
        %v5138 = vmul.f32 %v5074, 0.796875
        %v5139 = vmul.f32 %v5075, 0.796875
        %v5140 = vmul.f32 %v5076, 0.796875
        %v5141 = vmul.f32 %v5077, 0.796875
        %v5142 = vmul.f32 %v5078, 0.796875
        %v5143 = vmul.f32 %v5079, 0.796875
        %v5144 = vmul.f32 %v5080, 0.796875
        %v5145 = vmul.f32 %v5081, 0.796875
        %v5146 = vmul.f32 %v5082, 0.796875
        %v5147 = vmul.f32 %v5083, 0.796875
        %v5148 = vmul.f32 %v5084, 0.796875
        %v5149 = vmul.f32 %v5085, 0.796875
        %v5150 = vmul.f32 %v5086, 0.796875
        %v5151 = vmul.f32 %v5087, 0.796875
        %v5152 = vmul.f32 %v5088, 0.796875
        %v5153 = vmul.f32 %v5089, 0.796875
        %v5154 = vmul.f32 %v5090, 0.796875
        %v5155 = vmul.f32 %v5091, 0.796875
        %v5156 = vmul.f32 %v5092, 0.796875
        %v5157 = vmul.f32 %v5093, 0.796875
        %v5158 = vmul.f32 %v5094, 0.796875
        %v5159 = vmul.f32 %v5095, 0.796875
        %v5160 = vmul.f32 %v5096, 0.796875
        %v5161 = vmul.f32 %v5097, 0.796875
        %v5162 = vmul.f32 %v5098, 0.796875
        %v5163 = vmul.f32 %v5099, 0.796875
        %v5164 = vmul.f32 %v5100, 0.796875
        %v5165 = vmul.f32 %v5101, 0.796875
        %v5166 = vmul.f32 %v5102, 0.796875
        %v5167 = vmul.f32 %v5103, 0.796875
        %v5168 = vmul.f32 %v5104, 0.796875
        %v5169 = vmul.f32 %v5105, 0.796875
        %v5170 = vmul.f32 %v5106, 0.796875
        %v5171 = vmul.f32 %v5107, 0.796875
        %v5172 = vmul.f32 %v5108, 0.796875
        %v5173 = vmul.f32 %v5109, 0.796875
        %v5174 = vmul.f32 %v5110, 0.796875
        %v5175 = vmul.f32 %v5111, 0.796875
        %v5176 = vmul.f32 %v5112, 0.796875
        %v5177 = vmul.f32 %v5113, 0.796875
        %v5178 = vmul.f32 %v5114, 0.796875
        %v5179 = vmul.f32 %v5115, 0.796875
        %v5180 = vpack.c.bf16 %v5117, %v5116
        %v5181 = vpack.c.bf16 %v5119, %v5118
        %v5182 = vpack.c.bf16 %v5121, %v5120
        %v5183 = vpack.c.bf16 %v5123, %v5122
        %v5184 = vpack.c.bf16 %v5125, %v5124
        %v5185 = vpack.c.bf16 %v5127, %v5126
        %v5186 = vpack.c.bf16 %v5129, %v5128
        %v5187 = vpack.c.bf16 %v5131, %v5130
        %v5188 = vpack.c.bf16 %v5133, %v5132
        %v5189 = vpack.c.bf16 %v5135, %v5134
        %v5190 = vpack.c.bf16 %v5137, %v5136
        %v5191 = vpack.c.bf16 %v5139, %v5138
        %v5192 = vpack.c.bf16 %v5141, %v5140
        %v5193 = vpack.c.bf16 %v5143, %v5142
        %v5194 = vpack.c.bf16 %v5145, %v5144
        %v5195 = vpack.c.bf16 %v5147, %v5146
        %v5196 = vpack.c.bf16 %v5149, %v5148
        %v5197 = vpack.c.bf16 %v5151, %v5150
        %v5198 = vpack.c.bf16 %v5153, %v5152
        %v5199 = vpack.c.bf16 %v5155, %v5154
        %v5200 = vpack.c.bf16 %v5157, %v5156
        %v5201 = vpack.c.bf16 %v5159, %v5158
        %v5202 = vpack.c.bf16 %v5161, %v5160
        %v5203 = vpack.c.bf16 %v5163, %v5162
        %v5204 = vpack.c.bf16 %v5165, %v5164
        %v5205 = vpack.c.bf16 %v5167, %v5166
        %v5206 = vpack.c.bf16 %v5169, %v5168
        %v5207 = vpack.c.bf16 %v5171, %v5170
        %v5208 = vpack.c.bf16 %v5173, %v5172
        %v5209 = vpack.c.bf16 %v5175, %v5174
        %v5210 = vpack.c.bf16 %v5177, %v5176
        %v5211 = vpack.c.bf16 %v5179, %v5178
        %v5212 = vunpack.c.l.bf16 %v5180
        %v5213 = vunpack.c.h.bf16 %v5180
        %v5214 = vunpack.c.l.bf16 %v5181
        %v5215 = vunpack.c.h.bf16 %v5181
        %v5216 = vunpack.c.l.bf16 %v5182
        %v5217 = vunpack.c.h.bf16 %v5182
        %v5218 = vunpack.c.l.bf16 %v5183
        %v5219 = vunpack.c.h.bf16 %v5183
        %v5220 = vunpack.c.l.bf16 %v5184
        %v5221 = vunpack.c.h.bf16 %v5184
        %v5222 = vunpack.c.l.bf16 %v5185
        %v5223 = vunpack.c.h.bf16 %v5185
        %v5224 = vunpack.c.l.bf16 %v5186
        %v5225 = vunpack.c.h.bf16 %v5186
        %v5226 = vunpack.c.l.bf16 %v5187
        %v5227 = vunpack.c.h.bf16 %v5187
        %v5228 = vunpack.c.l.bf16 %v5188
        %v5229 = vunpack.c.h.bf16 %v5188
        %v5230 = vunpack.c.l.bf16 %v5189
        %v5231 = vunpack.c.h.bf16 %v5189
        %v5232 = vunpack.c.l.bf16 %v5190
        %v5233 = vunpack.c.h.bf16 %v5190
        %v5234 = vunpack.c.l.bf16 %v5191
        %v5235 = vunpack.c.h.bf16 %v5191
        %v5236 = vunpack.c.l.bf16 %v5192
        %v5237 = vunpack.c.h.bf16 %v5192
        %v5238 = vunpack.c.l.bf16 %v5193
        %v5239 = vunpack.c.h.bf16 %v5193
        %v5240 = vunpack.c.l.bf16 %v5194
        %v5241 = vunpack.c.h.bf16 %v5194
        %v5242 = vunpack.c.l.bf16 %v5195
        %v5243 = vunpack.c.h.bf16 %v5195
        %v5244 = vunpack.c.l.bf16 %v5196
        %v5245 = vunpack.c.h.bf16 %v5196
        %v5246 = vunpack.c.l.bf16 %v5197
        %v5247 = vunpack.c.h.bf16 %v5197
        %v5248 = vunpack.c.l.bf16 %v5198
        %v5249 = vunpack.c.h.bf16 %v5198
        %v5250 = vunpack.c.l.bf16 %v5199
        %v5251 = vunpack.c.h.bf16 %v5199
        %v5252 = vunpack.c.l.bf16 %v5200
        %v5253 = vunpack.c.h.bf16 %v5200
        %v5254 = vunpack.c.l.bf16 %v5201
        %v5255 = vunpack.c.h.bf16 %v5201
        %v5256 = vunpack.c.l.bf16 %v5202
        %v5257 = vunpack.c.h.bf16 %v5202
        %v5258 = vunpack.c.l.bf16 %v5203
        %v5259 = vunpack.c.h.bf16 %v5203
        %v5260 = vunpack.c.l.bf16 %v5204
        %v5261 = vunpack.c.h.bf16 %v5204
        %v5262 = vunpack.c.l.bf16 %v5205
        %v5263 = vunpack.c.h.bf16 %v5205
        %v5264 = vunpack.c.l.bf16 %v5206
        %v5265 = vunpack.c.h.bf16 %v5206
        %v5266 = vunpack.c.l.bf16 %v5207
        %v5267 = vunpack.c.h.bf16 %v5207
        %v5268 = vunpack.c.l.bf16 %v5208
        %v5269 = vunpack.c.h.bf16 %v5208
        %v5270 = vunpack.c.l.bf16 %v5209
        %v5271 = vunpack.c.h.bf16 %v5209
        %v5272 = vunpack.c.l.bf16 %v5210
        %v5273 = vunpack.c.h.bf16 %v5210
        %v5274 = vunpack.c.l.bf16 %v5211
        %v5275 = vunpack.c.h.bf16 %v5211
        %v5276 = vtanh.pop %v5212
        %v5277 = vtanh.pop %v5213
        %v5278 = vtanh.pop %v5214
        %v5279 = vtanh.pop %v5215
        %v5280 = vtanh.pop %v5216
        %v5281 = vtanh.pop %v5217
        %v5282 = vtanh.pop %v5218
        %v5283 = vtanh.pop %v5219
        %v5284 = vtanh.pop %v5220
        %v5285 = vtanh.pop %v5221
        %v5286 = vtanh.pop %v5222
        %v5287 = vtanh.pop %v5223
        %v5288 = vtanh.pop %v5224
        %v5289 = vtanh.pop %v5225
        %v5290 = vtanh.pop %v5226
        %v5291 = vtanh.pop %v5227
        %v5292 = vtanh.pop %v5228
        %v5293 = vtanh.pop %v5229
        %v5294 = vtanh.pop %v5230
        %v5295 = vtanh.pop %v5231
        %v5296 = vtanh.pop %v5232
        %v5297 = vtanh.pop %v5233
        %v5298 = vtanh.pop %v5234
        %v5299 = vtanh.pop %v5235
        %v5300 = vtanh.pop %v5236
        %v5301 = vtanh.pop %v5237
        %v5302 = vtanh.pop %v5238
        %v5303 = vtanh.pop %v5239
        %v5304 = vtanh.pop %v5240
        %v5305 = vtanh.pop %v5241
        %v5306 = vtanh.pop %v5242
        %v5307 = vtanh.pop %v5243
        %v5308 = vtanh.pop %v5244
        %v5309 = vtanh.pop %v5245
        %v5310 = vtanh.pop %v5246
        %v5311 = vtanh.pop %v5247
        %v5312 = vtanh.pop %v5248
        %v5313 = vtanh.pop %v5249
        %v5314 = vtanh.pop %v5250
        %v5315 = vtanh.pop %v5251
        %v5316 = vtanh.pop %v5252
        %v5317 = vtanh.pop %v5253
        %v5318 = vtanh.pop %v5254
        %v5319 = vtanh.pop %v5255
        %v5320 = vtanh.pop %v5256
        %v5321 = vtanh.pop %v5257
        %v5322 = vtanh.pop %v5258
        %v5323 = vtanh.pop %v5259
        %v5324 = vtanh.pop %v5260
        %v5325 = vtanh.pop %v5261
        %v5326 = vtanh.pop %v5262
        %v5327 = vtanh.pop %v5263
        %v5328 = vtanh.pop %v5264
        %v5329 = vtanh.pop %v5265
        %v5330 = vtanh.pop %v5266
        %v5331 = vtanh.pop %v5267
        %v5332 = vtanh.pop %v5268
        %v5333 = vtanh.pop %v5269
        %v5334 = vtanh.pop %v5270
        %v5335 = vtanh.pop %v5271
        %v5336 = vtanh.pop %v5272
        %v5337 = vtanh.pop %v5273
        %v5338 = vtanh.pop %v5274
        %v5339 = vtanh.pop %v5275
        %v5340 = vpack.c.bf16 %v5277, %v5276
        %v5341 = vpack.c.bf16 %v5279, %v5278
        %v5342 = vpack.c.bf16 %v5281, %v5280
        %v5343 = vpack.c.bf16 %v5283, %v5282
        %v5344 = vpack.c.bf16 %v5285, %v5284
        %v5345 = vpack.c.bf16 %v5287, %v5286
        %v5346 = vpack.c.bf16 %v5289, %v5288
        %v5347 = vpack.c.bf16 %v5291, %v5290
        %v5348 = vpack.c.bf16 %v5293, %v5292
        %v5349 = vpack.c.bf16 %v5295, %v5294
        %v5350 = vpack.c.bf16 %v5297, %v5296
        %v5351 = vpack.c.bf16 %v5299, %v5298
        %v5352 = vpack.c.bf16 %v5301, %v5300
        %v5353 = vpack.c.bf16 %v5303, %v5302
        %v5354 = vpack.c.bf16 %v5305, %v5304
        %v5355 = vpack.c.bf16 %v5307, %v5306
        %v5356 = vpack.c.bf16 %v5309, %v5308
        %v5357 = vpack.c.bf16 %v5311, %v5310
        %v5358 = vpack.c.bf16 %v5313, %v5312
        %v5359 = vpack.c.bf16 %v5315, %v5314
        %v5360 = vpack.c.bf16 %v5317, %v5316
        %v5361 = vpack.c.bf16 %v5319, %v5318
        %v5362 = vpack.c.bf16 %v5321, %v5320
        %v5363 = vpack.c.bf16 %v5323, %v5322
        %v5364 = vpack.c.bf16 %v5325, %v5324
        %v5365 = vpack.c.bf16 %v5327, %v5326
        %v5366 = vpack.c.bf16 %v5329, %v5328
        %v5367 = vpack.c.bf16 %v5331, %v5330
        %v5368 = vpack.c.bf16 %v5333, %v5332
        %v5369 = vpack.c.bf16 %v5335, %v5334
        %v5370 = vpack.c.bf16 %v5337, %v5336
        %v5371 = vpack.c.bf16 %v5339, %v5338
        %v5372 = vunpack.c.l.bf16 %v5340
        %v5373 = vunpack.c.h.bf16 %v5340
        %v5374 = vunpack.c.l.bf16 %v5341
        %v5375 = vunpack.c.h.bf16 %v5341
        %v5376 = vunpack.c.l.bf16 %v5342
        %v5377 = vunpack.c.h.bf16 %v5342
        %v5378 = vunpack.c.l.bf16 %v5343
        %v5379 = vunpack.c.h.bf16 %v5343
        %v5380 = vunpack.c.l.bf16 %v5344
        %v5381 = vunpack.c.h.bf16 %v5344
        %v5382 = vunpack.c.l.bf16 %v5345
        %v5383 = vunpack.c.h.bf16 %v5345
        %v5384 = vunpack.c.l.bf16 %v5346
        %v5385 = vunpack.c.h.bf16 %v5346
        %v5386 = vunpack.c.l.bf16 %v5347
        %v5387 = vunpack.c.h.bf16 %v5347
        %v5388 = vunpack.c.l.bf16 %v5348
        %v5389 = vunpack.c.h.bf16 %v5348
        %v5390 = vunpack.c.l.bf16 %v5349
        %v5391 = vunpack.c.h.bf16 %v5349
        %v5392 = vunpack.c.l.bf16 %v5350
        %v5393 = vunpack.c.h.bf16 %v5350
        %v5394 = vunpack.c.l.bf16 %v5351
        %v5395 = vunpack.c.h.bf16 %v5351
        %v5396 = vunpack.c.l.bf16 %v5352
        %v5397 = vunpack.c.h.bf16 %v5352
        %v5398 = vunpack.c.l.bf16 %v5353
        %v5399 = vunpack.c.h.bf16 %v5353
        %v5400 = vunpack.c.l.bf16 %v5354
        %v5401 = vunpack.c.h.bf16 %v5354
        %v5402 = vunpack.c.l.bf16 %v5355
        %v5403 = vunpack.c.h.bf16 %v5355
        %v5404 = vunpack.c.l.bf16 %v5356
        %v5405 = vunpack.c.h.bf16 %v5356
        %v5406 = vunpack.c.l.bf16 %v5357
        %v5407 = vunpack.c.h.bf16 %v5357
        %v5408 = vunpack.c.l.bf16 %v5358
        %v5409 = vunpack.c.h.bf16 %v5358
        %v5410 = vunpack.c.l.bf16 %v5359
        %v5411 = vunpack.c.h.bf16 %v5359
        %v5412 = vunpack.c.l.bf16 %v5360
        %v5413 = vunpack.c.h.bf16 %v5360
        %v5414 = vunpack.c.l.bf16 %v5361
        %v5415 = vunpack.c.h.bf16 %v5361
        %v5416 = vunpack.c.l.bf16 %v5362
        %v5417 = vunpack.c.h.bf16 %v5362
        %v5418 = vunpack.c.l.bf16 %v5363
        %v5419 = vunpack.c.h.bf16 %v5363
        %v5420 = vunpack.c.l.bf16 %v5364
        %v5421 = vunpack.c.h.bf16 %v5364
        %v5422 = vunpack.c.l.bf16 %v5365
        %v5423 = vunpack.c.h.bf16 %v5365
        %v5424 = vunpack.c.l.bf16 %v5366
        %v5425 = vunpack.c.h.bf16 %v5366
        %v5426 = vunpack.c.l.bf16 %v5367
        %v5427 = vunpack.c.h.bf16 %v5367
        %v5428 = vunpack.c.l.bf16 %v5368
        %v5429 = vunpack.c.h.bf16 %v5368
        %v5430 = vunpack.c.l.bf16 %v5369
        %v5431 = vunpack.c.h.bf16 %v5369
        %v5432 = vunpack.c.l.bf16 %v5370
        %v5433 = vunpack.c.h.bf16 %v5370
        %v5434 = vunpack.c.l.bf16 %v5371
        %v5435 = vunpack.c.h.bf16 %v5371
        %v5436 = vadd.f32 %v5372, 1.0
        %v5437 = vadd.f32 %v5373, 1.0
        %v5438 = vadd.f32 %v5374, 1.0
        %v5439 = vadd.f32 %v5375, 1.0
        %v5440 = vadd.f32 %v5376, 1.0
        %v5441 = vadd.f32 %v5377, 1.0
        %v5442 = vadd.f32 %v5378, 1.0
        %v5443 = vadd.f32 %v5379, 1.0
        %v5444 = vadd.f32 %v5380, 1.0
        %v5445 = vadd.f32 %v5381, 1.0
        %v5446 = vadd.f32 %v5382, 1.0
        %v5447 = vadd.f32 %v5383, 1.0
        %v5448 = vadd.f32 %v5384, 1.0
        %v5449 = vadd.f32 %v5385, 1.0
        %v5450 = vadd.f32 %v5386, 1.0
        %v5451 = vadd.f32 %v5387, 1.0
        %v5452 = vadd.f32 %v5388, 1.0
        %v5453 = vadd.f32 %v5389, 1.0
        %v5454 = vadd.f32 %v5390, 1.0
        %v5455 = vadd.f32 %v5391, 1.0
        %v5456 = vadd.f32 %v5392, 1.0
        %v5457 = vadd.f32 %v5393, 1.0
        %v5458 = vadd.f32 %v5394, 1.0
        %v5459 = vadd.f32 %v5395, 1.0
        %v5460 = vadd.f32 %v5396, 1.0
        %v5461 = vadd.f32 %v5397, 1.0
        %v5462 = vadd.f32 %v5398, 1.0
        %v5463 = vadd.f32 %v5399, 1.0
        %v5464 = vadd.f32 %v5400, 1.0
        %v5465 = vadd.f32 %v5401, 1.0
        %v5466 = vadd.f32 %v5402, 1.0
        %v5467 = vadd.f32 %v5403, 1.0
        %v5468 = vadd.f32 %v5404, 1.0
        %v5469 = vadd.f32 %v5405, 1.0
        %v5470 = vadd.f32 %v5406, 1.0
        %v5471 = vadd.f32 %v5407, 1.0
        %v5472 = vadd.f32 %v5408, 1.0
        %v5473 = vadd.f32 %v5409, 1.0
        %v5474 = vadd.f32 %v5410, 1.0
        %v5475 = vadd.f32 %v5411, 1.0
        %v5476 = vadd.f32 %v5412, 1.0
        %v5477 = vadd.f32 %v5413, 1.0
        %v5478 = vadd.f32 %v5414, 1.0
        %v5479 = vadd.f32 %v5415, 1.0
        %v5480 = vadd.f32 %v5416, 1.0
        %v5481 = vadd.f32 %v5417, 1.0
        %v5482 = vadd.f32 %v5418, 1.0
        %v5483 = vadd.f32 %v5419, 1.0
        %v5484 = vadd.f32 %v5420, 1.0
        %v5485 = vadd.f32 %v5421, 1.0
        %v5486 = vadd.f32 %v5422, 1.0
        %v5487 = vadd.f32 %v5423, 1.0
        %v5488 = vadd.f32 %v5424, 1.0
        %v5489 = vadd.f32 %v5425, 1.0
        %v5490 = vadd.f32 %v5426, 1.0
        %v5491 = vadd.f32 %v5427, 1.0
        %v5492 = vadd.f32 %v5428, 1.0
        %v5493 = vadd.f32 %v5429, 1.0
        %v5494 = vadd.f32 %v5430, 1.0
        %v5495 = vadd.f32 %v5431, 1.0
        %v5496 = vadd.f32 %v5432, 1.0
        %v5497 = vadd.f32 %v5433, 1.0
        %v5498 = vadd.f32 %v5434, 1.0
        %v5499 = vadd.f32 %v5435, 1.0
        %v5500 = vpack.c.bf16 %v5437, %v5436
        %v5501 = vpack.c.bf16 %v5439, %v5438
        %v5502 = vpack.c.bf16 %v5441, %v5440
        %v5503 = vpack.c.bf16 %v5443, %v5442
        %v5504 = vpack.c.bf16 %v5445, %v5444
        %v5505 = vpack.c.bf16 %v5447, %v5446
        %v5506 = vpack.c.bf16 %v5449, %v5448
        %v5507 = vpack.c.bf16 %v5451, %v5450
        %v5508 = vpack.c.bf16 %v5453, %v5452
        %v5509 = vpack.c.bf16 %v5455, %v5454
        %v5510 = vpack.c.bf16 %v5457, %v5456
        %v5511 = vpack.c.bf16 %v5459, %v5458
        %v5512 = vpack.c.bf16 %v5461, %v5460
        %v5513 = vpack.c.bf16 %v5463, %v5462
        %v5514 = vpack.c.bf16 %v5465, %v5464
        %v5515 = vpack.c.bf16 %v5467, %v5466
        %v5516 = vpack.c.bf16 %v5469, %v5468
        %v5517 = vpack.c.bf16 %v5471, %v5470
        %v5518 = vpack.c.bf16 %v5473, %v5472
        %v5519 = vpack.c.bf16 %v5475, %v5474
        %v5520 = vpack.c.bf16 %v5477, %v5476
        %v5521 = vpack.c.bf16 %v5479, %v5478
        %v5522 = vpack.c.bf16 %v5481, %v5480
        %v5523 = vpack.c.bf16 %v5483, %v5482
        %v5524 = vpack.c.bf16 %v5485, %v5484
        %v5525 = vpack.c.bf16 %v5487, %v5486
        %v5526 = vpack.c.bf16 %v5489, %v5488
        %v5527 = vpack.c.bf16 %v5491, %v5490
        %v5528 = vpack.c.bf16 %v5493, %v5492
        %v5529 = vpack.c.bf16 %v5495, %v5494
        %v5530 = vpack.c.bf16 %v5497, %v5496
        %v5531 = vpack.c.bf16 %v5499, %v5498
        %v5532 = vunpack.c.l.bf16 %v5500
        %v5533 = vunpack.c.h.bf16 %v5500
        %v5534 = vunpack.c.l.bf16 %v5501
        %v5535 = vunpack.c.h.bf16 %v5501
        %v5536 = vunpack.c.l.bf16 %v5502
        %v5537 = vunpack.c.h.bf16 %v5502
        %v5538 = vunpack.c.l.bf16 %v5503
        %v5539 = vunpack.c.h.bf16 %v5503
        %v5540 = vunpack.c.l.bf16 %v5504
        %v5541 = vunpack.c.h.bf16 %v5504
        %v5542 = vunpack.c.l.bf16 %v5505
        %v5543 = vunpack.c.h.bf16 %v5505
        %v5544 = vunpack.c.l.bf16 %v5506
        %v5545 = vunpack.c.h.bf16 %v5506
        %v5546 = vunpack.c.l.bf16 %v5507
        %v5547 = vunpack.c.h.bf16 %v5507
        %v5548 = vunpack.c.l.bf16 %v5508
        %v5549 = vunpack.c.h.bf16 %v5508
        %v5550 = vunpack.c.l.bf16 %v5509
        %v5551 = vunpack.c.h.bf16 %v5509
        %v5552 = vunpack.c.l.bf16 %v5510
        %v5553 = vunpack.c.h.bf16 %v5510
        %v5554 = vunpack.c.l.bf16 %v5511
        %v5555 = vunpack.c.h.bf16 %v5511
        %v5556 = vunpack.c.l.bf16 %v5512
        %v5557 = vunpack.c.h.bf16 %v5512
        %v5558 = vunpack.c.l.bf16 %v5513
        %v5559 = vunpack.c.h.bf16 %v5513
        %v5560 = vunpack.c.l.bf16 %v5514
        %v5561 = vunpack.c.h.bf16 %v5514
        %v5562 = vunpack.c.l.bf16 %v5515
        %v5563 = vunpack.c.h.bf16 %v5515
        %v5564 = vunpack.c.l.bf16 %v5516
        %v5565 = vunpack.c.h.bf16 %v5516
        %v5566 = vunpack.c.l.bf16 %v5517
        %v5567 = vunpack.c.h.bf16 %v5517
        %v5568 = vunpack.c.l.bf16 %v5518
        %v5569 = vunpack.c.h.bf16 %v5518
        %v5570 = vunpack.c.l.bf16 %v5519
        %v5571 = vunpack.c.h.bf16 %v5519
        %v5572 = vunpack.c.l.bf16 %v5520
        %v5573 = vunpack.c.h.bf16 %v5520
        %v5574 = vunpack.c.l.bf16 %v5521
        %v5575 = vunpack.c.h.bf16 %v5521
        %v5576 = vunpack.c.l.bf16 %v5522
        %v5577 = vunpack.c.h.bf16 %v5522
        %v5578 = vunpack.c.l.bf16 %v5523
        %v5579 = vunpack.c.h.bf16 %v5523
        %v5580 = vunpack.c.l.bf16 %v5524
        %v5581 = vunpack.c.h.bf16 %v5524
        %v5582 = vunpack.c.l.bf16 %v5525
        %v5583 = vunpack.c.h.bf16 %v5525
        %v5584 = vunpack.c.l.bf16 %v5526
        %v5585 = vunpack.c.h.bf16 %v5526
        %v5586 = vunpack.c.l.bf16 %v5527
        %v5587 = vunpack.c.h.bf16 %v5527
        %v5588 = vunpack.c.l.bf16 %v5528
        %v5589 = vunpack.c.h.bf16 %v5528
        %v5590 = vunpack.c.l.bf16 %v5529
        %v5591 = vunpack.c.h.bf16 %v5529
        %v5592 = vunpack.c.l.bf16 %v5530
        %v5593 = vunpack.c.h.bf16 %v5530
        %v5594 = vunpack.c.l.bf16 %v5531
        %v5595 = vunpack.c.h.bf16 %v5531
        %v5596 = vmul.f32 %v5532, 0.5
        %v5597 = vmul.f32 %v5533, 0.5
        %v5598 = vmul.f32 %v5534, 0.5
        %v5599 = vmul.f32 %v5535, 0.5
        %v5600 = vmul.f32 %v5536, 0.5
        %v5601 = vmul.f32 %v5537, 0.5
        %v5602 = vmul.f32 %v5538, 0.5
        %v5603 = vmul.f32 %v5539, 0.5
        %v5604 = vmul.f32 %v5540, 0.5
        %v5605 = vmul.f32 %v5541, 0.5
        %v5606 = vmul.f32 %v5542, 0.5
        %v5607 = vmul.f32 %v5543, 0.5
        %v5608 = vmul.f32 %v5544, 0.5
        %v5609 = vmul.f32 %v5545, 0.5
        %v5610 = vmul.f32 %v5546, 0.5
        %v5611 = vmul.f32 %v5547, 0.5
        %v5612 = vmul.f32 %v5548, 0.5
        %v5613 = vmul.f32 %v5549, 0.5
        %v5614 = vmul.f32 %v5550, 0.5
        %v5615 = vmul.f32 %v5551, 0.5
        %v5616 = vmul.f32 %v5552, 0.5
        %v5617 = vmul.f32 %v5553, 0.5
        %v5618 = vmul.f32 %v5554, 0.5
        %v5619 = vmul.f32 %v5555, 0.5
        %v5620 = vmul.f32 %v5556, 0.5
        %v5621 = vmul.f32 %v5557, 0.5
        %v5622 = vmul.f32 %v5558, 0.5
        %v5623 = vmul.f32 %v5559, 0.5
        %v5624 = vmul.f32 %v5560, 0.5
        %v5625 = vmul.f32 %v5561, 0.5
        %v5626 = vmul.f32 %v5562, 0.5
        %v5627 = vmul.f32 %v5563, 0.5
        %v5628 = vmul.f32 %v5564, 0.5
        %v5629 = vmul.f32 %v5565, 0.5
        %v5630 = vmul.f32 %v5566, 0.5
        %v5631 = vmul.f32 %v5567, 0.5
        %v5632 = vmul.f32 %v5568, 0.5
        %v5633 = vmul.f32 %v5569, 0.5
        %v5634 = vmul.f32 %v5570, 0.5
        %v5635 = vmul.f32 %v5571, 0.5
        %v5636 = vmul.f32 %v5572, 0.5
        %v5637 = vmul.f32 %v5573, 0.5
        %v5638 = vmul.f32 %v5574, 0.5
        %v5639 = vmul.f32 %v5575, 0.5
        %v5640 = vmul.f32 %v5576, 0.5
        %v5641 = vmul.f32 %v5577, 0.5
        %v5642 = vmul.f32 %v5578, 0.5
        %v5643 = vmul.f32 %v5579, 0.5
        %v5644 = vmul.f32 %v5580, 0.5
        %v5645 = vmul.f32 %v5581, 0.5
        %v5646 = vmul.f32 %v5582, 0.5
        %v5647 = vmul.f32 %v5583, 0.5
        %v5648 = vmul.f32 %v5584, 0.5
        %v5649 = vmul.f32 %v5585, 0.5
        %v5650 = vmul.f32 %v5586, 0.5
        %v5651 = vmul.f32 %v5587, 0.5
        %v5652 = vmul.f32 %v5588, 0.5
        %v5653 = vmul.f32 %v5589, 0.5
        %v5654 = vmul.f32 %v5590, 0.5
        %v5655 = vmul.f32 %v5591, 0.5
        %v5656 = vmul.f32 %v5592, 0.5
        %v5657 = vmul.f32 %v5593, 0.5
        %v5658 = vmul.f32 %v5594, 0.5
        %v5659 = vmul.f32 %v5595, 0.5
        %v5660 = vpack.c.bf16 %v5597, %v5596
        %v5661 = vpack.c.bf16 %v5599, %v5598
        %v5662 = vpack.c.bf16 %v5601, %v5600
        %v5663 = vpack.c.bf16 %v5603, %v5602
        %v5664 = vpack.c.bf16 %v5605, %v5604
        %v5665 = vpack.c.bf16 %v5607, %v5606
        %v5666 = vpack.c.bf16 %v5609, %v5608
        %v5667 = vpack.c.bf16 %v5611, %v5610
        %v5668 = vpack.c.bf16 %v5613, %v5612
        %v5669 = vpack.c.bf16 %v5615, %v5614
        %v5670 = vpack.c.bf16 %v5617, %v5616
        %v5671 = vpack.c.bf16 %v5619, %v5618
        %v5672 = vpack.c.bf16 %v5621, %v5620
        %v5673 = vpack.c.bf16 %v5623, %v5622
        %v5674 = vpack.c.bf16 %v5625, %v5624
        %v5675 = vpack.c.bf16 %v5627, %v5626
        %v5676 = vpack.c.bf16 %v5629, %v5628
        %v5677 = vpack.c.bf16 %v5631, %v5630
        %v5678 = vpack.c.bf16 %v5633, %v5632
        %v5679 = vpack.c.bf16 %v5635, %v5634
        %v5680 = vpack.c.bf16 %v5637, %v5636
        %v5681 = vpack.c.bf16 %v5639, %v5638
        %v5682 = vpack.c.bf16 %v5641, %v5640
        %v5683 = vpack.c.bf16 %v5643, %v5642
        %v5684 = vpack.c.bf16 %v5645, %v5644
        %v5685 = vpack.c.bf16 %v5647, %v5646
        %v5686 = vpack.c.bf16 %v5649, %v5648
        %v5687 = vpack.c.bf16 %v5651, %v5650
        %v5688 = vpack.c.bf16 %v5653, %v5652
        %v5689 = vpack.c.bf16 %v5655, %v5654
        %v5690 = vpack.c.bf16 %v5657, %v5656
        %v5691 = vpack.c.bf16 %v5659, %v5658
        %v5692 = vunpack.c.l.bf16 %v5660
        %v5693 = vunpack.c.h.bf16 %v5660
        %v5694 = vunpack.c.l.bf16 %v5661
        %v5695 = vunpack.c.h.bf16 %v5661
        %v5696 = vunpack.c.l.bf16 %v5662
        %v5697 = vunpack.c.h.bf16 %v5662
        %v5698 = vunpack.c.l.bf16 %v5663
        %v5699 = vunpack.c.h.bf16 %v5663
        %v5700 = vunpack.c.l.bf16 %v5664
        %v5701 = vunpack.c.h.bf16 %v5664
        %v5702 = vunpack.c.l.bf16 %v5665
        %v5703 = vunpack.c.h.bf16 %v5665
        %v5704 = vunpack.c.l.bf16 %v5666
        %v5705 = vunpack.c.h.bf16 %v5666
        %v5706 = vunpack.c.l.bf16 %v5667
        %v5707 = vunpack.c.h.bf16 %v5667
        %v5708 = vunpack.c.l.bf16 %v5668
        %v5709 = vunpack.c.h.bf16 %v5668
        %v5710 = vunpack.c.l.bf16 %v5669
        %v5711 = vunpack.c.h.bf16 %v5669
        %v5712 = vunpack.c.l.bf16 %v5670
        %v5713 = vunpack.c.h.bf16 %v5670
        %v5714 = vunpack.c.l.bf16 %v5671
        %v5715 = vunpack.c.h.bf16 %v5671
        %v5716 = vunpack.c.l.bf16 %v5672
        %v5717 = vunpack.c.h.bf16 %v5672
        %v5718 = vunpack.c.l.bf16 %v5673
        %v5719 = vunpack.c.h.bf16 %v5673
        %v5720 = vunpack.c.l.bf16 %v5674
        %v5721 = vunpack.c.h.bf16 %v5674
        %v5722 = vunpack.c.l.bf16 %v5675
        %v5723 = vunpack.c.h.bf16 %v5675
        %v5724 = vunpack.c.l.bf16 %v5676
        %v5725 = vunpack.c.h.bf16 %v5676
        %v5726 = vunpack.c.l.bf16 %v5677
        %v5727 = vunpack.c.h.bf16 %v5677
        %v5728 = vunpack.c.l.bf16 %v5678
        %v5729 = vunpack.c.h.bf16 %v5678
        %v5730 = vunpack.c.l.bf16 %v5679
        %v5731 = vunpack.c.h.bf16 %v5679
        %v5732 = vunpack.c.l.bf16 %v5680
        %v5733 = vunpack.c.h.bf16 %v5680
        %v5734 = vunpack.c.l.bf16 %v5681
        %v5735 = vunpack.c.h.bf16 %v5681
        %v5736 = vunpack.c.l.bf16 %v5682
        %v5737 = vunpack.c.h.bf16 %v5682
        %v5738 = vunpack.c.l.bf16 %v5683
        %v5739 = vunpack.c.h.bf16 %v5683
        %v5740 = vunpack.c.l.bf16 %v5684
        %v5741 = vunpack.c.h.bf16 %v5684
        %v5742 = vunpack.c.l.bf16 %v5685
        %v5743 = vunpack.c.h.bf16 %v5685
        %v5744 = vunpack.c.l.bf16 %v5686
        %v5745 = vunpack.c.h.bf16 %v5686
        %v5746 = vunpack.c.l.bf16 %v5687
        %v5747 = vunpack.c.h.bf16 %v5687
        %v5748 = vunpack.c.l.bf16 %v5688
        %v5749 = vunpack.c.h.bf16 %v5688
        %v5750 = vunpack.c.l.bf16 %v5689
        %v5751 = vunpack.c.h.bf16 %v5689
        %v5752 = vunpack.c.l.bf16 %v5690
        %v5753 = vunpack.c.h.bf16 %v5690
        %v5754 = vunpack.c.l.bf16 %v5691
        %v5755 = vunpack.c.h.bf16 %v5691
        %v5756 = vmul.f32 %v4412, %v5692
        %v5757 = vmul.f32 %v4413, %v5693
        %v5758 = vmul.f32 %v4414, %v5694
        %v5759 = vmul.f32 %v4415, %v5695
        %v5760 = vmul.f32 %v4416, %v5696
        %v5761 = vmul.f32 %v4417, %v5697
        %v5762 = vmul.f32 %v4418, %v5698
        %v5763 = vmul.f32 %v4419, %v5699
        %v5764 = vmul.f32 %v4420, %v5700
        %v5765 = vmul.f32 %v4421, %v5701
        %v5766 = vmul.f32 %v4422, %v5702
        %v5767 = vmul.f32 %v4423, %v5703
        %v5768 = vmul.f32 %v4424, %v5704
        %v5769 = vmul.f32 %v4425, %v5705
        %v5770 = vmul.f32 %v4426, %v5706
        %v5771 = vmul.f32 %v4427, %v5707
        %v5772 = vmul.f32 %v4428, %v5708
        %v5773 = vmul.f32 %v4429, %v5709
        %v5774 = vmul.f32 %v4430, %v5710
        %v5775 = vmul.f32 %v4431, %v5711
        %v5776 = vmul.f32 %v4432, %v5712
        %v5777 = vmul.f32 %v4433, %v5713
        %v5778 = vmul.f32 %v4434, %v5714
        %v5779 = vmul.f32 %v4435, %v5715
        %v5780 = vmul.f32 %v4436, %v5716
        %v5781 = vmul.f32 %v4437, %v5717
        %v5782 = vmul.f32 %v4438, %v5718
        %v5783 = vmul.f32 %v4439, %v5719
        %v5784 = vmul.f32 %v4440, %v5720
        %v5785 = vmul.f32 %v4441, %v5721
        %v5786 = vmul.f32 %v4442, %v5722
        %v5787 = vmul.f32 %v4443, %v5723
        %v5788 = vmul.f32 %v4444, %v5724
        %v5789 = vmul.f32 %v4445, %v5725
        %v5790 = vmul.f32 %v4446, %v5726
        %v5791 = vmul.f32 %v4447, %v5727
        %v5792 = vmul.f32 %v4448, %v5728
        %v5793 = vmul.f32 %v4449, %v5729
        %v5794 = vmul.f32 %v4450, %v5730
        %v5795 = vmul.f32 %v4451, %v5731
        %v5796 = vmul.f32 %v4452, %v5732
        %v5797 = vmul.f32 %v4453, %v5733
        %v5798 = vmul.f32 %v4454, %v5734
        %v5799 = vmul.f32 %v4455, %v5735
        %v5800 = vmul.f32 %v4456, %v5736
        %v5801 = vmul.f32 %v4457, %v5737
        %v5802 = vmul.f32 %v4458, %v5738
        %v5803 = vmul.f32 %v4459, %v5739
        %v5804 = vmul.f32 %v4460, %v5740
        %v5805 = vmul.f32 %v4461, %v5741
        %v5806 = vmul.f32 %v4462, %v5742
        %v5807 = vmul.f32 %v4463, %v5743
        %v5808 = vmul.f32 %v4464, %v5744
        %v5809 = vmul.f32 %v4465, %v5745
        %v5810 = vmul.f32 %v4466, %v5746
        %v5811 = vmul.f32 %v4467, %v5747
        %v5812 = vmul.f32 %v4468, %v5748
        %v5813 = vmul.f32 %v4469, %v5749
        %v5814 = vmul.f32 %v4470, %v5750
        %v5815 = vmul.f32 %v4471, %v5751
        %v5816 = vmul.f32 %v4472, %v5752
        %v5817 = vmul.f32 %v4473, %v5753
        %v5818 = vmul.f32 %v4474, %v5754
        %v5819 = vmul.f32 %v4475, %v5755
        %v5820 = vpack.c.bf16 %v5758, %v5756
        %v5821 = vpack.c.bf16 %v5759, %v5757
        %v5822 = vpack.c.bf16 %v5762, %v5760
        %v5823 = vpack.c.bf16 %v5763, %v5761
        %v5824 = vpack.c.bf16 %v5766, %v5764
        %v5825 = vpack.c.bf16 %v5767, %v5765
        %v5826 = vpack.c.bf16 %v5770, %v5768
        %v5827 = vpack.c.bf16 %v5771, %v5769
        %v5828 = vpack.c.bf16 %v5774, %v5772
        %v5829 = vpack.c.bf16 %v5775, %v5773
        %v5830 = vpack.c.bf16 %v5778, %v5776
        %v5831 = vpack.c.bf16 %v5779, %v5777
        %v5832 = vpack.c.bf16 %v5782, %v5780
        %v5833 = vpack.c.bf16 %v5783, %v5781
        %v5834 = vpack.c.bf16 %v5786, %v5784
        %v5835 = vpack.c.bf16 %v5787, %v5785
        %v5836 = vpack.c.bf16 %v5790, %v5788
        %v5837 = vpack.c.bf16 %v5791, %v5789
        %v5838 = vpack.c.bf16 %v5794, %v5792
        %v5839 = vpack.c.bf16 %v5795, %v5793
        %v5840 = vpack.c.bf16 %v5798, %v5796
        %v5841 = vpack.c.bf16 %v5799, %v5797
        %v5842 = vpack.c.bf16 %v5802, %v5800
        %v5843 = vpack.c.bf16 %v5803, %v5801
        %v5844 = vpack.c.bf16 %v5806, %v5804
        %v5845 = vpack.c.bf16 %v5807, %v5805
        %v5846 = vpack.c.bf16 %v5810, %v5808
        %v5847 = vpack.c.bf16 %v5811, %v5809
        %v5848 = vpack.c.bf16 %v5814, %v5812
        %v5849 = vpack.c.bf16 %v5815, %v5813
        %v5850 = vpack.c.bf16 %v5818, %v5816
        %v5851 = vpack.c.bf16 %v5819, %v5817
        %s5852 = scalar_lea.vmem [#allocation2], 128
        %v5853 = vld [vmem:[%s5852] sm:$0xff]
        %v5854 = vld [vmem:[%s5852 + $0x8] sm:$0xff]
        %v5855 = vld [vmem:[%s5852 + $0x10] sm:$0xff]
        %v5856 = vld [vmem:[%s5852 + $0x18] sm:$0xff]
        %v5857 = vld [vmem:[%s5852 + $0x20] sm:$0xff]
        %v5858 = vld [vmem:[%s5852 + $0x28] sm:$0xff]
        %v5859 = vld [vmem:[%s5852 + $0x30] sm:$0xff]
        %v5860 = vld [vmem:[%s5852 + $0x38] sm:$0xff]
        %v5861 = vld [vmem:[%s5852 + $0x40] sm:$0xff]
        %v5862 = vld [vmem:[%s5852 + $0x48] sm:$0xff]
        %v5863 = vld [vmem:[%s5852 + $0x50] sm:$0xff]
        %v5864 = vld [vmem:[%s5852 + $0x58] sm:$0xff]
        %v5865 = vld [vmem:[%s5852 + $0x60] sm:$0xff]
        %v5866 = vld [vmem:[%s5852 + $0x68] sm:$0xff]
        %v5867 = vld [vmem:[%s5852 + $0x70] sm:$0xff]
        %v5868 = vld [vmem:[%s5852 + $0x78] sm:$0xff]
        %v5885 = vunpack.c.l.b16 %v5853
        %v5886 = vunpack.c.h.b16 %v5853
        %v5887 = vunpack.c.l.b16 %v5854
        %v5888 = vunpack.c.h.b16 %v5854
        %v5889 = vunpack.c.l.b16 %v5855
        %v5890 = vunpack.c.h.b16 %v5855
        %v5891 = vunpack.c.l.b16 %v5856
        %v5892 = vunpack.c.h.b16 %v5856
        %v5893 = vunpack.c.l.b16 %v5857
        %v5894 = vunpack.c.h.b16 %v5857
        %v5895 = vunpack.c.l.b16 %v5858
        %v5896 = vunpack.c.h.b16 %v5858
        %v5897 = vunpack.c.l.b16 %v5859
        %v5898 = vunpack.c.h.b16 %v5859
        %v5899 = vunpack.c.l.b16 %v5860
        %v5900 = vunpack.c.h.b16 %v5860
        %v5901 = vunpack.c.l.b16 %v5861
        %v5902 = vunpack.c.h.b16 %v5861
        %v5903 = vunpack.c.l.b16 %v5862
        %v5904 = vunpack.c.h.b16 %v5862
        %v5905 = vunpack.c.l.b16 %v5863
        %v5906 = vunpack.c.h.b16 %v5863
        %v5907 = vunpack.c.l.b16 %v5864
        %v5908 = vunpack.c.h.b16 %v5864
        %v5909 = vunpack.c.l.b16 %v5865
        %v5910 = vunpack.c.h.b16 %v5865
        %v5911 = vunpack.c.l.b16 %v5866
        %v5912 = vunpack.c.h.b16 %v5866
        %v5913 = vunpack.c.l.b16 %v5867
        %v5914 = vunpack.c.h.b16 %v5867
        %v5915 = vunpack.c.l.b16 %v5868
        %v5916 = vunpack.c.h.b16 %v5868
        %v5917 = vpack.c.b16 %v5887, %v5885
        %v5918 = vpack.c.b16 %v5888, %v5886
        %v5919 = vpack.c.b16 %v5891, %v5889
        %v5920 = vpack.c.b16 %v5892, %v5890
        %v5921 = vpack.c.b16 %v5895, %v5893
        %v5922 = vpack.c.b16 %v5896, %v5894
        %v5923 = vpack.c.b16 %v5899, %v5897
        %v5924 = vpack.c.b16 %v5900, %v5898
        %v5925 = vpack.c.b16 %v5903, %v5901
        %v5926 = vpack.c.b16 %v5904, %v5902
        %v5927 = vpack.c.b16 %v5907, %v5905
        %v5928 = vpack.c.b16 %v5908, %v5906
        %v5929 = vpack.c.b16 %v5911, %v5909
        %v5930 = vpack.c.b16 %v5912, %v5910
        %v5931 = vpack.c.b16 %v5915, %v5913
        %v5932 = vpack.c.b16 %v5916, %v5914
        %5949 = vmatpush.bf16.msra.mxu0 %v5834
        %5950 = vmatpush.bf16.msra.mxu0 %v5832
        %5951 = vmatpush.bf16.msra.mxu0 %v5830
        %5952 = vmatpush.bf16.msra.mxu0 %v5828
        %5953 = vmatpush.bf16.msra.mxu0 %v5826
        %5954 = vmatpush.bf16.msra.mxu0 %v5824
        %5955 = vmatpush.bf16.msra.mxu0 %v5822
        %5956 = vmatpush.bf16.msra.mxu0 %v5820
        %5957 = vmatmul.bf16.gmra.mxu0 %v5917
        %v5958 = vpop.f32.mrf.mxu0
        %v5959 = vadd.f32 0.0, %v5958
        %v5960 = vpop.f32.mrf.mxu0
        %v5961 = vadd.f32 0.0, %v5960
        %5962 = vmatmul.bf16.gmra.mxu0 %v5919
        %v5963 = vpop.f32.mrf.mxu0
        %v5964 = vadd.f32 0.0, %v5963
        %v5965 = vpop.f32.mrf.mxu0
        %v5966 = vadd.f32 0.0, %v5965
        %5967 = vmatmul.bf16.gmra.mxu0 %v5921
        %v5968 = vpop.f32.mrf.mxu0
        %v5969 = vadd.f32 0.0, %v5968
        %v5970 = vpop.f32.mrf.mxu0
        %v5971 = vadd.f32 0.0, %v5970
        %5972 = vmatmul.bf16.gmra.mxu0 %v5923
        %v5973 = vpop.f32.mrf.mxu0
        %v5974 = vadd.f32 0.0, %v5973
        %v5975 = vpop.f32.mrf.mxu0
        %v5976 = vadd.f32 0.0, %v5975
        %5977 = vmatmul.bf16.gmra.mxu0 %v5925
        %v5978 = vpop.f32.mrf.mxu0
        %v5979 = vadd.f32 0.0, %v5978
        %v5980 = vpop.f32.mrf.mxu0
        %v5981 = vadd.f32 0.0, %v5980
        %5982 = vmatmul.bf16.gmra.mxu0 %v5927
        %v5983 = vpop.f32.mrf.mxu0
        %v5984 = vadd.f32 0.0, %v5983
        %v5985 = vpop.f32.mrf.mxu0
        %v5986 = vadd.f32 0.0, %v5985
        %5987 = vmatmul.bf16.gmra.mxu0 %v5929
        %v5988 = vpop.f32.mrf.mxu0
        %v5989 = vadd.f32 0.0, %v5988
        %v5990 = vpop.f32.mrf.mxu0
        %v5991 = vadd.f32 0.0, %v5990
        %5992 = vmatmul.bf16.gmra.mxu0 %v5931
        %v5993 = vpop.f32.mrf.mxu0
        %v5994 = vadd.f32 0.0, %v5993
        %v5995 = vpop.f32.mrf.mxu0
        %v5996 = vadd.f32 0.0, %v5995
        %5997 = vdwg.mxu0
        %5998 = vmatpush.bf16.msra.mxu0 %v5850
        %5999 = vmatpush.bf16.msra.mxu0 %v5848
        %6000 = vmatpush.bf16.msra.mxu0 %v5846
        %6001 = vmatpush.bf16.msra.mxu0 %v5844
        %6002 = vmatpush.bf16.msra.mxu0 %v5842
        %6003 = vmatpush.bf16.msra.mxu0 %v5840
        %6004 = vmatpush.bf16.msra.mxu0 %v5838
        %6005 = vmatpush.bf16.msra.mxu0 %v5836
        %6006 = vmatmul.bf16.gmra.mxu0 %v5918
        %v6007 = vpop.f32.mrf.mxu0
        %v6008 = vadd.f32 %v5959, %v6007
        %v6009 = vpop.f32.mrf.mxu0
        %v6010 = vadd.f32 %v5961, %v6009
        %6011 = vmatmul.bf16.gmra.mxu0 %v5920
        %v6012 = vpop.f32.mrf.mxu0
        %v6013 = vadd.f32 %v5964, %v6012
        %v6014 = vpop.f32.mrf.mxu0
        %v6015 = vadd.f32 %v5966, %v6014
        %6016 = vmatmul.bf16.gmra.mxu0 %v5922
        %v6017 = vpop.f32.mrf.mxu0
        %v6018 = vadd.f32 %v5969, %v6017
        %v6019 = vpop.f32.mrf.mxu0
        %v6020 = vadd.f32 %v5971, %v6019
        %6021 = vmatmul.bf16.gmra.mxu0 %v5924
        %v6022 = vpop.f32.mrf.mxu0
        %v6023 = vadd.f32 %v5974, %v6022
        %v6024 = vpop.f32.mrf.mxu0
        %v6025 = vadd.f32 %v5976, %v6024
        %6026 = vmatmul.bf16.gmra.mxu0 %v5926
        %v6027 = vpop.f32.mrf.mxu0
        %v6028 = vadd.f32 %v5979, %v6027
        %v6029 = vpop.f32.mrf.mxu0
        %v6030 = vadd.f32 %v5981, %v6029
        %6031 = vmatmul.bf16.gmra.mxu0 %v5928
        %v6032 = vpop.f32.mrf.mxu0
        %v6033 = vadd.f32 %v5984, %v6032
        %v6034 = vpop.f32.mrf.mxu0
        %v6035 = vadd.f32 %v5986, %v6034
        %6036 = vmatmul.bf16.gmra.mxu0 %v5930
        %v6037 = vpop.f32.mrf.mxu0
        %v6038 = vadd.f32 %v5989, %v6037
        %v6039 = vpop.f32.mrf.mxu0
        %v6040 = vadd.f32 %v5991, %v6039
        %6041 = vmatmul.bf16.gmra.mxu0 %v5932
        %v6042 = vpop.f32.mrf.mxu0
        %v6043 = vadd.f32 %v5994, %v6042
        %v6044 = vpop.f32.mrf.mxu0
        %v6045 = vadd.f32 %v5996, %v6044
        %6046 = vdwg.mxu0
        %6047 = vmatpush.bf16.msra.mxu0 %v5835
        %6048 = vmatpush.bf16.msra.mxu0 %v5833
        %6049 = vmatpush.bf16.msra.mxu0 %v5831
        %6050 = vmatpush.bf16.msra.mxu0 %v5829
        %6051 = vmatpush.bf16.msra.mxu0 %v5827
        %6052 = vmatpush.bf16.msra.mxu0 %v5825
        %6053 = vmatpush.bf16.msra.mxu0 %v5823
        %6054 = vmatpush.bf16.msra.mxu0 %v5821
        %6055 = vmatmul.bf16.gmra.mxu0 %v5917
        %v6056 = vpop.f32.mrf.mxu0
        %v6057 = vadd.f32 0.0, %v6056
        %v6058 = vpop.f32.mrf.mxu0
        %v6059 = vadd.f32 0.0, %v6058
        %6060 = vmatmul.bf16.gmra.mxu0 %v5919
        %v6061 = vpop.f32.mrf.mxu0
        %v6062 = vadd.f32 0.0, %v6061
        %v6063 = vpop.f32.mrf.mxu0
        %v6064 = vadd.f32 0.0, %v6063
        %6065 = vmatmul.bf16.gmra.mxu0 %v5921
        %v6066 = vpop.f32.mrf.mxu0
        %v6067 = vadd.f32 0.0, %v6066
        %v6068 = vpop.f32.mrf.mxu0
        %v6069 = vadd.f32 0.0, %v6068
        %6070 = vmatmul.bf16.gmra.mxu0 %v5923
        %v6071 = vpop.f32.mrf.mxu0
        %v6072 = vadd.f32 0.0, %v6071
        %v6073 = vpop.f32.mrf.mxu0
        %v6074 = vadd.f32 0.0, %v6073
        %6075 = vmatmul.bf16.gmra.mxu0 %v5925
        %v6076 = vpop.f32.mrf.mxu0
        %v6077 = vadd.f32 0.0, %v6076
        %v6078 = vpop.f32.mrf.mxu0
        %v6079 = vadd.f32 0.0, %v6078
        %6080 = vmatmul.bf16.gmra.mxu0 %v5927
        %v6081 = vpop.f32.mrf.mxu0
        %v6082 = vadd.f32 0.0, %v6081
        %v6083 = vpop.f32.mrf.mxu0
        %v6084 = vadd.f32 0.0, %v6083
        %6085 = vmatmul.bf16.gmra.mxu0 %v5929
        %v6086 = vpop.f32.mrf.mxu0
        %v6087 = vadd.f32 0.0, %v6086
        %v6088 = vpop.f32.mrf.mxu0
        %v6089 = vadd.f32 0.0, %v6088
        %6090 = vmatmul.bf16.gmra.mxu0 %v5931
        %v6091 = vpop.f32.mrf.mxu0
        %v6092 = vadd.f32 0.0, %v6091
        %v6093 = vpop.f32.mrf.mxu0
        %v6094 = vadd.f32 0.0, %v6093
        %6095 = vdwg.mxu0
        %6096 = vmatpush.bf16.msra.mxu0 %v5851
        %6097 = vmatpush.bf16.msra.mxu0 %v5849
        %6098 = vmatpush.bf16.msra.mxu0 %v5847
        %6099 = vmatpush.bf16.msra.mxu0 %v5845
        %6100 = vmatpush.bf16.msra.mxu0 %v5843
        %6101 = vmatpush.bf16.msra.mxu0 %v5841
        %6102 = vmatpush.bf16.msra.mxu0 %v5839
        %6103 = vmatpush.bf16.msra.mxu0 %v5837
        %6104 = vmatmul.bf16.gmra.mxu0 %v5918
        %v6105 = vpop.f32.mrf.mxu0
        %v6106 = vadd.f32 %v6057, %v6105
        %v6107 = vpop.f32.mrf.mxu0
        %v6108 = vadd.f32 %v6059, %v6107
        %6109 = vmatmul.bf16.gmra.mxu0 %v5920
        %v6110 = vpop.f32.mrf.mxu0
        %v6111 = vadd.f32 %v6062, %v6110
        %v6112 = vpop.f32.mrf.mxu0
        %v6113 = vadd.f32 %v6064, %v6112
        %6114 = vmatmul.bf16.gmra.mxu0 %v5922
        %v6115 = vpop.f32.mrf.mxu0
        %v6116 = vadd.f32 %v6067, %v6115
        %v6117 = vpop.f32.mrf.mxu0
        %v6118 = vadd.f32 %v6069, %v6117
        %6119 = vmatmul.bf16.gmra.mxu0 %v5924
        %v6120 = vpop.f32.mrf.mxu0
        %v6121 = vadd.f32 %v6072, %v6120
        %v6122 = vpop.f32.mrf.mxu0
        %v6123 = vadd.f32 %v6074, %v6122
        %6124 = vmatmul.bf16.gmra.mxu0 %v5926
        %v6125 = vpop.f32.mrf.mxu0
        %v6126 = vadd.f32 %v6077, %v6125
        %v6127 = vpop.f32.mrf.mxu0
        %v6128 = vadd.f32 %v6079, %v6127
        %6129 = vmatmul.bf16.gmra.mxu0 %v5928
        %v6130 = vpop.f32.mrf.mxu0
        %v6131 = vadd.f32 %v6082, %v6130
        %v6132 = vpop.f32.mrf.mxu0
        %v6133 = vadd.f32 %v6084, %v6132
        %6134 = vmatmul.bf16.gmra.mxu0 %v5930
        %v6135 = vpop.f32.mrf.mxu0
        %v6136 = vadd.f32 %v6087, %v6135
        %v6137 = vpop.f32.mrf.mxu0
        %v6138 = vadd.f32 %v6089, %v6137
        %6139 = vmatmul.bf16.gmra.mxu0 %v5932
        %v6140 = vpop.f32.mrf.mxu0
        %v6141 = vadd.f32 %v6092, %v6140
        %v6142 = vpop.f32.mrf.mxu0
        %v6143 = vadd.f32 %v6094, %v6142
        %6144 = vdwg.mxu0
        %v6145 = vadd.f32 %v3274, %v6008
        %v6146 = vadd.f32 %v3275, %v6106
        %v6147 = vadd.f32 %v3276, %v6010
        %v6148 = vadd.f32 %v3277, %v6108
        %v6149 = vadd.f32 %v3278, %v6013
        %v6150 = vadd.f32 %v3279, %v6111
        %v6151 = vadd.f32 %v3280, %v6015
        %v6152 = vadd.f32 %v3281, %v6113
        %v6153 = vadd.f32 %v3282, %v6018
        %v6154 = vadd.f32 %v3283, %v6116
        %v6155 = vadd.f32 %v3284, %v6020
        %v6156 = vadd.f32 %v3285, %v6118
        %v6157 = vadd.f32 %v3286, %v6023
        %v6158 = vadd.f32 %v3287, %v6121
        %v6159 = vadd.f32 %v3288, %v6025
        %v6160 = vadd.f32 %v3289, %v6123
        %v6161 = vadd.f32 %v3290, %v6028
        %v6162 = vadd.f32 %v3291, %v6126
        %v6163 = vadd.f32 %v3292, %v6030
        %v6164 = vadd.f32 %v3293, %v6128
        %v6165 = vadd.f32 %v3294, %v6033
        %v6166 = vadd.f32 %v3295, %v6131
        %v6167 = vadd.f32 %v3296, %v6035
        %v6168 = vadd.f32 %v3297, %v6133
        %v6169 = vadd.f32 %v3298, %v6038
        %v6170 = vadd.f32 %v3299, %v6136
        %v6171 = vadd.f32 %v3300, %v6040
        %v6172 = vadd.f32 %v3301, %v6138
        %v6173 = vadd.f32 %v3302, %v6043
        %v6174 = vadd.f32 %v3303, %v6141
        %v6175 = vadd.f32 %v3304, %v6045
        %v6176 = vadd.f32 %v3305, %v6143
        %s6177 = scalar_lea.vmem %s4, 128
        %v6178 = vld [vmem:[%s6177] sm:$0xff]
        %v6179 = vld [vmem:[%s6177 + $0x8] sm:$0xff]
        %v6180 = vld [vmem:[%s6177 + $0x10] sm:$0xff]
        %v6181 = vld [vmem:[%s6177 + $0x18] sm:$0xff]
        %v6182 = vld [vmem:[%s6177 + $0x20] sm:$0xff]
        %v6183 = vld [vmem:[%s6177 + $0x28] sm:$0xff]
        %v6184 = vld [vmem:[%s6177 + $0x30] sm:$0xff]
        %v6185 = vld [vmem:[%s6177 + $0x38] sm:$0xff]
        %v6186 = vld [vmem:[%s6177 + $0x40] sm:$0xff]
        %v6187 = vld [vmem:[%s6177 + $0x48] sm:$0xff]
        %v6188 = vld [vmem:[%s6177 + $0x50] sm:$0xff]
        %v6189 = vld [vmem:[%s6177 + $0x58] sm:$0xff]
        %v6190 = vld [vmem:[%s6177 + $0x60] sm:$0xff]
        %v6191 = vld [vmem:[%s6177 + $0x68] sm:$0xff]
        %v6192 = vld [vmem:[%s6177 + $0x70] sm:$0xff]
        %v6193 = vld [vmem:[%s6177 + $0x78] sm:$0xff]
        %6195 = vset.pattern.permute.xlu0 0
        %6196 = vperm.xlu0 %6195, %v6178
        %v6197 = vpop.permute.xlu0 %6196
        %6200 = vset.pattern.permute.xlu0 0
        %6201 = vperm.xlu0 %6200, %v6179
        %v6202 = vpop.permute.xlu0 %6201
        %6205 = vset.pattern.permute.xlu0 0
        %6206 = vperm.xlu0 %6205, %v6180
        %v6207 = vpop.permute.xlu0 %6206
        %6210 = vset.pattern.permute.xlu0 0
        %6211 = vperm.xlu0 %6210, %v6181
        %v6212 = vpop.permute.xlu0 %6211
        %6215 = vset.pattern.permute.xlu0 0
        %6216 = vperm.xlu0 %6215, %v6182
        %v6217 = vpop.permute.xlu0 %6216
        %6220 = vset.pattern.permute.xlu0 0
        %6221 = vperm.xlu0 %6220, %v6183
        %v6222 = vpop.permute.xlu0 %6221
        %6225 = vset.pattern.permute.xlu0 0
        %6226 = vperm.xlu0 %6225, %v6184
        %v6227 = vpop.permute.xlu0 %6226
        %6230 = vset.pattern.permute.xlu0 0
        %6231 = vperm.xlu0 %6230, %v6185
        %v6232 = vpop.permute.xlu0 %6231
        %6235 = vset.pattern.permute.xlu0 0
        %6236 = vperm.xlu0 %6235, %v6186
        %v6237 = vpop.permute.xlu0 %6236
        %6240 = vset.pattern.permute.xlu0 0
        %6241 = vperm.xlu0 %6240, %v6187
        %v6242 = vpop.permute.xlu0 %6241
        %6245 = vset.pattern.permute.xlu0 0
        %6246 = vperm.xlu0 %6245, %v6188
        %v6247 = vpop.permute.xlu0 %6246
        %6250 = vset.pattern.permute.xlu0 0
        %6251 = vperm.xlu0 %6250, %v6189
        %v6252 = vpop.permute.xlu0 %6251
        %6255 = vset.pattern.permute.xlu0 0
        %6256 = vperm.xlu0 %6255, %v6190
        %v6257 = vpop.permute.xlu0 %6256
        %6260 = vset.pattern.permute.xlu0 0
        %6261 = vperm.xlu0 %6260, %v6191
        %v6262 = vpop.permute.xlu0 %6261
        %6265 = vset.pattern.permute.xlu0 0
        %6266 = vperm.xlu0 %6265, %v6192
        %v6267 = vpop.permute.xlu0 %6266
        %6270 = vset.pattern.permute.xlu0 0
        %6271 = vperm.xlu0 %6270, %v6193
        %v6272 = vpop.permute.xlu0 %6271
        %v6274 = vadd.f32 %v6145, %v6197
        %v6275 = vadd.f32 %v6146, %v6197
        %v6276 = vadd.f32 %v6147, %v6202
        %v6277 = vadd.f32 %v6148, %v6202
        %v6278 = vadd.f32 %v6149, %v6207
        %v6279 = vadd.f32 %v6150, %v6207
        %v6280 = vadd.f32 %v6151, %v6212
        %v6281 = vadd.f32 %v6152, %v6212
        %v6282 = vadd.f32 %v6153, %v6217
        %v6283 = vadd.f32 %v6154, %v6217
        %v6284 = vadd.f32 %v6155, %v6222
        %v6285 = vadd.f32 %v6156, %v6222
        %v6286 = vadd.f32 %v6157, %v6227
        %v6287 = vadd.f32 %v6158, %v6227
        %v6288 = vadd.f32 %v6159, %v6232
        %v6289 = vadd.f32 %v6160, %v6232
        %v6290 = vadd.f32 %v6161, %v6237
        %v6291 = vadd.f32 %v6162, %v6237
        %v6292 = vadd.f32 %v6163, %v6242
        %v6293 = vadd.f32 %v6164, %v6242
        %v6294 = vadd.f32 %v6165, %v6247
        %v6295 = vadd.f32 %v6166, %v6247
        %v6296 = vadd.f32 %v6167, %v6252
        %v6297 = vadd.f32 %v6168, %v6252
        %v6298 = vadd.f32 %v6169, %v6257
        %v6299 = vadd.f32 %v6170, %v6257
        %v6300 = vadd.f32 %v6171, %v6262
        %v6301 = vadd.f32 %v6172, %v6262
        %v6302 = vadd.f32 %v6173, %v6267
        %v6303 = vadd.f32 %v6174, %v6267
        %v6304 = vadd.f32 %v6175, %v6272
        %v6305 = vadd.f32 %v6176, %v6272
        %v6306 = vadd.f32 %v6274, %v6276
        %v6307 = vadd.f32 %v6306, %v6278
        %v6308 = vadd.f32 %v6307, %v6280
        %v6309 = vadd.f32 %v6308, %v6282
        %v6310 = vadd.f32 %v6309, %v6284
        %v6311 = vadd.f32 %v6310, %v6286
        %v6312 = vadd.f32 %v6311, %v6288
        %v6313 = vadd.f32 %v6312, %v6290
        %v6314 = vadd.f32 %v6313, %v6292
        %v6315 = vadd.f32 %v6314, %v6294
        %v6316 = vadd.f32 %v6315, %v6296
        %v6317 = vadd.f32 %v6316, %v6298
        %v6318 = vadd.f32 %v6317, %v6300
        %v6319 = vadd.f32 %v6318, %v6302
        %v6320 = vadd.f32 %v6319, %v6304
        %v6321 = vrot.slane %v6320, 4
        %v6322 = vadd.f32 %v6320, %v6321
        %v6323 = vrot.slane %v6322, 2
        %v6324 = vadd.f32 %v6322, %v6323
        %v6325 = vrot.slane %v6324, 1
        %v6326 = vadd.f32 %v6324, %v6325
        %v6327 = vadd.f32 %v6275, %v6277
        %v6328 = vadd.f32 %v6327, %v6279
        %v6329 = vadd.f32 %v6328, %v6281
        %v6330 = vadd.f32 %v6329, %v6283
        %v6331 = vadd.f32 %v6330, %v6285
        %v6332 = vadd.f32 %v6331, %v6287
        %v6333 = vadd.f32 %v6332, %v6289
        %v6334 = vadd.f32 %v6333, %v6291
        %v6335 = vadd.f32 %v6334, %v6293
        %v6336 = vadd.f32 %v6335, %v6295
        %v6337 = vadd.f32 %v6336, %v6297
        %v6338 = vadd.f32 %v6337, %v6299
        %v6339 = vadd.f32 %v6338, %v6301
        %v6340 = vadd.f32 %v6339, %v6303
        %v6341 = vadd.f32 %v6340, %v6305
        %v6342 = vrot.slane %v6341, 4
        %v6343 = vadd.f32 %v6341, %v6342
        %v6344 = vrot.slane %v6343, 2
        %v6345 = vadd.f32 %v6343, %v6344
        %v6346 = vrot.slane %v6345, 1
        %v6347 = vadd.f32 %v6345, %v6346
        %v6348 = vmul.f32 %v6326, %v351
        %v6349 = vmul.f32 %v6347, %v351
        %v6350 = vsub.f32 %v6274, %v6348
        %v6351 = vsub.f32 %v6275, %v6349
        %v6352 = vsub.f32 %v6276, %v6348
        %v6353 = vsub.f32 %v6277, %v6349
        %v6354 = vsub.f32 %v6278, %v6348
        %v6355 = vsub.f32 %v6279, %v6349
        %v6356 = vsub.f32 %v6280, %v6348
        %v6357 = vsub.f32 %v6281, %v6349
        %v6358 = vsub.f32 %v6282, %v6348
        %v6359 = vsub.f32 %v6283, %v6349
        %v6360 = vsub.f32 %v6284, %v6348
        %v6361 = vsub.f32 %v6285, %v6349
        %v6362 = vsub.f32 %v6286, %v6348
        %v6363 = vsub.f32 %v6287, %v6349
        %v6364 = vsub.f32 %v6288, %v6348
        %v6365 = vsub.f32 %v6289, %v6349
        %v6366 = vsub.f32 %v6290, %v6348
        %v6367 = vsub.f32 %v6291, %v6349
        %v6368 = vsub.f32 %v6292, %v6348
        %v6369 = vsub.f32 %v6293, %v6349
        %v6370 = vsub.f32 %v6294, %v6348
        %v6371 = vsub.f32 %v6295, %v6349
        %v6372 = vsub.f32 %v6296, %v6348
        %v6373 = vsub.f32 %v6297, %v6349
        %v6374 = vsub.f32 %v6298, %v6348
        %v6375 = vsub.f32 %v6299, %v6349
        %v6376 = vsub.f32 %v6300, %v6348
        %v6377 = vsub.f32 %v6301, %v6349
        %v6378 = vsub.f32 %v6302, %v6348
        %v6379 = vsub.f32 %v6303, %v6349
        %v6380 = vsub.f32 %v6304, %v6348
        %v6381 = vsub.f32 %v6305, %v6349
        %v6382 = vmul.f32 %v6350, %v6350
        %v6383 = vmul.f32 %v6351, %v6351
        %v6384 = vmul.f32 %v6352, %v6352
        %v6385 = vmul.f32 %v6353, %v6353
        %v6386 = vmul.f32 %v6354, %v6354
        %v6387 = vmul.f32 %v6355, %v6355
        %v6388 = vmul.f32 %v6356, %v6356
        %v6389 = vmul.f32 %v6357, %v6357
        %v6390 = vmul.f32 %v6358, %v6358
        %v6391 = vmul.f32 %v6359, %v6359
        %v6392 = vmul.f32 %v6360, %v6360
        %v6393 = vmul.f32 %v6361, %v6361
        %v6394 = vmul.f32 %v6362, %v6362
        %v6395 = vmul.f32 %v6363, %v6363
        %v6396 = vmul.f32 %v6364, %v6364
        %v6397 = vmul.f32 %v6365, %v6365
        %v6398 = vmul.f32 %v6366, %v6366
        %v6399 = vmul.f32 %v6367, %v6367
        %v6400 = vmul.f32 %v6368, %v6368
        %v6401 = vmul.f32 %v6369, %v6369
        %v6402 = vmul.f32 %v6370, %v6370
        %v6403 = vmul.f32 %v6371, %v6371
        %v6404 = vmul.f32 %v6372, %v6372
        %v6405 = vmul.f32 %v6373, %v6373
        %v6406 = vmul.f32 %v6374, %v6374
        %v6407 = vmul.f32 %v6375, %v6375
        %v6408 = vmul.f32 %v6376, %v6376
        %v6409 = vmul.f32 %v6377, %v6377
        %v6410 = vmul.f32 %v6378, %v6378
        %v6411 = vmul.f32 %v6379, %v6379
        %v6412 = vmul.f32 %v6380, %v6380
        %v6413 = vmul.f32 %v6381, %v6381
        %v6414 = vadd.f32 %v6382, %v6384
        %v6415 = vadd.f32 %v6414, %v6386
        %v6416 = vadd.f32 %v6415, %v6388
        %v6417 = vadd.f32 %v6416, %v6390
        %v6418 = vadd.f32 %v6417, %v6392
        %v6419 = vadd.f32 %v6418, %v6394
        %v6420 = vadd.f32 %v6419, %v6396
        %v6421 = vadd.f32 %v6420, %v6398
        %v6422 = vadd.f32 %v6421, %v6400
        %v6423 = vadd.f32 %v6422, %v6402
        %v6424 = vadd.f32 %v6423, %v6404
        %v6425 = vadd.f32 %v6424, %v6406
        %v6426 = vadd.f32 %v6425, %v6408
        %v6427 = vadd.f32 %v6426, %v6410
        %v6428 = vadd.f32 %v6427, %v6412
        %v6429 = vrot.slane %v6428, 4
        %v6430 = vadd.f32 %v6428, %v6429
        %v6431 = vrot.slane %v6430, 2
        %v6432 = vadd.f32 %v6430, %v6431
        %v6433 = vrot.slane %v6432, 1
        %v6434 = vadd.f32 %v6432, %v6433
        %v6435 = vadd.f32 %v6383, %v6385
        %v6436 = vadd.f32 %v6435, %v6387
        %v6437 = vadd.f32 %v6436, %v6389
        %v6438 = vadd.f32 %v6437, %v6391
        %v6439 = vadd.f32 %v6438, %v6393
        %v6440 = vadd.f32 %v6439, %v6395
        %v6441 = vadd.f32 %v6440, %v6397
        %v6442 = vadd.f32 %v6441, %v6399
        %v6443 = vadd.f32 %v6442, %v6401
        %v6444 = vadd.f32 %v6443, %v6403
        %v6445 = vadd.f32 %v6444, %v6405
        %v6446 = vadd.f32 %v6445, %v6407
        %v6447 = vadd.f32 %v6446, %v6409
        %v6448 = vadd.f32 %v6447, %v6411
        %v6449 = vadd.f32 %v6448, %v6413
        %v6450 = vrot.slane %v6449, 4
        %v6451 = vadd.f32 %v6449, %v6450
        %v6452 = vrot.slane %v6451, 2
        %v6453 = vadd.f32 %v6451, %v6452
        %v6454 = vrot.slane %v6453, 1
        %v6455 = vadd.f32 %v6453, %v6454
        %v6456 = vmul.f32 %v6434, %v351
        %v6457 = vmul.f32 %v6455, %v351
        %v6458 = vadd.f32 %v6456, 1e-05
        %v6459 = vadd.f32 %v6457, 1e-05
        %v6460 = vrsqrt.pop %v6458
        %v6461 = vmul.f32 %v6460, %v6458
        %v6462 = vmul.f32 %v6461, %v6460
        %v6463 = vmul.f32 0.5, %v6462
        %v6464 = vsub.f32 1.5, %v6463
        %v6465 = vmul.f32 %v6460, %v6464
        %vm6466 = vweird.f32 %v6458
        %vm6467 = vweird.f32 %v6460
        %vm6468 = vmor %vm6466, %vm6467
        %v6469 = vsel %vm6468, %v6460, %v6465
        %v6470 = vrsqrt.pop %v6459
        %v6471 = vmul.f32 %v6470, %v6459
        %v6472 = vmul.f32 %v6471, %v6470
        %v6473 = vmul.f32 0.5, %v6472
        %v6474 = vsub.f32 1.5, %v6473
        %v6475 = vmul.f32 %v6470, %v6474
        %vm6476 = vweird.f32 %v6459
        %vm6477 = vweird.f32 %v6470
        %vm6478 = vmor %vm6476, %vm6477
        %v6479 = vsel %vm6478, %v6470, %v6475
        %v6480 = vmul.f32 %v6350, %v6469
        %v6481 = vmul.f32 %v6351, %v6479
        %v6482 = vmul.f32 %v6352, %v6469
        %v6483 = vmul.f32 %v6353, %v6479
        %v6484 = vmul.f32 %v6354, %v6469
        %v6485 = vmul.f32 %v6355, %v6479
        %v6486 = vmul.f32 %v6356, %v6469
        %v6487 = vmul.f32 %v6357, %v6479
        %v6488 = vmul.f32 %v6358, %v6469
        %v6489 = vmul.f32 %v6359, %v6479
        %v6490 = vmul.f32 %v6360, %v6469
        %v6491 = vmul.f32 %v6361, %v6479
        %v6492 = vmul.f32 %v6362, %v6469
        %v6493 = vmul.f32 %v6363, %v6479
        %v6494 = vmul.f32 %v6364, %v6469
        %v6495 = vmul.f32 %v6365, %v6479
        %v6496 = vmul.f32 %v6366, %v6469
        %v6497 = vmul.f32 %v6367, %v6479
        %v6498 = vmul.f32 %v6368, %v6469
        %v6499 = vmul.f32 %v6369, %v6479
        %v6500 = vmul.f32 %v6370, %v6469
        %v6501 = vmul.f32 %v6371, %v6479
        %v6502 = vmul.f32 %v6372, %v6469
        %v6503 = vmul.f32 %v6373, %v6479
        %v6504 = vmul.f32 %v6374, %v6469
        %v6505 = vmul.f32 %v6375, %v6479
        %v6506 = vmul.f32 %v6376, %v6469
        %v6507 = vmul.f32 %v6377, %v6479
        %v6508 = vmul.f32 %v6378, %v6469
        %v6509 = vmul.f32 %v6379, %v6479
        %v6510 = vmul.f32 %v6380, %v6469
        %v6511 = vmul.f32 %v6381, %v6479
        %s6512 = scalar_lea.vmem %s1, 256
        %v6513 = vld [vmem:[%s6512] sm:$0xf]
        %v6514 = vld [vmem:[%s6512 + $0x4] sm:$0xf]
        %v6515 = vld [vmem:[%s6512 + $0x8] sm:$0xf]
        %v6516 = vld [vmem:[%s6512 + $0xc] sm:$0xf]
        %v6517 = vld [vmem:[%s6512 + $0x10] sm:$0xf]
        %v6518 = vld [vmem:[%s6512 + $0x14] sm:$0xf]
        %v6519 = vld [vmem:[%s6512 + $0x18] sm:$0xf]
        %v6520 = vld [vmem:[%s6512 + $0x1c] sm:$0xf]
        %v6521 = vld [vmem:[%s6512 + $0x20] sm:$0xf]
        %v6522 = vld [vmem:[%s6512 + $0x24] sm:$0xf]
        %v6523 = vld [vmem:[%s6512 + $0x28] sm:$0xf]
        %v6524 = vld [vmem:[%s6512 + $0x2c] sm:$0xf]
        %v6525 = vld [vmem:[%s6512 + $0x30] sm:$0xf]
        %v6526 = vld [vmem:[%s6512 + $0x34] sm:$0xf]
        %v6527 = vld [vmem:[%s6512 + $0x38] sm:$0xf]
        %v6528 = vld [vmem:[%s6512 + $0x3c] sm:$0xf]
        %v6529 = vld [vmem:[%s6512 + $0x40] sm:$0xf]
        %v6530 = vld [vmem:[%s6512 + $0x44] sm:$0xf]
        %v6531 = vld [vmem:[%s6512 + $0x48] sm:$0xf]
        %v6532 = vld [vmem:[%s6512 + $0x4c] sm:$0xf]
        %v6533 = vld [vmem:[%s6512 + $0x50] sm:$0xf]
        %v6534 = vld [vmem:[%s6512 + $0x54] sm:$0xf]
        %v6535 = vld [vmem:[%s6512 + $0x58] sm:$0xf]
        %v6536 = vld [vmem:[%s6512 + $0x5c] sm:$0xf]
        %v6537 = vld [vmem:[%s6512 + $0x60] sm:$0xf]
        %v6538 = vld [vmem:[%s6512 + $0x64] sm:$0xf]
        %v6539 = vld [vmem:[%s6512 + $0x68] sm:$0xf]
        %v6540 = vld [vmem:[%s6512 + $0x6c] sm:$0xf]
        %v6541 = vld [vmem:[%s6512 + $0x70] sm:$0xf]
        %v6542 = vld [vmem:[%s6512 + $0x74] sm:$0xf]
        %v6543 = vld [vmem:[%s6512 + $0x78] sm:$0xf]
        %v6544 = vld [vmem:[%s6512 + $0x7c] sm:$0xf]
        %v6545 = vpack.c.bf16 %v6482, %v6480
        %v6546 = vpack.c.bf16 %v6483, %v6481
        %v6547 = vpack.c.bf16 %v6486, %v6484
        %v6548 = vpack.c.bf16 %v6487, %v6485
        %v6549 = vpack.c.bf16 %v6490, %v6488
        %v6550 = vpack.c.bf16 %v6491, %v6489
        %v6551 = vpack.c.bf16 %v6494, %v6492
        %v6552 = vpack.c.bf16 %v6495, %v6493
        %v6553 = vpack.c.bf16 %v6498, %v6496
        %v6554 = vpack.c.bf16 %v6499, %v6497
        %v6555 = vpack.c.bf16 %v6502, %v6500
        %v6556 = vpack.c.bf16 %v6503, %v6501
        %v6557 = vpack.c.bf16 %v6506, %v6504
        %v6558 = vpack.c.bf16 %v6507, %v6505
        %v6559 = vpack.c.bf16 %v6510, %v6508
        %v6560 = vpack.c.bf16 %v6511, %v6509
        %v6593 = vunpack.c.l.b16 %v6513
        %v6594 = vunpack.c.l.b16 %v6514
        %v6595 = vunpack.c.l.b16 %v6515
        %v6596 = vunpack.c.l.b16 %v6516
        %v6597 = vunpack.c.l.b16 %v6517
        %v6598 = vunpack.c.l.b16 %v6518
        %v6599 = vunpack.c.l.b16 %v6519
        %v6600 = vunpack.c.l.b16 %v6520
        %v6601 = vunpack.c.l.b16 %v6521
        %v6602 = vunpack.c.l.b16 %v6522
        %v6603 = vunpack.c.l.b16 %v6523
        %v6604 = vunpack.c.l.b16 %v6524
        %v6605 = vunpack.c.l.b16 %v6525
        %v6606 = vunpack.c.l.b16 %v6526
        %v6607 = vunpack.c.l.b16 %v6527
        %v6608 = vunpack.c.l.b16 %v6528
        %v6609 = vunpack.c.l.b16 %v6529
        %v6610 = vunpack.c.l.b16 %v6530
        %v6611 = vunpack.c.l.b16 %v6531
        %v6612 = vunpack.c.l.b16 %v6532
        %v6613 = vunpack.c.l.b16 %v6533
        %v6614 = vunpack.c.l.b16 %v6534
        %v6615 = vunpack.c.l.b16 %v6535
        %v6616 = vunpack.c.l.b16 %v6536
        %v6617 = vunpack.c.l.b16 %v6537
        %v6618 = vunpack.c.l.b16 %v6538
        %v6619 = vunpack.c.l.b16 %v6539
        %v6620 = vunpack.c.l.b16 %v6540
        %v6621 = vunpack.c.l.b16 %v6541
        %v6622 = vunpack.c.l.b16 %v6542
        %v6623 = vunpack.c.l.b16 %v6543
        %v6624 = vunpack.c.l.b16 %v6544
        %v6625 = vpack.c.b16 %v6594, %v6593
        %v6626 = vpack.c.b16 %v6596, %v6595
        %v6627 = vpack.c.b16 %v6598, %v6597
        %v6628 = vpack.c.b16 %v6600, %v6599
        %v6629 = vpack.c.b16 %v6602, %v6601
        %v6630 = vpack.c.b16 %v6604, %v6603
        %v6631 = vpack.c.b16 %v6606, %v6605
        %v6632 = vpack.c.b16 %v6608, %v6607
        %v6633 = vpack.c.b16 %v6610, %v6609
        %v6634 = vpack.c.b16 %v6612, %v6611
        %v6635 = vpack.c.b16 %v6614, %v6613
        %v6636 = vpack.c.b16 %v6616, %v6615
        %v6637 = vpack.c.b16 %v6618, %v6617
        %v6638 = vpack.c.b16 %v6620, %v6619
        %v6639 = vpack.c.b16 %v6622, %v6621
        %v6640 = vpack.c.b16 %v6624, %v6623
        %6657 = vmatpush.bf16.msra.mxu0 %v6559
        %6658 = vmatpush.bf16.msra.mxu0 %v6557
        %6659 = vmatpush.bf16.msra.mxu0 %v6555
        %6660 = vmatpush.bf16.msra.mxu0 %v6553
        %6661 = vmatpush.bf16.msra.mxu0 %v6551
        %6662 = vmatpush.bf16.msra.mxu0 %v6549
        %6663 = vmatpush.bf16.msra.mxu0 %v6547
        %6664 = vmatpush.bf16.msra.mxu0 %v6545
        %6665 = vmatmul.bf16.gmra.mxu0 %v6625
        %v6666 = vpop.f32.mrf.mxu0
        %v6667 = vadd.f32 0.0, %v6666
        %v6668 = vpop.f32.mrf.mxu0
        %v6669 = vadd.f32 0.0, %v6668
        %6670 = vmatmul.bf16.gmra.mxu0 %v6626
        %v6671 = vpop.f32.mrf.mxu0
        %v6672 = vadd.f32 0.0, %v6671
        %v6673 = vpop.f32.mrf.mxu0
        %v6674 = vadd.f32 0.0, %v6673
        %6675 = vmatmul.bf16.gmra.mxu0 %v6627
        %v6676 = vpop.f32.mrf.mxu0
        %v6677 = vadd.f32 0.0, %v6676
        %v6678 = vpop.f32.mrf.mxu0
        %v6679 = vadd.f32 0.0, %v6678
        %6680 = vmatmul.bf16.gmra.mxu0 %v6628
        %v6681 = vpop.f32.mrf.mxu0
        %v6682 = vadd.f32 0.0, %v6681
        %v6683 = vpop.f32.mrf.mxu0
        %v6684 = vadd.f32 0.0, %v6683
        %6685 = vmatmul.bf16.gmra.mxu0 %v6629
        %v6686 = vpop.f32.mrf.mxu0
        %v6687 = vadd.f32 0.0, %v6686
        %v6688 = vpop.f32.mrf.mxu0
        %v6689 = vadd.f32 0.0, %v6688
        %6690 = vmatmul.bf16.gmra.mxu0 %v6630
        %v6691 = vpop.f32.mrf.mxu0
        %v6692 = vadd.f32 0.0, %v6691
        %v6693 = vpop.f32.mrf.mxu0
        %v6694 = vadd.f32 0.0, %v6693
        %6695 = vmatmul.bf16.gmra.mxu0 %v6631
        %v6696 = vpop.f32.mrf.mxu0
        %v6697 = vadd.f32 0.0, %v6696
        %v6698 = vpop.f32.mrf.mxu0
        %v6699 = vadd.f32 0.0, %v6698
        %6700 = vmatmul.bf16.gmra.mxu0 %v6632
        %v6701 = vpop.f32.mrf.mxu0
        %v6702 = vadd.f32 0.0, %v6701
        %v6703 = vpop.f32.mrf.mxu0
        %v6704 = vadd.f32 0.0, %v6703
        %6705 = vmatmul.bf16.gmra.mxu0 %v6633
        %v6706 = vpop.f32.mrf.mxu0
        %v6707 = vadd.f32 0.0, %v6706
        %v6708 = vpop.f32.mrf.mxu0
        %v6709 = vadd.f32 0.0, %v6708
        %6710 = vmatmul.bf16.gmra.mxu0 %v6634
        %v6711 = vpop.f32.mrf.mxu0
        %v6712 = vadd.f32 0.0, %v6711
        %v6713 = vpop.f32.mrf.mxu0
        %v6714 = vadd.f32 0.0, %v6713
        %6715 = vmatmul.bf16.gmra.mxu0 %v6635
        %v6716 = vpop.f32.mrf.mxu0
        %v6717 = vadd.f32 0.0, %v6716
        %v6718 = vpop.f32.mrf.mxu0
        %v6719 = vadd.f32 0.0, %v6718
        %6720 = vmatmul.bf16.gmra.mxu0 %v6636
        %v6721 = vpop.f32.mrf.mxu0
        %v6722 = vadd.f32 0.0, %v6721
        %v6723 = vpop.f32.mrf.mxu0
        %v6724 = vadd.f32 0.0, %v6723
        %6725 = vmatmul.bf16.gmra.mxu0 %v6637
        %v6726 = vpop.f32.mrf.mxu0
        %v6727 = vadd.f32 0.0, %v6726
        %v6728 = vpop.f32.mrf.mxu0
        %v6729 = vadd.f32 0.0, %v6728
        %6730 = vmatmul.bf16.gmra.mxu0 %v6638
        %v6731 = vpop.f32.mrf.mxu0
        %v6732 = vadd.f32 0.0, %v6731
        %v6733 = vpop.f32.mrf.mxu0
        %v6734 = vadd.f32 0.0, %v6733
        %6735 = vmatmul.bf16.gmra.mxu0 %v6639
        %v6736 = vpop.f32.mrf.mxu0
        %v6737 = vadd.f32 0.0, %v6736
        %v6738 = vpop.f32.mrf.mxu0
        %v6739 = vadd.f32 0.0, %v6738
        %6740 = vmatmul.bf16.gmra.mxu0 %v6640
        %v6741 = vpop.f32.mrf.mxu0
        %v6742 = vadd.f32 0.0, %v6741
        %v6743 = vpop.f32.mrf.mxu0
        %v6744 = vadd.f32 0.0, %v6743
        %6745 = vdwg.mxu0
        %6746 = vmatpush.bf16.msra.mxu0 %v6560
        %6747 = vmatpush.bf16.msra.mxu0 %v6558
        %6748 = vmatpush.bf16.msra.mxu0 %v6556
        %6749 = vmatpush.bf16.msra.mxu0 %v6554
        %6750 = vmatpush.bf16.msra.mxu0 %v6552
        %6751 = vmatpush.bf16.msra.mxu0 %v6550
        %6752 = vmatpush.bf16.msra.mxu0 %v6548
        %6753 = vmatpush.bf16.msra.mxu0 %v6546
        %6754 = vmatmul.bf16.gmra.mxu0 %v6625
        %v6755 = vpop.f32.mrf.mxu0
        %v6756 = vadd.f32 0.0, %v6755
        %v6757 = vpop.f32.mrf.mxu0
        %v6758 = vadd.f32 0.0, %v6757
        %6759 = vmatmul.bf16.gmra.mxu0 %v6626
        %v6760 = vpop.f32.mrf.mxu0
        %v6761 = vadd.f32 0.0, %v6760
        %v6762 = vpop.f32.mrf.mxu0
        %v6763 = vadd.f32 0.0, %v6762
        %6764 = vmatmul.bf16.gmra.mxu0 %v6627
        %v6765 = vpop.f32.mrf.mxu0
        %v6766 = vadd.f32 0.0, %v6765
        %v6767 = vpop.f32.mrf.mxu0
        %v6768 = vadd.f32 0.0, %v6767
        %6769 = vmatmul.bf16.gmra.mxu0 %v6628
        %v6770 = vpop.f32.mrf.mxu0
        %v6771 = vadd.f32 0.0, %v6770
        %v6772 = vpop.f32.mrf.mxu0
        %v6773 = vadd.f32 0.0, %v6772
        %6774 = vmatmul.bf16.gmra.mxu0 %v6629
        %v6775 = vpop.f32.mrf.mxu0
        %v6776 = vadd.f32 0.0, %v6775
        %v6777 = vpop.f32.mrf.mxu0
        %v6778 = vadd.f32 0.0, %v6777
        %6779 = vmatmul.bf16.gmra.mxu0 %v6630
        %v6780 = vpop.f32.mrf.mxu0
        %v6781 = vadd.f32 0.0, %v6780
        %v6782 = vpop.f32.mrf.mxu0
        %v6783 = vadd.f32 0.0, %v6782
        %6784 = vmatmul.bf16.gmra.mxu0 %v6631
        %v6785 = vpop.f32.mrf.mxu0
        %v6786 = vadd.f32 0.0, %v6785
        %v6787 = vpop.f32.mrf.mxu0
        %v6788 = vadd.f32 0.0, %v6787
        %6789 = vmatmul.bf16.gmra.mxu0 %v6632
        %v6790 = vpop.f32.mrf.mxu0
        %v6791 = vadd.f32 0.0, %v6790
        %v6792 = vpop.f32.mrf.mxu0
        %v6793 = vadd.f32 0.0, %v6792
        %6794 = vmatmul.bf16.gmra.mxu0 %v6633
        %v6795 = vpop.f32.mrf.mxu0
        %v6796 = vadd.f32 0.0, %v6795
        %v6797 = vpop.f32.mrf.mxu0
        %v6798 = vadd.f32 0.0, %v6797
        %6799 = vmatmul.bf16.gmra.mxu0 %v6634
        %v6800 = vpop.f32.mrf.mxu0
        %v6801 = vadd.f32 0.0, %v6800
        %v6802 = vpop.f32.mrf.mxu0
        %v6803 = vadd.f32 0.0, %v6802
        %6804 = vmatmul.bf16.gmra.mxu0 %v6635
        %v6805 = vpop.f32.mrf.mxu0
        %v6806 = vadd.f32 0.0, %v6805
        %v6807 = vpop.f32.mrf.mxu0
        %v6808 = vadd.f32 0.0, %v6807
        %6809 = vmatmul.bf16.gmra.mxu0 %v6636
        %v6810 = vpop.f32.mrf.mxu0
        %v6811 = vadd.f32 0.0, %v6810
        %v6812 = vpop.f32.mrf.mxu0
        %v6813 = vadd.f32 0.0, %v6812
        %6814 = vmatmul.bf16.gmra.mxu0 %v6637
        %v6815 = vpop.f32.mrf.mxu0
        %v6816 = vadd.f32 0.0, %v6815
        %v6817 = vpop.f32.mrf.mxu0
        %v6818 = vadd.f32 0.0, %v6817
        %6819 = vmatmul.bf16.gmra.mxu0 %v6638
        %v6820 = vpop.f32.mrf.mxu0
        %v6821 = vadd.f32 0.0, %v6820
        %v6822 = vpop.f32.mrf.mxu0
        %v6823 = vadd.f32 0.0, %v6822
        %6824 = vmatmul.bf16.gmra.mxu0 %v6639
        %v6825 = vpop.f32.mrf.mxu0
        %v6826 = vadd.f32 0.0, %v6825
        %v6827 = vpop.f32.mrf.mxu0
        %v6828 = vadd.f32 0.0, %v6827
        %6829 = vmatmul.bf16.gmra.mxu0 %v6640
        %v6830 = vpop.f32.mrf.mxu0
        %v6831 = vadd.f32 0.0, %v6830
        %v6832 = vpop.f32.mrf.mxu0
        %v6833 = vadd.f32 0.0, %v6832
        %6834 = vdwg.mxu0
        %v6835 = vpack.c.bf16 %v6756, %v6667
        %v6836 = vpack.c.bf16 %v6758, %v6669
        %v6837 = vpack.c.bf16 %v6761, %v6672
        %v6838 = vpack.c.bf16 %v6763, %v6674
        %v6839 = vpack.c.bf16 %v6766, %v6677
        %v6840 = vpack.c.bf16 %v6768, %v6679
        %v6841 = vpack.c.bf16 %v6771, %v6682
        %v6842 = vpack.c.bf16 %v6773, %v6684
        %v6843 = vpack.c.bf16 %v6776, %v6687
        %v6844 = vpack.c.bf16 %v6778, %v6689
        %v6845 = vpack.c.bf16 %v6781, %v6692
        %v6846 = vpack.c.bf16 %v6783, %v6694
        %v6847 = vpack.c.bf16 %v6786, %v6697
        %v6848 = vpack.c.bf16 %v6788, %v6699
        %v6849 = vpack.c.bf16 %v6791, %v6702
        %v6850 = vpack.c.bf16 %v6793, %v6704
        %v6851 = vpack.c.bf16 %v6796, %v6707
        %v6852 = vpack.c.bf16 %v6798, %v6709
        %v6853 = vpack.c.bf16 %v6801, %v6712
        %v6854 = vpack.c.bf16 %v6803, %v6714
        %v6855 = vpack.c.bf16 %v6806, %v6717
        %v6856 = vpack.c.bf16 %v6808, %v6719
        %v6857 = vpack.c.bf16 %v6811, %v6722
        %v6858 = vpack.c.bf16 %v6813, %v6724
        %v6859 = vpack.c.bf16 %v6816, %v6727
        %v6860 = vpack.c.bf16 %v6818, %v6729
        %v6861 = vpack.c.bf16 %v6821, %v6732
        %v6862 = vpack.c.bf16 %v6823, %v6734
        %v6863 = vpack.c.bf16 %v6826, %v6737
        %v6864 = vpack.c.bf16 %v6828, %v6739
        %v6865 = vpack.c.bf16 %v6831, %v6742
        %v6866 = vpack.c.bf16 %v6833, %v6744
        %s6867 = scalar_lea.vmem %s2, 512
        %v6868 = vld [vmem:[%s6867] sm:$0xff]
        %v6869 = vld [vmem:[%s6867 + $0x8] sm:$0xff]
        %v6870 = vld [vmem:[%s6867 + $0x10] sm:$0xff]
        %v6871 = vld [vmem:[%s6867 + $0x18] sm:$0xff]
        %v6872 = vld [vmem:[%s6867 + $0x20] sm:$0xff]
        %v6873 = vld [vmem:[%s6867 + $0x28] sm:$0xff]
        %v6874 = vld [vmem:[%s6867 + $0x30] sm:$0xff]
        %v6875 = vld [vmem:[%s6867 + $0x38] sm:$0xff]
        %v6876 = vld [vmem:[%s6867 + $0x40] sm:$0xff]
        %v6877 = vld [vmem:[%s6867 + $0x48] sm:$0xff]
        %v6878 = vld [vmem:[%s6867 + $0x50] sm:$0xff]
        %v6879 = vld [vmem:[%s6867 + $0x58] sm:$0xff]
        %v6880 = vld [vmem:[%s6867 + $0x60] sm:$0xff]
        %v6881 = vld [vmem:[%s6867 + $0x68] sm:$0xff]
        %v6882 = vld [vmem:[%s6867 + $0x70] sm:$0xff]
        %v6883 = vld [vmem:[%s6867 + $0x78] sm:$0xff]
        %v6884 = vld [vmem:[%s6867 + $0x80] sm:$0xff]
        %v6885 = vld [vmem:[%s6867 + $0x88] sm:$0xff]
        %v6886 = vld [vmem:[%s6867 + $0x90] sm:$0xff]
        %v6887 = vld [vmem:[%s6867 + $0x98] sm:$0xff]
        %v6888 = vld [vmem:[%s6867 + $0xa0] sm:$0xff]
        %v6889 = vld [vmem:[%s6867 + $0xa8] sm:$0xff]
        %v6890 = vld [vmem:[%s6867 + $0xb0] sm:$0xff]
        %v6891 = vld [vmem:[%s6867 + $0xb8] sm:$0xff]
        %v6892 = vld [vmem:[%s6867 + $0xc0] sm:$0xff]
        %v6893 = vld [vmem:[%s6867 + $0xc8] sm:$0xff]
        %v6894 = vld [vmem:[%s6867 + $0xd0] sm:$0xff]
        %v6895 = vld [vmem:[%s6867 + $0xd8] sm:$0xff]
        %v6896 = vld [vmem:[%s6867 + $0xe0] sm:$0xff]
        %v6897 = vld [vmem:[%s6867 + $0xe8] sm:$0xff]
        %v6898 = vld [vmem:[%s6867 + $0xf0] sm:$0xff]
        %v6899 = vld [vmem:[%s6867 + $0xf8] sm:$0xff]
        %v6900 = vpack.c.bf16 %v6868, %v6868
        %v6901 = vpack.c.bf16 %v6869, %v6869
        %v6902 = vpack.c.bf16 %v6870, %v6870
        %v6903 = vpack.c.bf16 %v6871, %v6871
        %v6904 = vpack.c.bf16 %v6872, %v6872
        %v6905 = vpack.c.bf16 %v6873, %v6873
        %v6906 = vpack.c.bf16 %v6874, %v6874
        %v6907 = vpack.c.bf16 %v6875, %v6875
        %v6908 = vpack.c.bf16 %v6876, %v6876
        %v6909 = vpack.c.bf16 %v6877, %v6877
        %v6910 = vpack.c.bf16 %v6878, %v6878
        %v6911 = vpack.c.bf16 %v6879, %v6879
        %v6912 = vpack.c.bf16 %v6880, %v6880
        %v6913 = vpack.c.bf16 %v6881, %v6881
        %v6914 = vpack.c.bf16 %v6882, %v6882
        %v6915 = vpack.c.bf16 %v6883, %v6883
        %v6916 = vpack.c.bf16 %v6884, %v6884
        %v6917 = vpack.c.bf16 %v6885, %v6885
        %v6918 = vpack.c.bf16 %v6886, %v6886
        %v6919 = vpack.c.bf16 %v6887, %v6887
        %v6920 = vpack.c.bf16 %v6888, %v6888
        %v6921 = vpack.c.bf16 %v6889, %v6889
        %v6922 = vpack.c.bf16 %v6890, %v6890
        %v6923 = vpack.c.bf16 %v6891, %v6891
        %v6924 = vpack.c.bf16 %v6892, %v6892
        %v6925 = vpack.c.bf16 %v6893, %v6893
        %v6926 = vpack.c.bf16 %v6894, %v6894
        %v6927 = vpack.c.bf16 %v6895, %v6895
        %v6928 = vpack.c.bf16 %v6896, %v6896
        %v6929 = vpack.c.bf16 %v6897, %v6897
        %v6930 = vpack.c.bf16 %v6898, %v6898
        %v6931 = vpack.c.bf16 %v6899, %v6899
        %6933 = vset.pattern.permute.xlu0 0
        %6934 = vperm.xlu0 %6933, %v6900
        %v6935 = vpop.permute.xlu0 %6934
        %v6938 = vunpack.c.l.s4 839922192
        %v6939 = vunpack.c.0.s8 %v6938
        %v6940 = vperm.slane %v6935, %v6939
        %6942 = vset.pattern.permute.xlu0 0
        %6943 = vperm.xlu0 %6942, %v6901
        %v6944 = vpop.permute.xlu0 %6943
        %v6947 = vunpack.c.l.s4 839922192
        %v6948 = vunpack.c.0.s8 %v6947
        %v6949 = vperm.slane %v6944, %v6948
        %6951 = vset.pattern.permute.xlu0 0
        %6952 = vperm.xlu0 %6951, %v6902
        %v6953 = vpop.permute.xlu0 %6952
        %v6956 = vunpack.c.l.s4 839922192
        %v6957 = vunpack.c.0.s8 %v6956
        %v6958 = vperm.slane %v6953, %v6957
        %6960 = vset.pattern.permute.xlu0 0
        %6961 = vperm.xlu0 %6960, %v6903
        %v6962 = vpop.permute.xlu0 %6961
        %v6965 = vunpack.c.l.s4 839922192
        %v6966 = vunpack.c.0.s8 %v6965
        %v6967 = vperm.slane %v6962, %v6966
        %6969 = vset.pattern.permute.xlu0 0
        %6970 = vperm.xlu0 %6969, %v6904
        %v6971 = vpop.permute.xlu0 %6970
        %v6974 = vunpack.c.l.s4 839922192
        %v6975 = vunpack.c.0.s8 %v6974
        %v6976 = vperm.slane %v6971, %v6975
        %6978 = vset.pattern.permute.xlu0 0
        %6979 = vperm.xlu0 %6978, %v6905
        %v6980 = vpop.permute.xlu0 %6979
        %v6983 = vunpack.c.l.s4 839922192
        %v6984 = vunpack.c.0.s8 %v6983
        %v6985 = vperm.slane %v6980, %v6984
        %6987 = vset.pattern.permute.xlu0 0
        %6988 = vperm.xlu0 %6987, %v6906
        %v6989 = vpop.permute.xlu0 %6988
        %v6992 = vunpack.c.l.s4 839922192
        %v6993 = vunpack.c.0.s8 %v6992
        %v6994 = vperm.slane %v6989, %v6993
        %6996 = vset.pattern.permute.xlu0 0
        %6997 = vperm.xlu0 %6996, %v6907
        %v6998 = vpop.permute.xlu0 %6997
        %v7001 = vunpack.c.l.s4 839922192
        %v7002 = vunpack.c.0.s8 %v7001
        %v7003 = vperm.slane %v6998, %v7002
        %7005 = vset.pattern.permute.xlu0 0
        %7006 = vperm.xlu0 %7005, %v6908
        %v7007 = vpop.permute.xlu0 %7006
        %v7010 = vunpack.c.l.s4 839922192
        %v7011 = vunpack.c.0.s8 %v7010
        %v7012 = vperm.slane %v7007, %v7011
        %7014 = vset.pattern.permute.xlu0 0
        %7015 = vperm.xlu0 %7014, %v6909
        %v7016 = vpop.permute.xlu0 %7015
        %v7019 = vunpack.c.l.s4 839922192
        %v7020 = vunpack.c.0.s8 %v7019
        %v7021 = vperm.slane %v7016, %v7020
        %7023 = vset.pattern.permute.xlu0 0
        %7024 = vperm.xlu0 %7023, %v6910
        %v7025 = vpop.permute.xlu0 %7024
        %v7028 = vunpack.c.l.s4 839922192
        %v7029 = vunpack.c.0.s8 %v7028
        %v7030 = vperm.slane %v7025, %v7029
        %7032 = vset.pattern.permute.xlu0 0
        %7033 = vperm.xlu0 %7032, %v6911
        %v7034 = vpop.permute.xlu0 %7033
        %v7037 = vunpack.c.l.s4 839922192
        %v7038 = vunpack.c.0.s8 %v7037
        %v7039 = vperm.slane %v7034, %v7038
        %7041 = vset.pattern.permute.xlu0 0
        %7042 = vperm.xlu0 %7041, %v6912
        %v7043 = vpop.permute.xlu0 %7042
        %v7046 = vunpack.c.l.s4 839922192
        %v7047 = vunpack.c.0.s8 %v7046
        %v7048 = vperm.slane %v7043, %v7047
        %7050 = vset.pattern.permute.xlu0 0
        %7051 = vperm.xlu0 %7050, %v6913
        %v7052 = vpop.permute.xlu0 %7051
        %v7055 = vunpack.c.l.s4 839922192
        %v7056 = vunpack.c.0.s8 %v7055
        %v7057 = vperm.slane %v7052, %v7056
        %7059 = vset.pattern.permute.xlu0 0
        %7060 = vperm.xlu0 %7059, %v6914
        %v7061 = vpop.permute.xlu0 %7060
        %v7064 = vunpack.c.l.s4 839922192
        %v7065 = vunpack.c.0.s8 %v7064
        %v7066 = vperm.slane %v7061, %v7065
        %7068 = vset.pattern.permute.xlu0 0
        %7069 = vperm.xlu0 %7068, %v6915
        %v7070 = vpop.permute.xlu0 %7069
        %v7073 = vunpack.c.l.s4 839922192
        %v7074 = vunpack.c.0.s8 %v7073
        %v7075 = vperm.slane %v7070, %v7074
        %7077 = vset.pattern.permute.xlu0 0
        %7078 = vperm.xlu0 %7077, %v6916
        %v7079 = vpop.permute.xlu0 %7078
        %v7082 = vunpack.c.l.s4 839922192
        %v7083 = vunpack.c.0.s8 %v7082
        %v7084 = vperm.slane %v7079, %v7083
        %7086 = vset.pattern.permute.xlu0 0
        %7087 = vperm.xlu0 %7086, %v6917
        %v7088 = vpop.permute.xlu0 %7087
        %v7091 = vunpack.c.l.s4 839922192
        %v7092 = vunpack.c.0.s8 %v7091
        %v7093 = vperm.slane %v7088, %v7092
        %7095 = vset.pattern.permute.xlu0 0
        %7096 = vperm.xlu0 %7095, %v6918
        %v7097 = vpop.permute.xlu0 %7096
        %v7100 = vunpack.c.l.s4 839922192
        %v7101 = vunpack.c.0.s8 %v7100
        %v7102 = vperm.slane %v7097, %v7101
        %7104 = vset.pattern.permute.xlu0 0
        %7105 = vperm.xlu0 %7104, %v6919
        %v7106 = vpop.permute.xlu0 %7105
        %v7109 = vunpack.c.l.s4 839922192
        %v7110 = vunpack.c.0.s8 %v7109
        %v7111 = vperm.slane %v7106, %v7110
        %7113 = vset.pattern.permute.xlu0 0
        %7114 = vperm.xlu0 %7113, %v6920
        %v7115 = vpop.permute.xlu0 %7114
        %v7118 = vunpack.c.l.s4 839922192
        %v7119 = vunpack.c.0.s8 %v7118
        %v7120 = vperm.slane %v7115, %v7119
        %7122 = vset.pattern.permute.xlu0 0
        %7123 = vperm.xlu0 %7122, %v6921
        %v7124 = vpop.permute.xlu0 %7123
        %v7127 = vunpack.c.l.s4 839922192
        %v7128 = vunpack.c.0.s8 %v7127
        %v7129 = vperm.slane %v7124, %v7128
        %7131 = vset.pattern.permute.xlu0 0
        %7132 = vperm.xlu0 %7131, %v6922
        %v7133 = vpop.permute.xlu0 %7132
        %v7136 = vunpack.c.l.s4 839922192
        %v7137 = vunpack.c.0.s8 %v7136
        %v7138 = vperm.slane %v7133, %v7137
        %7140 = vset.pattern.permute.xlu0 0
        %7141 = vperm.xlu0 %7140, %v6923
        %v7142 = vpop.permute.xlu0 %7141
        %v7145 = vunpack.c.l.s4 839922192
        %v7146 = vunpack.c.0.s8 %v7145
        %v7147 = vperm.slane %v7142, %v7146
        %7149 = vset.pattern.permute.xlu0 0
        %7150 = vperm.xlu0 %7149, %v6924
        %v7151 = vpop.permute.xlu0 %7150
        %v7154 = vunpack.c.l.s4 839922192
        %v7155 = vunpack.c.0.s8 %v7154
        %v7156 = vperm.slane %v7151, %v7155
        %7158 = vset.pattern.permute.xlu0 0
        %7159 = vperm.xlu0 %7158, %v6925
        %v7160 = vpop.permute.xlu0 %7159
        %v7163 = vunpack.c.l.s4 839922192
        %v7164 = vunpack.c.0.s8 %v7163
        %v7165 = vperm.slane %v7160, %v7164
        %7167 = vset.pattern.permute.xlu0 0
        %7168 = vperm.xlu0 %7167, %v6926
        %v7169 = vpop.permute.xlu0 %7168
        %v7172 = vunpack.c.l.s4 839922192
        %v7173 = vunpack.c.0.s8 %v7172
        %v7174 = vperm.slane %v7169, %v7173
        %7176 = vset.pattern.permute.xlu0 0
        %7177 = vperm.xlu0 %7176, %v6927
        %v7178 = vpop.permute.xlu0 %7177
        %v7181 = vunpack.c.l.s4 839922192
        %v7182 = vunpack.c.0.s8 %v7181
        %v7183 = vperm.slane %v7178, %v7182
        %7185 = vset.pattern.permute.xlu0 0
        %7186 = vperm.xlu0 %7185, %v6928
        %v7187 = vpop.permute.xlu0 %7186
        %v7190 = vunpack.c.l.s4 839922192
        %v7191 = vunpack.c.0.s8 %v7190
        %v7192 = vperm.slane %v7187, %v7191
        %7194 = vset.pattern.permute.xlu0 0
        %7195 = vperm.xlu0 %7194, %v6929
        %v7196 = vpop.permute.xlu0 %7195
        %v7199 = vunpack.c.l.s4 839922192
        %v7200 = vunpack.c.0.s8 %v7199
        %v7201 = vperm.slane %v7196, %v7200
        %7203 = vset.pattern.permute.xlu0 0
        %7204 = vperm.xlu0 %7203, %v6930
        %v7205 = vpop.permute.xlu0 %7204
        %v7208 = vunpack.c.l.s4 839922192
        %v7209 = vunpack.c.0.s8 %v7208
        %v7210 = vperm.slane %v7205, %v7209
        %7212 = vset.pattern.permute.xlu0 0
        %7213 = vperm.xlu0 %7212, %v6931
        %v7214 = vpop.permute.xlu0 %7213
        %v7217 = vunpack.c.l.s4 839922192
        %v7218 = vunpack.c.0.s8 %v7217
        %v7219 = vperm.slane %v7214, %v7218
        %v7220 = vunpack.c.l.bf16 %v6835
        %v7221 = vunpack.c.h.bf16 %v6835
        %v7222 = vunpack.c.l.bf16 %v6836
        %v7223 = vunpack.c.h.bf16 %v6836
        %v7224 = vunpack.c.l.bf16 %v6837
        %v7225 = vunpack.c.h.bf16 %v6837
        %v7226 = vunpack.c.l.bf16 %v6838
        %v7227 = vunpack.c.h.bf16 %v6838
        %v7228 = vunpack.c.l.bf16 %v6839
        %v7229 = vunpack.c.h.bf16 %v6839
        %v7230 = vunpack.c.l.bf16 %v6840
        %v7231 = vunpack.c.h.bf16 %v6840
        %v7232 = vunpack.c.l.bf16 %v6841
        %v7233 = vunpack.c.h.bf16 %v6841
        %v7234 = vunpack.c.l.bf16 %v6842
        %v7235 = vunpack.c.h.bf16 %v6842
        %v7236 = vunpack.c.l.bf16 %v6843
        %v7237 = vunpack.c.h.bf16 %v6843
        %v7238 = vunpack.c.l.bf16 %v6844
        %v7239 = vunpack.c.h.bf16 %v6844
        %v7240 = vunpack.c.l.bf16 %v6845
        %v7241 = vunpack.c.h.bf16 %v6845
        %v7242 = vunpack.c.l.bf16 %v6846
        %v7243 = vunpack.c.h.bf16 %v6846
        %v7244 = vunpack.c.l.bf16 %v6847
        %v7245 = vunpack.c.h.bf16 %v6847
        %v7246 = vunpack.c.l.bf16 %v6848
        %v7247 = vunpack.c.h.bf16 %v6848
        %v7248 = vunpack.c.l.bf16 %v6849
        %v7249 = vunpack.c.h.bf16 %v6849
        %v7250 = vunpack.c.l.bf16 %v6850
        %v7251 = vunpack.c.h.bf16 %v6850
        %v7252 = vunpack.c.l.bf16 %v6851
        %v7253 = vunpack.c.h.bf16 %v6851
        %v7254 = vunpack.c.l.bf16 %v6852
        %v7255 = vunpack.c.h.bf16 %v6852
        %v7256 = vunpack.c.l.bf16 %v6853
        %v7257 = vunpack.c.h.bf16 %v6853
        %v7258 = vunpack.c.l.bf16 %v6854
        %v7259 = vunpack.c.h.bf16 %v6854
        %v7260 = vunpack.c.l.bf16 %v6855
        %v7261 = vunpack.c.h.bf16 %v6855
        %v7262 = vunpack.c.l.bf16 %v6856
        %v7263 = vunpack.c.h.bf16 %v6856
        %v7264 = vunpack.c.l.bf16 %v6857
        %v7265 = vunpack.c.h.bf16 %v6857
        %v7266 = vunpack.c.l.bf16 %v6858
        %v7267 = vunpack.c.h.bf16 %v6858
        %v7268 = vunpack.c.l.bf16 %v6859
        %v7269 = vunpack.c.h.bf16 %v6859
        %v7270 = vunpack.c.l.bf16 %v6860
        %v7271 = vunpack.c.h.bf16 %v6860
        %v7272 = vunpack.c.l.bf16 %v6861
        %v7273 = vunpack.c.h.bf16 %v6861
        %v7274 = vunpack.c.l.bf16 %v6862
        %v7275 = vunpack.c.h.bf16 %v6862
        %v7276 = vunpack.c.l.bf16 %v6863
        %v7277 = vunpack.c.h.bf16 %v6863
        %v7278 = vunpack.c.l.bf16 %v6864
        %v7279 = vunpack.c.h.bf16 %v6864
        %v7280 = vunpack.c.l.bf16 %v6865
        %v7281 = vunpack.c.h.bf16 %v6865
        %v7282 = vunpack.c.l.bf16 %v6866
        %v7283 = vunpack.c.h.bf16 %v6866
        %v7284 = vunpack.c.l.bf16 %v6940
        %v7285 = vunpack.c.l.bf16 %v6949
        %v7286 = vunpack.c.l.bf16 %v6958
        %v7287 = vunpack.c.l.bf16 %v6967
        %v7288 = vunpack.c.l.bf16 %v6976
        %v7289 = vunpack.c.l.bf16 %v6985
        %v7290 = vunpack.c.l.bf16 %v6994
        %v7291 = vunpack.c.l.bf16 %v7003
        %v7292 = vunpack.c.l.bf16 %v7012
        %v7293 = vunpack.c.l.bf16 %v7021
        %v7294 = vunpack.c.l.bf16 %v7030
        %v7295 = vunpack.c.l.bf16 %v7039
        %v7296 = vunpack.c.l.bf16 %v7048
        %v7297 = vunpack.c.l.bf16 %v7057
        %v7298 = vunpack.c.l.bf16 %v7066
        %v7299 = vunpack.c.l.bf16 %v7075
        %v7300 = vunpack.c.l.bf16 %v7084
        %v7301 = vunpack.c.l.bf16 %v7093
        %v7302 = vunpack.c.l.bf16 %v7102
        %v7303 = vunpack.c.l.bf16 %v7111
        %v7304 = vunpack.c.l.bf16 %v7120
        %v7305 = vunpack.c.l.bf16 %v7129
        %v7306 = vunpack.c.l.bf16 %v7138
        %v7307 = vunpack.c.l.bf16 %v7147
        %v7308 = vunpack.c.l.bf16 %v7156
        %v7309 = vunpack.c.l.bf16 %v7165
        %v7310 = vunpack.c.l.bf16 %v7174
        %v7311 = vunpack.c.l.bf16 %v7183
        %v7312 = vunpack.c.l.bf16 %v7192
        %v7313 = vunpack.c.l.bf16 %v7201
        %v7314 = vunpack.c.l.bf16 %v7210
        %v7315 = vunpack.c.l.bf16 %v7219
        %v7316 = vadd.f32 %v7220, %v7284
        %v7317 = vadd.f32 %v7221, %v7284
        %v7318 = vadd.f32 %v7222, %v7285
        %v7319 = vadd.f32 %v7223, %v7285
        %v7320 = vadd.f32 %v7224, %v7286
        %v7321 = vadd.f32 %v7225, %v7286
        %v7322 = vadd.f32 %v7226, %v7287
        %v7323 = vadd.f32 %v7227, %v7287
        %v7324 = vadd.f32 %v7228, %v7288
        %v7325 = vadd.f32 %v7229, %v7288
        %v7326 = vadd.f32 %v7230, %v7289
        %v7327 = vadd.f32 %v7231, %v7289
        %v7328 = vadd.f32 %v7232, %v7290
        %v7329 = vadd.f32 %v7233, %v7290
        %v7330 = vadd.f32 %v7234, %v7291
        %v7331 = vadd.f32 %v7235, %v7291
        %v7332 = vadd.f32 %v7236, %v7292
        %v7333 = vadd.f32 %v7237, %v7292
        %v7334 = vadd.f32 %v7238, %v7293
        %v7335 = vadd.f32 %v7239, %v7293
        %v7336 = vadd.f32 %v7240, %v7294
        %v7337 = vadd.f32 %v7241, %v7294
        %v7338 = vadd.f32 %v7242, %v7295
        %v7339 = vadd.f32 %v7243, %v7295
        %v7340 = vadd.f32 %v7244, %v7296
        %v7341 = vadd.f32 %v7245, %v7296
        %v7342 = vadd.f32 %v7246, %v7297
        %v7343 = vadd.f32 %v7247, %v7297
        %v7344 = vadd.f32 %v7248, %v7298
        %v7345 = vadd.f32 %v7249, %v7298
        %v7346 = vadd.f32 %v7250, %v7299
        %v7347 = vadd.f32 %v7251, %v7299
        %v7348 = vadd.f32 %v7252, %v7300
        %v7349 = vadd.f32 %v7253, %v7300
        %v7350 = vadd.f32 %v7254, %v7301
        %v7351 = vadd.f32 %v7255, %v7301
        %v7352 = vadd.f32 %v7256, %v7302
        %v7353 = vadd.f32 %v7257, %v7302
        %v7354 = vadd.f32 %v7258, %v7303
        %v7355 = vadd.f32 %v7259, %v7303
        %v7356 = vadd.f32 %v7260, %v7304
        %v7357 = vadd.f32 %v7261, %v7304
        %v7358 = vadd.f32 %v7262, %v7305
        %v7359 = vadd.f32 %v7263, %v7305
        %v7360 = vadd.f32 %v7264, %v7306
        %v7361 = vadd.f32 %v7265, %v7306
        %v7362 = vadd.f32 %v7266, %v7307
        %v7363 = vadd.f32 %v7267, %v7307
        %v7364 = vadd.f32 %v7268, %v7308
        %v7365 = vadd.f32 %v7269, %v7308
        %v7366 = vadd.f32 %v7270, %v7309
        %v7367 = vadd.f32 %v7271, %v7309
        %v7368 = vadd.f32 %v7272, %v7310
        %v7369 = vadd.f32 %v7273, %v7310
        %v7370 = vadd.f32 %v7274, %v7311
        %v7371 = vadd.f32 %v7275, %v7311
        %v7372 = vadd.f32 %v7276, %v7312
        %v7373 = vadd.f32 %v7277, %v7312
        %v7374 = vadd.f32 %v7278, %v7313
        %v7375 = vadd.f32 %v7279, %v7313
        %v7376 = vadd.f32 %v7280, %v7314
        %v7377 = vadd.f32 %v7281, %v7314
        %v7378 = vadd.f32 %v7282, %v7315
        %v7379 = vadd.f32 %v7283, %v7315
        %v7380 = vpack.c.bf16 %v7317, %v7316
        %v7381 = vpack.c.bf16 %v7319, %v7318
        %v7382 = vpack.c.bf16 %v7321, %v7320
        %v7383 = vpack.c.bf16 %v7323, %v7322
        %v7384 = vpack.c.bf16 %v7325, %v7324
        %v7385 = vpack.c.bf16 %v7327, %v7326
        %v7386 = vpack.c.bf16 %v7329, %v7328
        %v7387 = vpack.c.bf16 %v7331, %v7330
        %v7388 = vpack.c.bf16 %v7333, %v7332
        %v7389 = vpack.c.bf16 %v7335, %v7334
        %v7390 = vpack.c.bf16 %v7337, %v7336
        %v7391 = vpack.c.bf16 %v7339, %v7338
        %v7392 = vpack.c.bf16 %v7341, %v7340
        %v7393 = vpack.c.bf16 %v7343, %v7342
        %v7394 = vpack.c.bf16 %v7345, %v7344
        %v7395 = vpack.c.bf16 %v7347, %v7346
        %v7396 = vpack.c.bf16 %v7349, %v7348
        %v7397 = vpack.c.bf16 %v7351, %v7350
        %v7398 = vpack.c.bf16 %v7353, %v7352
        %v7399 = vpack.c.bf16 %v7355, %v7354
        %v7400 = vpack.c.bf16 %v7357, %v7356
        %v7401 = vpack.c.bf16 %v7359, %v7358
        %v7402 = vpack.c.bf16 %v7361, %v7360
        %v7403 = vpack.c.bf16 %v7363, %v7362
        %v7404 = vpack.c.bf16 %v7365, %v7364
        %v7405 = vpack.c.bf16 %v7367, %v7366
        %v7406 = vpack.c.bf16 %v7369, %v7368
        %v7407 = vpack.c.bf16 %v7371, %v7370
        %v7408 = vpack.c.bf16 %v7373, %v7372
        %v7409 = vpack.c.bf16 %v7375, %v7374
        %v7410 = vpack.c.bf16 %v7377, %v7376
        %v7411 = vpack.c.bf16 %v7379, %v7378
        %v7412 = vunpack.c.l.bf16 %v7380
        %v7413 = vunpack.c.h.bf16 %v7380
        %v7414 = vunpack.c.l.bf16 %v7381
        %v7415 = vunpack.c.h.bf16 %v7381
        %v7416 = vunpack.c.l.bf16 %v7382
        %v7417 = vunpack.c.h.bf16 %v7382
        %v7418 = vunpack.c.l.bf16 %v7383
        %v7419 = vunpack.c.h.bf16 %v7383
        %v7420 = vunpack.c.l.bf16 %v7384
        %v7421 = vunpack.c.h.bf16 %v7384
        %v7422 = vunpack.c.l.bf16 %v7385
        %v7423 = vunpack.c.h.bf16 %v7385
        %v7424 = vunpack.c.l.bf16 %v7386
        %v7425 = vunpack.c.h.bf16 %v7386
        %v7426 = vunpack.c.l.bf16 %v7387
        %v7427 = vunpack.c.h.bf16 %v7387
        %v7428 = vunpack.c.l.bf16 %v7388
        %v7429 = vunpack.c.h.bf16 %v7388
        %v7430 = vunpack.c.l.bf16 %v7389
        %v7431 = vunpack.c.h.bf16 %v7389
        %v7432 = vunpack.c.l.bf16 %v7390
        %v7433 = vunpack.c.h.bf16 %v7390
        %v7434 = vunpack.c.l.bf16 %v7391
        %v7435 = vunpack.c.h.bf16 %v7391
        %v7436 = vunpack.c.l.bf16 %v7392
        %v7437 = vunpack.c.h.bf16 %v7392
        %v7438 = vunpack.c.l.bf16 %v7393
        %v7439 = vunpack.c.h.bf16 %v7393
        %v7440 = vunpack.c.l.bf16 %v7394
        %v7441 = vunpack.c.h.bf16 %v7394
        %v7442 = vunpack.c.l.bf16 %v7395
        %v7443 = vunpack.c.h.bf16 %v7395
        %v7444 = vunpack.c.l.bf16 %v7396
        %v7445 = vunpack.c.h.bf16 %v7396
        %v7446 = vunpack.c.l.bf16 %v7397
        %v7447 = vunpack.c.h.bf16 %v7397
        %v7448 = vunpack.c.l.bf16 %v7398
        %v7449 = vunpack.c.h.bf16 %v7398
        %v7450 = vunpack.c.l.bf16 %v7399
        %v7451 = vunpack.c.h.bf16 %v7399
        %v7452 = vunpack.c.l.bf16 %v7400
        %v7453 = vunpack.c.h.bf16 %v7400
        %v7454 = vunpack.c.l.bf16 %v7401
        %v7455 = vunpack.c.h.bf16 %v7401
        %v7456 = vunpack.c.l.bf16 %v7402
        %v7457 = vunpack.c.h.bf16 %v7402
        %v7458 = vunpack.c.l.bf16 %v7403
        %v7459 = vunpack.c.h.bf16 %v7403
        %v7460 = vunpack.c.l.bf16 %v7404
        %v7461 = vunpack.c.h.bf16 %v7404
        %v7462 = vunpack.c.l.bf16 %v7405
        %v7463 = vunpack.c.h.bf16 %v7405
        %v7464 = vunpack.c.l.bf16 %v7406
        %v7465 = vunpack.c.h.bf16 %v7406
        %v7466 = vunpack.c.l.bf16 %v7407
        %v7467 = vunpack.c.h.bf16 %v7407
        %v7468 = vunpack.c.l.bf16 %v7408
        %v7469 = vunpack.c.h.bf16 %v7408
        %v7470 = vunpack.c.l.bf16 %v7409
        %v7471 = vunpack.c.h.bf16 %v7409
        %v7472 = vunpack.c.l.bf16 %v7410
        %v7473 = vunpack.c.h.bf16 %v7410
        %v7474 = vunpack.c.l.bf16 %v7411
        %v7475 = vunpack.c.h.bf16 %v7411
        %v7476 = vmul.f32 %v7412, %v7412
        %v7477 = vmul.f32 %v7413, %v7413
        %v7478 = vmul.f32 %v7414, %v7414
        %v7479 = vmul.f32 %v7415, %v7415
        %v7480 = vmul.f32 %v7416, %v7416
        %v7481 = vmul.f32 %v7417, %v7417
        %v7482 = vmul.f32 %v7418, %v7418
        %v7483 = vmul.f32 %v7419, %v7419
        %v7484 = vmul.f32 %v7420, %v7420
        %v7485 = vmul.f32 %v7421, %v7421
        %v7486 = vmul.f32 %v7422, %v7422
        %v7487 = vmul.f32 %v7423, %v7423
        %v7488 = vmul.f32 %v7424, %v7424
        %v7489 = vmul.f32 %v7425, %v7425
        %v7490 = vmul.f32 %v7426, %v7426
        %v7491 = vmul.f32 %v7427, %v7427
        %v7492 = vmul.f32 %v7428, %v7428
        %v7493 = vmul.f32 %v7429, %v7429
        %v7494 = vmul.f32 %v7430, %v7430
        %v7495 = vmul.f32 %v7431, %v7431
        %v7496 = vmul.f32 %v7432, %v7432
        %v7497 = vmul.f32 %v7433, %v7433
        %v7498 = vmul.f32 %v7434, %v7434
        %v7499 = vmul.f32 %v7435, %v7435
        %v7500 = vmul.f32 %v7436, %v7436
        %v7501 = vmul.f32 %v7437, %v7437
        %v7502 = vmul.f32 %v7438, %v7438
        %v7503 = vmul.f32 %v7439, %v7439
        %v7504 = vmul.f32 %v7440, %v7440
        %v7505 = vmul.f32 %v7441, %v7441
        %v7506 = vmul.f32 %v7442, %v7442
        %v7507 = vmul.f32 %v7443, %v7443
        %v7508 = vmul.f32 %v7444, %v7444
        %v7509 = vmul.f32 %v7445, %v7445
        %v7510 = vmul.f32 %v7446, %v7446
        %v7511 = vmul.f32 %v7447, %v7447
        %v7512 = vmul.f32 %v7448, %v7448
        %v7513 = vmul.f32 %v7449, %v7449
        %v7514 = vmul.f32 %v7450, %v7450
        %v7515 = vmul.f32 %v7451, %v7451
        %v7516 = vmul.f32 %v7452, %v7452
        %v7517 = vmul.f32 %v7453, %v7453
        %v7518 = vmul.f32 %v7454, %v7454
        %v7519 = vmul.f32 %v7455, %v7455
        %v7520 = vmul.f32 %v7456, %v7456
        %v7521 = vmul.f32 %v7457, %v7457
        %v7522 = vmul.f32 %v7458, %v7458
        %v7523 = vmul.f32 %v7459, %v7459
        %v7524 = vmul.f32 %v7460, %v7460
        %v7525 = vmul.f32 %v7461, %v7461
        %v7526 = vmul.f32 %v7462, %v7462
        %v7527 = vmul.f32 %v7463, %v7463
        %v7528 = vmul.f32 %v7464, %v7464
        %v7529 = vmul.f32 %v7465, %v7465
        %v7530 = vmul.f32 %v7466, %v7466
        %v7531 = vmul.f32 %v7467, %v7467
        %v7532 = vmul.f32 %v7468, %v7468
        %v7533 = vmul.f32 %v7469, %v7469
        %v7534 = vmul.f32 %v7470, %v7470
        %v7535 = vmul.f32 %v7471, %v7471
        %v7536 = vmul.f32 %v7472, %v7472
        %v7537 = vmul.f32 %v7473, %v7473
        %v7538 = vmul.f32 %v7474, %v7474
        %v7539 = vmul.f32 %v7475, %v7475
        %v7540 = vpack.c.bf16 %v7477, %v7476
        %v7541 = vpack.c.bf16 %v7479, %v7478
        %v7542 = vpack.c.bf16 %v7481, %v7480
        %v7543 = vpack.c.bf16 %v7483, %v7482
        %v7544 = vpack.c.bf16 %v7485, %v7484
        %v7545 = vpack.c.bf16 %v7487, %v7486
        %v7546 = vpack.c.bf16 %v7489, %v7488
        %v7547 = vpack.c.bf16 %v7491, %v7490
        %v7548 = vpack.c.bf16 %v7493, %v7492
        %v7549 = vpack.c.bf16 %v7495, %v7494
        %v7550 = vpack.c.bf16 %v7497, %v7496
        %v7551 = vpack.c.bf16 %v7499, %v7498
        %v7552 = vpack.c.bf16 %v7501, %v7500
        %v7553 = vpack.c.bf16 %v7503, %v7502
        %v7554 = vpack.c.bf16 %v7505, %v7504
        %v7555 = vpack.c.bf16 %v7507, %v7506
        %v7556 = vpack.c.bf16 %v7509, %v7508
        %v7557 = vpack.c.bf16 %v7511, %v7510
        %v7558 = vpack.c.bf16 %v7513, %v7512
        %v7559 = vpack.c.bf16 %v7515, %v7514
        %v7560 = vpack.c.bf16 %v7517, %v7516
        %v7561 = vpack.c.bf16 %v7519, %v7518
        %v7562 = vpack.c.bf16 %v7521, %v7520
        %v7563 = vpack.c.bf16 %v7523, %v7522
        %v7564 = vpack.c.bf16 %v7525, %v7524
        %v7565 = vpack.c.bf16 %v7527, %v7526
        %v7566 = vpack.c.bf16 %v7529, %v7528
        %v7567 = vpack.c.bf16 %v7531, %v7530
        %v7568 = vpack.c.bf16 %v7533, %v7532
        %v7569 = vpack.c.bf16 %v7535, %v7534
        %v7570 = vpack.c.bf16 %v7537, %v7536
        %v7571 = vpack.c.bf16 %v7539, %v7538
        %v7572 = vunpack.c.l.bf16 %v7540
        %v7573 = vunpack.c.h.bf16 %v7540
        %v7574 = vunpack.c.l.bf16 %v7541
        %v7575 = vunpack.c.h.bf16 %v7541
        %v7576 = vunpack.c.l.bf16 %v7542
        %v7577 = vunpack.c.h.bf16 %v7542
        %v7578 = vunpack.c.l.bf16 %v7543
        %v7579 = vunpack.c.h.bf16 %v7543
        %v7580 = vunpack.c.l.bf16 %v7544
        %v7581 = vunpack.c.h.bf16 %v7544
        %v7582 = vunpack.c.l.bf16 %v7545
        %v7583 = vunpack.c.h.bf16 %v7545
        %v7584 = vunpack.c.l.bf16 %v7546
        %v7585 = vunpack.c.h.bf16 %v7546
        %v7586 = vunpack.c.l.bf16 %v7547
        %v7587 = vunpack.c.h.bf16 %v7547
        %v7588 = vunpack.c.l.bf16 %v7548
        %v7589 = vunpack.c.h.bf16 %v7548
        %v7590 = vunpack.c.l.bf16 %v7549
        %v7591 = vunpack.c.h.bf16 %v7549
        %v7592 = vunpack.c.l.bf16 %v7550
        %v7593 = vunpack.c.h.bf16 %v7550
        %v7594 = vunpack.c.l.bf16 %v7551
        %v7595 = vunpack.c.h.bf16 %v7551
        %v7596 = vunpack.c.l.bf16 %v7552
        %v7597 = vunpack.c.h.bf16 %v7552
        %v7598 = vunpack.c.l.bf16 %v7553
        %v7599 = vunpack.c.h.bf16 %v7553
        %v7600 = vunpack.c.l.bf16 %v7554
        %v7601 = vunpack.c.h.bf16 %v7554
        %v7602 = vunpack.c.l.bf16 %v7555
        %v7603 = vunpack.c.h.bf16 %v7555
        %v7604 = vunpack.c.l.bf16 %v7556
        %v7605 = vunpack.c.h.bf16 %v7556
        %v7606 = vunpack.c.l.bf16 %v7557
        %v7607 = vunpack.c.h.bf16 %v7557
        %v7608 = vunpack.c.l.bf16 %v7558
        %v7609 = vunpack.c.h.bf16 %v7558
        %v7610 = vunpack.c.l.bf16 %v7559
        %v7611 = vunpack.c.h.bf16 %v7559
        %v7612 = vunpack.c.l.bf16 %v7560
        %v7613 = vunpack.c.h.bf16 %v7560
        %v7614 = vunpack.c.l.bf16 %v7561
        %v7615 = vunpack.c.h.bf16 %v7561
        %v7616 = vunpack.c.l.bf16 %v7562
        %v7617 = vunpack.c.h.bf16 %v7562
        %v7618 = vunpack.c.l.bf16 %v7563
        %v7619 = vunpack.c.h.bf16 %v7563
        %v7620 = vunpack.c.l.bf16 %v7564
        %v7621 = vunpack.c.h.bf16 %v7564
        %v7622 = vunpack.c.l.bf16 %v7565
        %v7623 = vunpack.c.h.bf16 %v7565
        %v7624 = vunpack.c.l.bf16 %v7566
        %v7625 = vunpack.c.h.bf16 %v7566
        %v7626 = vunpack.c.l.bf16 %v7567
        %v7627 = vunpack.c.h.bf16 %v7567
        %v7628 = vunpack.c.l.bf16 %v7568
        %v7629 = vunpack.c.h.bf16 %v7568
        %v7630 = vunpack.c.l.bf16 %v7569
        %v7631 = vunpack.c.h.bf16 %v7569
        %v7632 = vunpack.c.l.bf16 %v7570
        %v7633 = vunpack.c.h.bf16 %v7570
        %v7634 = vunpack.c.l.bf16 %v7571
        %v7635 = vunpack.c.h.bf16 %v7571
        %v7636 = vmul.f32 %v7412, %v7572
        %v7637 = vmul.f32 %v7413, %v7573
        %v7638 = vmul.f32 %v7414, %v7574
        %v7639 = vmul.f32 %v7415, %v7575
        %v7640 = vmul.f32 %v7416, %v7576
        %v7641 = vmul.f32 %v7417, %v7577
        %v7642 = vmul.f32 %v7418, %v7578
        %v7643 = vmul.f32 %v7419, %v7579
        %v7644 = vmul.f32 %v7420, %v7580
        %v7645 = vmul.f32 %v7421, %v7581
        %v7646 = vmul.f32 %v7422, %v7582
        %v7647 = vmul.f32 %v7423, %v7583
        %v7648 = vmul.f32 %v7424, %v7584
        %v7649 = vmul.f32 %v7425, %v7585
        %v7650 = vmul.f32 %v7426, %v7586
        %v7651 = vmul.f32 %v7427, %v7587
        %v7652 = vmul.f32 %v7428, %v7588
        %v7653 = vmul.f32 %v7429, %v7589
        %v7654 = vmul.f32 %v7430, %v7590
        %v7655 = vmul.f32 %v7431, %v7591
        %v7656 = vmul.f32 %v7432, %v7592
        %v7657 = vmul.f32 %v7433, %v7593
        %v7658 = vmul.f32 %v7434, %v7594
        %v7659 = vmul.f32 %v7435, %v7595
        %v7660 = vmul.f32 %v7436, %v7596
        %v7661 = vmul.f32 %v7437, %v7597
        %v7662 = vmul.f32 %v7438, %v7598
        %v7663 = vmul.f32 %v7439, %v7599
        %v7664 = vmul.f32 %v7440, %v7600
        %v7665 = vmul.f32 %v7441, %v7601
        %v7666 = vmul.f32 %v7442, %v7602
        %v7667 = vmul.f32 %v7443, %v7603
        %v7668 = vmul.f32 %v7444, %v7604
        %v7669 = vmul.f32 %v7445, %v7605
        %v7670 = vmul.f32 %v7446, %v7606
        %v7671 = vmul.f32 %v7447, %v7607
        %v7672 = vmul.f32 %v7448, %v7608
        %v7673 = vmul.f32 %v7449, %v7609
        %v7674 = vmul.f32 %v7450, %v7610
        %v7675 = vmul.f32 %v7451, %v7611
        %v7676 = vmul.f32 %v7452, %v7612
        %v7677 = vmul.f32 %v7453, %v7613
        %v7678 = vmul.f32 %v7454, %v7614
        %v7679 = vmul.f32 %v7455, %v7615
        %v7680 = vmul.f32 %v7456, %v7616
        %v7681 = vmul.f32 %v7457, %v7617
        %v7682 = vmul.f32 %v7458, %v7618
        %v7683 = vmul.f32 %v7459, %v7619
        %v7684 = vmul.f32 %v7460, %v7620
        %v7685 = vmul.f32 %v7461, %v7621
        %v7686 = vmul.f32 %v7462, %v7622
        %v7687 = vmul.f32 %v7463, %v7623
        %v7688 = vmul.f32 %v7464, %v7624
        %v7689 = vmul.f32 %v7465, %v7625
        %v7690 = vmul.f32 %v7466, %v7626
        %v7691 = vmul.f32 %v7467, %v7627
        %v7692 = vmul.f32 %v7468, %v7628
        %v7693 = vmul.f32 %v7469, %v7629
        %v7694 = vmul.f32 %v7470, %v7630
        %v7695 = vmul.f32 %v7471, %v7631
        %v7696 = vmul.f32 %v7472, %v7632
        %v7697 = vmul.f32 %v7473, %v7633
        %v7698 = vmul.f32 %v7474, %v7634
        %v7699 = vmul.f32 %v7475, %v7635
        %v7700 = vpack.c.bf16 %v7637, %v7636
        %v7701 = vpack.c.bf16 %v7639, %v7638
        %v7702 = vpack.c.bf16 %v7641, %v7640
        %v7703 = vpack.c.bf16 %v7643, %v7642
        %v7704 = vpack.c.bf16 %v7645, %v7644
        %v7705 = vpack.c.bf16 %v7647, %v7646
        %v7706 = vpack.c.bf16 %v7649, %v7648
        %v7707 = vpack.c.bf16 %v7651, %v7650
        %v7708 = vpack.c.bf16 %v7653, %v7652
        %v7709 = vpack.c.bf16 %v7655, %v7654
        %v7710 = vpack.c.bf16 %v7657, %v7656
        %v7711 = vpack.c.bf16 %v7659, %v7658
        %v7712 = vpack.c.bf16 %v7661, %v7660
        %v7713 = vpack.c.bf16 %v7663, %v7662
        %v7714 = vpack.c.bf16 %v7665, %v7664
        %v7715 = vpack.c.bf16 %v7667, %v7666
        %v7716 = vpack.c.bf16 %v7669, %v7668
        %v7717 = vpack.c.bf16 %v7671, %v7670
        %v7718 = vpack.c.bf16 %v7673, %v7672
        %v7719 = vpack.c.bf16 %v7675, %v7674
        %v7720 = vpack.c.bf16 %v7677, %v7676
        %v7721 = vpack.c.bf16 %v7679, %v7678
        %v7722 = vpack.c.bf16 %v7681, %v7680
        %v7723 = vpack.c.bf16 %v7683, %v7682
        %v7724 = vpack.c.bf16 %v7685, %v7684
        %v7725 = vpack.c.bf16 %v7687, %v7686
        %v7726 = vpack.c.bf16 %v7689, %v7688
        %v7727 = vpack.c.bf16 %v7691, %v7690
        %v7728 = vpack.c.bf16 %v7693, %v7692
        %v7729 = vpack.c.bf16 %v7695, %v7694
        %v7730 = vpack.c.bf16 %v7697, %v7696
        %v7731 = vpack.c.bf16 %v7699, %v7698
        %v7732 = vunpack.c.l.bf16 %v7700
        %v7733 = vunpack.c.h.bf16 %v7700
        %v7734 = vunpack.c.l.bf16 %v7701
        %v7735 = vunpack.c.h.bf16 %v7701
        %v7736 = vunpack.c.l.bf16 %v7702
        %v7737 = vunpack.c.h.bf16 %v7702
        %v7738 = vunpack.c.l.bf16 %v7703
        %v7739 = vunpack.c.h.bf16 %v7703
        %v7740 = vunpack.c.l.bf16 %v7704
        %v7741 = vunpack.c.h.bf16 %v7704
        %v7742 = vunpack.c.l.bf16 %v7705
        %v7743 = vunpack.c.h.bf16 %v7705
        %v7744 = vunpack.c.l.bf16 %v7706
        %v7745 = vunpack.c.h.bf16 %v7706
        %v7746 = vunpack.c.l.bf16 %v7707
        %v7747 = vunpack.c.h.bf16 %v7707
        %v7748 = vunpack.c.l.bf16 %v7708
        %v7749 = vunpack.c.h.bf16 %v7708
        %v7750 = vunpack.c.l.bf16 %v7709
        %v7751 = vunpack.c.h.bf16 %v7709
        %v7752 = vunpack.c.l.bf16 %v7710
        %v7753 = vunpack.c.h.bf16 %v7710
        %v7754 = vunpack.c.l.bf16 %v7711
        %v7755 = vunpack.c.h.bf16 %v7711
        %v7756 = vunpack.c.l.bf16 %v7712
        %v7757 = vunpack.c.h.bf16 %v7712
        %v7758 = vunpack.c.l.bf16 %v7713
        %v7759 = vunpack.c.h.bf16 %v7713
        %v7760 = vunpack.c.l.bf16 %v7714
        %v7761 = vunpack.c.h.bf16 %v7714
        %v7762 = vunpack.c.l.bf16 %v7715
        %v7763 = vunpack.c.h.bf16 %v7715
        %v7764 = vunpack.c.l.bf16 %v7716
        %v7765 = vunpack.c.h.bf16 %v7716
        %v7766 = vunpack.c.l.bf16 %v7717
        %v7767 = vunpack.c.h.bf16 %v7717
        %v7768 = vunpack.c.l.bf16 %v7718
        %v7769 = vunpack.c.h.bf16 %v7718
        %v7770 = vunpack.c.l.bf16 %v7719
        %v7771 = vunpack.c.h.bf16 %v7719
        %v7772 = vunpack.c.l.bf16 %v7720
        %v7773 = vunpack.c.h.bf16 %v7720
        %v7774 = vunpack.c.l.bf16 %v7721
        %v7775 = vunpack.c.h.bf16 %v7721
        %v7776 = vunpack.c.l.bf16 %v7722
        %v7777 = vunpack.c.h.bf16 %v7722
        %v7778 = vunpack.c.l.bf16 %v7723
        %v7779 = vunpack.c.h.bf16 %v7723
        %v7780 = vunpack.c.l.bf16 %v7724
        %v7781 = vunpack.c.h.bf16 %v7724
        %v7782 = vunpack.c.l.bf16 %v7725
        %v7783 = vunpack.c.h.bf16 %v7725
        %v7784 = vunpack.c.l.bf16 %v7726
        %v7785 = vunpack.c.h.bf16 %v7726
        %v7786 = vunpack.c.l.bf16 %v7727
        %v7787 = vunpack.c.h.bf16 %v7727
        %v7788 = vunpack.c.l.bf16 %v7728
        %v7789 = vunpack.c.h.bf16 %v7728
        %v7790 = vunpack.c.l.bf16 %v7729
        %v7791 = vunpack.c.h.bf16 %v7729
        %v7792 = vunpack.c.l.bf16 %v7730
        %v7793 = vunpack.c.h.bf16 %v7730
        %v7794 = vunpack.c.l.bf16 %v7731
        %v7795 = vunpack.c.h.bf16 %v7731
        %v7796 = vmul.f32 %v7732, 0.044677734
        %v7797 = vmul.f32 %v7733, 0.044677734
        %v7798 = vmul.f32 %v7734, 0.044677734
        %v7799 = vmul.f32 %v7735, 0.044677734
        %v7800 = vmul.f32 %v7736, 0.044677734
        %v7801 = vmul.f32 %v7737, 0.044677734
        %v7802 = vmul.f32 %v7738, 0.044677734
        %v7803 = vmul.f32 %v7739, 0.044677734
        %v7804 = vmul.f32 %v7740, 0.044677734
        %v7805 = vmul.f32 %v7741, 0.044677734
        %v7806 = vmul.f32 %v7742, 0.044677734
        %v7807 = vmul.f32 %v7743, 0.044677734
        %v7808 = vmul.f32 %v7744, 0.044677734
        %v7809 = vmul.f32 %v7745, 0.044677734
        %v7810 = vmul.f32 %v7746, 0.044677734
        %v7811 = vmul.f32 %v7747, 0.044677734
        %v7812 = vmul.f32 %v7748, 0.044677734
        %v7813 = vmul.f32 %v7749, 0.044677734
        %v7814 = vmul.f32 %v7750, 0.044677734
        %v7815 = vmul.f32 %v7751, 0.044677734
        %v7816 = vmul.f32 %v7752, 0.044677734
        %v7817 = vmul.f32 %v7753, 0.044677734
        %v7818 = vmul.f32 %v7754, 0.044677734
        %v7819 = vmul.f32 %v7755, 0.044677734
        %v7820 = vmul.f32 %v7756, 0.044677734
        %v7821 = vmul.f32 %v7757, 0.044677734
        %v7822 = vmul.f32 %v7758, 0.044677734
        %v7823 = vmul.f32 %v7759, 0.044677734
        %v7824 = vmul.f32 %v7760, 0.044677734
        %v7825 = vmul.f32 %v7761, 0.044677734
        %v7826 = vmul.f32 %v7762, 0.044677734
        %v7827 = vmul.f32 %v7763, 0.044677734
        %v7828 = vmul.f32 %v7764, 0.044677734
        %v7829 = vmul.f32 %v7765, 0.044677734
        %v7830 = vmul.f32 %v7766, 0.044677734
        %v7831 = vmul.f32 %v7767, 0.044677734
        %v7832 = vmul.f32 %v7768, 0.044677734
        %v7833 = vmul.f32 %v7769, 0.044677734
        %v7834 = vmul.f32 %v7770, 0.044677734
        %v7835 = vmul.f32 %v7771, 0.044677734
        %v7836 = vmul.f32 %v7772, 0.044677734
        %v7837 = vmul.f32 %v7773, 0.044677734
        %v7838 = vmul.f32 %v7774, 0.044677734
        %v7839 = vmul.f32 %v7775, 0.044677734
        %v7840 = vmul.f32 %v7776, 0.044677734
        %v7841 = vmul.f32 %v7777, 0.044677734
        %v7842 = vmul.f32 %v7778, 0.044677734
        %v7843 = vmul.f32 %v7779, 0.044677734
        %v7844 = vmul.f32 %v7780, 0.044677734
        %v7845 = vmul.f32 %v7781, 0.044677734
        %v7846 = vmul.f32 %v7782, 0.044677734
        %v7847 = vmul.f32 %v7783, 0.044677734
        %v7848 = vmul.f32 %v7784, 0.044677734
        %v7849 = vmul.f32 %v7785, 0.044677734
        %v7850 = vmul.f32 %v7786, 0.044677734
        %v7851 = vmul.f32 %v7787, 0.044677734
        %v7852 = vmul.f32 %v7788, 0.044677734
        %v7853 = vmul.f32 %v7789, 0.044677734
        %v7854 = vmul.f32 %v7790, 0.044677734
        %v7855 = vmul.f32 %v7791, 0.044677734
        %v7856 = vmul.f32 %v7792, 0.044677734
        %v7857 = vmul.f32 %v7793, 0.044677734
        %v7858 = vmul.f32 %v7794, 0.044677734
        %v7859 = vmul.f32 %v7795, 0.044677734
        %v7860 = vpack.c.bf16 %v7797, %v7796
        %v7861 = vpack.c.bf16 %v7799, %v7798
        %v7862 = vpack.c.bf16 %v7801, %v7800
        %v7863 = vpack.c.bf16 %v7803, %v7802
        %v7864 = vpack.c.bf16 %v7805, %v7804
        %v7865 = vpack.c.bf16 %v7807, %v7806
        %v7866 = vpack.c.bf16 %v7809, %v7808
        %v7867 = vpack.c.bf16 %v7811, %v7810
        %v7868 = vpack.c.bf16 %v7813, %v7812
        %v7869 = vpack.c.bf16 %v7815, %v7814
        %v7870 = vpack.c.bf16 %v7817, %v7816
        %v7871 = vpack.c.bf16 %v7819, %v7818
        %v7872 = vpack.c.bf16 %v7821, %v7820
        %v7873 = vpack.c.bf16 %v7823, %v7822
        %v7874 = vpack.c.bf16 %v7825, %v7824
        %v7875 = vpack.c.bf16 %v7827, %v7826
        %v7876 = vpack.c.bf16 %v7829, %v7828
        %v7877 = vpack.c.bf16 %v7831, %v7830
        %v7878 = vpack.c.bf16 %v7833, %v7832
        %v7879 = vpack.c.bf16 %v7835, %v7834
        %v7880 = vpack.c.bf16 %v7837, %v7836
        %v7881 = vpack.c.bf16 %v7839, %v7838
        %v7882 = vpack.c.bf16 %v7841, %v7840
        %v7883 = vpack.c.bf16 %v7843, %v7842
        %v7884 = vpack.c.bf16 %v7845, %v7844
        %v7885 = vpack.c.bf16 %v7847, %v7846
        %v7886 = vpack.c.bf16 %v7849, %v7848
        %v7887 = vpack.c.bf16 %v7851, %v7850
        %v7888 = vpack.c.bf16 %v7853, %v7852
        %v7889 = vpack.c.bf16 %v7855, %v7854
        %v7890 = vpack.c.bf16 %v7857, %v7856
        %v7891 = vpack.c.bf16 %v7859, %v7858
        %v7892 = vunpack.c.l.bf16 %v7860
        %v7893 = vunpack.c.h.bf16 %v7860
        %v7894 = vunpack.c.l.bf16 %v7861
        %v7895 = vunpack.c.h.bf16 %v7861
        %v7896 = vunpack.c.l.bf16 %v7862
        %v7897 = vunpack.c.h.bf16 %v7862
        %v7898 = vunpack.c.l.bf16 %v7863
        %v7899 = vunpack.c.h.bf16 %v7863
        %v7900 = vunpack.c.l.bf16 %v7864
        %v7901 = vunpack.c.h.bf16 %v7864
        %v7902 = vunpack.c.l.bf16 %v7865
        %v7903 = vunpack.c.h.bf16 %v7865
        %v7904 = vunpack.c.l.bf16 %v7866
        %v7905 = vunpack.c.h.bf16 %v7866
        %v7906 = vunpack.c.l.bf16 %v7867
        %v7907 = vunpack.c.h.bf16 %v7867
        %v7908 = vunpack.c.l.bf16 %v7868
        %v7909 = vunpack.c.h.bf16 %v7868
        %v7910 = vunpack.c.l.bf16 %v7869
        %v7911 = vunpack.c.h.bf16 %v7869
        %v7912 = vunpack.c.l.bf16 %v7870
        %v7913 = vunpack.c.h.bf16 %v7870
        %v7914 = vunpack.c.l.bf16 %v7871
        %v7915 = vunpack.c.h.bf16 %v7871
        %v7916 = vunpack.c.l.bf16 %v7872
        %v7917 = vunpack.c.h.bf16 %v7872
        %v7918 = vunpack.c.l.bf16 %v7873
        %v7919 = vunpack.c.h.bf16 %v7873
        %v7920 = vunpack.c.l.bf16 %v7874
        %v7921 = vunpack.c.h.bf16 %v7874
        %v7922 = vunpack.c.l.bf16 %v7875
        %v7923 = vunpack.c.h.bf16 %v7875
        %v7924 = vunpack.c.l.bf16 %v7876
        %v7925 = vunpack.c.h.bf16 %v7876
        %v7926 = vunpack.c.l.bf16 %v7877
        %v7927 = vunpack.c.h.bf16 %v7877
        %v7928 = vunpack.c.l.bf16 %v7878
        %v7929 = vunpack.c.h.bf16 %v7878
        %v7930 = vunpack.c.l.bf16 %v7879
        %v7931 = vunpack.c.h.bf16 %v7879
        %v7932 = vunpack.c.l.bf16 %v7880
        %v7933 = vunpack.c.h.bf16 %v7880
        %v7934 = vunpack.c.l.bf16 %v7881
        %v7935 = vunpack.c.h.bf16 %v7881
        %v7936 = vunpack.c.l.bf16 %v7882
        %v7937 = vunpack.c.h.bf16 %v7882
        %v7938 = vunpack.c.l.bf16 %v7883
        %v7939 = vunpack.c.h.bf16 %v7883
        %v7940 = vunpack.c.l.bf16 %v7884
        %v7941 = vunpack.c.h.bf16 %v7884
        %v7942 = vunpack.c.l.bf16 %v7885
        %v7943 = vunpack.c.h.bf16 %v7885
        %v7944 = vunpack.c.l.bf16 %v7886
        %v7945 = vunpack.c.h.bf16 %v7886
        %v7946 = vunpack.c.l.bf16 %v7887
        %v7947 = vunpack.c.h.bf16 %v7887
        %v7948 = vunpack.c.l.bf16 %v7888
        %v7949 = vunpack.c.h.bf16 %v7888
        %v7950 = vunpack.c.l.bf16 %v7889
        %v7951 = vunpack.c.h.bf16 %v7889
        %v7952 = vunpack.c.l.bf16 %v7890
        %v7953 = vunpack.c.h.bf16 %v7890
        %v7954 = vunpack.c.l.bf16 %v7891
        %v7955 = vunpack.c.h.bf16 %v7891
        %v7956 = vadd.f32 %v7412, %v7892
        %v7957 = vadd.f32 %v7413, %v7893
        %v7958 = vadd.f32 %v7414, %v7894
        %v7959 = vadd.f32 %v7415, %v7895
        %v7960 = vadd.f32 %v7416, %v7896
        %v7961 = vadd.f32 %v7417, %v7897
        %v7962 = vadd.f32 %v7418, %v7898
        %v7963 = vadd.f32 %v7419, %v7899
        %v7964 = vadd.f32 %v7420, %v7900
        %v7965 = vadd.f32 %v7421, %v7901
        %v7966 = vadd.f32 %v7422, %v7902
        %v7967 = vadd.f32 %v7423, %v7903
        %v7968 = vadd.f32 %v7424, %v7904
        %v7969 = vadd.f32 %v7425, %v7905
        %v7970 = vadd.f32 %v7426, %v7906
        %v7971 = vadd.f32 %v7427, %v7907
        %v7972 = vadd.f32 %v7428, %v7908
        %v7973 = vadd.f32 %v7429, %v7909
        %v7974 = vadd.f32 %v7430, %v7910
        %v7975 = vadd.f32 %v7431, %v7911
        %v7976 = vadd.f32 %v7432, %v7912
        %v7977 = vadd.f32 %v7433, %v7913
        %v7978 = vadd.f32 %v7434, %v7914
        %v7979 = vadd.f32 %v7435, %v7915
        %v7980 = vadd.f32 %v7436, %v7916
        %v7981 = vadd.f32 %v7437, %v7917
        %v7982 = vadd.f32 %v7438, %v7918
        %v7983 = vadd.f32 %v7439, %v7919
        %v7984 = vadd.f32 %v7440, %v7920
        %v7985 = vadd.f32 %v7441, %v7921
        %v7986 = vadd.f32 %v7442, %v7922
        %v7987 = vadd.f32 %v7443, %v7923
        %v7988 = vadd.f32 %v7444, %v7924
        %v7989 = vadd.f32 %v7445, %v7925
        %v7990 = vadd.f32 %v7446, %v7926
        %v7991 = vadd.f32 %v7447, %v7927
        %v7992 = vadd.f32 %v7448, %v7928
        %v7993 = vadd.f32 %v7449, %v7929
        %v7994 = vadd.f32 %v7450, %v7930
        %v7995 = vadd.f32 %v7451, %v7931
        %v7996 = vadd.f32 %v7452, %v7932
        %v7997 = vadd.f32 %v7453, %v7933
        %v7998 = vadd.f32 %v7454, %v7934
        %v7999 = vadd.f32 %v7455, %v7935
        %v8000 = vadd.f32 %v7456, %v7936
        %v8001 = vadd.f32 %v7457, %v7937
        %v8002 = vadd.f32 %v7458, %v7938
        %v8003 = vadd.f32 %v7459, %v7939
        %v8004 = vadd.f32 %v7460, %v7940
        %v8005 = vadd.f32 %v7461, %v7941
        %v8006 = vadd.f32 %v7462, %v7942
        %v8007 = vadd.f32 %v7463, %v7943
        %v8008 = vadd.f32 %v7464, %v7944
        %v8009 = vadd.f32 %v7465, %v7945
        %v8010 = vadd.f32 %v7466, %v7946
        %v8011 = vadd.f32 %v7467, %v7947
        %v8012 = vadd.f32 %v7468, %v7948
        %v8013 = vadd.f32 %v7469, %v7949
        %v8014 = vadd.f32 %v7470, %v7950
        %v8015 = vadd.f32 %v7471, %v7951
        %v8016 = vadd.f32 %v7472, %v7952
        %v8017 = vadd.f32 %v7473, %v7953
        %v8018 = vadd.f32 %v7474, %v7954
        %v8019 = vadd.f32 %v7475, %v7955
        %v8020 = vpack.c.bf16 %v7957, %v7956
        %v8021 = vpack.c.bf16 %v7959, %v7958
        %v8022 = vpack.c.bf16 %v7961, %v7960
        %v8023 = vpack.c.bf16 %v7963, %v7962
        %v8024 = vpack.c.bf16 %v7965, %v7964
        %v8025 = vpack.c.bf16 %v7967, %v7966
        %v8026 = vpack.c.bf16 %v7969, %v7968
        %v8027 = vpack.c.bf16 %v7971, %v7970
        %v8028 = vpack.c.bf16 %v7973, %v7972
        %v8029 = vpack.c.bf16 %v7975, %v7974
        %v8030 = vpack.c.bf16 %v7977, %v7976
        %v8031 = vpack.c.bf16 %v7979, %v7978
        %v8032 = vpack.c.bf16 %v7981, %v7980
        %v8033 = vpack.c.bf16 %v7983, %v7982
        %v8034 = vpack.c.bf16 %v7985, %v7984
        %v8035 = vpack.c.bf16 %v7987, %v7986
        %v8036 = vpack.c.bf16 %v7989, %v7988
        %v8037 = vpack.c.bf16 %v7991, %v7990
        %v8038 = vpack.c.bf16 %v7993, %v7992
        %v8039 = vpack.c.bf16 %v7995, %v7994
        %v8040 = vpack.c.bf16 %v7997, %v7996
        %v8041 = vpack.c.bf16 %v7999, %v7998
        %v8042 = vpack.c.bf16 %v8001, %v8000
        %v8043 = vpack.c.bf16 %v8003, %v8002
        %v8044 = vpack.c.bf16 %v8005, %v8004
        %v8045 = vpack.c.bf16 %v8007, %v8006
        %v8046 = vpack.c.bf16 %v8009, %v8008
        %v8047 = vpack.c.bf16 %v8011, %v8010
        %v8048 = vpack.c.bf16 %v8013, %v8012
        %v8049 = vpack.c.bf16 %v8015, %v8014
        %v8050 = vpack.c.bf16 %v8017, %v8016
        %v8051 = vpack.c.bf16 %v8019, %v8018
        %v8052 = vunpack.c.l.bf16 %v8020
        %v8053 = vunpack.c.h.bf16 %v8020
        %v8054 = vunpack.c.l.bf16 %v8021
        %v8055 = vunpack.c.h.bf16 %v8021
        %v8056 = vunpack.c.l.bf16 %v8022
        %v8057 = vunpack.c.h.bf16 %v8022
        %v8058 = vunpack.c.l.bf16 %v8023
        %v8059 = vunpack.c.h.bf16 %v8023
        %v8060 = vunpack.c.l.bf16 %v8024
        %v8061 = vunpack.c.h.bf16 %v8024
        %v8062 = vunpack.c.l.bf16 %v8025
        %v8063 = vunpack.c.h.bf16 %v8025
        %v8064 = vunpack.c.l.bf16 %v8026
        %v8065 = vunpack.c.h.bf16 %v8026
        %v8066 = vunpack.c.l.bf16 %v8027
        %v8067 = vunpack.c.h.bf16 %v8027
        %v8068 = vunpack.c.l.bf16 %v8028
        %v8069 = vunpack.c.h.bf16 %v8028
        %v8070 = vunpack.c.l.bf16 %v8029
        %v8071 = vunpack.c.h.bf16 %v8029
        %v8072 = vunpack.c.l.bf16 %v8030
        %v8073 = vunpack.c.h.bf16 %v8030
        %v8074 = vunpack.c.l.bf16 %v8031
        %v8075 = vunpack.c.h.bf16 %v8031
        %v8076 = vunpack.c.l.bf16 %v8032
        %v8077 = vunpack.c.h.bf16 %v8032
        %v8078 = vunpack.c.l.bf16 %v8033
        %v8079 = vunpack.c.h.bf16 %v8033
        %v8080 = vunpack.c.l.bf16 %v8034
        %v8081 = vunpack.c.h.bf16 %v8034
        %v8082 = vunpack.c.l.bf16 %v8035
        %v8083 = vunpack.c.h.bf16 %v8035
        %v8084 = vunpack.c.l.bf16 %v8036
        %v8085 = vunpack.c.h.bf16 %v8036
        %v8086 = vunpack.c.l.bf16 %v8037
        %v8087 = vunpack.c.h.bf16 %v8037
        %v8088 = vunpack.c.l.bf16 %v8038
        %v8089 = vunpack.c.h.bf16 %v8038
        %v8090 = vunpack.c.l.bf16 %v8039
        %v8091 = vunpack.c.h.bf16 %v8039
        %v8092 = vunpack.c.l.bf16 %v8040
        %v8093 = vunpack.c.h.bf16 %v8040
        %v8094 = vunpack.c.l.bf16 %v8041
        %v8095 = vunpack.c.h.bf16 %v8041
        %v8096 = vunpack.c.l.bf16 %v8042
        %v8097 = vunpack.c.h.bf16 %v8042
        %v8098 = vunpack.c.l.bf16 %v8043
        %v8099 = vunpack.c.h.bf16 %v8043
        %v8100 = vunpack.c.l.bf16 %v8044
        %v8101 = vunpack.c.h.bf16 %v8044
        %v8102 = vunpack.c.l.bf16 %v8045
        %v8103 = vunpack.c.h.bf16 %v8045
        %v8104 = vunpack.c.l.bf16 %v8046
        %v8105 = vunpack.c.h.bf16 %v8046
        %v8106 = vunpack.c.l.bf16 %v8047
        %v8107 = vunpack.c.h.bf16 %v8047
        %v8108 = vunpack.c.l.bf16 %v8048
        %v8109 = vunpack.c.h.bf16 %v8048
        %v8110 = vunpack.c.l.bf16 %v8049
        %v8111 = vunpack.c.h.bf16 %v8049
        %v8112 = vunpack.c.l.bf16 %v8050
        %v8113 = vunpack.c.h.bf16 %v8050
        %v8114 = vunpack.c.l.bf16 %v8051
        %v8115 = vunpack.c.h.bf16 %v8051
        %v8116 = vmul.f32 %v8052, 0.796875
        %v8117 = vmul.f32 %v8053, 0.796875
        %v8118 = vmul.f32 %v8054, 0.796875
        %v8119 = vmul.f32 %v8055, 0.796875
        %v8120 = vmul.f32 %v8056, 0.796875
        %v8121 = vmul.f32 %v8057, 0.796875
        %v8122 = vmul.f32 %v8058, 0.796875
        %v8123 = vmul.f32 %v8059, 0.796875
        %v8124 = vmul.f32 %v8060, 0.796875
        %v8125 = vmul.f32 %v8061, 0.796875
        %v8126 = vmul.f32 %v8062, 0.796875
        %v8127 = vmul.f32 %v8063, 0.796875
        %v8128 = vmul.f32 %v8064, 0.796875
        %v8129 = vmul.f32 %v8065, 0.796875
        %v8130 = vmul.f32 %v8066, 0.796875
        %v8131 = vmul.f32 %v8067, 0.796875
        %v8132 = vmul.f32 %v8068, 0.796875
        %v8133 = vmul.f32 %v8069, 0.796875
        %v8134 = vmul.f32 %v8070, 0.796875
        %v8135 = vmul.f32 %v8071, 0.796875
        %v8136 = vmul.f32 %v8072, 0.796875
        %v8137 = vmul.f32 %v8073, 0.796875
        %v8138 = vmul.f32 %v8074, 0.796875
        %v8139 = vmul.f32 %v8075, 0.796875
        %v8140 = vmul.f32 %v8076, 0.796875
        %v8141 = vmul.f32 %v8077, 0.796875
        %v8142 = vmul.f32 %v8078, 0.796875
        %v8143 = vmul.f32 %v8079, 0.796875
        %v8144 = vmul.f32 %v8080, 0.796875
        %v8145 = vmul.f32 %v8081, 0.796875
        %v8146 = vmul.f32 %v8082, 0.796875
        %v8147 = vmul.f32 %v8083, 0.796875
        %v8148 = vmul.f32 %v8084, 0.796875
        %v8149 = vmul.f32 %v8085, 0.796875
        %v8150 = vmul.f32 %v8086, 0.796875
        %v8151 = vmul.f32 %v8087, 0.796875
        %v8152 = vmul.f32 %v8088, 0.796875
        %v8153 = vmul.f32 %v8089, 0.796875
        %v8154 = vmul.f32 %v8090, 0.796875
        %v8155 = vmul.f32 %v8091, 0.796875
        %v8156 = vmul.f32 %v8092, 0.796875
        %v8157 = vmul.f32 %v8093, 0.796875
        %v8158 = vmul.f32 %v8094, 0.796875
        %v8159 = vmul.f32 %v8095, 0.796875
        %v8160 = vmul.f32 %v8096, 0.796875
        %v8161 = vmul.f32 %v8097, 0.796875
        %v8162 = vmul.f32 %v8098, 0.796875
        %v8163 = vmul.f32 %v8099, 0.796875
        %v8164 = vmul.f32 %v8100, 0.796875
        %v8165 = vmul.f32 %v8101, 0.796875
        %v8166 = vmul.f32 %v8102, 0.796875
        %v8167 = vmul.f32 %v8103, 0.796875
        %v8168 = vmul.f32 %v8104, 0.796875
        %v8169 = vmul.f32 %v8105, 0.796875
        %v8170 = vmul.f32 %v8106, 0.796875
        %v8171 = vmul.f32 %v8107, 0.796875
        %v8172 = vmul.f32 %v8108, 0.796875
        %v8173 = vmul.f32 %v8109, 0.796875
        %v8174 = vmul.f32 %v8110, 0.796875
        %v8175 = vmul.f32 %v8111, 0.796875
        %v8176 = vmul.f32 %v8112, 0.796875
        %v8177 = vmul.f32 %v8113, 0.796875
        %v8178 = vmul.f32 %v8114, 0.796875
        %v8179 = vmul.f32 %v8115, 0.796875
        %v8180 = vpack.c.bf16 %v8117, %v8116
        %v8181 = vpack.c.bf16 %v8119, %v8118
        %v8182 = vpack.c.bf16 %v8121, %v8120
        %v8183 = vpack.c.bf16 %v8123, %v8122
        %v8184 = vpack.c.bf16 %v8125, %v8124
        %v8185 = vpack.c.bf16 %v8127, %v8126
        %v8186 = vpack.c.bf16 %v8129, %v8128
        %v8187 = vpack.c.bf16 %v8131, %v8130
        %v8188 = vpack.c.bf16 %v8133, %v8132
        %v8189 = vpack.c.bf16 %v8135, %v8134
        %v8190 = vpack.c.bf16 %v8137, %v8136
        %v8191 = vpack.c.bf16 %v8139, %v8138
        %v8192 = vpack.c.bf16 %v8141, %v8140
        %v8193 = vpack.c.bf16 %v8143, %v8142
        %v8194 = vpack.c.bf16 %v8145, %v8144
        %v8195 = vpack.c.bf16 %v8147, %v8146
        %v8196 = vpack.c.bf16 %v8149, %v8148
        %v8197 = vpack.c.bf16 %v8151, %v8150
        %v8198 = vpack.c.bf16 %v8153, %v8152
        %v8199 = vpack.c.bf16 %v8155, %v8154
        %v8200 = vpack.c.bf16 %v8157, %v8156
        %v8201 = vpack.c.bf16 %v8159, %v8158
        %v8202 = vpack.c.bf16 %v8161, %v8160
        %v8203 = vpack.c.bf16 %v8163, %v8162
        %v8204 = vpack.c.bf16 %v8165, %v8164
        %v8205 = vpack.c.bf16 %v8167, %v8166
        %v8206 = vpack.c.bf16 %v8169, %v8168
        %v8207 = vpack.c.bf16 %v8171, %v8170
        %v8208 = vpack.c.bf16 %v8173, %v8172
        %v8209 = vpack.c.bf16 %v8175, %v8174
        %v8210 = vpack.c.bf16 %v8177, %v8176
        %v8211 = vpack.c.bf16 %v8179, %v8178
        %v8212 = vunpack.c.l.bf16 %v8180
        %v8213 = vunpack.c.h.bf16 %v8180
        %v8214 = vunpack.c.l.bf16 %v8181
        %v8215 = vunpack.c.h.bf16 %v8181
        %v8216 = vunpack.c.l.bf16 %v8182
        %v8217 = vunpack.c.h.bf16 %v8182
        %v8218 = vunpack.c.l.bf16 %v8183
        %v8219 = vunpack.c.h.bf16 %v8183
        %v8220 = vunpack.c.l.bf16 %v8184
        %v8221 = vunpack.c.h.bf16 %v8184
        %v8222 = vunpack.c.l.bf16 %v8185
        %v8223 = vunpack.c.h.bf16 %v8185
        %v8224 = vunpack.c.l.bf16 %v8186
        %v8225 = vunpack.c.h.bf16 %v8186
        %v8226 = vunpack.c.l.bf16 %v8187
        %v8227 = vunpack.c.h.bf16 %v8187
        %v8228 = vunpack.c.l.bf16 %v8188
        %v8229 = vunpack.c.h.bf16 %v8188
        %v8230 = vunpack.c.l.bf16 %v8189
        %v8231 = vunpack.c.h.bf16 %v8189
        %v8232 = vunpack.c.l.bf16 %v8190
        %v8233 = vunpack.c.h.bf16 %v8190
        %v8234 = vunpack.c.l.bf16 %v8191
        %v8235 = vunpack.c.h.bf16 %v8191
        %v8236 = vunpack.c.l.bf16 %v8192
        %v8237 = vunpack.c.h.bf16 %v8192
        %v8238 = vunpack.c.l.bf16 %v8193
        %v8239 = vunpack.c.h.bf16 %v8193
        %v8240 = vunpack.c.l.bf16 %v8194
        %v8241 = vunpack.c.h.bf16 %v8194
        %v8242 = vunpack.c.l.bf16 %v8195
        %v8243 = vunpack.c.h.bf16 %v8195
        %v8244 = vunpack.c.l.bf16 %v8196
        %v8245 = vunpack.c.h.bf16 %v8196
        %v8246 = vunpack.c.l.bf16 %v8197
        %v8247 = vunpack.c.h.bf16 %v8197
        %v8248 = vunpack.c.l.bf16 %v8198
        %v8249 = vunpack.c.h.bf16 %v8198
        %v8250 = vunpack.c.l.bf16 %v8199
        %v8251 = vunpack.c.h.bf16 %v8199
        %v8252 = vunpack.c.l.bf16 %v8200
        %v8253 = vunpack.c.h.bf16 %v8200
        %v8254 = vunpack.c.l.bf16 %v8201
        %v8255 = vunpack.c.h.bf16 %v8201
        %v8256 = vunpack.c.l.bf16 %v8202
        %v8257 = vunpack.c.h.bf16 %v8202
        %v8258 = vunpack.c.l.bf16 %v8203
        %v8259 = vunpack.c.h.bf16 %v8203
        %v8260 = vunpack.c.l.bf16 %v8204
        %v8261 = vunpack.c.h.bf16 %v8204
        %v8262 = vunpack.c.l.bf16 %v8205
        %v8263 = vunpack.c.h.bf16 %v8205
        %v8264 = vunpack.c.l.bf16 %v8206
        %v8265 = vunpack.c.h.bf16 %v8206
        %v8266 = vunpack.c.l.bf16 %v8207
        %v8267 = vunpack.c.h.bf16 %v8207
        %v8268 = vunpack.c.l.bf16 %v8208
        %v8269 = vunpack.c.h.bf16 %v8208
        %v8270 = vunpack.c.l.bf16 %v8209
        %v8271 = vunpack.c.h.bf16 %v8209
        %v8272 = vunpack.c.l.bf16 %v8210
        %v8273 = vunpack.c.h.bf16 %v8210
        %v8274 = vunpack.c.l.bf16 %v8211
        %v8275 = vunpack.c.h.bf16 %v8211
        %v8276 = vtanh.pop %v8212
        %v8277 = vtanh.pop %v8213
        %v8278 = vtanh.pop %v8214
        %v8279 = vtanh.pop %v8215
        %v8280 = vtanh.pop %v8216
        %v8281 = vtanh.pop %v8217
        %v8282 = vtanh.pop %v8218
        %v8283 = vtanh.pop %v8219
        %v8284 = vtanh.pop %v8220
        %v8285 = vtanh.pop %v8221
        %v8286 = vtanh.pop %v8222
        %v8287 = vtanh.pop %v8223
        %v8288 = vtanh.pop %v8224
        %v8289 = vtanh.pop %v8225
        %v8290 = vtanh.pop %v8226
        %v8291 = vtanh.pop %v8227
        %v8292 = vtanh.pop %v8228
        %v8293 = vtanh.pop %v8229
        %v8294 = vtanh.pop %v8230
        %v8295 = vtanh.pop %v8231
        %v8296 = vtanh.pop %v8232
        %v8297 = vtanh.pop %v8233
        %v8298 = vtanh.pop %v8234
        %v8299 = vtanh.pop %v8235
        %v8300 = vtanh.pop %v8236
        %v8301 = vtanh.pop %v8237
        %v8302 = vtanh.pop %v8238
        %v8303 = vtanh.pop %v8239
        %v8304 = vtanh.pop %v8240
        %v8305 = vtanh.pop %v8241
        %v8306 = vtanh.pop %v8242
        %v8307 = vtanh.pop %v8243
        %v8308 = vtanh.pop %v8244
        %v8309 = vtanh.pop %v8245
        %v8310 = vtanh.pop %v8246
        %v8311 = vtanh.pop %v8247
        %v8312 = vtanh.pop %v8248
        %v8313 = vtanh.pop %v8249
        %v8314 = vtanh.pop %v8250
        %v8315 = vtanh.pop %v8251
        %v8316 = vtanh.pop %v8252
        %v8317 = vtanh.pop %v8253
        %v8318 = vtanh.pop %v8254
        %v8319 = vtanh.pop %v8255
        %v8320 = vtanh.pop %v8256
        %v8321 = vtanh.pop %v8257
        %v8322 = vtanh.pop %v8258
        %v8323 = vtanh.pop %v8259
        %v8324 = vtanh.pop %v8260
        %v8325 = vtanh.pop %v8261
        %v8326 = vtanh.pop %v8262
        %v8327 = vtanh.pop %v8263
        %v8328 = vtanh.pop %v8264
        %v8329 = vtanh.pop %v8265
        %v8330 = vtanh.pop %v8266
        %v8331 = vtanh.pop %v8267
        %v8332 = vtanh.pop %v8268
        %v8333 = vtanh.pop %v8269
        %v8334 = vtanh.pop %v8270
        %v8335 = vtanh.pop %v8271
        %v8336 = vtanh.pop %v8272
        %v8337 = vtanh.pop %v8273
        %v8338 = vtanh.pop %v8274
        %v8339 = vtanh.pop %v8275
        %v8340 = vpack.c.bf16 %v8277, %v8276
        %v8341 = vpack.c.bf16 %v8279, %v8278
        %v8342 = vpack.c.bf16 %v8281, %v8280
        %v8343 = vpack.c.bf16 %v8283, %v8282
        %v8344 = vpack.c.bf16 %v8285, %v8284
        %v8345 = vpack.c.bf16 %v8287, %v8286
        %v8346 = vpack.c.bf16 %v8289, %v8288
        %v8347 = vpack.c.bf16 %v8291, %v8290
        %v8348 = vpack.c.bf16 %v8293, %v8292
        %v8349 = vpack.c.bf16 %v8295, %v8294
        %v8350 = vpack.c.bf16 %v8297, %v8296
        %v8351 = vpack.c.bf16 %v8299, %v8298
        %v8352 = vpack.c.bf16 %v8301, %v8300
        %v8353 = vpack.c.bf16 %v8303, %v8302
        %v8354 = vpack.c.bf16 %v8305, %v8304
        %v8355 = vpack.c.bf16 %v8307, %v8306
        %v8356 = vpack.c.bf16 %v8309, %v8308
        %v8357 = vpack.c.bf16 %v8311, %v8310
        %v8358 = vpack.c.bf16 %v8313, %v8312
        %v8359 = vpack.c.bf16 %v8315, %v8314
        %v8360 = vpack.c.bf16 %v8317, %v8316
        %v8361 = vpack.c.bf16 %v8319, %v8318
        %v8362 = vpack.c.bf16 %v8321, %v8320
        %v8363 = vpack.c.bf16 %v8323, %v8322
        %v8364 = vpack.c.bf16 %v8325, %v8324
        %v8365 = vpack.c.bf16 %v8327, %v8326
        %v8366 = vpack.c.bf16 %v8329, %v8328
        %v8367 = vpack.c.bf16 %v8331, %v8330
        %v8368 = vpack.c.bf16 %v8333, %v8332
        %v8369 = vpack.c.bf16 %v8335, %v8334
        %v8370 = vpack.c.bf16 %v8337, %v8336
        %v8371 = vpack.c.bf16 %v8339, %v8338
        %v8372 = vunpack.c.l.bf16 %v8340
        %v8373 = vunpack.c.h.bf16 %v8340
        %v8374 = vunpack.c.l.bf16 %v8341
        %v8375 = vunpack.c.h.bf16 %v8341
        %v8376 = vunpack.c.l.bf16 %v8342
        %v8377 = vunpack.c.h.bf16 %v8342
        %v8378 = vunpack.c.l.bf16 %v8343
        %v8379 = vunpack.c.h.bf16 %v8343
        %v8380 = vunpack.c.l.bf16 %v8344
        %v8381 = vunpack.c.h.bf16 %v8344
        %v8382 = vunpack.c.l.bf16 %v8345
        %v8383 = vunpack.c.h.bf16 %v8345
        %v8384 = vunpack.c.l.bf16 %v8346
        %v8385 = vunpack.c.h.bf16 %v8346
        %v8386 = vunpack.c.l.bf16 %v8347
        %v8387 = vunpack.c.h.bf16 %v8347
        %v8388 = vunpack.c.l.bf16 %v8348
        %v8389 = vunpack.c.h.bf16 %v8348
        %v8390 = vunpack.c.l.bf16 %v8349
        %v8391 = vunpack.c.h.bf16 %v8349
        %v8392 = vunpack.c.l.bf16 %v8350
        %v8393 = vunpack.c.h.bf16 %v8350
        %v8394 = vunpack.c.l.bf16 %v8351
        %v8395 = vunpack.c.h.bf16 %v8351
        %v8396 = vunpack.c.l.bf16 %v8352
        %v8397 = vunpack.c.h.bf16 %v8352
        %v8398 = vunpack.c.l.bf16 %v8353
        %v8399 = vunpack.c.h.bf16 %v8353
        %v8400 = vunpack.c.l.bf16 %v8354
        %v8401 = vunpack.c.h.bf16 %v8354
        %v8402 = vunpack.c.l.bf16 %v8355
        %v8403 = vunpack.c.h.bf16 %v8355
        %v8404 = vunpack.c.l.bf16 %v8356
        %v8405 = vunpack.c.h.bf16 %v8356
        %v8406 = vunpack.c.l.bf16 %v8357
        %v8407 = vunpack.c.h.bf16 %v8357
        %v8408 = vunpack.c.l.bf16 %v8358
        %v8409 = vunpack.c.h.bf16 %v8358
        %v8410 = vunpack.c.l.bf16 %v8359
        %v8411 = vunpack.c.h.bf16 %v8359
        %v8412 = vunpack.c.l.bf16 %v8360
        %v8413 = vunpack.c.h.bf16 %v8360
        %v8414 = vunpack.c.l.bf16 %v8361
        %v8415 = vunpack.c.h.bf16 %v8361
        %v8416 = vunpack.c.l.bf16 %v8362
        %v8417 = vunpack.c.h.bf16 %v8362
        %v8418 = vunpack.c.l.bf16 %v8363
        %v8419 = vunpack.c.h.bf16 %v8363
        %v8420 = vunpack.c.l.bf16 %v8364
        %v8421 = vunpack.c.h.bf16 %v8364
        %v8422 = vunpack.c.l.bf16 %v8365
        %v8423 = vunpack.c.h.bf16 %v8365
        %v8424 = vunpack.c.l.bf16 %v8366
        %v8425 = vunpack.c.h.bf16 %v8366
        %v8426 = vunpack.c.l.bf16 %v8367
        %v8427 = vunpack.c.h.bf16 %v8367
        %v8428 = vunpack.c.l.bf16 %v8368
        %v8429 = vunpack.c.h.bf16 %v8368
        %v8430 = vunpack.c.l.bf16 %v8369
        %v8431 = vunpack.c.h.bf16 %v8369
        %v8432 = vunpack.c.l.bf16 %v8370
        %v8433 = vunpack.c.h.bf16 %v8370
        %v8434 = vunpack.c.l.bf16 %v8371
        %v8435 = vunpack.c.h.bf16 %v8371
        %v8436 = vadd.f32 %v8372, 1.0
        %v8437 = vadd.f32 %v8373, 1.0
        %v8438 = vadd.f32 %v8374, 1.0
        %v8439 = vadd.f32 %v8375, 1.0
        %v8440 = vadd.f32 %v8376, 1.0
        %v8441 = vadd.f32 %v8377, 1.0
        %v8442 = vadd.f32 %v8378, 1.0
        %v8443 = vadd.f32 %v8379, 1.0
        %v8444 = vadd.f32 %v8380, 1.0
        %v8445 = vadd.f32 %v8381, 1.0
        %v8446 = vadd.f32 %v8382, 1.0
        %v8447 = vadd.f32 %v8383, 1.0
        %v8448 = vadd.f32 %v8384, 1.0
        %v8449 = vadd.f32 %v8385, 1.0
        %v8450 = vadd.f32 %v8386, 1.0
        %v8451 = vadd.f32 %v8387, 1.0
        %v8452 = vadd.f32 %v8388, 1.0
        %v8453 = vadd.f32 %v8389, 1.0
        %v8454 = vadd.f32 %v8390, 1.0
        %v8455 = vadd.f32 %v8391, 1.0
        %v8456 = vadd.f32 %v8392, 1.0
        %v8457 = vadd.f32 %v8393, 1.0
        %v8458 = vadd.f32 %v8394, 1.0
        %v8459 = vadd.f32 %v8395, 1.0
        %v8460 = vadd.f32 %v8396, 1.0
        %v8461 = vadd.f32 %v8397, 1.0
        %v8462 = vadd.f32 %v8398, 1.0
        %v8463 = vadd.f32 %v8399, 1.0
        %v8464 = vadd.f32 %v8400, 1.0
        %v8465 = vadd.f32 %v8401, 1.0
        %v8466 = vadd.f32 %v8402, 1.0
        %v8467 = vadd.f32 %v8403, 1.0
        %v8468 = vadd.f32 %v8404, 1.0
        %v8469 = vadd.f32 %v8405, 1.0
        %v8470 = vadd.f32 %v8406, 1.0
        %v8471 = vadd.f32 %v8407, 1.0
        %v8472 = vadd.f32 %v8408, 1.0
        %v8473 = vadd.f32 %v8409, 1.0
        %v8474 = vadd.f32 %v8410, 1.0
        %v8475 = vadd.f32 %v8411, 1.0
        %v8476 = vadd.f32 %v8412, 1.0
        %v8477 = vadd.f32 %v8413, 1.0
        %v8478 = vadd.f32 %v8414, 1.0
        %v8479 = vadd.f32 %v8415, 1.0
        %v8480 = vadd.f32 %v8416, 1.0
        %v8481 = vadd.f32 %v8417, 1.0
        %v8482 = vadd.f32 %v8418, 1.0
        %v8483 = vadd.f32 %v8419, 1.0
        %v8484 = vadd.f32 %v8420, 1.0
        %v8485 = vadd.f32 %v8421, 1.0
        %v8486 = vadd.f32 %v8422, 1.0
        %v8487 = vadd.f32 %v8423, 1.0
        %v8488 = vadd.f32 %v8424, 1.0
        %v8489 = vadd.f32 %v8425, 1.0
        %v8490 = vadd.f32 %v8426, 1.0
        %v8491 = vadd.f32 %v8427, 1.0
        %v8492 = vadd.f32 %v8428, 1.0
        %v8493 = vadd.f32 %v8429, 1.0
        %v8494 = vadd.f32 %v8430, 1.0
        %v8495 = vadd.f32 %v8431, 1.0
        %v8496 = vadd.f32 %v8432, 1.0
        %v8497 = vadd.f32 %v8433, 1.0
        %v8498 = vadd.f32 %v8434, 1.0
        %v8499 = vadd.f32 %v8435, 1.0
        %v8500 = vpack.c.bf16 %v8437, %v8436
        %v8501 = vpack.c.bf16 %v8439, %v8438
        %v8502 = vpack.c.bf16 %v8441, %v8440
        %v8503 = vpack.c.bf16 %v8443, %v8442
        %v8504 = vpack.c.bf16 %v8445, %v8444
        %v8505 = vpack.c.bf16 %v8447, %v8446
        %v8506 = vpack.c.bf16 %v8449, %v8448
        %v8507 = vpack.c.bf16 %v8451, %v8450
        %v8508 = vpack.c.bf16 %v8453, %v8452
        %v8509 = vpack.c.bf16 %v8455, %v8454
        %v8510 = vpack.c.bf16 %v8457, %v8456
        %v8511 = vpack.c.bf16 %v8459, %v8458
        %v8512 = vpack.c.bf16 %v8461, %v8460
        %v8513 = vpack.c.bf16 %v8463, %v8462
        %v8514 = vpack.c.bf16 %v8465, %v8464
        %v8515 = vpack.c.bf16 %v8467, %v8466
        %v8516 = vpack.c.bf16 %v8469, %v8468
        %v8517 = vpack.c.bf16 %v8471, %v8470
        %v8518 = vpack.c.bf16 %v8473, %v8472
        %v8519 = vpack.c.bf16 %v8475, %v8474
        %v8520 = vpack.c.bf16 %v8477, %v8476
        %v8521 = vpack.c.bf16 %v8479, %v8478
        %v8522 = vpack.c.bf16 %v8481, %v8480
        %v8523 = vpack.c.bf16 %v8483, %v8482
        %v8524 = vpack.c.bf16 %v8485, %v8484
        %v8525 = vpack.c.bf16 %v8487, %v8486
        %v8526 = vpack.c.bf16 %v8489, %v8488
        %v8527 = vpack.c.bf16 %v8491, %v8490
        %v8528 = vpack.c.bf16 %v8493, %v8492
        %v8529 = vpack.c.bf16 %v8495, %v8494
        %v8530 = vpack.c.bf16 %v8497, %v8496
        %v8531 = vpack.c.bf16 %v8499, %v8498
        %v8532 = vunpack.c.l.bf16 %v8500
        %v8533 = vunpack.c.h.bf16 %v8500
        %v8534 = vunpack.c.l.bf16 %v8501
        %v8535 = vunpack.c.h.bf16 %v8501
        %v8536 = vunpack.c.l.bf16 %v8502
        %v8537 = vunpack.c.h.bf16 %v8502
        %v8538 = vunpack.c.l.bf16 %v8503
        %v8539 = vunpack.c.h.bf16 %v8503
        %v8540 = vunpack.c.l.bf16 %v8504
        %v8541 = vunpack.c.h.bf16 %v8504
        %v8542 = vunpack.c.l.bf16 %v8505
        %v8543 = vunpack.c.h.bf16 %v8505
        %v8544 = vunpack.c.l.bf16 %v8506
        %v8545 = vunpack.c.h.bf16 %v8506
        %v8546 = vunpack.c.l.bf16 %v8507
        %v8547 = vunpack.c.h.bf16 %v8507
        %v8548 = vunpack.c.l.bf16 %v8508
        %v8549 = vunpack.c.h.bf16 %v8508
        %v8550 = vunpack.c.l.bf16 %v8509
        %v8551 = vunpack.c.h.bf16 %v8509
        %v8552 = vunpack.c.l.bf16 %v8510
        %v8553 = vunpack.c.h.bf16 %v8510
        %v8554 = vunpack.c.l.bf16 %v8511
        %v8555 = vunpack.c.h.bf16 %v8511
        %v8556 = vunpack.c.l.bf16 %v8512
        %v8557 = vunpack.c.h.bf16 %v8512
        %v8558 = vunpack.c.l.bf16 %v8513
        %v8559 = vunpack.c.h.bf16 %v8513
        %v8560 = vunpack.c.l.bf16 %v8514
        %v8561 = vunpack.c.h.bf16 %v8514
        %v8562 = vunpack.c.l.bf16 %v8515
        %v8563 = vunpack.c.h.bf16 %v8515
        %v8564 = vunpack.c.l.bf16 %v8516
        %v8565 = vunpack.c.h.bf16 %v8516
        %v8566 = vunpack.c.l.bf16 %v8517
        %v8567 = vunpack.c.h.bf16 %v8517
        %v8568 = vunpack.c.l.bf16 %v8518
        %v8569 = vunpack.c.h.bf16 %v8518
        %v8570 = vunpack.c.l.bf16 %v8519
        %v8571 = vunpack.c.h.bf16 %v8519
        %v8572 = vunpack.c.l.bf16 %v8520
        %v8573 = vunpack.c.h.bf16 %v8520
        %v8574 = vunpack.c.l.bf16 %v8521
        %v8575 = vunpack.c.h.bf16 %v8521
        %v8576 = vunpack.c.l.bf16 %v8522
        %v8577 = vunpack.c.h.bf16 %v8522
        %v8578 = vunpack.c.l.bf16 %v8523
        %v8579 = vunpack.c.h.bf16 %v8523
        %v8580 = vunpack.c.l.bf16 %v8524
        %v8581 = vunpack.c.h.bf16 %v8524
        %v8582 = vunpack.c.l.bf16 %v8525
        %v8583 = vunpack.c.h.bf16 %v8525
        %v8584 = vunpack.c.l.bf16 %v8526
        %v8585 = vunpack.c.h.bf16 %v8526
        %v8586 = vunpack.c.l.bf16 %v8527
        %v8587 = vunpack.c.h.bf16 %v8527
        %v8588 = vunpack.c.l.bf16 %v8528
        %v8589 = vunpack.c.h.bf16 %v8528
        %v8590 = vunpack.c.l.bf16 %v8529
        %v8591 = vunpack.c.h.bf16 %v8529
        %v8592 = vunpack.c.l.bf16 %v8530
        %v8593 = vunpack.c.h.bf16 %v8530
        %v8594 = vunpack.c.l.bf16 %v8531
        %v8595 = vunpack.c.h.bf16 %v8531
        %v8596 = vmul.f32 %v8532, 0.5
        %v8597 = vmul.f32 %v8533, 0.5
        %v8598 = vmul.f32 %v8534, 0.5
        %v8599 = vmul.f32 %v8535, 0.5
        %v8600 = vmul.f32 %v8536, 0.5
        %v8601 = vmul.f32 %v8537, 0.5
        %v8602 = vmul.f32 %v8538, 0.5
        %v8603 = vmul.f32 %v8539, 0.5
        %v8604 = vmul.f32 %v8540, 0.5
        %v8605 = vmul.f32 %v8541, 0.5
        %v8606 = vmul.f32 %v8542, 0.5
        %v8607 = vmul.f32 %v8543, 0.5
        %v8608 = vmul.f32 %v8544, 0.5
        %v8609 = vmul.f32 %v8545, 0.5
        %v8610 = vmul.f32 %v8546, 0.5
        %v8611 = vmul.f32 %v8547, 0.5
        %v8612 = vmul.f32 %v8548, 0.5
        %v8613 = vmul.f32 %v8549, 0.5
        %v8614 = vmul.f32 %v8550, 0.5
        %v8615 = vmul.f32 %v8551, 0.5
        %v8616 = vmul.f32 %v8552, 0.5
        %v8617 = vmul.f32 %v8553, 0.5
        %v8618 = vmul.f32 %v8554, 0.5
        %v8619 = vmul.f32 %v8555, 0.5
        %v8620 = vmul.f32 %v8556, 0.5
        %v8621 = vmul.f32 %v8557, 0.5
        %v8622 = vmul.f32 %v8558, 0.5
        %v8623 = vmul.f32 %v8559, 0.5
        %v8624 = vmul.f32 %v8560, 0.5
        %v8625 = vmul.f32 %v8561, 0.5
        %v8626 = vmul.f32 %v8562, 0.5
        %v8627 = vmul.f32 %v8563, 0.5
        %v8628 = vmul.f32 %v8564, 0.5
        %v8629 = vmul.f32 %v8565, 0.5
        %v8630 = vmul.f32 %v8566, 0.5
        %v8631 = vmul.f32 %v8567, 0.5
        %v8632 = vmul.f32 %v8568, 0.5
        %v8633 = vmul.f32 %v8569, 0.5
        %v8634 = vmul.f32 %v8570, 0.5
        %v8635 = vmul.f32 %v8571, 0.5
        %v8636 = vmul.f32 %v8572, 0.5
        %v8637 = vmul.f32 %v8573, 0.5
        %v8638 = vmul.f32 %v8574, 0.5
        %v8639 = vmul.f32 %v8575, 0.5
        %v8640 = vmul.f32 %v8576, 0.5
        %v8641 = vmul.f32 %v8577, 0.5
        %v8642 = vmul.f32 %v8578, 0.5
        %v8643 = vmul.f32 %v8579, 0.5
        %v8644 = vmul.f32 %v8580, 0.5
        %v8645 = vmul.f32 %v8581, 0.5
        %v8646 = vmul.f32 %v8582, 0.5
        %v8647 = vmul.f32 %v8583, 0.5
        %v8648 = vmul.f32 %v8584, 0.5
        %v8649 = vmul.f32 %v8585, 0.5
        %v8650 = vmul.f32 %v8586, 0.5
        %v8651 = vmul.f32 %v8587, 0.5
        %v8652 = vmul.f32 %v8588, 0.5
        %v8653 = vmul.f32 %v8589, 0.5
        %v8654 = vmul.f32 %v8590, 0.5
        %v8655 = vmul.f32 %v8591, 0.5
        %v8656 = vmul.f32 %v8592, 0.5
        %v8657 = vmul.f32 %v8593, 0.5
        %v8658 = vmul.f32 %v8594, 0.5
        %v8659 = vmul.f32 %v8595, 0.5
        %v8660 = vpack.c.bf16 %v8597, %v8596
        %v8661 = vpack.c.bf16 %v8599, %v8598
        %v8662 = vpack.c.bf16 %v8601, %v8600
        %v8663 = vpack.c.bf16 %v8603, %v8602
        %v8664 = vpack.c.bf16 %v8605, %v8604
        %v8665 = vpack.c.bf16 %v8607, %v8606
        %v8666 = vpack.c.bf16 %v8609, %v8608
        %v8667 = vpack.c.bf16 %v8611, %v8610
        %v8668 = vpack.c.bf16 %v8613, %v8612
        %v8669 = vpack.c.bf16 %v8615, %v8614
        %v8670 = vpack.c.bf16 %v8617, %v8616
        %v8671 = vpack.c.bf16 %v8619, %v8618
        %v8672 = vpack.c.bf16 %v8621, %v8620
        %v8673 = vpack.c.bf16 %v8623, %v8622
        %v8674 = vpack.c.bf16 %v8625, %v8624
        %v8675 = vpack.c.bf16 %v8627, %v8626
        %v8676 = vpack.c.bf16 %v8629, %v8628
        %v8677 = vpack.c.bf16 %v8631, %v8630
        %v8678 = vpack.c.bf16 %v8633, %v8632
        %v8679 = vpack.c.bf16 %v8635, %v8634
        %v8680 = vpack.c.bf16 %v8637, %v8636
        %v8681 = vpack.c.bf16 %v8639, %v8638
        %v8682 = vpack.c.bf16 %v8641, %v8640
        %v8683 = vpack.c.bf16 %v8643, %v8642
        %v8684 = vpack.c.bf16 %v8645, %v8644
        %v8685 = vpack.c.bf16 %v8647, %v8646
        %v8686 = vpack.c.bf16 %v8649, %v8648
        %v8687 = vpack.c.bf16 %v8651, %v8650
        %v8688 = vpack.c.bf16 %v8653, %v8652
        %v8689 = vpack.c.bf16 %v8655, %v8654
        %v8690 = vpack.c.bf16 %v8657, %v8656
        %v8691 = vpack.c.bf16 %v8659, %v8658
        %v8692 = vunpack.c.l.bf16 %v8660
        %v8693 = vunpack.c.h.bf16 %v8660
        %v8694 = vunpack.c.l.bf16 %v8661
        %v8695 = vunpack.c.h.bf16 %v8661
        %v8696 = vunpack.c.l.bf16 %v8662
        %v8697 = vunpack.c.h.bf16 %v8662
        %v8698 = vunpack.c.l.bf16 %v8663
        %v8699 = vunpack.c.h.bf16 %v8663
        %v8700 = vunpack.c.l.bf16 %v8664
        %v8701 = vunpack.c.h.bf16 %v8664
        %v8702 = vunpack.c.l.bf16 %v8665
        %v8703 = vunpack.c.h.bf16 %v8665
        %v8704 = vunpack.c.l.bf16 %v8666
        %v8705 = vunpack.c.h.bf16 %v8666
        %v8706 = vunpack.c.l.bf16 %v8667
        %v8707 = vunpack.c.h.bf16 %v8667
        %v8708 = vunpack.c.l.bf16 %v8668
        %v8709 = vunpack.c.h.bf16 %v8668
        %v8710 = vunpack.c.l.bf16 %v8669
        %v8711 = vunpack.c.h.bf16 %v8669
        %v8712 = vunpack.c.l.bf16 %v8670
        %v8713 = vunpack.c.h.bf16 %v8670
        %v8714 = vunpack.c.l.bf16 %v8671
        %v8715 = vunpack.c.h.bf16 %v8671
        %v8716 = vunpack.c.l.bf16 %v8672
        %v8717 = vunpack.c.h.bf16 %v8672
        %v8718 = vunpack.c.l.bf16 %v8673
        %v8719 = vunpack.c.h.bf16 %v8673
        %v8720 = vunpack.c.l.bf16 %v8674
        %v8721 = vunpack.c.h.bf16 %v8674
        %v8722 = vunpack.c.l.bf16 %v8675
        %v8723 = vunpack.c.h.bf16 %v8675
        %v8724 = vunpack.c.l.bf16 %v8676
        %v8725 = vunpack.c.h.bf16 %v8676
        %v8726 = vunpack.c.l.bf16 %v8677
        %v8727 = vunpack.c.h.bf16 %v8677
        %v8728 = vunpack.c.l.bf16 %v8678
        %v8729 = vunpack.c.h.bf16 %v8678
        %v8730 = vunpack.c.l.bf16 %v8679
        %v8731 = vunpack.c.h.bf16 %v8679
        %v8732 = vunpack.c.l.bf16 %v8680
        %v8733 = vunpack.c.h.bf16 %v8680
        %v8734 = vunpack.c.l.bf16 %v8681
        %v8735 = vunpack.c.h.bf16 %v8681
        %v8736 = vunpack.c.l.bf16 %v8682
        %v8737 = vunpack.c.h.bf16 %v8682
        %v8738 = vunpack.c.l.bf16 %v8683
        %v8739 = vunpack.c.h.bf16 %v8683
        %v8740 = vunpack.c.l.bf16 %v8684
        %v8741 = vunpack.c.h.bf16 %v8684
        %v8742 = vunpack.c.l.bf16 %v8685
        %v8743 = vunpack.c.h.bf16 %v8685
        %v8744 = vunpack.c.l.bf16 %v8686
        %v8745 = vunpack.c.h.bf16 %v8686
        %v8746 = vunpack.c.l.bf16 %v8687
        %v8747 = vunpack.c.h.bf16 %v8687
        %v8748 = vunpack.c.l.bf16 %v8688
        %v8749 = vunpack.c.h.bf16 %v8688
        %v8750 = vunpack.c.l.bf16 %v8689
        %v8751 = vunpack.c.h.bf16 %v8689
        %v8752 = vunpack.c.l.bf16 %v8690
        %v8753 = vunpack.c.h.bf16 %v8690
        %v8754 = vunpack.c.l.bf16 %v8691
        %v8755 = vunpack.c.h.bf16 %v8691
        %v8756 = vmul.f32 %v7412, %v8692
        %v8757 = vmul.f32 %v7413, %v8693
        %v8758 = vmul.f32 %v7414, %v8694
        %v8759 = vmul.f32 %v7415, %v8695
        %v8760 = vmul.f32 %v7416, %v8696
        %v8761 = vmul.f32 %v7417, %v8697
        %v8762 = vmul.f32 %v7418, %v8698
        %v8763 = vmul.f32 %v7419, %v8699
        %v8764 = vmul.f32 %v7420, %v8700
        %v8765 = vmul.f32 %v7421, %v8701
        %v8766 = vmul.f32 %v7422, %v8702
        %v8767 = vmul.f32 %v7423, %v8703
        %v8768 = vmul.f32 %v7424, %v8704
        %v8769 = vmul.f32 %v7425, %v8705
        %v8770 = vmul.f32 %v7426, %v8706
        %v8771 = vmul.f32 %v7427, %v8707
        %v8772 = vmul.f32 %v7428, %v8708
        %v8773 = vmul.f32 %v7429, %v8709
        %v8774 = vmul.f32 %v7430, %v8710
        %v8775 = vmul.f32 %v7431, %v8711
        %v8776 = vmul.f32 %v7432, %v8712
        %v8777 = vmul.f32 %v7433, %v8713
        %v8778 = vmul.f32 %v7434, %v8714
        %v8779 = vmul.f32 %v7435, %v8715
        %v8780 = vmul.f32 %v7436, %v8716
        %v8781 = vmul.f32 %v7437, %v8717
        %v8782 = vmul.f32 %v7438, %v8718
        %v8783 = vmul.f32 %v7439, %v8719
        %v8784 = vmul.f32 %v7440, %v8720
        %v8785 = vmul.f32 %v7441, %v8721
        %v8786 = vmul.f32 %v7442, %v8722
        %v8787 = vmul.f32 %v7443, %v8723
        %v8788 = vmul.f32 %v7444, %v8724
        %v8789 = vmul.f32 %v7445, %v8725
        %v8790 = vmul.f32 %v7446, %v8726
        %v8791 = vmul.f32 %v7447, %v8727
        %v8792 = vmul.f32 %v7448, %v8728
        %v8793 = vmul.f32 %v7449, %v8729
        %v8794 = vmul.f32 %v7450, %v8730
        %v8795 = vmul.f32 %v7451, %v8731
        %v8796 = vmul.f32 %v7452, %v8732
        %v8797 = vmul.f32 %v7453, %v8733
        %v8798 = vmul.f32 %v7454, %v8734
        %v8799 = vmul.f32 %v7455, %v8735
        %v8800 = vmul.f32 %v7456, %v8736
        %v8801 = vmul.f32 %v7457, %v8737
        %v8802 = vmul.f32 %v7458, %v8738
        %v8803 = vmul.f32 %v7459, %v8739
        %v8804 = vmul.f32 %v7460, %v8740
        %v8805 = vmul.f32 %v7461, %v8741
        %v8806 = vmul.f32 %v7462, %v8742
        %v8807 = vmul.f32 %v7463, %v8743
        %v8808 = vmul.f32 %v7464, %v8744
        %v8809 = vmul.f32 %v7465, %v8745
        %v8810 = vmul.f32 %v7466, %v8746
        %v8811 = vmul.f32 %v7467, %v8747
        %v8812 = vmul.f32 %v7468, %v8748
        %v8813 = vmul.f32 %v7469, %v8749
        %v8814 = vmul.f32 %v7470, %v8750
        %v8815 = vmul.f32 %v7471, %v8751
        %v8816 = vmul.f32 %v7472, %v8752
        %v8817 = vmul.f32 %v7473, %v8753
        %v8818 = vmul.f32 %v7474, %v8754
        %v8819 = vmul.f32 %v7475, %v8755
        %v8820 = vpack.c.bf16 %v8758, %v8756
        %v8821 = vpack.c.bf16 %v8759, %v8757
        %v8822 = vpack.c.bf16 %v8762, %v8760
        %v8823 = vpack.c.bf16 %v8763, %v8761
        %v8824 = vpack.c.bf16 %v8766, %v8764
        %v8825 = vpack.c.bf16 %v8767, %v8765
        %v8826 = vpack.c.bf16 %v8770, %v8768
        %v8827 = vpack.c.bf16 %v8771, %v8769
        %v8828 = vpack.c.bf16 %v8774, %v8772
        %v8829 = vpack.c.bf16 %v8775, %v8773
        %v8830 = vpack.c.bf16 %v8778, %v8776
        %v8831 = vpack.c.bf16 %v8779, %v8777
        %v8832 = vpack.c.bf16 %v8782, %v8780
        %v8833 = vpack.c.bf16 %v8783, %v8781
        %v8834 = vpack.c.bf16 %v8786, %v8784
        %v8835 = vpack.c.bf16 %v8787, %v8785
        %v8836 = vpack.c.bf16 %v8790, %v8788
        %v8837 = vpack.c.bf16 %v8791, %v8789
        %v8838 = vpack.c.bf16 %v8794, %v8792
        %v8839 = vpack.c.bf16 %v8795, %v8793
        %v8840 = vpack.c.bf16 %v8798, %v8796
        %v8841 = vpack.c.bf16 %v8799, %v8797
        %v8842 = vpack.c.bf16 %v8802, %v8800
        %v8843 = vpack.c.bf16 %v8803, %v8801
        %v8844 = vpack.c.bf16 %v8806, %v8804
        %v8845 = vpack.c.bf16 %v8807, %v8805
        %v8846 = vpack.c.bf16 %v8810, %v8808
        %v8847 = vpack.c.bf16 %v8811, %v8809
        %v8848 = vpack.c.bf16 %v8814, %v8812
        %v8849 = vpack.c.bf16 %v8815, %v8813
        %v8850 = vpack.c.bf16 %v8818, %v8816
        %v8851 = vpack.c.bf16 %v8819, %v8817
        %s8852 = scalar_lea.vmem [#allocation2], 256
        %v8853 = vld [vmem:[%s8852] sm:$0xff]
        %v8854 = vld [vmem:[%s8852 + $0x8] sm:$0xff]
        %v8855 = vld [vmem:[%s8852 + $0x10] sm:$0xff]
        %v8856 = vld [vmem:[%s8852 + $0x18] sm:$0xff]
        %v8857 = vld [vmem:[%s8852 + $0x20] sm:$0xff]
        %v8858 = vld [vmem:[%s8852 + $0x28] sm:$0xff]
        %v8859 = vld [vmem:[%s8852 + $0x30] sm:$0xff]
        %v8860 = vld [vmem:[%s8852 + $0x38] sm:$0xff]
        %v8861 = vld [vmem:[%s8852 + $0x40] sm:$0xff]
        %v8862 = vld [vmem:[%s8852 + $0x48] sm:$0xff]
        %v8863 = vld [vmem:[%s8852 + $0x50] sm:$0xff]
        %v8864 = vld [vmem:[%s8852 + $0x58] sm:$0xff]
        %v8865 = vld [vmem:[%s8852 + $0x60] sm:$0xff]
        %v8866 = vld [vmem:[%s8852 + $0x68] sm:$0xff]
        %v8867 = vld [vmem:[%s8852 + $0x70] sm:$0xff]
        %v8868 = vld [vmem:[%s8852 + $0x78] sm:$0xff]
        %v8885 = vunpack.c.l.b16 %v8853
        %v8886 = vunpack.c.h.b16 %v8853
        %v8887 = vunpack.c.l.b16 %v8854
        %v8888 = vunpack.c.h.b16 %v8854
        %v8889 = vunpack.c.l.b16 %v8855
        %v8890 = vunpack.c.h.b16 %v8855
        %v8891 = vunpack.c.l.b16 %v8856
        %v8892 = vunpack.c.h.b16 %v8856
        %v8893 = vunpack.c.l.b16 %v8857
        %v8894 = vunpack.c.h.b16 %v8857
        %v8895 = vunpack.c.l.b16 %v8858
        %v8896 = vunpack.c.h.b16 %v8858
        %v8897 = vunpack.c.l.b16 %v8859
        %v8898 = vunpack.c.h.b16 %v8859
        %v8899 = vunpack.c.l.b16 %v8860
        %v8900 = vunpack.c.h.b16 %v8860
        %v8901 = vunpack.c.l.b16 %v8861
        %v8902 = vunpack.c.h.b16 %v8861
        %v8903 = vunpack.c.l.b16 %v8862
        %v8904 = vunpack.c.h.b16 %v8862
        %v8905 = vunpack.c.l.b16 %v8863
        %v8906 = vunpack.c.h.b16 %v8863
        %v8907 = vunpack.c.l.b16 %v8864
        %v8908 = vunpack.c.h.b16 %v8864
        %v8909 = vunpack.c.l.b16 %v8865
        %v8910 = vunpack.c.h.b16 %v8865
        %v8911 = vunpack.c.l.b16 %v8866
        %v8912 = vunpack.c.h.b16 %v8866
        %v8913 = vunpack.c.l.b16 %v8867
        %v8914 = vunpack.c.h.b16 %v8867
        %v8915 = vunpack.c.l.b16 %v8868
        %v8916 = vunpack.c.h.b16 %v8868
        %v8917 = vpack.c.b16 %v8887, %v8885
        %v8918 = vpack.c.b16 %v8888, %v8886
        %v8919 = vpack.c.b16 %v8891, %v8889
        %v8920 = vpack.c.b16 %v8892, %v8890
        %v8921 = vpack.c.b16 %v8895, %v8893
        %v8922 = vpack.c.b16 %v8896, %v8894
        %v8923 = vpack.c.b16 %v8899, %v8897
        %v8924 = vpack.c.b16 %v8900, %v8898
        %v8925 = vpack.c.b16 %v8903, %v8901
        %v8926 = vpack.c.b16 %v8904, %v8902
        %v8927 = vpack.c.b16 %v8907, %v8905
        %v8928 = vpack.c.b16 %v8908, %v8906
        %v8929 = vpack.c.b16 %v8911, %v8909
        %v8930 = vpack.c.b16 %v8912, %v8910
        %v8931 = vpack.c.b16 %v8915, %v8913
        %v8932 = vpack.c.b16 %v8916, %v8914
        %8949 = vmatpush.bf16.msra.mxu0 %v8834
        %8950 = vmatpush.bf16.msra.mxu0 %v8832
        %8951 = vmatpush.bf16.msra.mxu0 %v8830
        %8952 = vmatpush.bf16.msra.mxu0 %v8828
        %8953 = vmatpush.bf16.msra.mxu0 %v8826
        %8954 = vmatpush.bf16.msra.mxu0 %v8824
        %8955 = vmatpush.bf16.msra.mxu0 %v8822
        %8956 = vmatpush.bf16.msra.mxu0 %v8820
        %8957 = vmatmul.bf16.gmra.mxu0 %v8917
        %v8958 = vpop.f32.mrf.mxu0
        %v8959 = vadd.f32 0.0, %v8958
        %v8960 = vpop.f32.mrf.mxu0
        %v8961 = vadd.f32 0.0, %v8960
        %8962 = vmatmul.bf16.gmra.mxu0 %v8919
        %v8963 = vpop.f32.mrf.mxu0
        %v8964 = vadd.f32 0.0, %v8963
        %v8965 = vpop.f32.mrf.mxu0
        %v8966 = vadd.f32 0.0, %v8965
        %8967 = vmatmul.bf16.gmra.mxu0 %v8921
        %v8968 = vpop.f32.mrf.mxu0
        %v8969 = vadd.f32 0.0, %v8968
        %v8970 = vpop.f32.mrf.mxu0
        %v8971 = vadd.f32 0.0, %v8970
        %8972 = vmatmul.bf16.gmra.mxu0 %v8923
        %v8973 = vpop.f32.mrf.mxu0
        %v8974 = vadd.f32 0.0, %v8973
        %v8975 = vpop.f32.mrf.mxu0
        %v8976 = vadd.f32 0.0, %v8975
        %8977 = vmatmul.bf16.gmra.mxu0 %v8925
        %v8978 = vpop.f32.mrf.mxu0
        %v8979 = vadd.f32 0.0, %v8978
        %v8980 = vpop.f32.mrf.mxu0
        %v8981 = vadd.f32 0.0, %v8980
        %8982 = vmatmul.bf16.gmra.mxu0 %v8927
        %v8983 = vpop.f32.mrf.mxu0
        %v8984 = vadd.f32 0.0, %v8983
        %v8985 = vpop.f32.mrf.mxu0
        %v8986 = vadd.f32 0.0, %v8985
        %8987 = vmatmul.bf16.gmra.mxu0 %v8929
        %v8988 = vpop.f32.mrf.mxu0
        %v8989 = vadd.f32 0.0, %v8988
        %v8990 = vpop.f32.mrf.mxu0
        %v8991 = vadd.f32 0.0, %v8990
        %8992 = vmatmul.bf16.gmra.mxu0 %v8931
        %v8993 = vpop.f32.mrf.mxu0
        %v8994 = vadd.f32 0.0, %v8993
        %v8995 = vpop.f32.mrf.mxu0
        %v8996 = vadd.f32 0.0, %v8995
        %8997 = vdwg.mxu0
        %8998 = vmatpush.bf16.msra.mxu0 %v8850
        %8999 = vmatpush.bf16.msra.mxu0 %v8848
        %9000 = vmatpush.bf16.msra.mxu0 %v8846
        %9001 = vmatpush.bf16.msra.mxu0 %v8844
        %9002 = vmatpush.bf16.msra.mxu0 %v8842
        %9003 = vmatpush.bf16.msra.mxu0 %v8840
        %9004 = vmatpush.bf16.msra.mxu0 %v8838
        %9005 = vmatpush.bf16.msra.mxu0 %v8836
        %9006 = vmatmul.bf16.gmra.mxu0 %v8918
        %v9007 = vpop.f32.mrf.mxu0
        %v9008 = vadd.f32 %v8959, %v9007
        %v9009 = vpop.f32.mrf.mxu0
        %v9010 = vadd.f32 %v8961, %v9009
        %9011 = vmatmul.bf16.gmra.mxu0 %v8920
        %v9012 = vpop.f32.mrf.mxu0
        %v9013 = vadd.f32 %v8964, %v9012
        %v9014 = vpop.f32.mrf.mxu0
        %v9015 = vadd.f32 %v8966, %v9014
        %9016 = vmatmul.bf16.gmra.mxu0 %v8922
        %v9017 = vpop.f32.mrf.mxu0
        %v9018 = vadd.f32 %v8969, %v9017
        %v9019 = vpop.f32.mrf.mxu0
        %v9020 = vadd.f32 %v8971, %v9019
        %9021 = vmatmul.bf16.gmra.mxu0 %v8924
        %v9022 = vpop.f32.mrf.mxu0
        %v9023 = vadd.f32 %v8974, %v9022
        %v9024 = vpop.f32.mrf.mxu0
        %v9025 = vadd.f32 %v8976, %v9024
        %9026 = vmatmul.bf16.gmra.mxu0 %v8926
        %v9027 = vpop.f32.mrf.mxu0
        %v9028 = vadd.f32 %v8979, %v9027
        %v9029 = vpop.f32.mrf.mxu0
        %v9030 = vadd.f32 %v8981, %v9029
        %9031 = vmatmul.bf16.gmra.mxu0 %v8928
        %v9032 = vpop.f32.mrf.mxu0
        %v9033 = vadd.f32 %v8984, %v9032
        %v9034 = vpop.f32.mrf.mxu0
        %v9035 = vadd.f32 %v8986, %v9034
        %9036 = vmatmul.bf16.gmra.mxu0 %v8930
        %v9037 = vpop.f32.mrf.mxu0
        %v9038 = vadd.f32 %v8989, %v9037
        %v9039 = vpop.f32.mrf.mxu0
        %v9040 = vadd.f32 %v8991, %v9039
        %9041 = vmatmul.bf16.gmra.mxu0 %v8932
        %v9042 = vpop.f32.mrf.mxu0
        %v9043 = vadd.f32 %v8994, %v9042
        %v9044 = vpop.f32.mrf.mxu0
        %v9045 = vadd.f32 %v8996, %v9044
        %9046 = vdwg.mxu0
        %9047 = vmatpush.bf16.msra.mxu0 %v8835
        %9048 = vmatpush.bf16.msra.mxu0 %v8833
        %9049 = vmatpush.bf16.msra.mxu0 %v8831
        %9050 = vmatpush.bf16.msra.mxu0 %v8829
        %9051 = vmatpush.bf16.msra.mxu0 %v8827
        %9052 = vmatpush.bf16.msra.mxu0 %v8825
        %9053 = vmatpush.bf16.msra.mxu0 %v8823
        %9054 = vmatpush.bf16.msra.mxu0 %v8821
        %9055 = vmatmul.bf16.gmra.mxu0 %v8917
        %v9056 = vpop.f32.mrf.mxu0
        %v9057 = vadd.f32 0.0, %v9056
        %v9058 = vpop.f32.mrf.mxu0
        %v9059 = vadd.f32 0.0, %v9058
        %9060 = vmatmul.bf16.gmra.mxu0 %v8919
        %v9061 = vpop.f32.mrf.mxu0
        %v9062 = vadd.f32 0.0, %v9061
        %v9063 = vpop.f32.mrf.mxu0
        %v9064 = vadd.f32 0.0, %v9063
        %9065 = vmatmul.bf16.gmra.mxu0 %v8921
        %v9066 = vpop.f32.mrf.mxu0
        %v9067 = vadd.f32 0.0, %v9066
        %v9068 = vpop.f32.mrf.mxu0
        %v9069 = vadd.f32 0.0, %v9068
        %9070 = vmatmul.bf16.gmra.mxu0 %v8923
        %v9071 = vpop.f32.mrf.mxu0
        %v9072 = vadd.f32 0.0, %v9071
        %v9073 = vpop.f32.mrf.mxu0
        %v9074 = vadd.f32 0.0, %v9073
        %9075 = vmatmul.bf16.gmra.mxu0 %v8925
        %v9076 = vpop.f32.mrf.mxu0
        %v9077 = vadd.f32 0.0, %v9076
        %v9078 = vpop.f32.mrf.mxu0
        %v9079 = vadd.f32 0.0, %v9078
        %9080 = vmatmul.bf16.gmra.mxu0 %v8927
        %v9081 = vpop.f32.mrf.mxu0
        %v9082 = vadd.f32 0.0, %v9081
        %v9083 = vpop.f32.mrf.mxu0
        %v9084 = vadd.f32 0.0, %v9083
        %9085 = vmatmul.bf16.gmra.mxu0 %v8929
        %v9086 = vpop.f32.mrf.mxu0
        %v9087 = vadd.f32 0.0, %v9086
        %v9088 = vpop.f32.mrf.mxu0
        %v9089 = vadd.f32 0.0, %v9088
        %9090 = vmatmul.bf16.gmra.mxu0 %v8931
        %v9091 = vpop.f32.mrf.mxu0
        %v9092 = vadd.f32 0.0, %v9091
        %v9093 = vpop.f32.mrf.mxu0
        %v9094 = vadd.f32 0.0, %v9093
        %9095 = vdwg.mxu0
        %9096 = vmatpush.bf16.msra.mxu0 %v8851
        %9097 = vmatpush.bf16.msra.mxu0 %v8849
        %9098 = vmatpush.bf16.msra.mxu0 %v8847
        %9099 = vmatpush.bf16.msra.mxu0 %v8845
        %9100 = vmatpush.bf16.msra.mxu0 %v8843
        %9101 = vmatpush.bf16.msra.mxu0 %v8841
        %9102 = vmatpush.bf16.msra.mxu0 %v8839
        %9103 = vmatpush.bf16.msra.mxu0 %v8837
        %9104 = vmatmul.bf16.gmra.mxu0 %v8918
        %v9105 = vpop.f32.mrf.mxu0
        %v9106 = vadd.f32 %v9057, %v9105
        %v9107 = vpop.f32.mrf.mxu0
        %v9108 = vadd.f32 %v9059, %v9107
        %9109 = vmatmul.bf16.gmra.mxu0 %v8920
        %v9110 = vpop.f32.mrf.mxu0
        %v9111 = vadd.f32 %v9062, %v9110
        %v9112 = vpop.f32.mrf.mxu0
        %v9113 = vadd.f32 %v9064, %v9112
        %9114 = vmatmul.bf16.gmra.mxu0 %v8922
        %v9115 = vpop.f32.mrf.mxu0
        %v9116 = vadd.f32 %v9067, %v9115
        %v9117 = vpop.f32.mrf.mxu0
        %v9118 = vadd.f32 %v9069, %v9117
        %9119 = vmatmul.bf16.gmra.mxu0 %v8924
        %v9120 = vpop.f32.mrf.mxu0
        %v9121 = vadd.f32 %v9072, %v9120
        %v9122 = vpop.f32.mrf.mxu0
        %v9123 = vadd.f32 %v9074, %v9122
        %9124 = vmatmul.bf16.gmra.mxu0 %v8926
        %v9125 = vpop.f32.mrf.mxu0
        %v9126 = vadd.f32 %v9077, %v9125
        %v9127 = vpop.f32.mrf.mxu0
        %v9128 = vadd.f32 %v9079, %v9127
        %9129 = vmatmul.bf16.gmra.mxu0 %v8928
        %v9130 = vpop.f32.mrf.mxu0
        %v9131 = vadd.f32 %v9082, %v9130
        %v9132 = vpop.f32.mrf.mxu0
        %v9133 = vadd.f32 %v9084, %v9132
        %9134 = vmatmul.bf16.gmra.mxu0 %v8930
        %v9135 = vpop.f32.mrf.mxu0
        %v9136 = vadd.f32 %v9087, %v9135
        %v9137 = vpop.f32.mrf.mxu0
        %v9138 = vadd.f32 %v9089, %v9137
        %9139 = vmatmul.bf16.gmra.mxu0 %v8932
        %v9140 = vpop.f32.mrf.mxu0
        %v9141 = vadd.f32 %v9092, %v9140
        %v9142 = vpop.f32.mrf.mxu0
        %v9143 = vadd.f32 %v9094, %v9142
        %9144 = vdwg.mxu0
        %v9145 = vadd.f32 %v6274, %v9008
        %v9146 = vadd.f32 %v6275, %v9106
        %v9147 = vadd.f32 %v6276, %v9010
        %v9148 = vadd.f32 %v6277, %v9108
        %v9149 = vadd.f32 %v6278, %v9013
        %v9150 = vadd.f32 %v6279, %v9111
        %v9151 = vadd.f32 %v6280, %v9015
        %v9152 = vadd.f32 %v6281, %v9113
        %v9153 = vadd.f32 %v6282, %v9018
        %v9154 = vadd.f32 %v6283, %v9116
        %v9155 = vadd.f32 %v6284, %v9020
        %v9156 = vadd.f32 %v6285, %v9118
        %v9157 = vadd.f32 %v6286, %v9023
        %v9158 = vadd.f32 %v6287, %v9121
        %v9159 = vadd.f32 %v6288, %v9025
        %v9160 = vadd.f32 %v6289, %v9123
        %v9161 = vadd.f32 %v6290, %v9028
        %v9162 = vadd.f32 %v6291, %v9126
        %v9163 = vadd.f32 %v6292, %v9030
        %v9164 = vadd.f32 %v6293, %v9128
        %v9165 = vadd.f32 %v6294, %v9033
        %v9166 = vadd.f32 %v6295, %v9131
        %v9167 = vadd.f32 %v6296, %v9035
        %v9168 = vadd.f32 %v6297, %v9133
        %v9169 = vadd.f32 %v6298, %v9038
        %v9170 = vadd.f32 %v6299, %v9136
        %v9171 = vadd.f32 %v6300, %v9040
        %v9172 = vadd.f32 %v6301, %v9138
        %v9173 = vadd.f32 %v6302, %v9043
        %v9174 = vadd.f32 %v6303, %v9141
        %v9175 = vadd.f32 %v6304, %v9045
        %v9176 = vadd.f32 %v6305, %v9143
        %s9177 = scalar_lea.vmem %s4, 256
        %v9178 = vld [vmem:[%s9177] sm:$0xff]
        %v9179 = vld [vmem:[%s9177 + $0x8] sm:$0xff]
        %v9180 = vld [vmem:[%s9177 + $0x10] sm:$0xff]
        %v9181 = vld [vmem:[%s9177 + $0x18] sm:$0xff]
        %v9182 = vld [vmem:[%s9177 + $0x20] sm:$0xff]
        %v9183 = vld [vmem:[%s9177 + $0x28] sm:$0xff]
        %v9184 = vld [vmem:[%s9177 + $0x30] sm:$0xff]
        %v9185 = vld [vmem:[%s9177 + $0x38] sm:$0xff]
        %v9186 = vld [vmem:[%s9177 + $0x40] sm:$0xff]
        %v9187 = vld [vmem:[%s9177 + $0x48] sm:$0xff]
        %v9188 = vld [vmem:[%s9177 + $0x50] sm:$0xff]
        %v9189 = vld [vmem:[%s9177 + $0x58] sm:$0xff]
        %v9190 = vld [vmem:[%s9177 + $0x60] sm:$0xff]
        %v9191 = vld [vmem:[%s9177 + $0x68] sm:$0xff]
        %v9192 = vld [vmem:[%s9177 + $0x70] sm:$0xff]
        %v9193 = vld [vmem:[%s9177 + $0x78] sm:$0xff]
        %9195 = vset.pattern.permute.xlu0 0
        %9196 = vperm.xlu0 %9195, %v9178
        %v9197 = vpop.permute.xlu0 %9196
        %9200 = vset.pattern.permute.xlu0 0
        %9201 = vperm.xlu0 %9200, %v9179
        %v9202 = vpop.permute.xlu0 %9201
        %9205 = vset.pattern.permute.xlu0 0
        %9206 = vperm.xlu0 %9205, %v9180
        %v9207 = vpop.permute.xlu0 %9206
        %9210 = vset.pattern.permute.xlu0 0
        %9211 = vperm.xlu0 %9210, %v9181
        %v9212 = vpop.permute.xlu0 %9211
        %9215 = vset.pattern.permute.xlu0 0
        %9216 = vperm.xlu0 %9215, %v9182
        %v9217 = vpop.permute.xlu0 %9216
        %9220 = vset.pattern.permute.xlu0 0
        %9221 = vperm.xlu0 %9220, %v9183
        %v9222 = vpop.permute.xlu0 %9221
        %9225 = vset.pattern.permute.xlu0 0
        %9226 = vperm.xlu0 %9225, %v9184
        %v9227 = vpop.permute.xlu0 %9226
        %9230 = vset.pattern.permute.xlu0 0
        %9231 = vperm.xlu0 %9230, %v9185
        %v9232 = vpop.permute.xlu0 %9231
        %9235 = vset.pattern.permute.xlu0 0
        %9236 = vperm.xlu0 %9235, %v9186
        %v9237 = vpop.permute.xlu0 %9236
        %9240 = vset.pattern.permute.xlu0 0
        %9241 = vperm.xlu0 %9240, %v9187
        %v9242 = vpop.permute.xlu0 %9241
        %9245 = vset.pattern.permute.xlu0 0
        %9246 = vperm.xlu0 %9245, %v9188
        %v9247 = vpop.permute.xlu0 %9246
        %9250 = vset.pattern.permute.xlu0 0
        %9251 = vperm.xlu0 %9250, %v9189
        %v9252 = vpop.permute.xlu0 %9251
        %9255 = vset.pattern.permute.xlu0 0
        %9256 = vperm.xlu0 %9255, %v9190
        %v9257 = vpop.permute.xlu0 %9256
        %9260 = vset.pattern.permute.xlu0 0
        %9261 = vperm.xlu0 %9260, %v9191
        %v9262 = vpop.permute.xlu0 %9261
        %9265 = vset.pattern.permute.xlu0 0
        %9266 = vperm.xlu0 %9265, %v9192
        %v9267 = vpop.permute.xlu0 %9266
        %9270 = vset.pattern.permute.xlu0 0
        %9271 = vperm.xlu0 %9270, %v9193
        %v9272 = vpop.permute.xlu0 %9271
        %v9274 = vadd.f32 %v9145, %v9197
        %v9275 = vadd.f32 %v9146, %v9197
        %v9276 = vadd.f32 %v9147, %v9202
        %v9277 = vadd.f32 %v9148, %v9202
        %v9278 = vadd.f32 %v9149, %v9207
        %v9279 = vadd.f32 %v9150, %v9207
        %v9280 = vadd.f32 %v9151, %v9212
        %v9281 = vadd.f32 %v9152, %v9212
        %v9282 = vadd.f32 %v9153, %v9217
        %v9283 = vadd.f32 %v9154, %v9217
        %v9284 = vadd.f32 %v9155, %v9222
        %v9285 = vadd.f32 %v9156, %v9222
        %v9286 = vadd.f32 %v9157, %v9227
        %v9287 = vadd.f32 %v9158, %v9227
        %v9288 = vadd.f32 %v9159, %v9232
        %v9289 = vadd.f32 %v9160, %v9232
        %v9290 = vadd.f32 %v9161, %v9237
        %v9291 = vadd.f32 %v9162, %v9237
        %v9292 = vadd.f32 %v9163, %v9242
        %v9293 = vadd.f32 %v9164, %v9242
        %v9294 = vadd.f32 %v9165, %v9247
        %v9295 = vadd.f32 %v9166, %v9247
        %v9296 = vadd.f32 %v9167, %v9252
        %v9297 = vadd.f32 %v9168, %v9252
        %v9298 = vadd.f32 %v9169, %v9257
        %v9299 = vadd.f32 %v9170, %v9257
        %v9300 = vadd.f32 %v9171, %v9262
        %v9301 = vadd.f32 %v9172, %v9262
        %v9302 = vadd.f32 %v9173, %v9267
        %v9303 = vadd.f32 %v9174, %v9267
        %v9304 = vadd.f32 %v9175, %v9272
        %v9305 = vadd.f32 %v9176, %v9272
        %9306 = vst [vmem:[%s259] sm:$0xff] %v9274
        %9307 = vst [vmem:[%s259 + $0x8] sm:$0xff] %v9275
        %9308 = vst [vmem:[%s259 + $0x10] sm:$0xff] %v9276
        %9309 = vst [vmem:[%s259 + $0x18] sm:$0xff] %v9277
        %9310 = vst [vmem:[%s259 + $0x20] sm:$0xff] %v9278
        %9311 = vst [vmem:[%s259 + $0x28] sm:$0xff] %v9279
        %9312 = vst [vmem:[%s259 + $0x30] sm:$0xff] %v9280
        %9313 = vst [vmem:[%s259 + $0x38] sm:$0xff] %v9281
        %9314 = vst [vmem:[%s259 + $0x40] sm:$0xff] %v9282
        %9315 = vst [vmem:[%s259 + $0x48] sm:$0xff] %v9283
        %9316 = vst [vmem:[%s259 + $0x50] sm:$0xff] %v9284
        %9317 = vst [vmem:[%s259 + $0x58] sm:$0xff] %v9285
        %9318 = vst [vmem:[%s259 + $0x60] sm:$0xff] %v9286
        %9319 = vst [vmem:[%s259 + $0x68] sm:$0xff] %v9287
        %9320 = vst [vmem:[%s259 + $0x70] sm:$0xff] %v9288
        %9321 = vst [vmem:[%s259 + $0x78] sm:$0xff] %v9289
        %9322 = vst [vmem:[%s259 + $0x80] sm:$0xff] %v9290
        %9323 = vst [vmem:[%s259 + $0x88] sm:$0xff] %v9291
        %9324 = vst [vmem:[%s259 + $0x90] sm:$0xff] %v9292
        %9325 = vst [vmem:[%s259 + $0x98] sm:$0xff] %v9293
        %9326 = vst [vmem:[%s259 + $0xa0] sm:$0xff] %v9294
        %9327 = vst [vmem:[%s259 + $0xa8] sm:$0xff] %v9295
        %9328 = vst [vmem:[%s259 + $0xb0] sm:$0xff] %v9296
        %9329 = vst [vmem:[%s259 + $0xb8] sm:$0xff] %v9297
        %9330 = vst [vmem:[%s259 + $0xc0] sm:$0xff] %v9298
        %9331 = vst [vmem:[%s259 + $0xc8] sm:$0xff] %v9299
        %9332 = vst [vmem:[%s259 + $0xd0] sm:$0xff] %v9300
        %9333 = vst [vmem:[%s259 + $0xd8] sm:$0xff] %v9301
        %9334 = vst [vmem:[%s259 + $0xe0] sm:$0xff] %v9302
        %9335 = vst [vmem:[%s259 + $0xe8] sm:$0xff] %v9303
        %9336 = vst [vmem:[%s259 + $0xf0] sm:$0xff] %v9304
        %9337 = vst [vmem:[%s259 + $0xf8] sm:$0xff] %v9305
        %s9338 = sand.u32 %s154, 1
        %s9339 = scalar_lea.sflag [#allocation4], %s9338
        %s9340 = sand.u32 %s154, 1
        %s9341 = smul.addr %s9340, 256
        %s9342 = scalar_lea.vmem [#allocation5], %s9341
        // Predicated region
        $region45: #{adsr_content_mlp.1} parent=39 // pred_check
          %p9343 = pneg %p164
        $region46: #{adsr_content_mlp.1} parent=39 // pred_check_branch
          %9345 = sbr.rel (%p9343) target = $region48
        $region47: #{adsr_content_mlp.1} parent=39 // pred_region
          %s9346 = smul.u32 2, %s25
          %9348 = vsyncadd %s9339, 0
          %s9349 = smul.addr %s24, 32
          %s9350 = sadd.s32 %s9346, %s9349
          %s9351 = smul.addr %s9350, 8
          %s9352 = scalar_lea.hbm %s5, %s9351
          %s9353 = sshll.u32 %s9342, 4
          %s9354 = int_to_ptr.vmem [resolvable:$true] %s9353
          %s9355 = sshll.u32 %s9352, 4
          %s9356 = int_to_ptr.hbm [resolvable:$true] %s9355
          %9361 = dma.vmem_to_hbm [thread:$0]  %s9354, 4096, %s9356, %s9339, 256, 256, 16
        $region48: #{adsr_content_mlp.1} parent=39 // pred_fallthru
          _
      $region40: #{adsr_content_mlp.1} parent=5 // pred_fallthru
        _
      %p9362 = scmp.le.s32.totalorder 2, %s15
      // Predicated region
      $region49: #{adsr_content_mlp.1} parent=5 // pred_check
        %p9363 = pneg %p9362
      $region50: #{adsr_content_mlp.1} parent=5 // pred_check_branch
        %9365 = sbr.rel (%p9363) target = $region52
      $region51: #{adsr_content_mlp.1} parent=5 // pred_region
        %s9366 = ssub.s32 %s15, 2
        // Predicated region
        $region53: #{adsr_content_mlp.1} parent=51 // pred_check
          %p9367 = pneg %p170
        $region54: #{adsr_content_mlp.1} parent=51 // pred_check_branch
          %9369 = sbr.rel (%p9367) target = $region56
        $region55: #{adsr_content_mlp.1} parent=51 // pred_region
          %s9370 = sand.u32 %s155, 1
          %s9371 = scalar_lea.sflag [#allocation4], %s9370
          %s9372 = sand.u32 %s155, 1
          %s9373 = smul.addr %s9372, 256
          %s9374 = scalar_lea.vmem [#allocation5], %s9373
          %9376 = dma.done %s9371, 4096
        $region56: #{adsr_content_mlp.1} parent=51 // pred_fallthru
          _
      $region52: #{adsr_content_mlp.1} parent=5 // pred_fallthru
        _
    $region6: #{adsr_content_mlp.1} parent=1 // loop_footer
      %s19 = sadd.s32 1, %s15
    $region7: #{adsr_content_mlp.1} parent=1 // loop_footer_branch
      %14 = sbr.rel target = $region3
    $region8: #{adsr_content_mlp.1} parent=1 // loop_exit
      _
    %9377 = vsyncpa [#allocation3], 1
    %s9378 = scalar_lea.sflag [#allocation3], 1
    %9379 = vsyncpa %s9378, 1
    %9380 = vsyncpa [#allocation4], 1
    %s9381 = scalar_lea.sflag [#allocation4], 1
    %9382 = vsyncpa %s9381, 1

</llo_original>
